<compile_context>
chip_gen: v5e
topology: v5e:2x2
jax: 0.10.0
libtpu: 0.0.40
codegen_flags: <defaults>
</compile_context>

<pallas_src>
import math
import functools

import numpy as np
import jax
import jax.numpy as jnp
from jax.experimental import pallas as pl
from jax.experimental.pallas import tpu as pltpu

# ---------------- small config consistent with the module ----------------
IMG_SIZE = 32
PATCH_SIZE = 16            # selects the patch_size == 16 FPN branch
IN_CHANS = 3
EMBED_DIM = 128
DEPTH = 4
NUM_HEADS = 4
MLP_RATIO = 4.0
OUT_INDICES = (0, 1, 2, 3)
LN_EPS = 1e-6
BN_EPS = 1e-5
HEAD_DIM = EMBED_DIM // NUM_HEADS
ATTN_SCALE = HEAD_DIM ** (-0.5)
MLP_HIDDEN = int(EMBED_DIM * MLP_RATIO)
NUM_PATCHES = (IMG_SIZE // PATCH_SIZE) ** 2     # 4
SEQ = NUM_PATCHES + 1                           # 5 real tokens (cls + patches)
SEQ_PAD = ((SEQ + 7) // 8) * 8                  # 8: sublane-aligned padded seq


# ------------------------------ in-kernel math ------------------------------
def _erf(x):
    # Abramowitz & Stegun 7.1.26 (max abs err ~1.5e-7) so GELU matches
    # PyTorch's exact (erf) nn.GELU.  Exact division (no approx reciprocal).
    a1, a2, a3, a4, a5 = (0.254829592, -0.284496736, 1.421413741,
                          -1.453152027, 1.061405429)
    pc = 0.3275911
    s = jnp.where(x >= 0.0, 1.0, -1.0)
    ax = jnp.abs(x)
    t = 1.0 / (1.0 + pc * ax)
    poly = t * (a1 + t * (a2 + t * (a3 + t * (a4 + t * a5))))
    return s * (1.0 - poly * jnp.exp(-ax * ax))


def _gelu(x):
    return 0.5 * x * (1.0 + _erf(x * (1.0 / math.sqrt(2.0))))


def _layernorm(x, g, b, eps):
    mu = jnp.mean(x, axis=-1, keepdims=True)
    xc = x - mu
    var = jnp.mean(xc * xc, axis=-1, keepdims=True)
    return xc * jax.lax.rsqrt(var + eps) * g + b


# ----------------------- the single fused iBOT kernel ------------------------
def _ibot_kernel(xp_ref, tokb_ref, abias_ref, hmask_ref, pew_ref,
                 g1_ref, b1_ref, qkvw_ref, projw_ref, projb_ref,
                 g2_ref, b2_ref, fc1w_ref, fc1b_ref, fc2w_ref, fc2b_ref,
                 f1w1_ref, f1b1_ref, f1w2_ref, f1b2_ref, f2w_ref, f2b_ref,
                 o1_ref, o2_ref, o3_ref, o4_ref,
                 carry_ref, feat_ref, *,
                 batch, seq_pad, n_patch, num_heads, head_dim, scale, eps,
                 depth, grid_h, grid_w):
    d = pl.program_id(0)
    C = carry_ref.shape[1]

    # ---- d == 0 prologue: patch embed; cls/pos/patch-bias fused in tok_bias ----
    @pl.when(d == 0)
    def _():
        patches = jnp.dot(xp_ref[...].astype(jnp.bfloat16), pew_ref[...],
                          preferred_element_type=jnp.float32)     # (M, C)
        carry_ref[...] = patches + tokb_ref[...]

    x = carry_ref[...]                                            # (M, C) f32

    # ---- attention branch (pre-norm), all B*seq_pad rows at once ----
    xn = _layernorm(x, g1_ref[0], b1_ref[0], eps)
    qkv = jnp.dot(xn.astype(jnp.bfloat16), qkvw_ref[0],
                  preferred_element_type=jnp.float32)             # (M, 3C)
    q = qkv[:, :C].astype(jnp.bfloat16)
    k = qkv[:, C:2 * C]
    v = qkv[:, 2 * C:]
    abias = abias_ref[...]                                        # (M, M) 0/-1e30

    attn_out = jnp.zeros_like(x)
    for h in range(num_heads):
        hm = hmask_ref[h:h + 1, :]                                # (1, C) lane mask
        kh = (k * hm).astype(jnp.bfloat16)
        vh = (v * hm).astype(jnp.bfloat16)
        s = jax.lax.dot_general(q, kh, (((1,), (1,)), ((), ())),
                                preferred_element_type=jnp.float32) * scale
        s = s + abias                                             # keep in f32
        s = s - jnp.max(s, axis=-1, keepdims=True)
        e = jnp.exp(s)
        p = e / jnp.sum(e, axis=-1, keepdims=True)
        attn_out = attn_out + jnp.dot(p.astype(jnp.bfloat16), vh,
                                      preferred_element_type=jnp.float32)

    y = jnp.dot(attn_out.astype(jnp.bfloat16), projw_ref[0],
                preferred_element_type=jnp.float32) + projb_ref[0]
    x = x + y

    # ---- MLP branch (pre-norm) ----
    xn2 = _layernorm(x, g2_ref[0], b2_ref[0], eps)
    h1 = _gelu(jnp.dot(xn2.astype(jnp.bfloat16), fc1w_ref[0],
                       preferred_element_type=jnp.float32) + fc1b_ref[0])
    y2 = jnp.dot(h1.astype(jnp.bfloat16), fc2w_ref[0],
                 preferred_element_type=jnp.float32) + fc2b_ref[0]
    xo = x + y2
    carry_ref[...] = xo                                           # stays in VMEM

    # ---- stash this depth's patch-token slab (drop cls + pad rows) ----
    for dd in range(depth):
        @pl.when(d == dd)
        def _(dd=dd):
            for b in range(batch):
                feat_ref[dd, b * n_patch:(b + 1) * n_patch, :] = (
                    xo[b * seq_pad + 1: b * seq_pad + 1 + n_patch, :])

    # ---- FPN epilogue at the last depth: all four heads fused in-kernel ----
    @pl.when(d == depth - 1)
    def _():
        f0 = feat_ref[0]                                          # (B*Np, C)
        f1 = feat_ref[1]
        f2 = feat_ref[2]
        f3 = feat_ref[3]
        # fpn1: ConvT2x2 (eval-mode SyncBN folded) -> GELU -> ConvT2x2
        #       (second ConvT as one block-diagonal matmul, lane-dense store)
        h0 = jnp.dot(f0.astype(jnp.bfloat16), f1w1_ref[...],
                     preferred_element_type=jnp.float32) + f1b1_ref[...]
        h0 = _gelu(h0)                                            # (B*Np, 4C)
        o1_ref[...] = jnp.dot(h0.astype(jnp.bfloat16), f1w2_ref[...],
                              preferred_element_type=jnp.float32) + f1b2_ref[...]
        # fpn2: single ConvT2x2
        o2_ref[...] = jnp.dot(f1.astype(jnp.bfloat16), f2w_ref[...],
                              preferred_element_type=jnp.float32) + f2b_ref[...]
        # fpn3: identity
        o3_ref[...] = f2
        # fpn4: MaxPool2d(2,2) over the (grid_h, grid_w) patch grid (pure VPU)
        for b in range(batch):
            base = b * n_patch
            for i in range(grid_h // 2):
                for j in range(grid_w // 2):
                    r00 = base + (2 * i) * grid_w + 2 * j
                    r01 = r00 + 1
                    r10 = base + (2 * i + 1) * grid_w + 2 * j
                    r11 = r10 + 1
                    m = jnp.maximum(
                        jnp.maximum(f3[r00:r00 + 1, :], f3[r01:r01 + 1, :]),
                        jnp.maximum(f3[r10:r10 + 1, :], f3[r11:r11 + 1, :]))
                    orow = (b * (grid_h // 2) + i) * (grid_w // 2) + j
                    o4_ref[orow:orow + 1, :] = m


def ibot_fused_pallas(xp_pad, p, *, batch, grid_h, grid_w):
    """Run patch-embed + all transformer blocks + all FPN heads in one call.

    xp_pad: (batch*SEQ_PAD, Cin*P*P) f32 im2col patches laid out per batch as
            [cls-slot(0), patches..., pad(0)...].
    Returns (o1, o2, o3, o4) channel-last slabs.
    """
    M, pdim = xp_pad.shape
    C = EMBED_DIM
    D = DEPTH
    MH = MLP_HIDDEN
    Np = NUM_PATCHES
    n_pool = batch * (grid_h // 2) * (grid_w // 2)

    def fs(shape):                    # resident input: full block, constant map
        zeros = (0,) * len(shape)
        return pl.BlockSpec(shape, lambda d, _z=zeros: _z)

    def wspec(shape):                 # per-depth streamed weight (Buffered(2))
        nd = len(shape)
        return pl.BlockSpec((1,) + shape, lambda d, _n=nd: (d,) + (0,) * _n)

    kernel = functools.partial(
        _ibot_kernel, batch=batch, seq_pad=SEQ_PAD, n_patch=Np,
        num_heads=NUM_HEADS, head_dim=HEAD_DIM, scale=ATTN_SCALE, eps=LN_EPS,
        depth=D, grid_h=grid_h, grid_w=grid_w)

    out_shape = (
        jax.ShapeDtypeStruct((batch * Np, 16 * C), jnp.float32),   # fpn1
        jax.ShapeDtypeStruct((batch * Np, 4 * C), jnp.float32),    # fpn2
        jax.ShapeDtypeStruct((batch * Np, C), jnp.float32),        # fpn3 (id)
        jax.ShapeDtypeStruct((n_pool, C), jnp.float32),            # fpn4 (pool)
    )

    return pl.pallas_call(
        kernel,
        out_shape=out_shape,
        grid=(D,),
        in_specs=[
            fs((M, pdim)),                       # padded im2col patches (d==0)
            fs((M, C)),                          # fused token bias (cls/pos/b)
            fs((M, M)),                          # block-diag attention bias
            fs((NUM_HEADS, C)),                  # per-head lane masks
            fs((pdim, C)),                       # patch-embed weight (bf16)
            wspec((1, C)), wspec((1, C)),        # ln1 g, b
            wspec((C, 3 * C)),                   # fused qkv (bf16)
            wspec((C, C)), wspec((1, C)),        # proj w, b
            wspec((1, C)), wspec((1, C)),        # ln2 g, b
            wspec((C, MH)), wspec((1, MH)),      # fc1 w, b
            wspec((MH, C)), wspec((1, C)),       # fc2 w, b
            fs((C, 4 * C)), fs((1, 4 * C)),      # fpn1 ConvT1 (BN folded)
            fs((4 * C, 16 * C)), fs((1, 16 * C)),  # fpn1 ConvT2 (block-diag)
            fs((C, 4 * C)), fs((1, 4 * C)),      # fpn2 ConvT
        ],
        out_specs=(
            fs((batch * Np, 16 * C)),
            fs((batch * Np, 4 * C)),
            fs((batch * Np, C)),
            fs((n_pool, C)),
        ),
        scratch_shapes=[
            pltpu.VMEM((M, C), jnp.float32),             # resident token carry
            pltpu.VMEM((D, batch * Np, C), jnp.float32),  # per-depth feature slabs
        ],
        compiler_params=pltpu.CompilerParams(
            dimension_semantics=("arbitrary",)),          # depth is sequential
    )(xp_pad, p["tok_bias"], p["attn_bias"], p["head_mask"], p["patch_w"],
      p["ln1_g"], p["ln1_b"], p["wqkv"], p["proj_w"], p["proj_b"],
      p["ln2_g"], p["ln2_b"], p["fc1_w"], p["fc1_b"], p["fc2_w"], p["fc2_b"],
      p["fpn1_w1"], p["fpn1_b1"], p["fpn1_w2"], p["fpn1_b2"],
      p["fpn2_w"], p["fpn2_b"])


# ------------------------------ iBOT forward ---------------------------------
def ibot_forward(x, p):
    B, Cin, Himg, Wimg = x.shape
    Hp, Wp = Himg // PATCH_SIZE, Wimg // PATCH_SIZE
    Np = Hp * Wp
    C = EMBED_DIM

    # im2col of the stride-16 patch conv, laid out per batch element as
    # [cls-slot(0), patches..., pad(0)...] so the kernel's d==0 prologue is a
    # single matmul + token-bias add.  (Pure layout glue; fused by XLA.)
    xp = x.reshape(B, Cin, Hp, PATCH_SIZE, Wp, PATCH_SIZE)
    xp = jnp.transpose(xp, (0, 2, 4, 1, 3, 5)).reshape(
        B, Np, Cin * PATCH_SIZE * PATCH_SIZE)
    xp_pad = jnp.pad(xp, ((0, 0), (1, SEQ_PAD - 1 - Np), (0, 0))).reshape(
        B * SEQ_PAD, -1)

    o1, o2, o3, o4 = ibot_fused_pallas(xp_pad, p, batch=B, grid_h=Hp, grid_w=Wp)

    # Final NHWC -> NCHW conversions: exactly once per output.
    f1 = o1.reshape(B, Hp, Wp, 2, 2, 2, 2, C)
    f1 = jnp.transpose(f1, (0, 7, 1, 3, 5, 2, 4, 6)).reshape(B, C, 4 * Hp, 4 * Wp)
    f2 = o2.reshape(B, Hp, Wp, 2, 2, C)
    f2 = jnp.transpose(f2, (0, 5, 1, 3, 2, 4)).reshape(B, C, 2 * Hp, 2 * Wp)
    f3 = jnp.transpose(o3.reshape(B, Hp, Wp, C), (0, 3, 1, 2))
    f4 = jnp.transpose(o4.reshape(B, Hp // 2, Wp // 2, C), (0, 3, 1, 2))
    return (f1, f2, f3, f4)


# ------------------------- parameter init & packing --------------------------
def _ct_weight_mat(w):
    """(Cin, Cout, 2, 2) torch ConvTranspose weight -> (Cin, 4*Cout);
       column = (di*2 + dj)*Cout + cout."""
    Cin = w.shape[0]
    return jnp.transpose(w, (0, 2, 3, 1)).reshape(Cin, -1)


def init_params(key):
    keys = jax.random.split(key, 64)
    it = iter(keys)

    def nrm(shape, std=0.02):
        return std * jax.random.normal(next(it), shape, dtype=jnp.float32)

    num_patches = NUM_PATCHES
    params = {
        "patch_w": nrm((EMBED_DIM, IN_CHANS, PATCH_SIZE, PATCH_SIZE)),
        "patch_b": jnp.zeros((EMBED_DIM,), jnp.float32),
        "cls_token": nrm((1, 1, EMBED_DIM)),
        "pos_embed": nrm((1, num_patches + 1, EMBED_DIM)),
    }
    blocks = []
    for _ in range(DEPTH):
        qkv_w = nrm((3 * EMBED_DIM, EMBED_DIM))           # torch (out, in) layout
        blocks.append({
            "ln1_g": jnp.ones((1, EMBED_DIM), jnp.float32),
            "ln1_b": jnp.zeros((1, EMBED_DIM), jnp.float32),
            "wq": qkv_w[0:EMBED_DIM].T,
            "wk": qkv_w[EMBED_DIM:2 * EMBED_DIM].T,
            "wv": qkv_w[2 * EMBED_DIM:3 * EMBED_DIM].T,
            "proj_w": nrm((EMBED_DIM, EMBED_DIM)).T,
            "proj_b": jnp.zeros((1, EMBED_DIM), jnp.float32),
            "ln2_g": jnp.ones((1, EMBED_DIM), jnp.float32),
            "ln2_b": jnp.zeros((1, EMBED_DIM), jnp.float32),
            "fc1_w": nrm((MLP_HIDDEN, EMBED_DIM)).T,
            "fc1_b": jnp.zeros((1, MLP_HIDDEN), jnp.float32),
            "fc2_w": nrm((EMBED_DIM, MLP_HIDDEN)).T,
            "fc2_b": jnp.zeros((1, EMBED_DIM), jnp.float32),
        })
    params["blocks"] = blocks
    # FPN (patch_size == 16): ConvT weights in PyTorch layout (Cin, Cout, 2, 2)
    params["fpn1_ct1_w"] = nrm((EMBED_DIM, EMBED_DIM, 2, 2))
    params["fpn1_ct1_b"] = jnp.zeros((EMBED_DIM,), jnp.float32)
    params["fpn1_bn_g"] = jnp.ones((EMBED_DIM,), jnp.float32)
    params["fpn1_bn_b"] = jnp.zeros((EMBED_DIM,), jnp.float32)
    params["fpn1_bn_mean"] = jnp.zeros((EMBED_DIM,), jnp.float32)
    params["fpn1_bn_var"] = jnp.ones((EMBED_DIM,), jnp.float32)
    params["fpn1_ct2_w"] = nrm((EMBED_DIM, EMBED_DIM, 2, 2))
    params["fpn1_ct2_b"] = jnp.zeros((EMBED_DIM,), jnp.float32)
    params["fpn2_ct_w"] = nrm((EMBED_DIM, EMBED_DIM, 2, 2))
    params["fpn2_ct_b"] = jnp.zeros((EMBED_DIM,), jnp.float32)
    return params


def pack_params(params, batch):
    """One-time repack: stack per-block weights over depth, fuse qkv, fold BN,
    precompute the loop-invariant attention bias / head masks / token bias,
    build the block-diagonal fpn1 second ConvT weight, and cast matmul weights
    to bf16 (activations are cast in-kernel; f32 accumulation)."""
    C = EMBED_DIM
    p = {}
    # Patch embed: stride-16 conv as a (Cin*P*P, C) matmul weight.
    p["patch_w"] = params["patch_w"].reshape(C, -1).T.astype(jnp.bfloat16)

    # Per-row additive token bias: fuses cls token, pos_embed and the patch
    # projection bias; pad rows are exactly zero.
    pos = params["pos_embed"][0]                       # (SEQ, C)
    cls = params["cls_token"].reshape(1, C)
    pbias = params["patch_b"].reshape(1, C)
    per_batch = jnp.concatenate(
        [cls + pos[0:1], pbias + pos[1:],
         jnp.zeros((SEQ_PAD - SEQ, C), jnp.float32)], axis=0)
    p["tok_bias"] = jnp.tile(per_batch, (batch, 1))    # (batch*SEQ_PAD, C)

    # Additive attention bias: 0 inside a batch block on real key columns,
    # -1e30 elsewhere (cross-batch and pad keys).  Loop-invariant -> hoisted.
    idx = np.arange(batch * SEQ_PAD)
    same = (idx[:, None] // SEQ_PAD) == (idx[None, :] // SEQ_PAD)
    real = (idx[None, :] % SEQ_PAD) < SEQ
    p["attn_bias"] = jnp.asarray(
        np.where(same & real, 0.0, -1e30).astype(np.float32))

    # Per-head lane masks (NUM_HEADS, C).
    lane = np.arange(C)
    p["head_mask"] = jnp.asarray(np.stack(
        [((lane >= h * HEAD_DIM) & (lane < (h + 1) * HEAD_DIM)).astype(np.float32)
         for h in range(NUM_HEADS)], axis=0))

    def stack(key):
        return jnp.stack([blk[key] for blk in params["blocks"]], axis=0)

    p["ln1_g"], p["ln1_b"] = stack("ln1_g"), stack("ln1_b")
    p["ln2_g"], p["ln2_b"] = stack("ln2_g"), stack("ln2_b")
    p["wqkv"] = jnp.stack(
        [jnp.concatenate([blk["wq"], blk["wk"], blk["wv"]], axis=1)
         for blk in params["blocks"]], axis=0).astype(jnp.bfloat16)
    p["proj_w"] = stack("proj_w").astype(jnp.bfloat16)
    p["proj_b"] = stack("proj_b")
    p["fc1_w"] = stack("fc1_w").astype(jnp.bfloat16)
    p["fc1_b"] = stack("fc1_b")
    p["fc2_w"] = stack("fc2_w").astype(jnp.bfloat16)
    p["fc2_b"] = stack("fc2_b")

    # fpn1: fold eval-mode SyncBN into the first ConvTranspose.
    # TODO(synk): SyncBatchNorm training-mode cross-replica batch statistics
    #             are not reproduced (eval-mode running stats folded only).
    s = params["fpn1_bn_g"] / jnp.sqrt(params["fpn1_bn_var"] + BN_EPS)
    w1 = params["fpn1_ct1_w"] * s[None, :, None, None]
    b1 = (params["fpn1_ct1_b"] - params["fpn1_bn_mean"]) * s + params["fpn1_bn_b"]
    p["fpn1_w1"] = _ct_weight_mat(w1).astype(jnp.bfloat16)          # (C, 4C)
    p["fpn1_b1"] = jnp.tile(b1, (4,)).reshape(1, -1)
    # Second ConvT as one block-diagonal matmul: (4C, 16C), diag blocks = w2.
    w2 = _ct_weight_mat(params["fpn1_ct2_w"])                       # (C, 4C)
    p["fpn1_w2"] = jnp.kron(jnp.eye(4, dtype=w2.dtype), w2).astype(jnp.bfloat16)
    p["fpn1_b2"] = jnp.tile(params["fpn1_ct2_b"], (16,)).reshape(1, -1)
    # fpn2: single ConvTranspose.
    p["fpn2_w"] = _ct_weight_mat(params["fpn2_ct_w"]).astype(jnp.bfloat16)
    p["fpn2_b"] = jnp.tile(params["fpn2_ct_b"], (4,)).reshape(1, -1)
    return p


if __name__ == "__main__":
    key = jax.random.PRNGKey(0)
    kx, kp = jax.random.split(key)
    x = jax.random.normal(kx, (2, IN_CHANS, IMG_SIZE, IMG_SIZE), dtype=jnp.float32)
    params = init_params(kp)
    packed = pack_params(params, batch=2)

    feats = jax.jit(ibot_forward)(x, packed)
    feats = jax.block_until_ready(feats)

    expected = [(2, EMBED_DIM, 8, 8), (2, EMBED_DIM, 4, 4),
                (2, EMBED_DIM, 2, 2), (2, EMBED_DIM, 1, 1)]
    assert [tuple(f.shape) for f in feats] == expected, [f.shape for f in feats]
    assert all(bool(jnp.all(jnp.isfinite(f))) for f in feats)
    print("KERNEL_OK")
</pallas_src>

<mosaic_0001>
module attributes {stable_mosaic.version = 11 : i64} {
  func.func @_ibot_kernel(%arg0: i32, %arg1: memref<16x768xf32, #tpu.memory_space<vmem>>, %arg2: memref<16x128xf32, #tpu.memory_space<vmem>>, %arg3: memref<16x16xf32, #tpu.memory_space<vmem>>, %arg4: memref<4x128xf32, #tpu.memory_space<vmem>>, %arg5: memref<768x128xbf16, #tpu.memory_space<vmem>>, %arg6: memref<1x1x128xf32, #tpu.memory_space<vmem>>, %arg7: memref<1x1x128xf32, #tpu.memory_space<vmem>>, %arg8: memref<1x128x384xbf16, #tpu.memory_space<vmem>>, %arg9: memref<1x128x128xbf16, #tpu.memory_space<vmem>>, %arg10: memref<1x1x128xf32, #tpu.memory_space<vmem>>, %arg11: memref<1x1x128xf32, #tpu.memory_space<vmem>>, %arg12: memref<1x1x128xf32, #tpu.memory_space<vmem>>, %arg13: memref<1x128x512xbf16, #tpu.memory_space<vmem>>, %arg14: memref<1x1x512xf32, #tpu.memory_space<vmem>>, %arg15: memref<1x512x128xbf16, #tpu.memory_space<vmem>>, %arg16: memref<1x1x128xf32, #tpu.memory_space<vmem>>, %arg17: memref<128x512xbf16, #tpu.memory_space<vmem>>, %arg18: memref<1x512xf32, #tpu.memory_space<vmem>>, %arg19: memref<512x2048xbf16, #tpu.memory_space<vmem>>, %arg20: memref<1x2048xf32, #tpu.memory_space<vmem>>, %arg21: memref<128x512xbf16, #tpu.memory_space<vmem>>, %arg22: memref<1x512xf32, #tpu.memory_space<vmem>>, %arg23: memref<8x2048xf32, #tpu.memory_space<vmem>>, %arg24: memref<8x512xf32, #tpu.memory_space<vmem>>, %arg25: memref<8x128xf32, #tpu.memory_space<vmem>>, %arg26: memref<2x128xf32, #tpu.memory_space<vmem>>, %arg27: memref<16x128xf32, #tpu.memory_space<vmem>>, %arg28: memref<4x8x128xf32, #tpu.memory_space<vmem>>) attributes {dimension_semantics = [#tpu.dimension_semantics<arbitrary>], iteration_bounds = array<i64: 4>, scalar_prefetch = 0 : i64, scratch_operands = 2 : i64, tpu.core_type = #tpu.core_type<tc>, window_params = [{pipeline_mode = #tpu.pipeline_mode<synchronous>, transform_indices = @transform_0, window_bounds = array<i64: 16, 768>}, {pipeline_mode = #tpu.pipeline_mode<synchronous>, transform_indices = @transform_1, window_bounds = array<i64: 16, 128>}, {pipeline_mode = #tpu.pipeline_mode<synchronous>, transform_indices = @transform_2, window_bounds = array<i64: 16, 16>}, {pipeline_mode = #tpu.pipeline_mode<synchronous>, transform_indices = @transform_3, window_bounds = array<i64: 4, 128>}, {pipeline_mode = #tpu.pipeline_mode<synchronous>, transform_indices = @transform_4, window_bounds = array<i64: 768, 128>}, {transform_indices = @transform_5, window_bounds = array<i64: 1, 1, 128>}, {transform_indices = @transform_6, window_bounds = array<i64: 1, 1, 128>}, {transform_indices = @transform_7, window_bounds = array<i64: 1, 128, 384>}, {transform_indices = @transform_8, window_bounds = array<i64: 1, 128, 128>}, {transform_indices = @transform_9, window_bounds = array<i64: 1, 1, 128>}, {transform_indices = @transform_10, window_bounds = array<i64: 1, 1, 128>}, {transform_indices = @transform_11, window_bounds = array<i64: 1, 1, 128>}, {transform_indices = @transform_12, window_bounds = array<i64: 1, 128, 512>}, {transform_indices = @transform_13, window_bounds = array<i64: 1, 1, 512>}, {transform_indices = @transform_14, window_bounds = array<i64: 1, 512, 128>}, {transform_indices = @transform_15, window_bounds = array<i64: 1, 1, 128>}, {pipeline_mode = #tpu.pipeline_mode<synchronous>, transform_indices = @transform_16, window_bounds = array<i64: 128, 512>}, {pipeline_mode = #tpu.pipeline_mode<synchronous>, transform_indices = @transform_17, window_bounds = array<i64: 1, 512>}, {pipeline_mode = #tpu.pipeline_mode<synchronous>, transform_indices = @transform_18, window_bounds = array<i64: 512, 2048>}, {pipeline_mode = #tpu.pipeline_mode<synchronous>, transform_indices = @transform_19, window_bounds = array<i64: 1, 2048>}, {pipeline_mode = #tpu.pipeline_mode<synchronous>, transform_indices = @transform_20, window_bounds = array<i64: 128, 512>}, {pipeline_mode = #tpu.pipeline_mode<synchronous>, transform_indices = @transform_21, window_bounds = array<i64: 1, 512>}, {pipeline_mode = #tpu.pipeline_mode<synchronous>, transform_indices = @transform_22, window_bounds = array<i64: 8, 2048>}, {pipeline_mode = #tpu.pipeline_mode<synchronous>, transform_indices = @transform_23, window_bounds = array<i64: 8, 512>}, {pipeline_mode = #tpu.pipeline_mode<synchronous>, transform_indices = @transform_24, window_bounds = array<i64: 8, 128>}, {pipeline_mode = #tpu.pipeline_mode<synchronous>, transform_indices = @transform_25, window_bounds = array<i64: 2, 128>}]} {
    %c0_i32 = arith.constant 0 : i32
    %0 = arith.cmpi eq, %arg0, %c0_i32 : i32
    %1 = arith.extui %0 : i1 to i32
    %c0_i32_0 = arith.constant 0 : i32
    %2 = arith.cmpi ne, %1, %c0_i32_0 : i32
    scf.if %2 {
      %c0_101 = arith.constant 0 : index
      %c0_102 = arith.constant 0 : index
      %237 = vector.load %arg1[%c0_101, %c0_102] : memref<16x768xf32, #tpu.memory_space<vmem>>, vector<16x768xf32>
      %238 = arith.truncf %237 : vector<16x768xf32> to vector<16x768xbf16>
      %c0_103 = arith.constant 0 : index
      %c0_104 = arith.constant 0 : index
      %239 = vector.load %arg5[%c0_103, %c0_104] : memref<768x128xbf16, #tpu.memory_space<vmem>>, vector<768x128xbf16>
      %cst_105 = arith.constant dense<0.000000e+00> : vector<16x128xf32>
      %240 = tpu.matmul %238, %239, %cst_105 {dimension_numbers = #tpu.dot_dimension_numbers<[1], [0], [0], [1], [0, 0, 1, 1], [], []>} : vector<16x768xbf16>, vector<768x128xbf16>, vector<16x128xf32> -> vector<16x128xf32>
      %c0_106 = arith.constant 0 : index
      %c0_107 = arith.constant 0 : index
      %241 = vector.load %arg2[%c0_106, %c0_107] : memref<16x128xf32, #tpu.memory_space<vmem>>, vector<16x128xf32>
      %242 = arith.addf %240, %241 : vector<16x128xf32>
      %c0_108 = arith.constant 0 : index
      %c0_109 = arith.constant 0 : index
      %243 = vector.load %arg27[%c0_108, %c0_109] : memref<16x128xf32, #tpu.memory_space<vmem>>, vector<16x128xf32>
      tpu.vector_store %arg27[%c0_108, %c0_109], %242 {strides = array<i32>} : memref<16x128xf32, #tpu.memory_space<vmem>>, vector<16x128xf32>,
    } else {
    }
    %c0 = arith.constant 0 : index
    %c0_1 = arith.constant 0 : index
    %3 = vector.load %arg27[%c0, %c0_1] : memref<16x128xf32, #tpu.memory_space<vmem>>, vector<16x128xf32>
    %c0_2 = arith.constant 0 : index
    %c0_3 = arith.constant 0 : index
    %c0_4 = arith.constant 0 : index
    %4 = vector.load %arg6[%c0_2, %c0_3, %c0_4] : memref<1x1x128xf32, #tpu.memory_space<vmem>>, vector<1x1x128xf32>
    %5 = vector.shape_cast %4 : vector<1x1x128xf32> to vector<1x128xf32>
    %c0_5 = arith.constant 0 : index
    %c0_6 = arith.constant 0 : index
    %c0_7 = arith.constant 0 : index
    %6 = vector.load %arg7[%c0_5, %c0_6, %c0_7] : memref<1x1x128xf32, #tpu.memory_space<vmem>>, vector<1x1x128xf32>
    %7 = vector.shape_cast %6 : vector<1x1x128xf32> to vector<1x128xf32>
    %cst = arith.constant dense<0.000000e+00> : vector<16xf32>
    %8 = vector.multi_reduction <add>, %3, %cst [1] : vector<16x128xf32> to vector<16xf32>
    %9 = vector.shape_cast %8 : vector<16xf32> to vector<16x1xf32>
    %cst_8 = arith.constant 1.280000e+02 : f32
    %10 = vector.broadcast %cst_8 : f32 to vector<16x1xf32>
    %11 = arith.divf %9, %10 : vector<16x1xf32>
    %12 = vector.broadcast %11 : vector<16x1xf32> to vector<16x128xf32>
    %13 = arith.subf %3, %12 : vector<16x128xf32>
    %14 = arith.mulf %13, %13 : vector<16x128xf32>
    %cst_9 = arith.constant dense<0.000000e+00> : vector<16xf32>
    %15 = vector.multi_reduction <add>, %14, %cst_9 [1] : vector<16x128xf32> to vector<16xf32>
    %16 = vector.shape_cast %15 : vector<16xf32> to vector<16x1xf32>
    %cst_10 = arith.constant 1.280000e+02 : f32
    %17 = vector.broadcast %cst_10 : f32 to vector<16x1xf32>
    %18 = arith.divf %16, %17 : vector<16x1xf32>
    %cst_11 = arith.constant 9.99999997E-7 : f32
    %19 = vector.broadcast %cst_11 : f32 to vector<16x1xf32>
    %20 = arith.addf %18, %19 : vector<16x1xf32>
    %21 = math.rsqrt %20 : vector<16x1xf32>
    %22 = vector.broadcast %21 : vector<16x1xf32> to vector<16x128xf32>
    %23 = arith.mulf %13, %22 : vector<16x128xf32>
    %24 = vector.broadcast %5 : vector<1x128xf32> to vector<16x128xf32>
    %25 = arith.mulf %23, %24 : vector<16x128xf32>
    %26 = vector.broadcast %7 : vector<1x128xf32> to vector<16x128xf32>
    %27 = arith.addf %25, %26 : vector<16x128xf32>
    %28 = arith.truncf %27 : vector<16x128xf32> to vector<16x128xbf16>
    %c0_12 = arith.constant 0 : index
    %c0_13 = arith.constant 0 : index
    %c0_14 = arith.constant 0 : index
    %29 = vector.load %arg8[%c0_12, %c0_13, %c0_14] : memref<1x128x384xbf16, #tpu.memory_space<vmem>>, vector<1x128x384xbf16>
    %30 = vector.shape_cast %29 : vector<1x128x384xbf16> to vector<128x384xbf16>
    %cst_15 = arith.constant dense<0.000000e+00> : vector<16x384xf32>
    %31 = tpu.matmul %28, %30, %cst_15 {dimension_numbers = #tpu.dot_dimension_numbers<[1], [0], [0], [1], [0, 0, 1, 1], [], []>} : vector<16x128xbf16>, vector<128x384xbf16>, vector<16x384xf32> -> vector<16x384xf32>
    %32 = vector.extract_strided_slice %31 {offsets = [0, 0], sizes = [16, 128], strides = [1, 1]} : vector<16x384xf32> to vector<16x128xf32>
    %33 = arith.truncf %32 : vector<16x128xf32> to vector<16x128xbf16>
    %34 = vector.extract_strided_slice %31 {offsets = [0, 128], sizes = [16, 128], strides = [1, 1]} : vector<16x384xf32> to vector<16x128xf32>
    %35 = vector.extract_strided_slice %31 {offsets = [0, 256], sizes = [16, 128], strides = [1, 1]} : vector<16x384xf32> to vector<16x128xf32>
    %c0_16 = arith.constant 0 : index
    %c0_17 = arith.constant 0 : index
    %36 = vector.load %arg3[%c0_16, %c0_17] : memref<16x16xf32, #tpu.memory_space<vmem>>, vector<16x16xf32>
    %cst_18 = arith.constant 0.000000e+00 : f32
    %37 = vector.broadcast %cst_18 : f32 to vector<16x128xf32>
    %c0_19 = arith.constant 0 : index
    %c0_20 = arith.constant 0 : index
    %38 = vector.load %arg4[%c0_19, %c0_20] : memref<4x128xf32, #tpu.memory_space<vmem>>, vector<1x128xf32>
    %39 = vector.broadcast %38 : vector<1x128xf32> to vector<16x128xf32>
    %40 = arith.mulf %34, %39 : vector<16x128xf32>
    %41 = arith.truncf %40 : vector<16x128xf32> to vector<16x128xbf16>
    %42 = vector.broadcast %38 : vector<1x128xf32> to vector<16x128xf32>
    %43 = arith.mulf %35, %42 : vector<16x128xf32>
    %44 = arith.truncf %43 : vector<16x128xf32> to vector<16x128xbf16>
    %cst_21 = arith.constant dense<0.000000e+00> : vector<16x16xf32>
    %45 = tpu.matmul %33, %41, %cst_21 {dimension_numbers = #tpu.dot_dimension_numbers<[1], [1], [0], [0], [0, 0, 1, 0], [], []>} : vector<16x128xbf16>, vector<16x128xbf16>, vector<16x16xf32> -> vector<16x16xf32>
    %cst_22 = arith.constant 0.176776692 : f32
    %46 = vector.broadcast %cst_22 : f32 to vector<16x16xf32>
    %47 = arith.mulf %45, %46 : vector<16x16xf32>
    %48 = arith.addf %47, %36 : vector<16x16xf32>
    %cst_23 = arith.constant dense<0xFF800000> : vector<16xf32>
    %49 = vector.multi_reduction <maximumf>, %48, %cst_23 [1] : vector<16x16xf32> to vector<16xf32>
    %50 = vector.shape_cast %49 : vector<16xf32> to vector<16x1xf32>
    %51 = vector.broadcast %50 : vector<16x1xf32> to vector<16x16xf32>
    %52 = arith.subf %48, %51 : vector<16x16xf32>
    %53 = math.exp %52 : vector<16x16xf32>
    %cst_24 = arith.constant dense<0.000000e+00> : vector<16xf32>
    %54 = vector.multi_reduction <add>, %53, %cst_24 [1] : vector<16x16xf32> to vector<16xf32>
    %55 = vector.shape_cast %54 : vector<16xf32> to vector<16x1xf32>
    %56 = vector.broadcast %55 : vector<16x1xf32> to vector<16x16xf32>
    %57 = arith.divf %53, %56 : vector<16x16xf32>
    %58 = arith.truncf %57 : vector<16x16xf32> to vector<16x16xbf16>
    %cst_25 = arith.constant dense<0.000000e+00> : vector<16x128xf32>
    %59 = tpu.matmul %58, %44, %cst_25 {dimension_numbers = #tpu.dot_dimension_numbers<[1], [0], [0], [1], [0, 0, 1, 1], [], []>} : vector<16x16xbf16>, vector<16x128xbf16>, vector<16x128xf32> -> vector<16x128xf32>
    %60 = arith.addf %37, %59 : vector<16x128xf32>
    %c1 = arith.constant 1 : index
    %c0_26 = arith.constant 0 : index
    %61 = vector.load %arg4[%c1, %c0_26] : memref<4x128xf32, #tpu.memory_space<vmem>>, vector<1x128xf32>
    %62 = vector.broadcast %61 : vector<1x128xf32> to vector<16x128xf32>
    %63 = arith.mulf %34, %62 : vector<16x128xf32>
    %64 = arith.truncf %63 : vector<16x128xf32> to vector<16x128xbf16>
    %65 = vector.broadcast %61 : vector<1x128xf32> to vector<16x128xf32>
    %66 = arith.mulf %35, %65 : vector<16x128xf32>
    %67 = arith.truncf %66 : vector<16x128xf32> to vector<16x128xbf16>
    %cst_27 = arith.constant dense<0.000000e+00> : vector<16x16xf32>
    %68 = tpu.matmul %33, %64, %cst_27 {dimension_numbers = #tpu.dot_dimension_numbers<[1], [1], [0], [0], [0, 0, 1, 0], [], []>} : vector<16x128xbf16>, vector<16x128xbf16>, vector<16x16xf32> -> vector<16x16xf32>
    %cst_28 = arith.constant 0.176776692 : f32
    %69 = vector.broadcast %cst_28 : f32 to vector<16x16xf32>
    %70 = arith.mulf %68, %69 : vector<16x16xf32>
    %71 = arith.addf %70, %36 : vector<16x16xf32>
    %cst_29 = arith.constant dense<0xFF800000> : vector<16xf32>
    %72 = vector.multi_reduction <maximumf>, %71, %cst_29 [1] : vector<16x16xf32> to vector<16xf32>
    %73 = vector.shape_cast %72 : vector<16xf32> to vector<16x1xf32>
    %74 = vector.broadcast %73 : vector<16x1xf32> to vector<16x16xf32>
    %75 = arith.subf %71, %74 : vector<16x16xf32>
    %76 = math.exp %75 : vector<16x16xf32>
    %cst_30 = arith.constant dense<0.000000e+00> : vector<16xf32>
    %77 = vector.multi_reduction <add>, %76, %cst_30 [1] : vector<16x16xf32> to vector<16xf32>
    %78 = vector.shape_cast %77 : vector<16xf32> to vector<16x1xf32>
    %79 = vector.broadcast %78 : vector<16x1xf32> to vector<16x16xf32>
    %80 = arith.divf %76, %79 : vector<16x16xf32>
    %81 = arith.truncf %80 : vector<16x16xf32> to vector<16x16xbf16>
    %cst_31 = arith.constant dense<0.000000e+00> : vector<16x128xf32>
    %82 = tpu.matmul %81, %67, %cst_31 {dimension_numbers = #tpu.dot_dimension_numbers<[1], [0], [0], [1], [0, 0, 1, 1], [], []>} : vector<16x16xbf16>, vector<16x128xbf16>, vector<16x128xf32> -> vector<16x128xf32>
    %83 = arith.addf %60, %82 : vector<16x128xf32>
    %c2 = arith.constant 2 : index
    %c0_32 = arith.constant 0 : index
    %84 = vector.load %arg4[%c2, %c0_32] : memref<4x128xf32, #tpu.memory_space<vmem>>, vector<1x128xf32>
    %85 = vector.broadcast %84 : vector<1x128xf32> to vector<16x128xf32>
    %86 = arith.mulf %34, %85 : vector<16x128xf32>
    %87 = arith.truncf %86 : vector<16x128xf32> to vector<16x128xbf16>
    %88 = vector.broadcast %84 : vector<1x128xf32> to vector<16x128xf32>
    %89 = arith.mulf %35, %88 : vector<16x128xf32>
    %90 = arith.truncf %89 : vector<16x128xf32> to vector<16x128xbf16>
    %cst_33 = arith.constant dense<0.000000e+00> : vector<16x16xf32>
    %91 = tpu.matmul %33, %87, %cst_33 {dimension_numbers = #tpu.dot_dimension_numbers<[1], [1], [0], [0], [0, 0, 1, 0], [], []>} : vector<16x128xbf16>, vector<16x128xbf16>, vector<16x16xf32> -> vector<16x16xf32>
    %cst_34 = arith.constant 0.176776692 : f32
    %92 = vector.broadcast %cst_34 : f32 to vector<16x16xf32>
    %93 = arith.mulf %91, %92 : vector<16x16xf32>
    %94 = arith.addf %93, %36 : vector<16x16xf32>
    %cst_35 = arith.constant dense<0xFF800000> : vector<16xf32>
    %95 = vector.multi_reduction <maximumf>, %94, %cst_35 [1] : vector<16x16xf32> to vector<16xf32>
    %96 = vector.shape_cast %95 : vector<16xf32> to vector<16x1xf32>
    %97 = vector.broadcast %96 : vector<16x1xf32> to vector<16x16xf32>
    %98 = arith.subf %94, %97 : vector<16x16xf32>
    %99 = math.exp %98 : vector<16x16xf32>
    %cst_36 = arith.constant dense<0.000000e+00> : vector<16xf32>
    %100 = vector.multi_reduction <add>, %99, %cst_36 [1] : vector<16x16xf32> to vector<16xf32>
    %101 = vector.shape_cast %100 : vector<16xf32> to vector<16x1xf32>
    %102 = vector.broadcast %101 : vector<16x1xf32> to vector<16x16xf32>
    %103 = arith.divf %99, %102 : vector<16x16xf32>
    %104 = arith.truncf %103 : vector<16x16xf32> to vector<16x16xbf16>
    %cst_37 = arith.constant dense<0.000000e+00> : vector<16x128xf32>
    %105 = tpu.matmul %104, %90, %cst_37 {dimension_numbers = #tpu.dot_dimension_numbers<[1], [0], [0], [1], [0, 0, 1, 1], [], []>} : vector<16x16xbf16>, vector<16x128xbf16>, vector<16x128xf32> -> vector<16x128xf32>
    %106 = arith.addf %83, %105 : vector<16x128xf32>
    %c3 = arith.constant 3 : index
    %c0_38 = arith.constant 0 : index
    %107 = vector.load %arg4[%c3, %c0_38] : memref<4x128xf32, #tpu.memory_space<vmem>>, vector<1x128xf32>
    %108 = vector.broadcast %107 : vector<1x128xf32> to vector<16x128xf32>
    %109 = arith.mulf %34, %108 : vector<16x128xf32>
    %110 = arith.truncf %109 : vector<16x128xf32> to vector<16x128xbf16>
    %111 = vector.broadcast %107 : vector<1x128xf32> to vector<16x128xf32>
    %112 = arith.mulf %35, %111 : vector<16x128xf32>
    %113 = arith.truncf %112 : vector<16x128xf32> to vector<16x128xbf16>
    %cst_39 = arith.constant dense<0.000000e+00> : vector<16x16xf32>
    %114 = tpu.matmul %33, %110, %cst_39 {dimension_numbers = #tpu.dot_dimension_numbers<[1], [1], [0], [0], [0, 0, 1, 0], [], []>} : vector<16x128xbf16>, vector<16x128xbf16>, vector<16x16xf32> -> vector<16x16xf32>
    %cst_40 = arith.constant 0.176776692 : f32
    %115 = vector.broadcast %cst_40 : f32 to vector<16x16xf32>
    %116 = arith.mulf %114, %115 : vector<16x16xf32>
    %117 = arith.addf %116, %36 : vector<16x16xf32>
    %cst_41 = arith.constant dense<0xFF800000> : vector<16xf32>
    %118 = vector.multi_reduction <maximumf>, %117, %cst_41 [1] : vector<16x16xf32> to vector<16xf32>
    %119 = vector.shape_cast %118 : vector<16xf32> to vector<16x1xf32>
    %120 = vector.broadcast %119 : vector<16x1xf32> to vector<16x16xf32>
    %121 = arith.subf %117, %120 : vector<16x16xf32>
    %122 = math.exp %121 : vector<16x16xf32>
    %cst_42 = arith.constant dense<0.000000e+00> : vector<16xf32>
    %123 = vector.multi_reduction <add>, %122, %cst_42 [1] : vector<16x16xf32> to vector<16xf32>
    %124 = vector.shape_cast %123 : vector<16xf32> to vector<16x1xf32>
    %125 = vector.broadcast %124 : vector<16x1xf32> to vector<16x16xf32>
    %126 = arith.divf %122, %125 : vector<16x16xf32>
    %127 = arith.truncf %126 : vector<16x16xf32> to vector<16x16xbf16>
    %cst_43 = arith.constant dense<0.000000e+00> : vector<16x128xf32>
    %128 = tpu.matmul %127, %113, %cst_43 {dimension_numbers = #tpu.dot_dimension_numbers<[1], [0], [0], [1], [0, 0, 1, 1], [], []>} : vector<16x16xbf16>, vector<16x128xbf16>, vector<16x128xf32> -> vector<16x128xf32>
    %129 = arith.addf %106, %128 : vector<16x128xf32>
    %130 = arith.truncf %129 : vector<16x128xf32> to vector<16x128xbf16>
    %c0_44 = arith.constant 0 : index
    %c0_45 = arith.constant 0 : index
    %c0_46 = arith.constant 0 : index
    %131 = vector.load %arg9[%c0_44, %c0_45, %c0_46] : memref<1x128x128xbf16, #tpu.memory_space<vmem>>, vector<1x128x128xbf16>
    %132 = vector.shape_cast %131 : vector<1x128x128xbf16> to vector<128x128xbf16>
    %cst_47 = arith.constant dense<0.000000e+00> : vector<16x128xf32>
    %133 = tpu.matmul %130, %132, %cst_47 {dimension_numbers = #tpu.dot_dimension_numbers<[1], [0], [0], [1], [0, 0, 1, 1], [], []>} : vector<16x128xbf16>, vector<128x128xbf16>, vector<16x128xf32> -> vector<16x128xf32>
    %c0_48 = arith.constant 0 : index
    %c0_49 = arith.constant 0 : index
    %c0_50 = arith.constant 0 : index
    %134 = vector.load %arg10[%c0_48, %c0_49, %c0_50] : memref<1x1x128xf32, #tpu.memory_space<vmem>>, vector<1x1x128xf32>
    %135 = vector.shape_cast %134 : vector<1x1x128xf32> to vector<1x128xf32>
    %136 = vector.broadcast %135 : vector<1x128xf32> to vector<16x128xf32>
    %137 = arith.addf %133, %136 : vector<16x128xf32>
    %138 = arith.addf %3, %137 : vector<16x128xf32>
    %c0_51 = arith.constant 0 : index
    %c0_52 = arith.constant 0 : index
    %c0_53 = arith.constant 0 : index
    %139 = vector.load %arg11[%c0_51, %c0_52, %c0_53] : memref<1x1x128xf32, #tpu.memory_space<vmem>>, vector<1x1x128xf32>
    %140 = vector.shape_cast %139 : vector<1x1x128xf32> to vector<1x128xf32>
    %c0_54 = arith.constant 0 : index
    %c0_55 = arith.constant 0 : index
    %c0_56 = arith.constant 0 : index
    %141 = vector.load %arg12[%c0_54, %c0_55, %c0_56] : memref<1x1x128xf32, #tpu.memory_space<vmem>>, vector<1x1x128xf32>
    %142 = vector.shape_cast %141 : vector<1x1x128xf32> to vector<1x128xf32>
    %cst_57 = arith.constant dense<0.000000e+00> : vector<16xf32>
    %143 = vector.multi_reduction <add>, %138, %cst_57 [1] : vector<16x128xf32> to vector<16xf32>
    %144 = vector.shape_cast %143 : vector<16xf32> to vector<16x1xf32>
    %cst_58 = arith.constant 1.280000e+02 : f32
    %145 = vector.broadcast %cst_58 : f32 to vector<16x1xf32>
    %146 = arith.divf %144, %145 : vector<16x1xf32>
    %147 = vector.broadcast %146 : vector<16x1xf32> to vector<16x128xf32>
    %148 = arith.subf %138, %147 : vector<16x128xf32>
    %149 = arith.mulf %148, %148 : vector<16x128xf32>
    %cst_59 = arith.constant dense<0.000000e+00> : vector<16xf32>
    %150 = vector.multi_reduction <add>, %149, %cst_59 [1] : vector<16x128xf32> to vector<16xf32>
    %151 = vector.shape_cast %150 : vector<16xf32> to vector<16x1xf32>
    %cst_60 = arith.constant 1.280000e+02 : f32
    %152 = vector.broadcast %cst_60 : f32 to vector<16x1xf32>
    %153 = arith.divf %151, %152 : vector<16x1xf32>
    %cst_61 = arith.constant 9.99999997E-7 : f32
    %154 = vector.broadcast %cst_61 : f32 to vector<16x1xf32>
    %155 = arith.addf %153, %154 : vector<16x1xf32>
    %156 = math.rsqrt %155 : vector<16x1xf32>
    %157 = vector.broadcast %156 : vector<16x1xf32> to vector<16x128xf32>
    %158 = arith.mulf %148, %157 : vector<16x128xf32>
    %159 = vector.broadcast %140 : vector<1x128xf32> to vector<16x128xf32>
    %160 = arith.mulf %158, %159 : vector<16x128xf32>
    %161 = vector.broadcast %142 : vector<1x128xf32> to vector<16x128xf32>
    %162 = arith.addf %160, %161 : vector<16x128xf32>
    %163 = arith.truncf %162 : vector<16x128xf32> to vector<16x128xbf16>
    %c0_62 = arith.constant 0 : index
    %c0_63 = arith.constant 0 : index
    %c0_64 = arith.constant 0 : index
    %164 = vector.load %arg13[%c0_62, %c0_63, %c0_64] : memref<1x128x512xbf16, #tpu.memory_space<vmem>>, vector<1x128x512xbf16>
    %165 = vector.shape_cast %164 : vector<1x128x512xbf16> to vector<128x512xbf16>
    %cst_65 = arith.constant dense<0.000000e+00> : vector<16x512xf32>
    %166 = tpu.matmul %163, %165, %cst_65 {dimension_numbers = #tpu.dot_dimension_numbers<[1], [0], [0], [1], [0, 0, 1, 1], [], []>} : vector<16x128xbf16>, vector<128x512xbf16>, vector<16x512xf32> -> vector<16x512xf32>
    %c0_66 = arith.constant 0 : index
    %c0_67 = arith.constant 0 : index
    %c0_68 = arith.constant 0 : index
    %167 = vector.load %arg14[%c0_66, %c0_67, %c0_68] : memref<1x1x512xf32, #tpu.memory_space<vmem>>, vector<1x1x512xf32>
    %168 = vector.shape_cast %167 : vector<1x1x512xf32> to vector<1x512xf32>
    %169 = vector.broadcast %168 : vector<1x512xf32> to vector<16x512xf32>
    %170 = arith.addf %166, %169 : vector<16x512xf32>
    %cst_69 = arith.constant 5.000000e-01 : f32
    %171 = vector.broadcast %cst_69 : f32 to vector<16x512xf32>
    %172 = arith.mulf %171, %170 : vector<16x512xf32>
    %cst_70 = arith.constant 0.707106769 : f32
    %173 = vector.broadcast %cst_70 : f32 to vector<16x512xf32>
    %174 = arith.mulf %170, %173 : vector<16x512xf32>
    %cst_71 = arith.constant 0.000000e+00 : f32
    %175 = vector.broadcast %cst_71 : f32 to vector<16x512xf32>
    %176 = arith.cmpf oge, %174, %175 : vector<16x512xf32>
    %cst_72 = arith.constant 1.000000e+00 : f32
    %cst_73 = arith.constant -1.000000e+00 : f32
    %177 = vector.broadcast %cst_72 : f32 to vector<16x512xf32>
    %178 = vector.broadcast %cst_73 : f32 to vector<16x512xf32>
    %179 = arith.select %176, %177, %178 : vector<16x512xi1>, vector<16x512xf32>
    %180 = math.absf %174 : vector<16x512xf32>
    %cst_74 = arith.constant 0.327591091 : f32
    %181 = vector.broadcast %cst_74 : f32 to vector<16x512xf32>
    %182 = arith.mulf %181, %180 : vector<16x512xf32>
    %cst_75 = arith.constant 1.000000e+00 : f32
    %183 = vector.broadcast %cst_75 : f32 to vector<16x512xf32>
    %184 = arith.addf %183, %182 : vector<16x512xf32>
    %cst_76 = arith.constant 1.000000e+00 : f32
    %185 = vector.broadcast %cst_76 : f32 to vector<16x512xf32>
    %186 = arith.divf %185, %184 : vector<16x512xf32>
    %cst_77 = arith.constant 1.06140542 : f32
    %187 = vector.broadcast %cst_77 : f32 to vector<16x512xf32>
    %188 = arith.mulf %186, %187 : vector<16x512xf32>
    %cst_78 = arith.constant -1.45315206 : f32
    %189 = vector.broadcast %cst_78 : f32 to vector<16x512xf32>
    %190 = arith.addf %189, %188 : vector<16x512xf32>
    %191 = arith.mulf %186, %190 : vector<16x512xf32>
    %cst_79 = arith.constant 1.42141378 : f32
    %192 = vector.broadcast %cst_79 : f32 to vector<16x512xf32>
    %193 = arith.addf %192, %191 : vector<16x512xf32>
    %194 = arith.mulf %186, %193 : vector<16x512xf32>
    %cst_80 = arith.constant -0.284496725 : f32
    %195 = vector.broadcast %cst_80 : f32 to vector<16x512xf32>
    %196 = arith.addf %195, %194 : vector<16x512xf32>
    %197 = arith.mulf %186, %196 : vector<16x512xf32>
    %cst_81 = arith.constant 0.254829586 : f32
    %198 = vector.broadcast %cst_81 : f32 to vector<16x512xf32>
    %199 = arith.addf %198, %197 : vector<16x512xf32>
    %200 = arith.mulf %186, %199 : vector<16x512xf32>
    %cst_82 = arith.constant 0.000000e+00 : f32
    %201 = vector.broadcast %cst_82 : f32 to vector<16x512xf32>
    %202 = arith.subf %201, %180 : vector<16x512xf32>
    %203 = arith.mulf %202, %180 : vector<16x512xf32>
    %204 = math.exp %203 : vector<16x512xf32>
    %205 = arith.mulf %200, %204 : vector<16x512xf32>
    %cst_83 = arith.constant 1.000000e+00 : f32
    %206 = vector.broadcast %cst_83 : f32 to vector<16x512xf32>
    %207 = arith.subf %206, %205 : vector<16x512xf32>
    %208 = arith.mulf %179, %207 : vector<16x512xf32>
    %cst_84 = arith.constant 1.000000e+00 : f32
    %209 = vector.broadcast %cst_84 : f32 to vector<16x512xf32>
    %210 = arith.addf %209, %208 : vector<16x512xf32>
    %211 = arith.mulf %172, %210 : vector<16x512xf32>
    %212 = arith.truncf %211 : vector<16x512xf32> to vector<16x512xbf16>
    %c0_85 = arith.constant 0 : index
    %c0_86 = arith.constant 0 : index
    %c0_87 = arith.constant 0 : index
    %213 = vector.load %arg15[%c0_85, %c0_86, %c0_87] : memref<1x512x128xbf16, #tpu.memory_space<vmem>>, vector<1x512x128xbf16>
    %214 = vector.shape_cast %213 : vector<1x512x128xbf16> to vector<512x128xbf16>
    %cst_88 = arith.constant dense<0.000000e+00> : vector<16x128xf32>
    %215 = tpu.matmul %212, %214, %cst_88 {dimension_numbers = #tpu.dot_dimension_numbers<[1], [0], [0], [1], [0, 0, 1, 1], [], []>} : vector<16x512xbf16>, vector<512x128xbf16>, vector<16x128xf32> -> vector<16x128xf32>
    %c0_89 = arith.constant 0 : index
    %c0_90 = arith.constant 0 : index
    %c0_91 = arith.constant 0 : index
    %216 = vector.load %arg16[%c0_89, %c0_90, %c0_91] : memref<1x1x128xf32, #tpu.memory_space<vmem>>, vector<1x1x128xf32>
    %217 = vector.shape_cast %216 : vector<1x1x128xf32> to vector<1x128xf32>
    %218 = vector.broadcast %217 : vector<1x128xf32> to vector<16x128xf32>
    %219 = arith.addf %215, %218 : vector<16x128xf32>
    %220 = arith.addf %138, %219 : vector<16x128xf32>
    %c0_92 = arith.constant 0 : index
    %c0_93 = arith.constant 0 : index
    %221 = vector.load %arg27[%c0_92, %c0_93] : memref<16x128xf32, #tpu.memory_space<vmem>>, vector<16x128xf32>
    tpu.vector_store %arg27[%c0_92, %c0_93], %220 {strides = array<i32>} : memref<16x128xf32, #tpu.memory_space<vmem>>, vector<16x128xf32>,
    %c0_i32_94 = arith.constant 0 : i32
    %222 = arith.cmpi eq, %arg0, %c0_i32_94 : i32
    %223 = arith.extui %222 : i1 to i32
    %c0_i32_95 = arith.constant 0 : i32
    %224 = arith.cmpi ne, %223, %c0_i32_95 : i32
    scf.if %224 {
      %237 = vector.extract_strided_slice %220 {offsets = [1, 0], sizes = [4, 128], strides = [1, 1]} : vector<16x128xf32> to vector<4x128xf32>
      %c0_101 = arith.constant 0 : index
      %c0_102 = arith.constant 0 : index
      %c0_103 = arith.constant 0 : index
      %238 = vector.load %arg28[%c0_101, %c0_102, %c0_103] : memref<4x8x128xf32, #tpu.memory_space<vmem>>, vector<1x4x128xf32>
      %239 = vector.shape_cast %238 : vector<1x4x128xf32> to vector<4x128xf32>
      %240 = vector.shape_cast %237 : vector<4x128xf32> to vector<1x4x128xf32>
      tpu.vector_store %arg28[%c0_101, %c0_102, %c0_103], %240 {strides = array<i32>} : memref<4x8x128xf32, #tpu.memory_space<vmem>>, vector<1x4x128xf32>,
      %241 = vector.extract_strided_slice %220 {offsets = [9, 0], sizes = [4, 128], strides = [1, 1]} : vector<16x128xf32> to vector<4x128xf32>
      %c0_104 = arith.constant 0 : index
      %c4 = arith.constant 4 : index
      %c0_105 = arith.constant 0 : index
      %242 = vector.load %arg28[%c0_104, %c4, %c0_105] : memref<4x8x128xf32, #tpu.memory_space<vmem>>, vector<1x4x128xf32>
      %243 = vector.shape_cast %242 : vector<1x4x128xf32> to vector<4x128xf32>
      %244 = vector.shape_cast %241 : vector<4x128xf32> to vector<1x4x128xf32>
      tpu.vector_store %arg28[%c0_104, %c4, %c0_105], %244 {strides = array<i32>} : memref<4x8x128xf32, #tpu.memory_space<vmem>>, vector<1x4x128xf32>,
    } else {
    }
    %c1_i32 = arith.constant 1 : i32
    %225 = arith.cmpi eq, %arg0, %c1_i32 : i32
    %226 = arith.extui %225 : i1 to i32
    %c0_i32_96 = arith.constant 0 : i32
    %227 = arith.cmpi ne, %226, %c0_i32_96 : i32
    scf.if %227 {
      %237 = vector.extract_strided_slice %220 {offsets = [1, 0], sizes = [4, 128], strides = [1, 1]} : vector<16x128xf32> to vector<4x128xf32>
      %c1_101 = arith.constant 1 : index
      %c0_102 = arith.constant 0 : index
      %c0_103 = arith.constant 0 : index
      %238 = vector.load %arg28[%c1_101, %c0_102, %c0_103] : memref<4x8x128xf32, #tpu.memory_space<vmem>>, vector<1x4x128xf32>
      %239 = vector.shape_cast %238 : vector<1x4x128xf32> to vector<4x128xf32>
      %240 = vector.shape_cast %237 : vector<4x128xf32> to vector<1x4x128xf32>
      tpu.vector_store %arg28[%c1_101, %c0_102, %c0_103], %240 {strides = array<i32>} : memref<4x8x128xf32, #tpu.memory_space<vmem>>, vector<1x4x128xf32>,
      %241 = vector.extract_strided_slice %220 {offsets = [9, 0], sizes = [4, 128], strides = [1, 1]} : vector<16x128xf32> to vector<4x128xf32>
      %c1_104 = arith.constant 1 : index
      %c4 = arith.constant 4 : index
      %c0_105 = arith.constant 0 : index
      %242 = vector.load %arg28[%c1_104, %c4, %c0_105] : memref<4x8x128xf32, #tpu.memory_space<vmem>>, vector<1x4x128xf32>
      %243 = vector.shape_cast %242 : vector<1x4x128xf32> to vector<4x128xf32>
      %244 = vector.shape_cast %241 : vector<4x128xf32> to vector<1x4x128xf32>
      tpu.vector_store %arg28[%c1_104, %c4, %c0_105], %244 {strides = array<i32>} : memref<4x8x128xf32, #tpu.memory_space<vmem>>, vector<1x4x128xf32>,
    } else {
    }
    %c2_i32 = arith.constant 2 : i32
    %228 = arith.cmpi eq, %arg0, %c2_i32 : i32
    %229 = arith.extui %228 : i1 to i32
    %c0_i32_97 = arith.constant 0 : i32
    %230 = arith.cmpi ne, %229, %c0_i32_97 : i32
    scf.if %230 {
      %237 = vector.extract_strided_slice %220 {offsets = [1, 0], sizes = [4, 128], strides = [1, 1]} : vector<16x128xf32> to vector<4x128xf32>
      %c2_101 = arith.constant 2 : index
      %c0_102 = arith.constant 0 : index
      %c0_103 = arith.constant 0 : index
      %238 = vector.load %arg28[%c2_101, %c0_102, %c0_103] : memref<4x8x128xf32, #tpu.memory_space<vmem>>, vector<1x4x128xf32>
      %239 = vector.shape_cast %238 : vector<1x4x128xf32> to vector<4x128xf32>
      %240 = vector.shape_cast %237 : vector<4x128xf32> to vector<1x4x128xf32>
      tpu.vector_store %arg28[%c2_101, %c0_102, %c0_103], %240 {strides = array<i32>} : memref<4x8x128xf32, #tpu.memory_space<vmem>>, vector<1x4x128xf32>,
      %241 = vector.extract_strided_slice %220 {offsets = [9, 0], sizes = [4, 128], strides = [1, 1]} : vector<16x128xf32> to vector<4x128xf32>
      %c2_104 = arith.constant 2 : index
      %c4 = arith.constant 4 : index
      %c0_105 = arith.constant 0 : index
      %242 = vector.load %arg28[%c2_104, %c4, %c0_105] : memref<4x8x128xf32, #tpu.memory_space<vmem>>, vector<1x4x128xf32>
      %243 = vector.shape_cast %242 : vector<1x4x128xf32> to vector<4x128xf32>
      %244 = vector.shape_cast %241 : vector<4x128xf32> to vector<1x4x128xf32>
      tpu.vector_store %arg28[%c2_104, %c4, %c0_105], %244 {strides = array<i32>} : memref<4x8x128xf32, #tpu.memory_space<vmem>>, vector<1x4x128xf32>,
    } else {
    }
    %c3_i32 = arith.constant 3 : i32
    %231 = arith.cmpi eq, %arg0, %c3_i32 : i32
    %232 = arith.extui %231 : i1 to i32
    %c0_i32_98 = arith.constant 0 : i32
    %233 = arith.cmpi ne, %232, %c0_i32_98 : i32
    scf.if %233 {
      %237 = vector.extract_strided_slice %220 {offsets = [1, 0], sizes = [4, 128], strides = [1, 1]} : vector<16x128xf32> to vector<4x128xf32>
      %c3_101 = arith.constant 3 : index
      %c0_102 = arith.constant 0 : index
      %c0_103 = arith.constant 0 : index
      %238 = vector.load %arg28[%c3_101, %c0_102, %c0_103] : memref<4x8x128xf32, #tpu.memory_space<vmem>>, vector<1x4x128xf32>
      %239 = vector.shape_cast %238 : vector<1x4x128xf32> to vector<4x128xf32>
      %240 = vector.shape_cast %237 : vector<4x128xf32> to vector<1x4x128xf32>
      tpu.vector_store %arg28[%c3_101, %c0_102, %c0_103], %240 {strides = array<i32>} : memref<4x8x128xf32, #tpu.memory_space<vmem>>, vector<1x4x128xf32>,
      %241 = vector.extract_strided_slice %220 {offsets = [9, 0], sizes = [4, 128], strides = [1, 1]} : vector<16x128xf32> to vector<4x128xf32>
      %c3_104 = arith.constant 3 : index
      %c4 = arith.constant 4 : index
      %c0_105 = arith.constant 0 : index
      %242 = vector.load %arg28[%c3_104, %c4, %c0_105] : memref<4x8x128xf32, #tpu.memory_space<vmem>>, vector<1x4x128xf32>
      %243 = vector.shape_cast %242 : vector<1x4x128xf32> to vector<4x128xf32>
      %244 = vector.shape_cast %241 : vector<4x128xf32> to vector<1x4x128xf32>
      tpu.vector_store %arg28[%c3_104, %c4, %c0_105], %244 {strides = array<i32>} : memref<4x8x128xf32, #tpu.memory_space<vmem>>, vector<1x4x128xf32>,
    } else {
    }
    %c3_i32_99 = arith.constant 3 : i32
    %234 = arith.cmpi eq, %arg0, %c3_i32_99 : i32
    %235 = arith.extui %234 : i1 to i32
    %c0_i32_100 = arith.constant 0 : i32
    %236 = arith.cmpi ne, %235, %c0_i32_100 : i32
    scf.if %236 {
      %c0_101 = arith.constant 0 : index
      %c0_102 = arith.constant 0 : index
      %c0_103 = arith.constant 0 : index
      %237 = vector.load %arg28[%c0_101, %c0_102, %c0_103] : memref<4x8x128xf32, #tpu.memory_space<vmem>>, vector<1x8x128xf32>
      %238 = vector.shape_cast %237 : vector<1x8x128xf32> to vector<8x128xf32>
      %c1_104 = arith.constant 1 : index
      %c0_105 = arith.constant 0 : index
      %c0_106 = arith.constant 0 : index
      %239 = vector.load %arg28[%c1_104, %c0_105, %c0_106] : memref<4x8x128xf32, #tpu.memory_space<vmem>>, vector<1x8x128xf32>
      %240 = vector.shape_cast %239 : vector<1x8x128xf32> to vector<8x128xf32>
      %c2_107 = arith.constant 2 : index
      %c0_108 = arith.constant 0 : index
      %c0_109 = arith.constant 0 : index
      %241 = vector.load %arg28[%c2_107, %c0_108, %c0_109] : memref<4x8x128xf32, #tpu.memory_space<vmem>>, vector<1x8x128xf32>
      %242 = vector.shape_cast %241 : vector<1x8x128xf32> to vector<8x128xf32>
      %c3_110 = arith.constant 3 : index
      %c0_111 = arith.constant 0 : index
      %c0_112 = arith.constant 0 : index
      %243 = vector.load %arg28[%c3_110, %c0_111, %c0_112] : memref<4x8x128xf32, #tpu.memory_space<vmem>>, vector<1x8x128xf32>
      %244 = vector.shape_cast %243 : vector<1x8x128xf32> to vector<8x128xf32>
      %245 = arith.truncf %238 : vector<8x128xf32> to vector<8x128xbf16>
      %c0_113 = arith.constant 0 : index
      %c0_114 = arith.constant 0 : index
      %246 = vector.load %arg17[%c0_113, %c0_114] : memref<128x512xbf16, #tpu.memory_space<vmem>>, vector<128x512xbf16>
      %cst_115 = arith.constant dense<0.000000e+00> : vector<8x512xf32>
      %247 = tpu.matmul %245, %246, %cst_115 {dimension_numbers = #tpu.dot_dimension_numbers<[1], [0], [0], [1], [0, 0, 1, 1], [], []>} : vector<8x128xbf16>, vector<128x512xbf16>, vector<8x512xf32> -> vector<8x512xf32>
      %c0_116 = arith.constant 0 : index
      %c0_117 = arith.constant 0 : index
      %248 = vector.load %arg18[%c0_116, %c0_117] : memref<1x512xf32, #tpu.memory_space<vmem>>, vector<1x512xf32>
      %249 = vector.broadcast %248 : vector<1x512xf32> to vector<8x512xf32>
      %250 = arith.addf %247, %249 : vector<8x512xf32>
      %cst_118 = arith.constant 5.000000e-01 : f32
      %251 = vector.broadcast %cst_118 : f32 to vector<8x512xf32>
      %252 = arith.mulf %251, %250 : vector<8x512xf32>
      %cst_119 = arith.constant 0.707106769 : f32
      %253 = vector.broadcast %cst_119 : f32 to vector<8x512xf32>
      %254 = arith.mulf %250, %253 : vector<8x512xf32>
      %cst_120 = arith.constant 0.000000e+00 : f32
      %255 = vector.broadcast %cst_120 : f32 to vector<8x512xf32>
      %256 = arith.cmpf oge, %254, %255 : vector<8x512xf32>
      %cst_121 = arith.constant 1.000000e+00 : f32
      %cst_122 = arith.constant -1.000000e+00 : f32
      %257 = vector.broadcast %cst_121 : f32 to vector<8x512xf32>
      %258 = vector.broadcast %cst_122 : f32 to vector<8x512xf32>
      %259 = arith.select %256, %257, %258 : vector<8x512xi1>, vector<8x512xf32>
      %260 = math.absf %254 : vector<8x512xf32>
      %cst_123 = arith.constant 0.327591091 : f32
      %261 = vector.broadcast %cst_123 : f32 to vector<8x512xf32>
      %262 = arith.mulf %261, %260 : vector<8x512xf32>
      %cst_124 = arith.constant 1.000000e+00 : f32
      %263 = vector.broadcast %cst_124 : f32 to vector<8x512xf32>
      %264 = arith.addf %263, %262 : vector<8x512xf32>
      %cst_125 = arith.constant 1.000000e+00 : f32
      %265 = vector.broadcast %cst_125 : f32 to vector<8x512xf32>
      %266 = arith.divf %265, %264 : vector<8x512xf32>
      %cst_126 = arith.constant 1.06140542 : f32
      %267 = vector.broadcast %cst_126 : f32 to vector<8x512xf32>
      %268 = arith.mulf %266, %267 : vector<8x512xf32>
      %cst_127 = arith.constant -1.45315206 : f32
      %269 = vector.broadcast %cst_127 : f32 to vector<8x512xf32>
      %270 = arith.addf %269, %268 : vector<8x512xf32>
      %271 = arith.mulf %266, %270 : vector<8x512xf32>
      %cst_128 = arith.constant 1.42141378 : f32
      %272 = vector.broadcast %cst_128 : f32 to vector<8x512xf32>
      %273 = arith.addf %272, %271 : vector<8x512xf32>
      %274 = arith.mulf %266, %273 : vector<8x512xf32>
      %cst_129 = arith.constant -0.284496725 : f32
      %275 = vector.broadcast %cst_129 : f32 to vector<8x512xf32>
      %276 = arith.addf %275, %274 : vector<8x512xf32>
      %277 = arith.mulf %266, %276 : vector<8x512xf32>
      %cst_130 = arith.constant 0.254829586 : f32
      %278 = vector.broadcast %cst_130 : f32 to vector<8x512xf32>
      %279 = arith.addf %278, %277 : vector<8x512xf32>
      %280 = arith.mulf %266, %279 : vector<8x512xf32>
      %cst_131 = arith.constant 0.000000e+00 : f32
      %281 = vector.broadcast %cst_131 : f32 to vector<8x512xf32>
      %282 = arith.subf %281, %260 : vector<8x512xf32>
      %283 = arith.mulf %282, %260 : vector<8x512xf32>
      %284 = math.exp %283 : vector<8x512xf32>
      %285 = arith.mulf %280, %284 : vector<8x512xf32>
      %cst_132 = arith.constant 1.000000e+00 : f32
      %286 = vector.broadcast %cst_132 : f32 to vector<8x512xf32>
      %287 = arith.subf %286, %285 : vector<8x512xf32>
      %288 = arith.mulf %259, %287 : vector<8x512xf32>
      %cst_133 = arith.constant 1.000000e+00 : f32
      %289 = vector.broadcast %cst_133 : f32 to vector<8x512xf32>
      %290 = arith.addf %289, %288 : vector<8x512xf32>
      %291 = arith.mulf %252, %290 : vector<8x512xf32>
      %292 = arith.truncf %291 : vector<8x512xf32> to vector<8x512xbf16>
      %c0_134 = arith.constant 0 : index
      %c0_135 = arith.constant 0 : index
      %293 = vector.load %arg19[%c0_134, %c0_135] : memref<512x2048xbf16, #tpu.memory_space<vmem>>, vector<512x2048xbf16>
      %cst_136 = arith.constant dense<0.000000e+00> : vector<8x2048xf32>
      %294 = tpu.matmul %292, %293, %cst_136 {dimension_numbers = #tpu.dot_dimension_numbers<[1], [0], [0], [1], [0, 0, 1, 1], [], []>} : vector<8x512xbf16>, vector<512x2048xbf16>, vector<8x2048xf32> -> vector<8x2048xf32>
      %c0_137 = arith.constant 0 : index
      %c0_138 = arith.constant 0 : index
      %295 = vector.load %arg20[%c0_137, %c0_138] : memref<1x2048xf32, #tpu.memory_space<vmem>>, vector<1x2048xf32>
      %296 = vector.broadcast %295 : vector<1x2048xf32> to vector<8x2048xf32>
      %297 = arith.addf %294, %296 : vector<8x2048xf32>
      %c0_139 = arith.constant 0 : index
      %c0_140 = arith.constant 0 : index
      %298 = vector.load %arg23[%c0_139, %c0_140] : memref<8x2048xf32, #tpu.memory_space<vmem>>, vector<8x2048xf32>
      tpu.vector_store %arg23[%c0_139, %c0_140], %297 {strides = array<i32>} : memref<8x2048xf32, #tpu.memory_space<vmem>>, vector<8x2048xf32>,
      %299 = arith.truncf %240 : vector<8x128xf32> to vector<8x128xbf16>
      %c0_141 = arith.constant 0 : index
      %c0_142 = arith.constant 0 : index
      %300 = vector.load %arg21[%c0_141, %c0_142] : memref<128x512xbf16, #tpu.memory_space<vmem>>, vector<128x512xbf16>
      %cst_143 = arith.constant dense<0.000000e+00> : vector<8x512xf32>
      %301 = tpu.matmul %299, %300, %cst_143 {dimension_numbers = #tpu.dot_dimension_numbers<[1], [0], [0], [1], [0, 0, 1, 1], [], []>} : vector<8x128xbf16>, vector<128x512xbf16>, vector<8x512xf32> -> vector<8x512xf32>
      %c0_144 = arith.constant 0 : index
      %c0_145 = arith.constant 0 : index
      %302 = vector.load %arg22[%c0_144, %c0_145] : memref<1x512xf32, #tpu.memory_space<vmem>>, vector<1x512xf32>
      %303 = vector.broadcast %302 : vector<1x512xf32> to vector<8x512xf32>
      %304 = arith.addf %301, %303 : vector<8x512xf32>
      %c0_146 = arith.constant 0 : index
      %c0_147 = arith.constant 0 : index
      %305 = vector.load %arg24[%c0_146, %c0_147] : memref<8x512xf32, #tpu.memory_space<vmem>>, vector<8x512xf32>
      tpu.vector_store %arg24[%c0_146, %c0_147], %304 {strides = array<i32>} : memref<8x512xf32, #tpu.memory_space<vmem>>, vector<8x512xf32>,
      %c0_148 = arith.constant 0 : index
      %c0_149 = arith.constant 0 : index
      %306 = vector.load %arg25[%c0_148, %c0_149] : memref<8x128xf32, #tpu.memory_space<vmem>>, vector<8x128xf32>
      tpu.vector_store %arg25[%c0_148, %c0_149], %242 {strides = array<i32>} : memref<8x128xf32, #tpu.memory_space<vmem>>, vector<8x128xf32>,
      %307 = vector.extract_strided_slice %244 {offsets = [0, 0], sizes = [1, 128], strides = [1, 1]} : vector<8x128xf32> to vector<1x128xf32>
      %308 = vector.extract_strided_slice %244 {offsets = [1, 0], sizes = [1, 128], strides = [1, 1]} : vector<8x128xf32> to vector<1x128xf32>
      %309 = arith.maximumf %307, %308 : vector<1x128xf32>
      %310 = vector.extract_strided_slice %244 {offsets = [2, 0], sizes = [1, 128], strides = [1, 1]} : vector<8x128xf32> to vector<1x128xf32>
      %311 = vector.extract_strided_slice %244 {offsets = [3, 0], sizes = [1, 128], strides = [1, 1]} : vector<8x128xf32> to vector<1x128xf32>
      %312 = arith.maximumf %310, %311 : vector<1x128xf32>
      %313 = arith.maximumf %309, %312 : vector<1x128xf32>
      %c0_150 = arith.constant 0 : index
      %c0_151 = arith.constant 0 : index
      %314 = vector.load %arg26[%c0_150, %c0_151] : memref<2x128xf32, #tpu.memory_space<vmem>>, vector<1x128xf32>
      tpu.vector_store %arg26[%c0_150, %c0_151], %313 {strides = array<i32>} : memref<2x128xf32, #tpu.memory_space<vmem>>, vector<1x128xf32>,
      %315 = vector.extract_strided_slice %244 {offsets = [4, 0], sizes = [1, 128], strides = [1, 1]} : vector<8x128xf32> to vector<1x128xf32>
      %316 = vector.extract_strided_slice %244 {offsets = [5, 0], sizes = [1, 128], strides = [1, 1]} : vector<8x128xf32> to vector<1x128xf32>
      %317 = arith.maximumf %315, %316 : vector<1x128xf32>
      %318 = vector.extract_strided_slice %244 {offsets = [6, 0], sizes = [1, 128], strides = [1, 1]} : vector<8x128xf32> to vector<1x128xf32>
      %319 = vector.extract_strided_slice %244 {offsets = [7, 0], sizes = [1, 128], strides = [1, 1]} : vector<8x128xf32> to vector<1x128xf32>
      %320 = arith.maximumf %318, %319 : vector<1x128xf32>
      %321 = arith.maximumf %317, %320 : vector<1x128xf32>
      %c1_152 = arith.constant 1 : index
      %c0_153 = arith.constant 0 : index
      %322 = vector.load %arg26[%c1_152, %c0_153] : memref<2x128xf32, #tpu.memory_space<vmem>>, vector<1x128xf32>
      tpu.vector_store %arg26[%c1_152, %c0_153], %321 {strides = array<i32>} : memref<2x128xf32, #tpu.memory_space<vmem>>, vector<1x128xf32>,
    } else {
    }
    return
  }
  func.func @transform_0(%arg0: i32) -> (i32, i32) {
    %c0_i32 = arith.constant 0 : i32
    %c0_i32_0 = arith.constant 0 : i32
    %c0_i32_1 = arith.constant 0 : i32
    return %c0_i32, %c0_i32_0 : i32, i32
  }
  func.func @transform_1(%arg0: i32) -> (i32, i32) {
    %c0_i32 = arith.constant 0 : i32
    %c0_i32_0 = arith.constant 0 : i32
    %c0_i32_1 = arith.constant 0 : i32
    return %c0_i32, %c0_i32_0 : i32, i32
  }
  func.func @transform_2(%arg0: i32) -> (i32, i32) {
    %c0_i32 = arith.constant 0 : i32
    %c0_i32_0 = arith.constant 0 : i32
    %c0_i32_1 = arith.constant 0 : i32
    return %c0_i32, %c0_i32_0 : i32, i32
  }
  func.func @transform_3(%arg0: i32) -> (i32, i32) {
    %c0_i32 = arith.constant 0 : i32
    %c0_i32_0 = arith.constant 0 : i32
    %c0_i32_1 = arith.constant 0 : i32
    return %c0_i32, %c0_i32_0 : i32, i32
  }
  func.func @transform_4(%arg0: i32) -> (i32, i32) {
    %c0_i32 = arith.constant 0 : i32
    %c0_i32_0 = arith.constant 0 : i32
    %c0_i32_1 = arith.constant 0 : i32
    return %c0_i32, %c0_i32_0 : i32, i32
  }
  func.func @transform_5(%arg0: i32) -> (i32, i32, i32) {
    %c0_i32 = arith.constant 0 : i32
    %c0_i32_0 = arith.constant 0 : i32
    %c0_i32_1 = arith.constant 0 : i32
    return %arg0, %c0_i32, %c0_i32_0 : i32, i32, i32
  }
  func.func @transform_6(%arg0: i32) -> (i32, i32, i32) {
    %c0_i32 = arith.constant 0 : i32
    %c0_i32_0 = arith.constant 0 : i32
    %c0_i32_1 = arith.constant 0 : i32
    return %arg0, %c0_i32, %c0_i32_0 : i32, i32, i32
  }
  func.func @transform_7(%arg0: i32) -> (i32, i32, i32) {
    %c0_i32 = arith.constant 0 : i32
    %c0_i32_0 = arith.constant 0 : i32
    %c0_i32_1 = arith.constant 0 : i32
    return %arg0, %c0_i32, %c0_i32_0 : i32, i32, i32
  }
  func.func @transform_8(%arg0: i32) -> (i32, i32, i32) {
    %c0_i32 = arith.constant 0 : i32
    %c0_i32_0 = arith.constant 0 : i32
    %c0_i32_1 = arith.constant 0 : i32
    return %arg0, %c0_i32, %c0_i32_0 : i32, i32, i32
  }
  func.func @transform_9(%arg0: i32) -> (i32, i32, i32) {
    %c0_i32 = arith.constant 0 : i32
    %c0_i32_0 = arith.constant 0 : i32
    %c0_i32_1 = arith.constant 0 : i32
    return %arg0, %c0_i32, %c0_i32_0 : i32, i32, i32
  }
  func.func @transform_10(%arg0: i32) -> (i32, i32, i32) {
    %c0_i32 = arith.constant 0 : i32
    %c0_i32_0 = arith.constant 0 : i32
    %c0_i32_1 = arith.constant 0 : i32
    return %arg0, %c0_i32, %c0_i32_0 : i32, i32, i32
  }
  func.func @transform_11(%arg0: i32) -> (i32, i32, i32) {
    %c0_i32 = arith.constant 0 : i32
    %c0_i32_0 = arith.constant 0 : i32
    %c0_i32_1 = arith.constant 0 : i32
    return %arg0, %c0_i32, %c0_i32_0 : i32, i32, i32
  }
  func.func @transform_12(%arg0: i32) -> (i32, i32, i32) {
    %c0_i32 = arith.constant 0 : i32
    %c0_i32_0 = arith.constant 0 : i32
    %c0_i32_1 = arith.constant 0 : i32
    return %arg0, %c0_i32, %c0_i32_0 : i32, i32, i32
  }
  func.func @transform_13(%arg0: i32) -> (i32, i32, i32) {
    %c0_i32 = arith.constant 0 : i32
    %c0_i32_0 = arith.constant 0 : i32
    %c0_i32_1 = arith.constant 0 : i32
    return %arg0, %c0_i32, %c0_i32_0 : i32, i32, i32
  }
  func.func @transform_14(%arg0: i32) -> (i32, i32, i32) {
    %c0_i32 = arith.constant 0 : i32
    %c0_i32_0 = arith.constant 0 : i32
    %c0_i32_1 = arith.constant 0 : i32
    return %arg0, %c0_i32, %c0_i32_0 : i32, i32, i32
  }
  func.func @transform_15(%arg0: i32) -> (i32, i32, i32) {
    %c0_i32 = arith.constant 0 : i32
    %c0_i32_0 = arith.constant 0 : i32
    %c0_i32_1 = arith.constant 0 : i32
    return %arg0, %c0_i32, %c0_i32_0 : i32, i32, i32
  }
  func.func @transform_16(%arg0: i32) -> (i32, i32) {
    %c0_i32 = arith.constant 0 : i32
    %c0_i32_0 = arith.constant 0 : i32
    %c0_i32_1 = arith.constant 0 : i32
    return %c0_i32, %c0_i32_0 : i32, i32
  }
  func.func @transform_17(%arg0: i32) -> (i32, i32) {
    %c0_i32 = arith.constant 0 : i32
    %c0_i32_0 = arith.constant 0 : i32
    %c0_i32_1 = arith.constant 0 : i32
    return %c0_i32, %c0_i32_0 : i32, i32
  }
  func.func @transform_18(%arg0: i32) -> (i32, i32) {
    %c0_i32 = arith.constant 0 : i32
    %c0_i32_0 = arith.constant 0 : i32
    %c0_i32_1 = arith.constant 0 : i32
    return %c0_i32, %c0_i32_0 : i32, i32
  }
  func.func @transform_19(%arg0: i32) -> (i32, i32) {
    %c0_i32 = arith.constant 0 : i32
    %c0_i32_0 = arith.constant 0 : i32
    %c0_i32_1 = arith.constant 0 : i32
    return %c0_i32, %c0_i32_0 : i32, i32
  }
  func.func @transform_20(%arg0: i32) -> (i32, i32) {
    %c0_i32 = arith.constant 0 : i32
    %c0_i32_0 = arith.constant 0 : i32
    %c0_i32_1 = arith.constant 0 : i32
    return %c0_i32, %c0_i32_0 : i32, i32
  }
  func.func @transform_21(%arg0: i32) -> (i32, i32) {
    %c0_i32 = arith.constant 0 : i32
    %c0_i32_0 = arith.constant 0 : i32
    %c0_i32_1 = arith.constant 0 : i32
    return %c0_i32, %c0_i32_0 : i32, i32
  }
  func.func @transform_22(%arg0: i32) -> (i32, i32) {
    %c0_i32 = arith.constant 0 : i32
    %c0_i32_0 = arith.constant 0 : i32
    %c0_i32_1 = arith.constant 0 : i32
    return %c0_i32, %c0_i32_0 : i32, i32
  }
  func.func @transform_23(%arg0: i32) -> (i32, i32) {
    %c0_i32 = arith.constant 0 : i32
    %c0_i32_0 = arith.constant 0 : i32
    %c0_i32_1 = arith.constant 0 : i32
    return %c0_i32, %c0_i32_0 : i32, i32
  }
  func.func @transform_24(%arg0: i32) -> (i32, i32) {
    %c0_i32 = arith.constant 0 : i32
    %c0_i32_0 = arith.constant 0 : i32
    %c0_i32_1 = arith.constant 0 : i32
    return %c0_i32, %c0_i32_0 : i32, i32
  }
  func.func @transform_25(%arg0: i32) -> (i32, i32) {
    %c0_i32 = arith.constant 0 : i32
    %c0_i32_0 = arith.constant 0 : i32
    %c0_i32_1 = arith.constant 0 : i32
    return %c0_i32, %c0_i32_0 : i32, i32
  }
}

</mosaic_0001>

<llo_original>
// kernel: ibot_forward.1
$region0: #{ibot_forward.1}
  #allocation0 [shape = 'u32[]', space=smem, size = 0x4, offset = 0x4, fixed_abs, tag = 'smem constant byte address 0x4 - core index']
  #allocation1 [shape = 'u32[72,128]{1,0:T(1,128)}', space=vmem, size = 0x9000, scoped, tag = 'internal scratch']
  #allocation2 [shape = 'f32[16,128]{1,0:T(8,128)}', space=vmem, size = 0x2000, scoped, tag = 'scratch operand']
  #allocation3 [shape = 'f32[4,8,128]{2,1,0:T(8,128)}', space=vmem, size = 0x4000, scoped, tag = 'scratch operand']
  %s0 = inlined_call_operand.vmem [shape: f32[16,768], index: 0, kind: input, shape index: {}]
  %s1 = inlined_call_operand.hbm [shape: f32[16,128], index: 1, kind: input, shape index: {}]
  %s2 = inlined_call_operand.hbm [shape: f32[16,16], index: 2, kind: input, shape index: {}]
  %s3 = inlined_call_operand.hbm [shape: f32[4,128], index: 3, kind: input, shape index: {}]
  %s4 = inlined_call_operand.hbm [shape: bf16[768,128], index: 4, kind: input, shape index: {}]
  %s5 = inlined_call_operand.hbm [shape: f32[4,1,128], index: 5, kind: input, shape index: {}]
  %s6 = inlined_call_operand.hbm [shape: f32[4,1,128], index: 6, kind: input, shape index: {}]
  %s7 = inlined_call_operand.hbm [shape: bf16[4,128,384], index: 7, kind: input, shape index: {}]
  %s8 = inlined_call_operand.hbm [shape: bf16[4,128,128], index: 8, kind: input, shape index: {}]
  %s9 = inlined_call_operand.hbm [shape: f32[4,1,128], index: 9, kind: input, shape index: {}]
  %s10 = inlined_call_operand.hbm [shape: f32[4,1,128], index: 10, kind: input, shape index: {}]
  %s11 = inlined_call_operand.hbm [shape: f32[4,1,128], index: 11, kind: input, shape index: {}]
  %s12 = inlined_call_operand.hbm [shape: bf16[4,128,512], index: 12, kind: input, shape index: {}]
  %s13 = inlined_call_operand.hbm [shape: f32[4,1,512], index: 13, kind: input, shape index: {}]
  %s14 = inlined_call_operand.hbm [shape: bf16[4,512,128], index: 14, kind: input, shape index: {}]
  %s15 = inlined_call_operand.hbm [shape: f32[4,1,128], index: 15, kind: input, shape index: {}]
  %s16 = inlined_call_operand.hbm [shape: bf16[128,512], index: 16, kind: input, shape index: {}]
  %s17 = inlined_call_operand.hbm [shape: f32[1,512], index: 17, kind: input, shape index: {}]
  %s18 = inlined_call_operand.hbm [shape: bf16[512,2048], index: 18, kind: input, shape index: {}]
  %s19 = inlined_call_operand.hbm [shape: f32[1,2048], index: 19, kind: input, shape index: {}]
  %s20 = inlined_call_operand.hbm [shape: bf16[128,512], index: 20, kind: input, shape index: {}]
  %s21 = inlined_call_operand.hbm [shape: f32[1,512], index: 21, kind: input, shape index: {}]
  %s22 = inlined_call_operand.vmem [shape: f32[8,2048], index: 22, kind: output, shape index: {0}]
  %s23 = inlined_call_operand.vmem [shape: f32[8,512], index: 23, kind: output, shape index: {1}]
  %s24 = inlined_call_operand.hbm [shape: f32[8,128], index: 24, kind: output, shape index: {2}]
  %s25 = inlined_call_operand.hbm [shape: f32[2,128], index: 25, kind: output, shape index: {3}]
  %26 = xla_tuple %s22, %s23, %s24, %s25
  %s27 = sld [smem:[#allocation0]]
  $region249: #{ibot_forward.1} parent=0
    _
  %s29 = ssub.s32 1, %s27
  %s30 = scalar_select 0, %s29, %s27
  $region1: #{ibot_forward.1} parent=0
    #allocation4 [shape = 'u8[8192]{0}', space=vmem, size = 0x2000, scoped, tag = 'input window, operand 1, single buffered']
    #allocation5 [shape = 's32[2]{0}', space=sflag, size = 0x8, scoped, tag = 'scoped memory for ibot_forward.1']
    #allocation6 [shape = 's32[2]{0}', space=sflag, size = 0x8, scoped, tag = 'scoped memory for ibot_forward.1']
    #allocation7 [shape = 'u8[8192]{0}', space=vmem, size = 0x2000, scoped, tag = 'input window, operand 2, single buffered']
    #allocation8 [shape = 's32[1]{0}', space=sflag, size = 0x4, scoped, tag = 'scoped memory for ibot_forward.1']
    #allocation9 [shape = 'u8[2048]{0}', space=vmem, size = 0x800, scoped, tag = 'input window, operand 3, single buffered']
    #allocation10 [shape = 'u8[196608]{0}', space=vmem, size = 0x30000, scoped, tag = 'input window, operand 4, single buffered']
    #allocation11 [shape = 's32[1]{0}', space=sflag, size = 0x4, scoped, tag = 'scoped memory for ibot_forward.1']
    #allocation12 [shape = 'u8[1024]{0}', space=vmem, size = 0x400, scoped, tag = 'input window, operand 5']
    #allocation13 [shape = 'u8[1024]{0}', space=vmem, size = 0x400, scoped, tag = 'input window, operand 6']
    #allocation14 [shape = 'u8[196608]{0}', space=vmem, size = 0x30000, scoped, tag = 'input window, operand 7']
    #allocation15 [shape = 'u8[65536]{0}', space=vmem, size = 0x10000, scoped, tag = 'input window, operand 8']
    #allocation16 [shape = 'u8[1024]{0}', space=vmem, size = 0x400, scoped, tag = 'input window, operand 9']
    #allocation17 [shape = 'u8[1024]{0}', space=vmem, size = 0x400, scoped, tag = 'input window, operand 10']
    #allocation18 [shape = 'u8[1024]{0}', space=vmem, size = 0x400, scoped, tag = 'input window, operand 11']
    #allocation19 [shape = 'u8[262144]{0}', space=vmem, size = 0x40000, scoped, tag = 'input window, operand 12']
    #allocation20 [shape = 'u8[4096]{0}', space=vmem, size = 0x1000, scoped, tag = 'input window, operand 13']
    #allocation21 [shape = 'u8[262144]{0}', space=vmem, size = 0x40000, scoped, tag = 'input window, operand 14']
    #allocation22 [shape = 'u8[1024]{0}', space=vmem, size = 0x400, scoped, tag = 'input window, operand 15']
    #allocation23 [shape = 'u8[131072]{0}', space=vmem, size = 0x20000, scoped, tag = 'input window, operand 16, single buffered']
    #allocation24 [shape = 'u8[2048]{0}', space=vmem, size = 0x800, scoped, tag = 'input window, operand 17, single buffered']
    #allocation25 [shape = 'u8[2097152]{0}', space=vmem, size = 0x200000, scoped, tag = 'input window, operand 18, single buffered']
    #allocation26 [shape = 's32[1]{0}', space=sflag, size = 0x4, scoped, tag = 'scoped memory for ibot_forward.1']
    #allocation27 [shape = 'u8[8192]{0}', space=vmem, size = 0x2000, scoped, tag = 'input window, operand 19, single buffered']
    #allocation28 [shape = 'u8[131072]{0}', space=vmem, size = 0x20000, scoped, tag = 'input window, operand 20, single buffered']
    #allocation29 [shape = 's32[1]{0}', space=sflag, size = 0x4, scoped, tag = 'scoped memory for ibot_forward.1']
    #allocation30 [shape = 'u8[2048]{0}', space=vmem, size = 0x800, scoped, tag = 'input window, operand 21, single buffered']
    #allocation31 [shape = 'u8[4096]{0}', space=vmem, size = 0x1000, scoped, tag = 'output window, operand 2, single buffered']
    #allocation32 [shape = 'u8[1024]{0}', space=vmem, size = 0x400, scoped, tag = 'output window, operand 3, single buffered']
    #allocation33 [shape = 's32[1]{0}', space=sflag, size = 0x4, scoped, tag = 'scoped memory for ibot_forward.1']
    %31 = vsyncpa [#allocation5], 0
    %32 = vsyncpa [#allocation8], 0
    %33 = vsyncpa [#allocation11], 0
    %34 = vsyncpa [#allocation26], 0
    %35 = vsyncpa [#allocation29], 0
    %36 = vsyncpa [#allocation6], 0
    %37 = vsyncpa [#allocation33], 0
    loop: start=0, step=1, limit=6
    $region2: #{ibot_forward.1} parent=1 // loop_pre_header
      _
    $region3: #{ibot_forward.1} parent=1 // loop_header
      %s39 = sphi 0, %s43
      %p40 = scmp.ge.s32.totalorder %s39, 6
      %s47 = sphi 0, %s47
      %s49 = sphi 0, %s47
      %s50 = sphi 0, %s49
      %s64 = sphi 0, %s50
      %s68 = sphi 0, %s68
      %s70 = sphi 0, %s68
      %s71 = sphi 0, %s70
      %s85 = sphi 0, %s71
      %s89 = sphi 0, %s89
      %s91 = sphi 0, %s89
      %s92 = sphi 0, %s91
      %s106 = sphi 0, %s92
      %s110 = sphi 0, %s110
      %s112 = sphi 0, %s110
      %s113 = sphi 0, %s112
      %s127 = sphi 0, %s113
      %s131 = sphi 0, %s131
      %s133 = sphi 0, %s131
      %s134 = sphi 0, %s133
      %s148 = sphi 0, %s134
      %s154 = sphi 0, %s156
      %s157 = sphi 0, %s154
      %s158 = sphi 0, %s157
      %s174 = sphi 0, %s158
      %s180 = sphi 0, %s182
      %s183 = sphi 0, %s180
      %s184 = sphi 0, %s183
      %s200 = sphi 0, %s184
      %s206 = sphi 0, %s208
      %s209 = sphi 0, %s206
      %s210 = sphi 0, %s209
      %s226 = sphi 0, %s210
      %s232 = sphi 0, %s234
      %s235 = sphi 0, %s232
      %s236 = sphi 0, %s235
      %s252 = sphi 0, %s236
      %s258 = sphi 0, %s260
      %s261 = sphi 0, %s258
      %s262 = sphi 0, %s261
      %s278 = sphi 0, %s262
      %s284 = sphi 0, %s286
      %s287 = sphi 0, %s284
      %s288 = sphi 0, %s287
      %s304 = sphi 0, %s288
      %s310 = sphi 0, %s312
      %s313 = sphi 0, %s310
      %s314 = sphi 0, %s313
      %s330 = sphi 0, %s314
      %s336 = sphi 0, %s338
      %s339 = sphi 0, %s336
      %s340 = sphi 0, %s339
      %s356 = sphi 0, %s340
      %s362 = sphi 0, %s364
      %s365 = sphi 0, %s362
      %s366 = sphi 0, %s365
      %s382 = sphi 0, %s366
      %s388 = sphi 0, %s390
      %s391 = sphi 0, %s388
      %s392 = sphi 0, %s391
      %s408 = sphi 0, %s392
      %s414 = sphi 0, %s416
      %s417 = sphi 0, %s414
      %s418 = sphi 0, %s417
      %s434 = sphi 0, %s418
      %s438 = sphi 0, %s438
      %s440 = sphi 0, %s438
      %s441 = sphi 0, %s440
      %s455 = sphi 0, %s441
      %s459 = sphi 0, %s459
      %s461 = sphi 0, %s459
      %s462 = sphi 0, %s461
      %s476 = sphi 0, %s462
      %s480 = sphi 0, %s480
      %s482 = sphi 0, %s480
      %s483 = sphi 0, %s482
      %s497 = sphi 0, %s483
      %s501 = sphi 0, %s501
      %s503 = sphi 0, %s501
      %s504 = sphi 0, %s503
      %s518 = sphi 0, %s504
      %s522 = sphi 0, %s522
      %s524 = sphi 0, %s522
      %s525 = sphi 0, %s524
      %s539 = sphi 0, %s525
      %s543 = sphi 0, %s543
      %s545 = sphi 0, %s543
      %s546 = sphi 0, %s545
      %s560 = sphi 0, %s546
      %s564 = sphi 0, %s564
      %s566 = sphi 0, %s564
      %s567 = sphi 0, %s566
      %s581 = sphi 0, %s567
      %s585 = sphi 0, %s585
      %s587 = sphi 0, %s585
      %s588 = sphi 0, %s587
      %s602 = sphi 0, %s588
      %s606 = sphi 0, %s606
      %s608 = sphi 0, %s606
      %s609 = sphi 0, %s608
      %s623 = sphi 0, %s609
      %s627 = sphi 0, %s627
      %s629 = sphi 0, %s627
      %s630 = sphi 0, %s629
      %s644 = sphi 0, %s630
    $region4: #{ibot_forward.1} parent=1 // loop_header_branch
      %42 = sbr.rel (%p40) target = $region8
    $region5: #{ibot_forward.1} parent=1 // loop_body
      %s44 = ssub.s32 %s39, 1
      %s45 = ssub.s32 %s39, 2
      %s46 = sadd.s32 %s39, 1
      %s48 = sadd.s32 %s47, 1
      %p51 = scmp.eq.s32.totalorder %s39, 3
      %p52 = scmp.ne.s32.totalorder %s47, %s49
      %p53 = scmp.eq.s32.totalorder %s39, 0
      %p54 = por %p52, %p53
      %p55 = scmp.ne.s32.totalorder %s47, %s49
      %p56 = scmp.eq.s32.totalorder %s44, 3
      %p57 = por %p55, %p56
      %p58 = scmp.ne.s32.totalorder %s49, %s50
      %p59 = scmp.eq.s32.totalorder %s44, 0
      %p60 = por %p58, %p59
      %p61 = scmp.ne.s32.totalorder %s49, %s50
      %p62 = scmp.eq.s32.totalorder %s45, 3
      %p63 = por %p61, %p62
      %p65 = scmp.ne.s32.totalorder %s50, %s64
      %p66 = scmp.eq.s32.totalorder %s45, 0
      %p67 = por %p65, %p66
      %s69 = sadd.s32 %s68, 1
      %p72 = scmp.eq.s32.totalorder %s39, 3
      %p73 = scmp.ne.s32.totalorder %s68, %s70
      %p74 = scmp.eq.s32.totalorder %s39, 0
      %p75 = por %p73, %p74
      %p76 = scmp.ne.s32.totalorder %s68, %s70
      %p77 = scmp.eq.s32.totalorder %s44, 3
      %p78 = por %p76, %p77
      %p79 = scmp.ne.s32.totalorder %s70, %s71
      %p80 = scmp.eq.s32.totalorder %s44, 0
      %p81 = por %p79, %p80
      %p82 = scmp.ne.s32.totalorder %s70, %s71
      %p83 = scmp.eq.s32.totalorder %s45, 3
      %p84 = por %p82, %p83
      %p86 = scmp.ne.s32.totalorder %s71, %s85
      %p87 = scmp.eq.s32.totalorder %s45, 0
      %p88 = por %p86, %p87
      %s90 = sadd.s32 %s89, 1
      %p93 = scmp.eq.s32.totalorder %s39, 3
      %p94 = scmp.ne.s32.totalorder %s89, %s91
      %p95 = scmp.eq.s32.totalorder %s39, 0
      %p96 = por %p94, %p95
      %p97 = scmp.ne.s32.totalorder %s89, %s91
      %p98 = scmp.eq.s32.totalorder %s44, 3
      %p99 = por %p97, %p98
      %p100 = scmp.ne.s32.totalorder %s91, %s92
      %p101 = scmp.eq.s32.totalorder %s44, 0
      %p102 = por %p100, %p101
      %p103 = scmp.ne.s32.totalorder %s91, %s92
      %p104 = scmp.eq.s32.totalorder %s45, 3
      %p105 = por %p103, %p104
      %p107 = scmp.ne.s32.totalorder %s92, %s106
      %p108 = scmp.eq.s32.totalorder %s45, 0
      %p109 = por %p107, %p108
      %s111 = sadd.s32 %s110, 1
      %p114 = scmp.eq.s32.totalorder %s39, 3
      %p115 = scmp.ne.s32.totalorder %s110, %s112
      %p116 = scmp.eq.s32.totalorder %s39, 0
      %p117 = por %p115, %p116
      %p118 = scmp.ne.s32.totalorder %s110, %s112
      %p119 = scmp.eq.s32.totalorder %s44, 3
      %p120 = por %p118, %p119
      %p121 = scmp.ne.s32.totalorder %s112, %s113
      %p122 = scmp.eq.s32.totalorder %s44, 0
      %p123 = por %p121, %p122
      %p124 = scmp.ne.s32.totalorder %s112, %s113
      %p125 = scmp.eq.s32.totalorder %s45, 3
      %p126 = por %p124, %p125
      %p128 = scmp.ne.s32.totalorder %s113, %s127
      %p129 = scmp.eq.s32.totalorder %s45, 0
      %p130 = por %p128, %p129
      %s132 = sadd.s32 %s131, 1
      %p135 = scmp.eq.s32.totalorder %s39, 3
      %p136 = scmp.ne.s32.totalorder %s131, %s133
      %p137 = scmp.eq.s32.totalorder %s39, 0
      %p138 = por %p136, %p137
      %p139 = scmp.ne.s32.totalorder %s131, %s133
      %p140 = scmp.eq.s32.totalorder %s44, 3
      %p141 = por %p139, %p140
      %p142 = scmp.ne.s32.totalorder %s133, %s134
      %p143 = scmp.eq.s32.totalorder %s44, 0
      %p144 = por %p142, %p143
      %p145 = scmp.ne.s32.totalorder %s133, %s134
      %p146 = scmp.eq.s32.totalorder %s45, 3
      %p147 = por %p145, %p146
      %p149 = scmp.ne.s32.totalorder %s134, %s148
      %p150 = scmp.eq.s32.totalorder %s45, 0
      %p151 = por %p149, %p150
      %s152 = ssub.s32 %s39, %s46
      %p153 = scmp.eq.s32.totalorder %s152, 0
      %s155 = sadd.s32 %s154, 1
      %s156 = scalar_select %p153, %s154, %s155
      %p159 = pneg %p153
      %p160 = scmp.eq.s32.totalorder %s39, 3
      %p161 = por %p159, %p160
      %p162 = scmp.ne.s32.totalorder %s154, %s157
      %p163 = scmp.eq.s32.totalorder %s39, 0
      %p164 = por %p162, %p163
      %p165 = scmp.ne.s32.totalorder %s154, %s157
      %p166 = scmp.eq.s32.totalorder %s44, 3
      %p167 = por %p165, %p166
      %p168 = scmp.ne.s32.totalorder %s157, %s158
      %p169 = scmp.eq.s32.totalorder %s44, 0
      %p170 = por %p168, %p169
      %p171 = scmp.ne.s32.totalorder %s157, %s158
      %p172 = scmp.eq.s32.totalorder %s45, 3
      %p173 = por %p171, %p172
      %p175 = scmp.ne.s32.totalorder %s158, %s174
      %p176 = scmp.eq.s32.totalorder %s45, 0
      %p177 = por %p175, %p176
      %s178 = ssub.s32 %s39, %s46
      %p179 = scmp.eq.s32.totalorder %s178, 0
      %s181 = sadd.s32 %s180, 1
      %s182 = scalar_select %p179, %s180, %s181
      %p185 = pneg %p179
      %p186 = scmp.eq.s32.totalorder %s39, 3
      %p187 = por %p185, %p186
      %p188 = scmp.ne.s32.totalorder %s180, %s183
      %p189 = scmp.eq.s32.totalorder %s39, 0
      %p190 = por %p188, %p189
      %p191 = scmp.ne.s32.totalorder %s180, %s183
      %p192 = scmp.eq.s32.totalorder %s44, 3
      %p193 = por %p191, %p192
      %p194 = scmp.ne.s32.totalorder %s183, %s184
      %p195 = scmp.eq.s32.totalorder %s44, 0
      %p196 = por %p194, %p195
      %p197 = scmp.ne.s32.totalorder %s183, %s184
      %p198 = scmp.eq.s32.totalorder %s45, 3
      %p199 = por %p197, %p198
      %p201 = scmp.ne.s32.totalorder %s184, %s200
      %p202 = scmp.eq.s32.totalorder %s45, 0
      %p203 = por %p201, %p202
      %s204 = ssub.s32 %s39, %s46
      %p205 = scmp.eq.s32.totalorder %s204, 0
      %s207 = sadd.s32 %s206, 1
      %s208 = scalar_select %p205, %s206, %s207
      %p211 = pneg %p205
      %p212 = scmp.eq.s32.totalorder %s39, 3
      %p213 = por %p211, %p212
      %p214 = scmp.ne.s32.totalorder %s206, %s209
      %p215 = scmp.eq.s32.totalorder %s39, 0
      %p216 = por %p214, %p215
      %p217 = scmp.ne.s32.totalorder %s206, %s209
      %p218 = scmp.eq.s32.totalorder %s44, 3
      %p219 = por %p217, %p218
      %p220 = scmp.ne.s32.totalorder %s209, %s210
      %p221 = scmp.eq.s32.totalorder %s44, 0
      %p222 = por %p220, %p221
      %p223 = scmp.ne.s32.totalorder %s209, %s210
      %p224 = scmp.eq.s32.totalorder %s45, 3
      %p225 = por %p223, %p224
      %p227 = scmp.ne.s32.totalorder %s210, %s226
      %p228 = scmp.eq.s32.totalorder %s45, 0
      %p229 = por %p227, %p228
      %s230 = ssub.s32 %s39, %s46
      %p231 = scmp.eq.s32.totalorder %s230, 0
      %s233 = sadd.s32 %s232, 1
      %s234 = scalar_select %p231, %s232, %s233
      %p237 = pneg %p231
      %p238 = scmp.eq.s32.totalorder %s39, 3
      %p239 = por %p237, %p238
      %p240 = scmp.ne.s32.totalorder %s232, %s235
      %p241 = scmp.eq.s32.totalorder %s39, 0
      %p242 = por %p240, %p241
      %p243 = scmp.ne.s32.totalorder %s232, %s235
      %p244 = scmp.eq.s32.totalorder %s44, 3
      %p245 = por %p243, %p244
      %p246 = scmp.ne.s32.totalorder %s235, %s236
      %p247 = scmp.eq.s32.totalorder %s44, 0
      %p248 = por %p246, %p247
      %p249 = scmp.ne.s32.totalorder %s235, %s236
      %p250 = scmp.eq.s32.totalorder %s45, 3
      %p251 = por %p249, %p250
      %p253 = scmp.ne.s32.totalorder %s236, %s252
      %p254 = scmp.eq.s32.totalorder %s45, 0
      %p255 = por %p253, %p254
      %s256 = ssub.s32 %s39, %s46
      %p257 = scmp.eq.s32.totalorder %s256, 0
      %s259 = sadd.s32 %s258, 1
      %s260 = scalar_select %p257, %s258, %s259
      %p263 = pneg %p257
      %p264 = scmp.eq.s32.totalorder %s39, 3
      %p265 = por %p263, %p264
      %p266 = scmp.ne.s32.totalorder %s258, %s261
      %p267 = scmp.eq.s32.totalorder %s39, 0
      %p268 = por %p266, %p267
      %p269 = scmp.ne.s32.totalorder %s258, %s261
      %p270 = scmp.eq.s32.totalorder %s44, 3
      %p271 = por %p269, %p270
      %p272 = scmp.ne.s32.totalorder %s261, %s262
      %p273 = scmp.eq.s32.totalorder %s44, 0
      %p274 = por %p272, %p273
      %p275 = scmp.ne.s32.totalorder %s261, %s262
      %p276 = scmp.eq.s32.totalorder %s45, 3
      %p277 = por %p275, %p276
      %p279 = scmp.ne.s32.totalorder %s262, %s278
      %p280 = scmp.eq.s32.totalorder %s45, 0
      %p281 = por %p279, %p280
      %s282 = ssub.s32 %s39, %s46
      %p283 = scmp.eq.s32.totalorder %s282, 0
      %s285 = sadd.s32 %s284, 1
      %s286 = scalar_select %p283, %s284, %s285
      %p289 = pneg %p283
      %p290 = scmp.eq.s32.totalorder %s39, 3
      %p291 = por %p289, %p290
      %p292 = scmp.ne.s32.totalorder %s284, %s287
      %p293 = scmp.eq.s32.totalorder %s39, 0
      %p294 = por %p292, %p293
      %p295 = scmp.ne.s32.totalorder %s284, %s287
      %p296 = scmp.eq.s32.totalorder %s44, 3
      %p297 = por %p295, %p296
      %p298 = scmp.ne.s32.totalorder %s287, %s288
      %p299 = scmp.eq.s32.totalorder %s44, 0
      %p300 = por %p298, %p299
      %p301 = scmp.ne.s32.totalorder %s287, %s288
      %p302 = scmp.eq.s32.totalorder %s45, 3
      %p303 = por %p301, %p302
      %p305 = scmp.ne.s32.totalorder %s288, %s304
      %p306 = scmp.eq.s32.totalorder %s45, 0
      %p307 = por %p305, %p306
      %s308 = ssub.s32 %s39, %s46
      %p309 = scmp.eq.s32.totalorder %s308, 0
      %s311 = sadd.s32 %s310, 1
      %s312 = scalar_select %p309, %s310, %s311
      %p315 = pneg %p309
      %p316 = scmp.eq.s32.totalorder %s39, 3
      %p317 = por %p315, %p316
      %p318 = scmp.ne.s32.totalorder %s310, %s313
      %p319 = scmp.eq.s32.totalorder %s39, 0
      %p320 = por %p318, %p319
      %p321 = scmp.ne.s32.totalorder %s310, %s313
      %p322 = scmp.eq.s32.totalorder %s44, 3
      %p323 = por %p321, %p322
      %p324 = scmp.ne.s32.totalorder %s313, %s314
      %p325 = scmp.eq.s32.totalorder %s44, 0
      %p326 = por %p324, %p325
      %p327 = scmp.ne.s32.totalorder %s313, %s314
      %p328 = scmp.eq.s32.totalorder %s45, 3
      %p329 = por %p327, %p328
      %p331 = scmp.ne.s32.totalorder %s314, %s330
      %p332 = scmp.eq.s32.totalorder %s45, 0
      %p333 = por %p331, %p332
      %s334 = ssub.s32 %s39, %s46
      %p335 = scmp.eq.s32.totalorder %s334, 0
      %s337 = sadd.s32 %s336, 1
      %s338 = scalar_select %p335, %s336, %s337
      %p341 = pneg %p335
      %p342 = scmp.eq.s32.totalorder %s39, 3
      %p343 = por %p341, %p342
      %p344 = scmp.ne.s32.totalorder %s336, %s339
      %p345 = scmp.eq.s32.totalorder %s39, 0
      %p346 = por %p344, %p345
      %p347 = scmp.ne.s32.totalorder %s336, %s339
      %p348 = scmp.eq.s32.totalorder %s44, 3
      %p349 = por %p347, %p348
      %p350 = scmp.ne.s32.totalorder %s339, %s340
      %p351 = scmp.eq.s32.totalorder %s44, 0
      %p352 = por %p350, %p351
      %p353 = scmp.ne.s32.totalorder %s339, %s340
      %p354 = scmp.eq.s32.totalorder %s45, 3
      %p355 = por %p353, %p354
      %p357 = scmp.ne.s32.totalorder %s340, %s356
      %p358 = scmp.eq.s32.totalorder %s45, 0
      %p359 = por %p357, %p358
      %s360 = ssub.s32 %s39, %s46
      %p361 = scmp.eq.s32.totalorder %s360, 0
      %s363 = sadd.s32 %s362, 1
      %s364 = scalar_select %p361, %s362, %s363
      %p367 = pneg %p361
      %p368 = scmp.eq.s32.totalorder %s39, 3
      %p369 = por %p367, %p368
      %p370 = scmp.ne.s32.totalorder %s362, %s365
      %p371 = scmp.eq.s32.totalorder %s39, 0
      %p372 = por %p370, %p371
      %p373 = scmp.ne.s32.totalorder %s362, %s365
      %p374 = scmp.eq.s32.totalorder %s44, 3
      %p375 = por %p373, %p374
      %p376 = scmp.ne.s32.totalorder %s365, %s366
      %p377 = scmp.eq.s32.totalorder %s44, 0
      %p378 = por %p376, %p377
      %p379 = scmp.ne.s32.totalorder %s365, %s366
      %p380 = scmp.eq.s32.totalorder %s45, 3
      %p381 = por %p379, %p380
      %p383 = scmp.ne.s32.totalorder %s366, %s382
      %p384 = scmp.eq.s32.totalorder %s45, 0
      %p385 = por %p383, %p384
      %s386 = ssub.s32 %s39, %s46
      %p387 = scmp.eq.s32.totalorder %s386, 0
      %s389 = sadd.s32 %s388, 1
      %s390 = scalar_select %p387, %s388, %s389
      %p393 = pneg %p387
      %p394 = scmp.eq.s32.totalorder %s39, 3
      %p395 = por %p393, %p394
      %p396 = scmp.ne.s32.totalorder %s388, %s391
      %p397 = scmp.eq.s32.totalorder %s39, 0
      %p398 = por %p396, %p397
      %p399 = scmp.ne.s32.totalorder %s388, %s391
      %p400 = scmp.eq.s32.totalorder %s44, 3
      %p401 = por %p399, %p400
      %p402 = scmp.ne.s32.totalorder %s391, %s392
      %p403 = scmp.eq.s32.totalorder %s44, 0
      %p404 = por %p402, %p403
      %p405 = scmp.ne.s32.totalorder %s391, %s392
      %p406 = scmp.eq.s32.totalorder %s45, 3
      %p407 = por %p405, %p406
      %p409 = scmp.ne.s32.totalorder %s392, %s408
      %p410 = scmp.eq.s32.totalorder %s45, 0
      %p411 = por %p409, %p410
      %s412 = ssub.s32 %s39, %s46
      %p413 = scmp.eq.s32.totalorder %s412, 0
      %s415 = sadd.s32 %s414, 1
      %s416 = scalar_select %p413, %s414, %s415
      %p419 = pneg %p413
      %p420 = scmp.eq.s32.totalorder %s39, 3
      %p421 = por %p419, %p420
      %p422 = scmp.ne.s32.totalorder %s414, %s417
      %p423 = scmp.eq.s32.totalorder %s39, 0
      %p424 = por %p422, %p423
      %p425 = scmp.ne.s32.totalorder %s414, %s417
      %p426 = scmp.eq.s32.totalorder %s44, 3
      %p427 = por %p425, %p426
      %p428 = scmp.ne.s32.totalorder %s417, %s418
      %p429 = scmp.eq.s32.totalorder %s44, 0
      %p430 = por %p428, %p429
      %p431 = scmp.ne.s32.totalorder %s417, %s418
      %p432 = scmp.eq.s32.totalorder %s45, 3
      %p433 = por %p431, %p432
      %p435 = scmp.ne.s32.totalorder %s418, %s434
      %p436 = scmp.eq.s32.totalorder %s45, 0
      %p437 = por %p435, %p436
      %s439 = sadd.s32 %s438, 1
      %p442 = scmp.eq.s32.totalorder %s39, 3
      %p443 = scmp.ne.s32.totalorder %s438, %s440
      %p444 = scmp.eq.s32.totalorder %s39, 0
      %p445 = por %p443, %p444
      %p446 = scmp.ne.s32.totalorder %s438, %s440
      %p447 = scmp.eq.s32.totalorder %s44, 3
      %p448 = por %p446, %p447
      %p449 = scmp.ne.s32.totalorder %s440, %s441
      %p450 = scmp.eq.s32.totalorder %s44, 0
      %p451 = por %p449, %p450
      %p452 = scmp.ne.s32.totalorder %s440, %s441
      %p453 = scmp.eq.s32.totalorder %s45, 3
      %p454 = por %p452, %p453
      %p456 = scmp.ne.s32.totalorder %s441, %s455
      %p457 = scmp.eq.s32.totalorder %s45, 0
      %p458 = por %p456, %p457
      %s460 = sadd.s32 %s459, 1
      %p463 = scmp.eq.s32.totalorder %s39, 3
      %p464 = scmp.ne.s32.totalorder %s459, %s461
      %p465 = scmp.eq.s32.totalorder %s39, 0
      %p466 = por %p464, %p465
      %p467 = scmp.ne.s32.totalorder %s459, %s461
      %p468 = scmp.eq.s32.totalorder %s44, 3
      %p469 = por %p467, %p468
      %p470 = scmp.ne.s32.totalorder %s461, %s462
      %p471 = scmp.eq.s32.totalorder %s44, 0
      %p472 = por %p470, %p471
      %p473 = scmp.ne.s32.totalorder %s461, %s462
      %p474 = scmp.eq.s32.totalorder %s45, 3
      %p475 = por %p473, %p474
      %p477 = scmp.ne.s32.totalorder %s462, %s476
      %p478 = scmp.eq.s32.totalorder %s45, 0
      %p479 = por %p477, %p478
      %s481 = sadd.s32 %s480, 1
      %p484 = scmp.eq.s32.totalorder %s39, 3
      %p485 = scmp.ne.s32.totalorder %s480, %s482
      %p486 = scmp.eq.s32.totalorder %s39, 0
      %p487 = por %p485, %p486
      %p488 = scmp.ne.s32.totalorder %s480, %s482
      %p489 = scmp.eq.s32.totalorder %s44, 3
      %p490 = por %p488, %p489
      %p491 = scmp.ne.s32.totalorder %s482, %s483
      %p492 = scmp.eq.s32.totalorder %s44, 0
      %p493 = por %p491, %p492
      %p494 = scmp.ne.s32.totalorder %s482, %s483
      %p495 = scmp.eq.s32.totalorder %s45, 3
      %p496 = por %p494, %p495
      %p498 = scmp.ne.s32.totalorder %s483, %s497
      %p499 = scmp.eq.s32.totalorder %s45, 0
      %p500 = por %p498, %p499
      %s502 = sadd.s32 %s501, 1
      %p505 = scmp.eq.s32.totalorder %s39, 3
      %p506 = scmp.ne.s32.totalorder %s501, %s503
      %p507 = scmp.eq.s32.totalorder %s39, 0
      %p508 = por %p506, %p507
      %p509 = scmp.ne.s32.totalorder %s501, %s503
      %p510 = scmp.eq.s32.totalorder %s44, 3
      %p511 = por %p509, %p510
      %p512 = scmp.ne.s32.totalorder %s503, %s504
      %p513 = scmp.eq.s32.totalorder %s44, 0
      %p514 = por %p512, %p513
      %p515 = scmp.ne.s32.totalorder %s503, %s504
      %p516 = scmp.eq.s32.totalorder %s45, 3
      %p517 = por %p515, %p516
      %p519 = scmp.ne.s32.totalorder %s504, %s518
      %p520 = scmp.eq.s32.totalorder %s45, 0
      %p521 = por %p519, %p520
      %s523 = sadd.s32 %s522, 1
      %p526 = scmp.eq.s32.totalorder %s39, 3
      %p527 = scmp.ne.s32.totalorder %s522, %s524
      %p528 = scmp.eq.s32.totalorder %s39, 0
      %p529 = por %p527, %p528
      %p530 = scmp.ne.s32.totalorder %s522, %s524
      %p531 = scmp.eq.s32.totalorder %s44, 3
      %p532 = por %p530, %p531
      %p533 = scmp.ne.s32.totalorder %s524, %s525
      %p534 = scmp.eq.s32.totalorder %s44, 0
      %p535 = por %p533, %p534
      %p536 = scmp.ne.s32.totalorder %s524, %s525
      %p537 = scmp.eq.s32.totalorder %s45, 3
      %p538 = por %p536, %p537
      %p540 = scmp.ne.s32.totalorder %s525, %s539
      %p541 = scmp.eq.s32.totalorder %s45, 0
      %p542 = por %p540, %p541
      %s544 = sadd.s32 %s543, 1
      %p547 = scmp.eq.s32.totalorder %s39, 3
      %p548 = scmp.ne.s32.totalorder %s543, %s545
      %p549 = scmp.eq.s32.totalorder %s39, 0
      %p550 = por %p548, %p549
      %p551 = scmp.ne.s32.totalorder %s543, %s545
      %p552 = scmp.eq.s32.totalorder %s44, 3
      %p553 = por %p551, %p552
      %p554 = scmp.ne.s32.totalorder %s545, %s546
      %p555 = scmp.eq.s32.totalorder %s44, 0
      %p556 = por %p554, %p555
      %p557 = scmp.ne.s32.totalorder %s545, %s546
      %p558 = scmp.eq.s32.totalorder %s45, 3
      %p559 = por %p557, %p558
      %p561 = scmp.ne.s32.totalorder %s546, %s560
      %p562 = scmp.eq.s32.totalorder %s45, 0
      %p563 = por %p561, %p562
      %s565 = sadd.s32 %s564, 1
      %p568 = scmp.eq.s32.totalorder %s39, 3
      %p569 = scmp.ne.s32.totalorder %s564, %s566
      %p570 = scmp.eq.s32.totalorder %s39, 0
      %p571 = por %p569, %p570
      %p572 = scmp.ne.s32.totalorder %s564, %s566
      %p573 = scmp.eq.s32.totalorder %s44, 3
      %p574 = por %p572, %p573
      %p575 = scmp.ne.s32.totalorder %s566, %s567
      %p576 = scmp.eq.s32.totalorder %s44, 0
      %p577 = por %p575, %p576
      %p578 = scmp.ne.s32.totalorder %s566, %s567
      %p579 = scmp.eq.s32.totalorder %s45, 3
      %p580 = por %p578, %p579
      %p582 = scmp.ne.s32.totalorder %s567, %s581
      %p583 = scmp.eq.s32.totalorder %s45, 0
      %p584 = por %p582, %p583
      %s586 = sadd.s32 %s585, 1
      %p589 = scmp.eq.s32.totalorder %s39, 3
      %p590 = scmp.ne.s32.totalorder %s585, %s587
      %p591 = scmp.eq.s32.totalorder %s39, 0
      %p592 = por %p590, %p591
      %p593 = scmp.ne.s32.totalorder %s585, %s587
      %p594 = scmp.eq.s32.totalorder %s44, 3
      %p595 = por %p593, %p594
      %p596 = scmp.ne.s32.totalorder %s587, %s588
      %p597 = scmp.eq.s32.totalorder %s44, 0
      %p598 = por %p596, %p597
      %p599 = scmp.ne.s32.totalorder %s587, %s588
      %p600 = scmp.eq.s32.totalorder %s45, 3
      %p601 = por %p599, %p600
      %p603 = scmp.ne.s32.totalorder %s588, %s602
      %p604 = scmp.eq.s32.totalorder %s45, 0
      %p605 = por %p603, %p604
      %s607 = sadd.s32 %s606, 1
      %p610 = scmp.eq.s32.totalorder %s39, 3
      %p611 = scmp.ne.s32.totalorder %s606, %s608
      %p612 = scmp.eq.s32.totalorder %s39, 0
      %p613 = por %p611, %p612
      %p614 = scmp.ne.s32.totalorder %s606, %s608
      %p615 = scmp.eq.s32.totalorder %s44, 3
      %p616 = por %p614, %p615
      %p617 = scmp.ne.s32.totalorder %s608, %s609
      %p618 = scmp.eq.s32.totalorder %s44, 0
      %p619 = por %p617, %p618
      %p620 = scmp.ne.s32.totalorder %s608, %s609
      %p621 = scmp.eq.s32.totalorder %s45, 3
      %p622 = por %p620, %p621
      %p624 = scmp.ne.s32.totalorder %s609, %s623
      %p625 = scmp.eq.s32.totalorder %s45, 0
      %p626 = por %p624, %p625
      %s628 = sadd.s32 %s627, 1
      %p631 = scmp.eq.s32.totalorder %s39, 3
      %p632 = scmp.ne.s32.totalorder %s627, %s629
      %p633 = scmp.eq.s32.totalorder %s39, 0
      %p634 = por %p632, %p633
      %p635 = scmp.ne.s32.totalorder %s627, %s629
      %p636 = scmp.eq.s32.totalorder %s44, 3
      %p637 = por %p635, %p636
      %p638 = scmp.ne.s32.totalorder %s629, %s630
      %p639 = scmp.eq.s32.totalorder %s44, 0
      %p640 = por %p638, %p639
      %p641 = scmp.ne.s32.totalorder %s629, %s630
      %p642 = scmp.eq.s32.totalorder %s45, 3
      %p643 = por %p641, %p642
      %p645 = scmp.ne.s32.totalorder %s630, %s644
      %p646 = scmp.eq.s32.totalorder %s45, 0
      %p647 = por %p645, %p646
      %p648 = scmp.le.s32.totalorder 1, %s39
      %p649 = scmp.lt.s32.totalorder %s39, 5
      %p650 = pnand %p648, %p649
      %p651 = pneg %p650
      // Predicated region
      $region9: #{ibot_forward.1} parent=5 // pred_check
        _
      $region10: #{ibot_forward.1} parent=5 // pred_check_branch
        %653 = sbr.rel (%p650) target = $region12
      $region11: #{ibot_forward.1} parent=5 // pred_region
        %s654 = ssub.s32 %s39, 1
        // Predicated region
        $region13: #{ibot_forward.1} parent=11 // pred_check
          %p655 = pneg %p60
        $region14: #{ibot_forward.1} parent=11 // pred_check_branch
          %657 = sbr.rel (%p655) target = $region16
        $region15: #{ibot_forward.1} parent=11 // pred_region
          _
        $region16: #{ibot_forward.1} parent=11 // pred_fallthru
          _
        // Predicated region
        $region17: #{ibot_forward.1} parent=11 // pred_check
          %p658 = pneg %p81
        $region18: #{ibot_forward.1} parent=11 // pred_check_branch
          %660 = sbr.rel (%p658) target = $region20
        $region19: #{ibot_forward.1} parent=11 // pred_region
          %662 = vsyncadd [#allocation5], 0
          %s663 = sshll.u32 %s1, 4
          %s664 = int_to_ptr.hbm [resolvable:$true] %s663
          %s665 = sshll.u32 [#allocation4], 4
          %s666 = int_to_ptr.vmem [resolvable:$true] %s665
          %671 = dma.hbm_to_vmem [thread:$0]  %s664, 256, %s666, [#allocation5], 128, 128, 8
        $region20: #{ibot_forward.1} parent=11 // pred_fallthru
          _
        // Predicated region
        $region21: #{ibot_forward.1} parent=11 // pred_check
          %p672 = pneg %p102
        $region22: #{ibot_forward.1} parent=11 // pred_check_branch
          %674 = sbr.rel (%p672) target = $region24
        $region23: #{ibot_forward.1} parent=11 // pred_region
          %676 = vsyncadd [#allocation8], 0
          %s677 = sshll.u32 %s2, 4
          %s678 = int_to_ptr.hbm [resolvable:$true] %s677
          %s679 = sshll.u32 [#allocation7], 4
          %s680 = int_to_ptr.vmem [resolvable:$true] %s679
          %685 = dma.hbm_to_vmem [thread:$0]  %s678, 256, %s680, [#allocation8], 128, 128, 8
        $region24: #{ibot_forward.1} parent=11 // pred_fallthru
          _
        // Predicated region
        $region25: #{ibot_forward.1} parent=11 // pred_check
          %p686 = pneg %p123
        $region26: #{ibot_forward.1} parent=11 // pred_check_branch
          %688 = sbr.rel (%p686) target = $region28
        $region27: #{ibot_forward.1} parent=11 // pred_region
          %690 = vsyncadd [#allocation8], 0
          %s692 = sshll.u32 %s3, 4
          %s693 = int_to_ptr.hbm [resolvable:$true] %s692
          %s694 = sshll.u32 [#allocation9], 4
          %s695 = int_to_ptr.vmem [resolvable:$true] %s694
          %697 = dma.hbm_to_vmem [thread:$0]  %s693, 64, %s695, [#allocation8]
        $region28: #{ibot_forward.1} parent=11 // pred_fallthru
          _
        // Predicated region
        $region29: #{ibot_forward.1} parent=11 // pred_check
          %p698 = pneg %p144
        $region30: #{ibot_forward.1} parent=11 // pred_check_branch
          %700 = sbr.rel (%p698) target = $region32
        $region31: #{ibot_forward.1} parent=11 // pred_region
          %702 = vsyncadd [#allocation11], 0
          %s703 = sshll.u32 %s4, 4
          %s704 = int_to_ptr.hbm [resolvable:$true] %s703
          %s705 = sshll.u32 [#allocation10], 4
          %s706 = int_to_ptr.vmem [resolvable:$true] %s705
          %711 = dma.hbm_to_vmem [thread:$0]  %s704, 6144, %s706, [#allocation11], 64, 64, 4
        $region32: #{ibot_forward.1} parent=11 // pred_fallthru
          _
        // Predicated region
        $region33: #{ibot_forward.1} parent=11 // pred_check
          %p712 = pneg %p451
        $region34: #{ibot_forward.1} parent=11 // pred_check_branch
          %714 = sbr.rel (%p712) target = $region36
        $region35: #{ibot_forward.1} parent=11 // pred_region
          %716 = vsyncadd [#allocation8], 0
          %s717 = sshll.u32 %s16, 4
          %s718 = int_to_ptr.hbm [resolvable:$true] %s717
          %s719 = sshll.u32 [#allocation23], 4
          %s720 = int_to_ptr.vmem [resolvable:$true] %s719
          %725 = dma.hbm_to_vmem [thread:$0]  %s718, 4096, %s720, [#allocation8], 256, 256, 16
        $region36: #{ibot_forward.1} parent=11 // pred_fallthru
          _
        // Predicated region
        $region37: #{ibot_forward.1} parent=11 // pred_check
          %p726 = pneg %p472
        $region38: #{ibot_forward.1} parent=11 // pred_check_branch
          %728 = sbr.rel (%p726) target = $region40
        $region39: #{ibot_forward.1} parent=11 // pred_region
          %730 = vsyncadd [#allocation11], 0
          %s732 = sshll.u32 %s17, 4
          %s733 = int_to_ptr.hbm [resolvable:$true] %s732
          %s734 = sshll.u32 [#allocation24], 4
          %s735 = int_to_ptr.vmem [resolvable:$true] %s734
          %737 = dma.hbm_to_vmem [thread:$0]  %s733, 64, %s735, [#allocation11]
        $region40: #{ibot_forward.1} parent=11 // pred_fallthru
          _
        // Predicated region
        $region41: #{ibot_forward.1} parent=11 // pred_check
          %p738 = pneg %p493
        $region42: #{ibot_forward.1} parent=11 // pred_check_branch
          %740 = sbr.rel (%p738) target = $region44
        $region43: #{ibot_forward.1} parent=11 // pred_region
          %742 = vsyncadd [#allocation26], 0
          %s743 = sshll.u32 %s18, 4
          %s744 = int_to_ptr.hbm [resolvable:$true] %s743
          %s745 = sshll.u32 [#allocation25], 4
          %s746 = int_to_ptr.vmem [resolvable:$true] %s745
          %751 = dma.hbm_to_vmem [thread:$0]  %s744, 65536, %s746, [#allocation26], 1024, 1024, 64
        $region44: #{ibot_forward.1} parent=11 // pred_fallthru
          _
        // Predicated region
        $region45: #{ibot_forward.1} parent=11 // pred_check
          %p752 = pneg %p514
        $region46: #{ibot_forward.1} parent=11 // pred_check_branch
          %754 = sbr.rel (%p752) target = $region48
        $region47: #{ibot_forward.1} parent=11 // pred_region
          %756 = vsyncadd [#allocation26], 0
          %s758 = sshll.u32 %s19, 4
          %s759 = int_to_ptr.hbm [resolvable:$true] %s758
          %s760 = sshll.u32 [#allocation27], 4
          %s761 = int_to_ptr.vmem [resolvable:$true] %s760
          %763 = dma.hbm_to_vmem [thread:$0]  %s759, 256, %s761, [#allocation26]
        $region48: #{ibot_forward.1} parent=11 // pred_fallthru
          _
        // Predicated region
        $region49: #{ibot_forward.1} parent=11 // pred_check
          %p764 = pneg %p535
        $region50: #{ibot_forward.1} parent=11 // pred_check_branch
          %766 = sbr.rel (%p764) target = $region52
        $region51: #{ibot_forward.1} parent=11 // pred_region
          %768 = vsyncadd [#allocation29], 0
          %s769 = sshll.u32 %s20, 4
          %s770 = int_to_ptr.hbm [resolvable:$true] %s769
          %s771 = sshll.u32 [#allocation28], 4
          %s772 = int_to_ptr.vmem [resolvable:$true] %s771
          %777 = dma.hbm_to_vmem [thread:$0]  %s770, 4096, %s772, [#allocation29], 256, 256, 16
        $region52: #{ibot_forward.1} parent=11 // pred_fallthru
          _
        // Predicated region
        $region53: #{ibot_forward.1} parent=11 // pred_check
          %p778 = pneg %p556
        $region54: #{ibot_forward.1} parent=11 // pred_check_branch
          %780 = sbr.rel (%p778) target = $region56
        $region55: #{ibot_forward.1} parent=11 // pred_region
          %782 = vsyncadd [#allocation29], 0
          %s784 = sshll.u32 %s21, 4
          %s785 = int_to_ptr.hbm [resolvable:$true] %s784
          %s786 = sshll.u32 [#allocation30], 4
          %s787 = int_to_ptr.vmem [resolvable:$true] %s786
          %789 = dma.hbm_to_vmem [thread:$0]  %s785, 64, %s787, [#allocation29]
        $region56: #{ibot_forward.1} parent=11 // pred_fallthru
          _
      $region12: #{ibot_forward.1} parent=5 // pred_fallthru
        _
      %p790 = scmp.lt.s32.totalorder %s39, 4
      // Predicated region
      $region57: #{ibot_forward.1} parent=5 // pred_check
        %p791 = pneg %p790
      $region58: #{ibot_forward.1} parent=5 // pred_check_branch
        %793 = sbr.rel (%p791) target = $region60
      $region59: #{ibot_forward.1} parent=5 // pred_region
        // Predicated region
        $region61: #{ibot_forward.1} parent=59 // pred_check
          %p794 = pneg %p164
        $region62: #{ibot_forward.1} parent=59 // pred_check_branch
          %796 = sbr.rel (%p794) target = $region64
        $region63: #{ibot_forward.1} parent=59 // pred_region
          %s797 = sand.u32 %s39, 1
          %s798 = scalar_lea.sflag [#allocation5], %s797
          %s799 = sand.u32 %s154, 1
          %s800 = scalar_lea.vmem [#allocation12], %s799
          %802 = vsyncadd %s798, 0
          %s803 = scalar_lea.hbm %s5, %s39
          %s805 = sshll.u32 %s803, 4
          %s806 = int_to_ptr.hbm [resolvable:$true] %s805
          %s807 = sshll.u32 %s800, 4
          %s808 = int_to_ptr.vmem [resolvable:$true] %s807
          %810 = dma.hbm_to_vmem [thread:$0]  %s806, 16, %s808, %s798
        $region64: #{ibot_forward.1} parent=59 // pred_fallthru
          _
        // Predicated region
        $region65: #{ibot_forward.1} parent=59 // pred_check
          %p811 = pneg %p190
        $region66: #{ibot_forward.1} parent=59 // pred_check_branch
          %813 = sbr.rel (%p811) target = $region68
        $region67: #{ibot_forward.1} parent=59 // pred_region
          %s814 = sand.u32 %s39, 1
          %s815 = scalar_lea.sflag [#allocation5], %s814
          %s816 = sand.u32 %s180, 1
          %s817 = scalar_lea.vmem [#allocation13], %s816
          %819 = vsyncadd %s815, 0
          %s820 = scalar_lea.hbm %s6, %s39
          %s822 = sshll.u32 %s820, 4
          %s823 = int_to_ptr.hbm [resolvable:$true] %s822
          %s824 = sshll.u32 %s817, 4
          %s825 = int_to_ptr.vmem [resolvable:$true] %s824
          %827 = dma.hbm_to_vmem [thread:$0]  %s823, 16, %s825, %s815
        $region68: #{ibot_forward.1} parent=59 // pred_fallthru
          _
        // Predicated region
        $region69: #{ibot_forward.1} parent=59 // pred_check
          %p828 = pneg %p216
        $region70: #{ibot_forward.1} parent=59 // pred_check_branch
          %830 = sbr.rel (%p828) target = $region72
        $region71: #{ibot_forward.1} parent=59 // pred_region
          %s831 = sand.u32 %s39, 1
          %s832 = scalar_lea.sflag [#allocation5], %s831
          %s833 = sand.u32 %s206, 1
          %s834 = smul.addr %s833, 192
          %s835 = scalar_lea.vmem [#allocation14], %s834
          %837 = vsyncadd %s832, 0
          %s838 = smul.addr %s39, 48
          %s839 = smul.addr %s838, 4
          %s840 = scalar_lea.hbm %s7, %s839
          %s841 = sshll.u32 %s840, 4
          %s842 = int_to_ptr.hbm [resolvable:$true] %s841
          %s843 = sshll.u32 %s835, 4
          %s844 = int_to_ptr.vmem [resolvable:$true] %s843
          %849 = dma.hbm_to_vmem [thread:$0]  %s842, 3072, %s844, %s832, 192, 192, 12
        $region72: #{ibot_forward.1} parent=59 // pred_fallthru
          _
        // Predicated region
        $region73: #{ibot_forward.1} parent=59 // pred_check
          %p850 = pneg %p242
        $region74: #{ibot_forward.1} parent=59 // pred_check_branch
          %852 = sbr.rel (%p850) target = $region76
        $region75: #{ibot_forward.1} parent=59 // pred_region
          %s853 = sand.u32 %s39, 1
          %s854 = scalar_lea.sflag [#allocation5], %s853
          %s855 = sand.u32 %s232, 1
          %s856 = smul.addr %s855, 64
          %s857 = scalar_lea.vmem [#allocation15], %s856
          %859 = vsyncadd %s854, 0
          %s860 = smul.addr %s39, 16
          %s861 = smul.addr %s860, 4
          %s862 = scalar_lea.hbm %s8, %s861
          %s863 = sshll.u32 %s862, 4
          %s864 = int_to_ptr.hbm [resolvable:$true] %s863
          %s865 = sshll.u32 %s857, 4
          %s866 = int_to_ptr.vmem [resolvable:$true] %s865
          %871 = dma.hbm_to_vmem [thread:$0]  %s864, 1024, %s866, %s854, 64, 64, 4
        $region76: #{ibot_forward.1} parent=59 // pred_fallthru
          _
        // Predicated region
        $region77: #{ibot_forward.1} parent=59 // pred_check
          %p872 = pneg %p268
        $region78: #{ibot_forward.1} parent=59 // pred_check_branch
          %874 = sbr.rel (%p872) target = $region80
        $region79: #{ibot_forward.1} parent=59 // pred_region
          %s875 = sand.u32 %s39, 1
          %s876 = scalar_lea.sflag [#allocation5], %s875
          %s877 = sand.u32 %s258, 1
          %s878 = scalar_lea.vmem [#allocation16], %s877
          %880 = vsyncadd %s876, 0
          %s881 = scalar_lea.hbm %s9, %s39
          %s883 = sshll.u32 %s881, 4
          %s884 = int_to_ptr.hbm [resolvable:$true] %s883
          %s885 = sshll.u32 %s878, 4
          %s886 = int_to_ptr.vmem [resolvable:$true] %s885
          %888 = dma.hbm_to_vmem [thread:$0]  %s884, 16, %s886, %s876
        $region80: #{ibot_forward.1} parent=59 // pred_fallthru
          _
        // Predicated region
        $region81: #{ibot_forward.1} parent=59 // pred_check
          %p889 = pneg %p294
        $region82: #{ibot_forward.1} parent=59 // pred_check_branch
          %891 = sbr.rel (%p889) target = $region84
        $region83: #{ibot_forward.1} parent=59 // pred_region
          %s892 = sand.u32 %s39, 1
          %s893 = scalar_lea.sflag [#allocation5], %s892
          %s894 = sand.u32 %s284, 1
          %s895 = scalar_lea.vmem [#allocation17], %s894
          %897 = vsyncadd %s893, 0
          %s898 = scalar_lea.hbm %s10, %s39
          %s900 = sshll.u32 %s898, 4
          %s901 = int_to_ptr.hbm [resolvable:$true] %s900
          %s902 = sshll.u32 %s895, 4
          %s903 = int_to_ptr.vmem [resolvable:$true] %s902
          %905 = dma.hbm_to_vmem [thread:$0]  %s901, 16, %s903, %s893
        $region84: #{ibot_forward.1} parent=59 // pred_fallthru
          _
        // Predicated region
        $region85: #{ibot_forward.1} parent=59 // pred_check
          %p906 = pneg %p320
        $region86: #{ibot_forward.1} parent=59 // pred_check_branch
          %908 = sbr.rel (%p906) target = $region88
        $region87: #{ibot_forward.1} parent=59 // pred_region
          %s909 = sand.u32 %s39, 1
          %s910 = scalar_lea.sflag [#allocation5], %s909
          %s911 = sand.u32 %s310, 1
          %s912 = scalar_lea.vmem [#allocation18], %s911
          %914 = vsyncadd %s910, 0
          %s915 = scalar_lea.hbm %s11, %s39
          %s917 = sshll.u32 %s915, 4
          %s918 = int_to_ptr.hbm [resolvable:$true] %s917
          %s919 = sshll.u32 %s912, 4
          %s920 = int_to_ptr.vmem [resolvable:$true] %s919
          %922 = dma.hbm_to_vmem [thread:$0]  %s918, 16, %s920, %s910
        $region88: #{ibot_forward.1} parent=59 // pred_fallthru
          _
        // Predicated region
        $region89: #{ibot_forward.1} parent=59 // pred_check
          %p923 = pneg %p346
        $region90: #{ibot_forward.1} parent=59 // pred_check_branch
          %925 = sbr.rel (%p923) target = $region92
        $region91: #{ibot_forward.1} parent=59 // pred_region
          %s926 = sand.u32 %s39, 1
          %s927 = scalar_lea.sflag [#allocation5], %s926
          %s928 = sand.u32 %s336, 1
          %s929 = smul.addr %s928, 256
          %s930 = scalar_lea.vmem [#allocation19], %s929
          %932 = vsyncadd %s927, 0
          %s933 = smul.addr %s39, 64
          %s934 = smul.addr %s933, 4
          %s935 = scalar_lea.hbm %s12, %s934
          %s936 = sshll.u32 %s935, 4
          %s937 = int_to_ptr.hbm [resolvable:$true] %s936
          %s938 = sshll.u32 %s930, 4
          %s939 = int_to_ptr.vmem [resolvable:$true] %s938
          %944 = dma.hbm_to_vmem [thread:$0]  %s937, 4096, %s939, %s927, 256, 256, 16
        $region92: #{ibot_forward.1} parent=59 // pred_fallthru
          _
        // Predicated region
        $region93: #{ibot_forward.1} parent=59 // pred_check
          %p945 = pneg %p372
        $region94: #{ibot_forward.1} parent=59 // pred_check_branch
          %947 = sbr.rel (%p945) target = $region96
        $region95: #{ibot_forward.1} parent=59 // pred_region
          %s948 = sand.u32 %s39, 1
          %s949 = scalar_lea.sflag [#allocation5], %s948
          %s950 = sand.u32 %s362, 1
          %s951 = smul.addr %s950, 4
          %s952 = scalar_lea.vmem [#allocation20], %s951
          %954 = vsyncadd %s949, 0
          %s955 = smul.addr %s39, 4
          %s956 = scalar_lea.hbm %s13, %s955
          %s958 = sshll.u32 %s956, 4
          %s959 = int_to_ptr.hbm [resolvable:$true] %s958
          %s960 = sshll.u32 %s952, 4
          %s961 = int_to_ptr.vmem [resolvable:$true] %s960
          %963 = dma.hbm_to_vmem [thread:$0]  %s959, 64, %s961, %s949
        $region96: #{ibot_forward.1} parent=59 // pred_fallthru
          _
        // Predicated region
        $region97: #{ibot_forward.1} parent=59 // pred_check
          %p964 = pneg %p398
        $region98: #{ibot_forward.1} parent=59 // pred_check_branch
          %966 = sbr.rel (%p964) target = $region100
        $region99: #{ibot_forward.1} parent=59 // pred_region
          %s967 = sand.u32 %s39, 1
          %s968 = scalar_lea.sflag [#allocation5], %s967
          %s969 = sand.u32 %s388, 1
          %s970 = smul.addr %s969, 256
          %s971 = scalar_lea.vmem [#allocation21], %s970
          %973 = vsyncadd %s968, 0
          %s974 = smul.addr %s39, 64
          %s975 = smul.addr %s974, 4
          %s976 = scalar_lea.hbm %s14, %s975
          %s977 = sshll.u32 %s976, 4
          %s978 = int_to_ptr.hbm [resolvable:$true] %s977
          %s979 = sshll.u32 %s971, 4
          %s980 = int_to_ptr.vmem [resolvable:$true] %s979
          %985 = dma.hbm_to_vmem [thread:$0]  %s978, 4096, %s980, %s968, 64, 64, 4
        $region100: #{ibot_forward.1} parent=59 // pred_fallthru
          _
        // Predicated region
        $region101: #{ibot_forward.1} parent=59 // pred_check
          %p986 = pneg %p424
        $region102: #{ibot_forward.1} parent=59 // pred_check_branch
          %988 = sbr.rel (%p986) target = $region104
        $region103: #{ibot_forward.1} parent=59 // pred_region
          %s989 = sand.u32 %s39, 1
          %s990 = scalar_lea.sflag [#allocation5], %s989
          %s991 = sand.u32 %s414, 1
          %s992 = scalar_lea.vmem [#allocation22], %s991
          %994 = vsyncadd %s990, 0
          %s995 = scalar_lea.hbm %s15, %s39
          %s997 = sshll.u32 %s995, 4
          %s998 = int_to_ptr.hbm [resolvable:$true] %s997
          %s999 = sshll.u32 %s992, 4
          %s1000 = int_to_ptr.vmem [resolvable:$true] %s999
          %1002 = dma.hbm_to_vmem [thread:$0]  %s998, 16, %s1000, %s990
        $region104: #{ibot_forward.1} parent=59 // pred_fallthru
          _
      $region60: #{ibot_forward.1} parent=5 // pred_fallthru
        _
      %p1003 = scmp.le.s32.totalorder 1, %s39
      %p1004 = scmp.lt.s32.totalorder %s39, 5
      %p1005 = pnand %p1003, %p1004
      %p1006 = pneg %p1005
      // Predicated region
      $region105: #{ibot_forward.1} parent=5 // pred_check
        _
      $region106: #{ibot_forward.1} parent=5 // pred_check_branch
        %1008 = sbr.rel (%p1005) target = $region108
      $region107: #{ibot_forward.1} parent=5 // pred_region
        %s1009 = ssub.s32 %s39, 1
        // Predicated region
        $region109: #{ibot_forward.1} parent=107 // pred_check
          %p1010 = pneg %p81
        $region110: #{ibot_forward.1} parent=107 // pred_check_branch
          %1012 = sbr.rel (%p1010) target = $region112
        $region111: #{ibot_forward.1} parent=107 // pred_region
          %1014 = dma.done [#allocation5], 256
        $region112: #{ibot_forward.1} parent=107 // pred_fallthru
          _
        // Predicated region
        $region113: #{ibot_forward.1} parent=107 // pred_check
          %p1015 = pneg %p102
        $region114: #{ibot_forward.1} parent=107 // pred_check_branch
          %1017 = sbr.rel (%p1015) target = $region116
        $region115: #{ibot_forward.1} parent=107 // pred_region
          %1019 = dma.done [#allocation8], 256
        $region116: #{ibot_forward.1} parent=107 // pred_fallthru
          _
        // Predicated region
        $region117: #{ibot_forward.1} parent=107 // pred_check
          %p1020 = pneg %p123
        $region118: #{ibot_forward.1} parent=107 // pred_check_branch
          %1022 = sbr.rel (%p1020) target = $region120
        $region119: #{ibot_forward.1} parent=107 // pred_region
          %1024 = dma.done [#allocation8], 64
        $region120: #{ibot_forward.1} parent=107 // pred_fallthru
          _
        // Predicated region
        $region121: #{ibot_forward.1} parent=107 // pred_check
          %p1025 = pneg %p144
        $region122: #{ibot_forward.1} parent=107 // pred_check_branch
          %1027 = sbr.rel (%p1025) target = $region124
        $region123: #{ibot_forward.1} parent=107 // pred_region
          %1029 = dma.done [#allocation11], 6144
        $region124: #{ibot_forward.1} parent=107 // pred_fallthru
          _
        %s1030 = sand.u32 %s44, 1
        %s1031 = scalar_lea.sflag [#allocation5], %s1030
        %s1032 = sand.u32 %s157, 1
        %s1033 = scalar_lea.vmem [#allocation12], %s1032
        // Predicated region
        $region125: #{ibot_forward.1} parent=107 // pred_check
          %p1034 = pneg %p170
        $region126: #{ibot_forward.1} parent=107 // pred_check_branch
          %1036 = sbr.rel (%p1034) target = $region128
        $region127: #{ibot_forward.1} parent=107 // pred_region
          %1038 = dma.done %s1031, 16
        $region128: #{ibot_forward.1} parent=107 // pred_fallthru
          _
        %s1039 = sand.u32 %s44, 1
        %s1040 = scalar_lea.sflag [#allocation5], %s1039
        %s1041 = sand.u32 %s183, 1
        %s1042 = scalar_lea.vmem [#allocation13], %s1041
        // Predicated region
        $region129: #{ibot_forward.1} parent=107 // pred_check
          %p1043 = pneg %p196
        $region130: #{ibot_forward.1} parent=107 // pred_check_branch
          %1045 = sbr.rel (%p1043) target = $region132
        $region131: #{ibot_forward.1} parent=107 // pred_region
          %1047 = dma.done %s1040, 16
        $region132: #{ibot_forward.1} parent=107 // pred_fallthru
          _
        %s1048 = sand.u32 %s44, 1
        %s1049 = scalar_lea.sflag [#allocation5], %s1048
        %s1050 = sand.u32 %s209, 1
        %s1051 = smul.addr %s1050, 192
        %s1052 = scalar_lea.vmem [#allocation14], %s1051
        // Predicated region
        $region133: #{ibot_forward.1} parent=107 // pred_check
          %p1053 = pneg %p222
        $region134: #{ibot_forward.1} parent=107 // pred_check_branch
          %1055 = sbr.rel (%p1053) target = $region136
        $region135: #{ibot_forward.1} parent=107 // pred_region
          %1057 = dma.done %s1049, 3072
        $region136: #{ibot_forward.1} parent=107 // pred_fallthru
          _
        %s1058 = sand.u32 %s44, 1
        %s1059 = scalar_lea.sflag [#allocation5], %s1058
        %s1060 = sand.u32 %s235, 1
        %s1061 = smul.addr %s1060, 64
        %s1062 = scalar_lea.vmem [#allocation15], %s1061
        // Predicated region
        $region137: #{ibot_forward.1} parent=107 // pred_check
          %p1063 = pneg %p248
        $region138: #{ibot_forward.1} parent=107 // pred_check_branch
          %1065 = sbr.rel (%p1063) target = $region140
        $region139: #{ibot_forward.1} parent=107 // pred_region
          %1067 = dma.done %s1059, 1024
        $region140: #{ibot_forward.1} parent=107 // pred_fallthru
          _
        %s1068 = sand.u32 %s44, 1
        %s1069 = scalar_lea.sflag [#allocation5], %s1068
        %s1070 = sand.u32 %s261, 1
        %s1071 = scalar_lea.vmem [#allocation16], %s1070
        // Predicated region
        $region141: #{ibot_forward.1} parent=107 // pred_check
          %p1072 = pneg %p274
        $region142: #{ibot_forward.1} parent=107 // pred_check_branch
          %1074 = sbr.rel (%p1072) target = $region144
        $region143: #{ibot_forward.1} parent=107 // pred_region
          %1076 = dma.done %s1069, 16
        $region144: #{ibot_forward.1} parent=107 // pred_fallthru
          _
        %s1077 = sand.u32 %s44, 1
        %s1078 = scalar_lea.sflag [#allocation5], %s1077
        %s1079 = sand.u32 %s287, 1
        %s1080 = scalar_lea.vmem [#allocation17], %s1079
        // Predicated region
        $region145: #{ibot_forward.1} parent=107 // pred_check
          %p1081 = pneg %p300
        $region146: #{ibot_forward.1} parent=107 // pred_check_branch
          %1083 = sbr.rel (%p1081) target = $region148
        $region147: #{ibot_forward.1} parent=107 // pred_region
          %1085 = dma.done %s1078, 16
        $region148: #{ibot_forward.1} parent=107 // pred_fallthru
          _
        %s1086 = sand.u32 %s44, 1
        %s1087 = scalar_lea.sflag [#allocation5], %s1086
        %s1088 = sand.u32 %s313, 1
        %s1089 = scalar_lea.vmem [#allocation18], %s1088
        // Predicated region
        $region149: #{ibot_forward.1} parent=107 // pred_check
          %p1090 = pneg %p326
        $region150: #{ibot_forward.1} parent=107 // pred_check_branch
          %1092 = sbr.rel (%p1090) target = $region152
        $region151: #{ibot_forward.1} parent=107 // pred_region
          %1094 = dma.done %s1087, 16
        $region152: #{ibot_forward.1} parent=107 // pred_fallthru
          _
        %s1095 = sand.u32 %s44, 1
        %s1096 = scalar_lea.sflag [#allocation5], %s1095
        %s1097 = sand.u32 %s339, 1
        %s1098 = smul.addr %s1097, 256
        %s1099 = scalar_lea.vmem [#allocation19], %s1098
        // Predicated region
        $region153: #{ibot_forward.1} parent=107 // pred_check
          %p1100 = pneg %p352
        $region154: #{ibot_forward.1} parent=107 // pred_check_branch
          %1102 = sbr.rel (%p1100) target = $region156
        $region155: #{ibot_forward.1} parent=107 // pred_region
          %1104 = dma.done %s1096, 4096
        $region156: #{ibot_forward.1} parent=107 // pred_fallthru
          _
        %s1105 = sand.u32 %s44, 1
        %s1106 = scalar_lea.sflag [#allocation5], %s1105
        %s1107 = sand.u32 %s365, 1
        %s1108 = smul.addr %s1107, 4
        %s1109 = scalar_lea.vmem [#allocation20], %s1108
        // Predicated region
        $region157: #{ibot_forward.1} parent=107 // pred_check
          %p1110 = pneg %p378
        $region158: #{ibot_forward.1} parent=107 // pred_check_branch
          %1112 = sbr.rel (%p1110) target = $region160
        $region159: #{ibot_forward.1} parent=107 // pred_region
          %1114 = dma.done %s1106, 64
        $region160: #{ibot_forward.1} parent=107 // pred_fallthru
          _
        %s1115 = sand.u32 %s44, 1
        %s1116 = scalar_lea.sflag [#allocation5], %s1115
        %s1117 = sand.u32 %s391, 1
        %s1118 = smul.addr %s1117, 256
        %s1119 = scalar_lea.vmem [#allocation21], %s1118
        // Predicated region
        $region161: #{ibot_forward.1} parent=107 // pred_check
          %p1120 = pneg %p404
        $region162: #{ibot_forward.1} parent=107 // pred_check_branch
          %1122 = sbr.rel (%p1120) target = $region164
        $region163: #{ibot_forward.1} parent=107 // pred_region
          %1124 = dma.done %s1116, 4096
        $region164: #{ibot_forward.1} parent=107 // pred_fallthru
          _
        %s1125 = sand.u32 %s44, 1
        %s1126 = scalar_lea.sflag [#allocation5], %s1125
        %s1127 = sand.u32 %s417, 1
        %s1128 = scalar_lea.vmem [#allocation22], %s1127
        // Predicated region
        $region165: #{ibot_forward.1} parent=107 // pred_check
          %p1129 = pneg %p430
        $region166: #{ibot_forward.1} parent=107 // pred_check_branch
          %1131 = sbr.rel (%p1129) target = $region168
        $region167: #{ibot_forward.1} parent=107 // pred_region
          %1133 = dma.done %s1126, 16
        $region168: #{ibot_forward.1} parent=107 // pred_fallthru
          _
        // Predicated region
        $region169: #{ibot_forward.1} parent=107 // pred_check
          %p1134 = pneg %p451
        $region170: #{ibot_forward.1} parent=107 // pred_check_branch
          %1136 = sbr.rel (%p1134) target = $region172
        $region171: #{ibot_forward.1} parent=107 // pred_region
          %1138 = dma.done [#allocation8], 4096
        $region172: #{ibot_forward.1} parent=107 // pred_fallthru
          _
        // Predicated region
        $region173: #{ibot_forward.1} parent=107 // pred_check
          %p1139 = pneg %p472
        $region174: #{ibot_forward.1} parent=107 // pred_check_branch
          %1141 = sbr.rel (%p1139) target = $region176
        $region175: #{ibot_forward.1} parent=107 // pred_region
          %1143 = dma.done [#allocation11], 64
        $region176: #{ibot_forward.1} parent=107 // pred_fallthru
          _
        // Predicated region
        $region177: #{ibot_forward.1} parent=107 // pred_check
          %p1144 = pneg %p493
        $region178: #{ibot_forward.1} parent=107 // pred_check_branch
          %1146 = sbr.rel (%p1144) target = $region180
        $region179: #{ibot_forward.1} parent=107 // pred_region
          %1148 = dma.done [#allocation26], 65536
        $region180: #{ibot_forward.1} parent=107 // pred_fallthru
          _
        // Predicated region
        $region181: #{ibot_forward.1} parent=107 // pred_check
          %p1149 = pneg %p514
        $region182: #{ibot_forward.1} parent=107 // pred_check_branch
          %1151 = sbr.rel (%p1149) target = $region184
        $region183: #{ibot_forward.1} parent=107 // pred_region
          %1153 = dma.done [#allocation26], 256
        $region184: #{ibot_forward.1} parent=107 // pred_fallthru
          _
        // Predicated region
        $region185: #{ibot_forward.1} parent=107 // pred_check
          %p1154 = pneg %p535
        $region186: #{ibot_forward.1} parent=107 // pred_check_branch
          %1156 = sbr.rel (%p1154) target = $region188
        $region187: #{ibot_forward.1} parent=107 // pred_region
          %1158 = dma.done [#allocation29], 4096
        $region188: #{ibot_forward.1} parent=107 // pred_fallthru
          _
        // Predicated region
        $region189: #{ibot_forward.1} parent=107 // pred_check
          %p1159 = pneg %p556
        $region190: #{ibot_forward.1} parent=107 // pred_check_branch
          %1161 = sbr.rel (%p1159) target = $region192
        $region191: #{ibot_forward.1} parent=107 // pred_region
          %1163 = dma.done [#allocation29], 64
        $region192: #{ibot_forward.1} parent=107 // pred_fallthru
          _
        %p1164 = pneg %p60
        %p1165 = pneg %p57
        %p1166 = pneg %p81
        %p1167 = pneg %p78
        %p1168 = pneg %p102
        %p1169 = pneg %p99
        %p1170 = pneg %p123
        %p1171 = pneg %p120
        %p1172 = pneg %p144
        %p1173 = pneg %p141
        %s1174 = sand.u32 %s44, 1
        %s1175 = scalar_lea.sflag [#allocation5], %s1174
        %s1176 = sand.u32 %s157, 1
        %s1177 = scalar_lea.vmem [#allocation12], %s1176
        %p1178 = pneg %p170
        %p1179 = pneg %p167
        %s1180 = sand.u32 %s44, 1
        %s1181 = scalar_lea.sflag [#allocation5], %s1180
        %s1182 = sand.u32 %s183, 1
        %s1183 = scalar_lea.vmem [#allocation13], %s1182
        %p1184 = pneg %p196
        %p1185 = pneg %p193
        %s1186 = sand.u32 %s44, 1
        %s1187 = scalar_lea.sflag [#allocation5], %s1186
        %s1188 = sand.u32 %s209, 1
        %s1189 = smul.addr %s1188, 192
        %s1190 = scalar_lea.vmem [#allocation14], %s1189
        %p1191 = pneg %p222
        %p1192 = pneg %p219
        %s1193 = sand.u32 %s44, 1
        %s1194 = scalar_lea.sflag [#allocation5], %s1193
        %s1195 = sand.u32 %s235, 1
        %s1196 = smul.addr %s1195, 64
        %s1197 = scalar_lea.vmem [#allocation15], %s1196
        %p1198 = pneg %p248
        %p1199 = pneg %p245
        %s1200 = sand.u32 %s44, 1
        %s1201 = scalar_lea.sflag [#allocation5], %s1200
        %s1202 = sand.u32 %s261, 1
        %s1203 = scalar_lea.vmem [#allocation16], %s1202
        %p1204 = pneg %p274
        %p1205 = pneg %p271
        %s1206 = sand.u32 %s44, 1
        %s1207 = scalar_lea.sflag [#allocation5], %s1206
        %s1208 = sand.u32 %s287, 1
        %s1209 = scalar_lea.vmem [#allocation17], %s1208
        %p1210 = pneg %p300
        %p1211 = pneg %p297
        %s1212 = sand.u32 %s44, 1
        %s1213 = scalar_lea.sflag [#allocation5], %s1212
        %s1214 = sand.u32 %s313, 1
        %s1215 = scalar_lea.vmem [#allocation18], %s1214
        %p1216 = pneg %p326
        %p1217 = pneg %p323
        %s1218 = sand.u32 %s44, 1
        %s1219 = scalar_lea.sflag [#allocation5], %s1218
        %s1220 = sand.u32 %s339, 1
        %s1221 = smul.addr %s1220, 256
        %s1222 = scalar_lea.vmem [#allocation19], %s1221
        %p1223 = pneg %p352
        %p1224 = pneg %p349
        %s1225 = sand.u32 %s44, 1
        %s1226 = scalar_lea.sflag [#allocation5], %s1225
        %s1227 = sand.u32 %s365, 1
        %s1228 = smul.addr %s1227, 4
        %s1229 = scalar_lea.vmem [#allocation20], %s1228
        %p1230 = pneg %p378
        %p1231 = pneg %p375
        %s1232 = sand.u32 %s44, 1
        %s1233 = scalar_lea.sflag [#allocation5], %s1232
        %s1234 = sand.u32 %s391, 1
        %s1235 = smul.addr %s1234, 256
        %s1236 = scalar_lea.vmem [#allocation21], %s1235
        %p1237 = pneg %p404
        %p1238 = pneg %p401
        %s1239 = sand.u32 %s44, 1
        %s1240 = scalar_lea.sflag [#allocation5], %s1239
        %s1241 = sand.u32 %s417, 1
        %s1242 = scalar_lea.vmem [#allocation22], %s1241
        %p1243 = pneg %p430
        %p1244 = pneg %p427
        %p1245 = pneg %p451
        %p1246 = pneg %p448
        %p1247 = pneg %p472
        %p1248 = pneg %p469
        %p1249 = pneg %p493
        %p1250 = pneg %p490
        %p1251 = pneg %p514
        %p1252 = pneg %p511
        %p1253 = pneg %p535
        %p1254 = pneg %p532
        %p1255 = pneg %p556
        %p1256 = pneg %p553
        %p1257 = pneg %p577
        %p1258 = pneg %p574
        %p1259 = pneg %p598
        %p1260 = pneg %p595
        %p1261 = pneg %p619
        %p1262 = pneg %p616
        %p1263 = pneg %p640
        %p1264 = pneg %p637
        %p1266 = scmp.eq.s32.totalorder %s44, 0
        // Predicated region
        $region193: #{ibot_forward.1} parent=107 // pred_check
          %p1267 = pneg %p1266
        $region194: #{ibot_forward.1} parent=107 // pred_check_branch
          %1269 = sbr.rel (%p1267) target = $region196
        $region195: #{ibot_forward.1} parent=107 // pred_region
          %v1270 = vld [vmem:[%s0] sm:$0xff]
          %v1271 = vld [vmem:[%s0 + $0x8] sm:$0xff]
          %v1272 = vld [vmem:[%s0 + $0x10] sm:$0xff]
          %v1273 = vld [vmem:[%s0 + $0x18] sm:$0xff]
          %v1274 = vld [vmem:[%s0 + $0x20] sm:$0xff]
          %v1275 = vld [vmem:[%s0 + $0x28] sm:$0xff]
          %v1276 = vld [vmem:[%s0 + $0x30] sm:$0xff]
          %v1277 = vld [vmem:[%s0 + $0x38] sm:$0xff]
          %v1278 = vld [vmem:[%s0 + $0x40] sm:$0xff]
          %v1279 = vld [vmem:[%s0 + $0x48] sm:$0xff]
          %v1280 = vld [vmem:[%s0 + $0x50] sm:$0xff]
          %v1281 = vld [vmem:[%s0 + $0x58] sm:$0xff]
          %v1282 = vpack.c.bf16 %v1276, %v1270
          %v1283 = vpack.c.bf16 %v1277, %v1271
          %v1284 = vpack.c.bf16 %v1278, %v1272
          %v1285 = vpack.c.bf16 %v1279, %v1273
          %v1286 = vpack.c.bf16 %v1280, %v1274
          %v1287 = vpack.c.bf16 %v1281, %v1275
          %v1288 = vld [vmem:[#allocation10] sm:$0xf]
          %v1289 = vld [vmem:[#allocation10 + $0x4] sm:$0xf]
          %v1290 = vld [vmem:[#allocation10 + $0x8] sm:$0xf]
          %v1291 = vld [vmem:[#allocation10 + $0xc] sm:$0xf]
          %v1292 = vld [vmem:[#allocation10 + $0x10] sm:$0xf]
          %v1293 = vld [vmem:[#allocation10 + $0x14] sm:$0xf]
          %v1294 = vld [vmem:[#allocation10 + $0x18] sm:$0xf]
          %v1295 = vld [vmem:[#allocation10 + $0x1c] sm:$0xf]
          %v1296 = vld [vmem:[#allocation10 + $0x20] sm:$0xf]
          %v1297 = vld [vmem:[#allocation10 + $0x24] sm:$0xf]
          %v1298 = vld [vmem:[#allocation10 + $0x28] sm:$0xf]
          %v1299 = vld [vmem:[#allocation10 + $0x2c] sm:$0xf]
          %v1300 = vld [vmem:[#allocation10 + $0x30] sm:$0xf]
          %v1301 = vld [vmem:[#allocation10 + $0x34] sm:$0xf]
          %v1302 = vld [vmem:[#allocation10 + $0x38] sm:$0xf]
          %v1303 = vld [vmem:[#allocation10 + $0x3c] sm:$0xf]
          %v1304 = vld [vmem:[#allocation10 + $0x40] sm:$0xf]
          %v1305 = vld [vmem:[#allocation10 + $0x44] sm:$0xf]
          %v1306 = vld [vmem:[#allocation10 + $0x48] sm:$0xf]
          %v1307 = vld [vmem:[#allocation10 + $0x4c] sm:$0xf]
          %v1308 = vld [vmem:[#allocation10 + $0x50] sm:$0xf]
          %v1309 = vld [vmem:[#allocation10 + $0x54] sm:$0xf]
          %v1310 = vld [vmem:[#allocation10 + $0x58] sm:$0xf]
          %v1311 = vld [vmem:[#allocation10 + $0x5c] sm:$0xf]
          %v1312 = vld [vmem:[#allocation10 + $0x60] sm:$0xf]
          %v1313 = vld [vmem:[#allocation10 + $0x64] sm:$0xf]
          %v1314 = vld [vmem:[#allocation10 + $0x68] sm:$0xf]
          %v1315 = vld [vmem:[#allocation10 + $0x6c] sm:$0xf]
          %v1316 = vld [vmem:[#allocation10 + $0x70] sm:$0xf]
          %v1317 = vld [vmem:[#allocation10 + $0x74] sm:$0xf]
          %v1318 = vld [vmem:[#allocation10 + $0x78] sm:$0xf]
          %v1319 = vld [vmem:[#allocation10 + $0x7c] sm:$0xf]
          %v1320 = vld [vmem:[#allocation10 + $0x80] sm:$0xf]
          %v1321 = vld [vmem:[#allocation10 + $0x84] sm:$0xf]
          %v1322 = vld [vmem:[#allocation10 + $0x88] sm:$0xf]
          %v1323 = vld [vmem:[#allocation10 + $0x8c] sm:$0xf]
          %v1324 = vld [vmem:[#allocation10 + $0x90] sm:$0xf]
          %v1325 = vld [vmem:[#allocation10 + $0x94] sm:$0xf]
          %v1326 = vld [vmem:[#allocation10 + $0x98] sm:$0xf]
          %v1327 = vld [vmem:[#allocation10 + $0x9c] sm:$0xf]
          %v1328 = vld [vmem:[#allocation10 + $0xa0] sm:$0xf]
          %v1329 = vld [vmem:[#allocation10 + $0xa4] sm:$0xf]
          %v1330 = vld [vmem:[#allocation10 + $0xa8] sm:$0xf]
          %v1331 = vld [vmem:[#allocation10 + $0xac] sm:$0xf]
          %v1332 = vld [vmem:[#allocation10 + $0xb0] sm:$0xf]
          %v1333 = vld [vmem:[#allocation10 + $0xb4] sm:$0xf]
          %v1334 = vld [vmem:[#allocation10 + $0xb8] sm:$0xf]
          %v1335 = vld [vmem:[#allocation10 + $0xbc] sm:$0xf]
          %v1336 = vld [vmem:[#allocation10 + $0xc0] sm:$0xf]
          %v1337 = vld [vmem:[#allocation10 + $0xc4] sm:$0xf]
          %v1338 = vld [vmem:[#allocation10 + $0xc8] sm:$0xf]
          %v1339 = vld [vmem:[#allocation10 + $0xcc] sm:$0xf]
          %v1340 = vld [vmem:[#allocation10 + $0xd0] sm:$0xf]
          %v1341 = vld [vmem:[#allocation10 + $0xd4] sm:$0xf]
          %v1342 = vld [vmem:[#allocation10 + $0xd8] sm:$0xf]
          %v1343 = vld [vmem:[#allocation10 + $0xdc] sm:$0xf]
          %v1344 = vld [vmem:[#allocation10 + $0xe0] sm:$0xf]
          %v1345 = vld [vmem:[#allocation10 + $0xe4] sm:$0xf]
          %v1346 = vld [vmem:[#allocation10 + $0xe8] sm:$0xf]
          %v1347 = vld [vmem:[#allocation10 + $0xec] sm:$0xf]
          %v1348 = vld [vmem:[#allocation10 + $0xf0] sm:$0xf]
          %v1349 = vld [vmem:[#allocation10 + $0xf4] sm:$0xf]
          %v1350 = vld [vmem:[#allocation10 + $0xf8] sm:$0xf]
          %v1351 = vld [vmem:[#allocation10 + $0xfc] sm:$0xf]
          %v1352 = vld [vmem:[#allocation10 + $0x100] sm:$0xf]
          %v1353 = vld [vmem:[#allocation10 + $0x104] sm:$0xf]
          %v1354 = vld [vmem:[#allocation10 + $0x108] sm:$0xf]
          %v1355 = vld [vmem:[#allocation10 + $0x10c] sm:$0xf]
          %v1356 = vld [vmem:[#allocation10 + $0x110] sm:$0xf]
          %v1357 = vld [vmem:[#allocation10 + $0x114] sm:$0xf]
          %v1358 = vld [vmem:[#allocation10 + $0x118] sm:$0xf]
          %v1359 = vld [vmem:[#allocation10 + $0x11c] sm:$0xf]
          %v1360 = vld [vmem:[#allocation10 + $0x120] sm:$0xf]
          %v1361 = vld [vmem:[#allocation10 + $0x124] sm:$0xf]
          %v1362 = vld [vmem:[#allocation10 + $0x128] sm:$0xf]
          %v1363 = vld [vmem:[#allocation10 + $0x12c] sm:$0xf]
          %v1364 = vld [vmem:[#allocation10 + $0x130] sm:$0xf]
          %v1365 = vld [vmem:[#allocation10 + $0x134] sm:$0xf]
          %v1366 = vld [vmem:[#allocation10 + $0x138] sm:$0xf]
          %v1367 = vld [vmem:[#allocation10 + $0x13c] sm:$0xf]
          %v1368 = vld [vmem:[#allocation10 + $0x140] sm:$0xf]
          %v1369 = vld [vmem:[#allocation10 + $0x144] sm:$0xf]
          %v1370 = vld [vmem:[#allocation10 + $0x148] sm:$0xf]
          %v1371 = vld [vmem:[#allocation10 + $0x14c] sm:$0xf]
          %v1372 = vld [vmem:[#allocation10 + $0x150] sm:$0xf]
          %v1373 = vld [vmem:[#allocation10 + $0x154] sm:$0xf]
          %v1374 = vld [vmem:[#allocation10 + $0x158] sm:$0xf]
          %v1375 = vld [vmem:[#allocation10 + $0x15c] sm:$0xf]
          %v1376 = vld [vmem:[#allocation10 + $0x160] sm:$0xf]
          %v1377 = vld [vmem:[#allocation10 + $0x164] sm:$0xf]
          %v1378 = vld [vmem:[#allocation10 + $0x168] sm:$0xf]
          %v1379 = vld [vmem:[#allocation10 + $0x16c] sm:$0xf]
          %v1380 = vld [vmem:[#allocation10 + $0x170] sm:$0xf]
          %v1381 = vld [vmem:[#allocation10 + $0x174] sm:$0xf]
          %v1382 = vld [vmem:[#allocation10 + $0x178] sm:$0xf]
          %v1383 = vld [vmem:[#allocation10 + $0x17c] sm:$0xf]
          %v1384 = vld [vmem:[#allocation4] sm:$0xff]
          %v1385 = vld [vmem:[#allocation4 + $0x8] sm:$0xff]
          %v1482 = vunpack.c.l.b16 %v1288
          %v1483 = vunpack.c.l.b16 %v1289
          %v1484 = vunpack.c.l.b16 %v1290
          %v1485 = vunpack.c.l.b16 %v1291
          %v1486 = vunpack.c.l.b16 %v1292
          %v1487 = vunpack.c.l.b16 %v1293
          %v1488 = vunpack.c.l.b16 %v1294
          %v1489 = vunpack.c.l.b16 %v1295
          %v1490 = vunpack.c.l.b16 %v1296
          %v1491 = vunpack.c.l.b16 %v1297
          %v1492 = vunpack.c.l.b16 %v1298
          %v1493 = vunpack.c.l.b16 %v1299
          %v1494 = vunpack.c.l.b16 %v1300
          %v1495 = vunpack.c.l.b16 %v1301
          %v1496 = vunpack.c.l.b16 %v1302
          %v1497 = vunpack.c.l.b16 %v1303
          %v1498 = vunpack.c.l.b16 %v1304
          %v1499 = vunpack.c.l.b16 %v1305
          %v1500 = vunpack.c.l.b16 %v1306
          %v1501 = vunpack.c.l.b16 %v1307
          %v1502 = vunpack.c.l.b16 %v1308
          %v1503 = vunpack.c.l.b16 %v1309
          %v1504 = vunpack.c.l.b16 %v1310
          %v1505 = vunpack.c.l.b16 %v1311
          %v1506 = vunpack.c.l.b16 %v1312
          %v1507 = vunpack.c.l.b16 %v1313
          %v1508 = vunpack.c.l.b16 %v1314
          %v1509 = vunpack.c.l.b16 %v1315
          %v1510 = vunpack.c.l.b16 %v1316
          %v1511 = vunpack.c.l.b16 %v1317
          %v1512 = vunpack.c.l.b16 %v1318
          %v1513 = vunpack.c.l.b16 %v1319
          %v1514 = vunpack.c.l.b16 %v1320
          %v1515 = vunpack.c.l.b16 %v1321
          %v1516 = vunpack.c.l.b16 %v1322
          %v1517 = vunpack.c.l.b16 %v1323
          %v1518 = vunpack.c.l.b16 %v1324
          %v1519 = vunpack.c.l.b16 %v1325
          %v1520 = vunpack.c.l.b16 %v1326
          %v1521 = vunpack.c.l.b16 %v1327
          %v1522 = vunpack.c.l.b16 %v1328
          %v1523 = vunpack.c.l.b16 %v1329
          %v1524 = vunpack.c.l.b16 %v1330
          %v1525 = vunpack.c.l.b16 %v1331
          %v1526 = vunpack.c.l.b16 %v1332
          %v1527 = vunpack.c.l.b16 %v1333
          %v1528 = vunpack.c.l.b16 %v1334
          %v1529 = vunpack.c.l.b16 %v1335
          %v1530 = vunpack.c.l.b16 %v1336
          %v1531 = vunpack.c.l.b16 %v1337
          %v1532 = vunpack.c.l.b16 %v1338
          %v1533 = vunpack.c.l.b16 %v1339
          %v1534 = vunpack.c.l.b16 %v1340
          %v1535 = vunpack.c.l.b16 %v1341
          %v1536 = vunpack.c.l.b16 %v1342
          %v1537 = vunpack.c.l.b16 %v1343
          %v1538 = vunpack.c.l.b16 %v1344
          %v1539 = vunpack.c.l.b16 %v1345
          %v1540 = vunpack.c.l.b16 %v1346
          %v1541 = vunpack.c.l.b16 %v1347
          %v1542 = vunpack.c.l.b16 %v1348
          %v1543 = vunpack.c.l.b16 %v1349
          %v1544 = vunpack.c.l.b16 %v1350
          %v1545 = vunpack.c.l.b16 %v1351
          %v1546 = vunpack.c.l.b16 %v1352
          %v1547 = vunpack.c.l.b16 %v1353
          %v1548 = vunpack.c.l.b16 %v1354
          %v1549 = vunpack.c.l.b16 %v1355
          %v1550 = vunpack.c.l.b16 %v1356
          %v1551 = vunpack.c.l.b16 %v1357
          %v1552 = vunpack.c.l.b16 %v1358
          %v1553 = vunpack.c.l.b16 %v1359
          %v1554 = vunpack.c.l.b16 %v1360
          %v1555 = vunpack.c.l.b16 %v1361
          %v1556 = vunpack.c.l.b16 %v1362
          %v1557 = vunpack.c.l.b16 %v1363
          %v1558 = vunpack.c.l.b16 %v1364
          %v1559 = vunpack.c.l.b16 %v1365
          %v1560 = vunpack.c.l.b16 %v1366
          %v1561 = vunpack.c.l.b16 %v1367
          %v1562 = vunpack.c.l.b16 %v1368
          %v1563 = vunpack.c.l.b16 %v1369
          %v1564 = vunpack.c.l.b16 %v1370
          %v1565 = vunpack.c.l.b16 %v1371
          %v1566 = vunpack.c.l.b16 %v1372
          %v1567 = vunpack.c.l.b16 %v1373
          %v1568 = vunpack.c.l.b16 %v1374
          %v1569 = vunpack.c.l.b16 %v1375
          %v1570 = vunpack.c.l.b16 %v1376
          %v1571 = vunpack.c.l.b16 %v1377
          %v1572 = vunpack.c.l.b16 %v1378
          %v1573 = vunpack.c.l.b16 %v1379
          %v1574 = vunpack.c.l.b16 %v1380
          %v1575 = vunpack.c.l.b16 %v1381
          %v1576 = vunpack.c.l.b16 %v1382
          %v1577 = vunpack.c.l.b16 %v1383
          %v1578 = vpack.c.b16 %v1483, %v1482
          %v1579 = vpack.c.b16 %v1485, %v1484
          %v1580 = vpack.c.b16 %v1487, %v1486
          %v1581 = vpack.c.b16 %v1489, %v1488
          %v1582 = vpack.c.b16 %v1491, %v1490
          %v1583 = vpack.c.b16 %v1493, %v1492
          %v1584 = vpack.c.b16 %v1495, %v1494
          %v1585 = vpack.c.b16 %v1497, %v1496
          %v1586 = vpack.c.b16 %v1499, %v1498
          %v1587 = vpack.c.b16 %v1501, %v1500
          %v1588 = vpack.c.b16 %v1503, %v1502
          %v1589 = vpack.c.b16 %v1505, %v1504
          %v1590 = vpack.c.b16 %v1507, %v1506
          %v1591 = vpack.c.b16 %v1509, %v1508
          %v1592 = vpack.c.b16 %v1511, %v1510
          %v1593 = vpack.c.b16 %v1513, %v1512
          %v1594 = vpack.c.b16 %v1515, %v1514
          %v1595 = vpack.c.b16 %v1517, %v1516
          %v1596 = vpack.c.b16 %v1519, %v1518
          %v1597 = vpack.c.b16 %v1521, %v1520
          %v1598 = vpack.c.b16 %v1523, %v1522
          %v1599 = vpack.c.b16 %v1525, %v1524
          %v1600 = vpack.c.b16 %v1527, %v1526
          %v1601 = vpack.c.b16 %v1529, %v1528
          %v1602 = vpack.c.b16 %v1531, %v1530
          %v1603 = vpack.c.b16 %v1533, %v1532
          %v1604 = vpack.c.b16 %v1535, %v1534
          %v1605 = vpack.c.b16 %v1537, %v1536
          %v1606 = vpack.c.b16 %v1539, %v1538
          %v1607 = vpack.c.b16 %v1541, %v1540
          %v1608 = vpack.c.b16 %v1543, %v1542
          %v1609 = vpack.c.b16 %v1545, %v1544
          %v1610 = vpack.c.b16 %v1547, %v1546
          %v1611 = vpack.c.b16 %v1549, %v1548
          %v1612 = vpack.c.b16 %v1551, %v1550
          %v1613 = vpack.c.b16 %v1553, %v1552
          %v1614 = vpack.c.b16 %v1555, %v1554
          %v1615 = vpack.c.b16 %v1557, %v1556
          %v1616 = vpack.c.b16 %v1559, %v1558
          %v1617 = vpack.c.b16 %v1561, %v1560
          %v1618 = vpack.c.b16 %v1563, %v1562
          %v1619 = vpack.c.b16 %v1565, %v1564
          %v1620 = vpack.c.b16 %v1567, %v1566
          %v1621 = vpack.c.b16 %v1569, %v1568
          %v1622 = vpack.c.b16 %v1571, %v1570
          %v1623 = vpack.c.b16 %v1573, %v1572
          %v1624 = vpack.c.b16 %v1575, %v1574
          %v1625 = vpack.c.b16 %v1577, %v1576
          %1674 = vmatpush.bf16.msra.mxu0 %v1585
          %1675 = vmatpush.bf16.msra.mxu0 %v1584
          %1676 = vmatpush.bf16.msra.mxu0 %v1583
          %1677 = vmatpush.bf16.msra.mxu0 %v1582
          %1678 = vmatpush.bf16.msra.mxu0 %v1581
          %1679 = vmatpush.bf16.msra.mxu0 %v1580
          %1680 = vmatpush.bf16.msra.mxu0 %v1579
          %1681 = vmatpush.bf16.msra.mxu0 %v1578
          %1682 = vmatmul.bf16.gmra.mxu0 %v1282
          %v1683 = vpop.f32.mrf.mxu0
          %v1684 = vadd.f32 %v1384, %v1683
          %v1685 = vpop.f32.mrf.mxu0
          %v1686 = vadd.f32 %v1385, %v1685
          %1687 = vdwg.mxu0
          %1688 = vmatpush.bf16.msra.mxu0 %v1593
          %1689 = vmatpush.bf16.msra.mxu0 %v1592
          %1690 = vmatpush.bf16.msra.mxu0 %v1591
          %1691 = vmatpush.bf16.msra.mxu0 %v1590
          %1692 = vmatpush.bf16.msra.mxu0 %v1589
          %1693 = vmatpush.bf16.msra.mxu0 %v1588
          %1694 = vmatpush.bf16.msra.mxu0 %v1587
          %1695 = vmatpush.bf16.msra.mxu0 %v1586
          %1696 = vmatmul.bf16.gmra.mxu0 %v1283
          %v1697 = vpop.f32.mrf.mxu0
          %v1698 = vadd.f32 %v1684, %v1697
          %v1699 = vpop.f32.mrf.mxu0
          %v1700 = vadd.f32 %v1686, %v1699
          %1701 = vdwg.mxu0
          %1702 = vmatpush.bf16.msra.mxu0 %v1601
          %1703 = vmatpush.bf16.msra.mxu0 %v1600
          %1704 = vmatpush.bf16.msra.mxu0 %v1599
          %1705 = vmatpush.bf16.msra.mxu0 %v1598
          %1706 = vmatpush.bf16.msra.mxu0 %v1597
          %1707 = vmatpush.bf16.msra.mxu0 %v1596
          %1708 = vmatpush.bf16.msra.mxu0 %v1595
          %1709 = vmatpush.bf16.msra.mxu0 %v1594
          %1710 = vmatmul.bf16.gmra.mxu0 %v1284
          %v1711 = vpop.f32.mrf.mxu0
          %v1712 = vadd.f32 %v1698, %v1711
          %v1713 = vpop.f32.mrf.mxu0
          %v1714 = vadd.f32 %v1700, %v1713
          %1715 = vdwg.mxu0
          %1716 = vmatpush.bf16.msra.mxu0 %v1609
          %1717 = vmatpush.bf16.msra.mxu0 %v1608
          %1718 = vmatpush.bf16.msra.mxu0 %v1607
          %1719 = vmatpush.bf16.msra.mxu0 %v1606
          %1720 = vmatpush.bf16.msra.mxu0 %v1605
          %1721 = vmatpush.bf16.msra.mxu0 %v1604
          %1722 = vmatpush.bf16.msra.mxu0 %v1603
          %1723 = vmatpush.bf16.msra.mxu0 %v1602
          %1724 = vmatmul.bf16.gmra.mxu0 %v1285
          %v1725 = vpop.f32.mrf.mxu0
          %v1726 = vadd.f32 %v1712, %v1725
          %v1727 = vpop.f32.mrf.mxu0
          %v1728 = vadd.f32 %v1714, %v1727
          %1729 = vdwg.mxu0
          %1730 = vmatpush.bf16.msra.mxu0 %v1617
          %1731 = vmatpush.bf16.msra.mxu0 %v1616
          %1732 = vmatpush.bf16.msra.mxu0 %v1615
          %1733 = vmatpush.bf16.msra.mxu0 %v1614
          %1734 = vmatpush.bf16.msra.mxu0 %v1613
          %1735 = vmatpush.bf16.msra.mxu0 %v1612
          %1736 = vmatpush.bf16.msra.mxu0 %v1611
          %1737 = vmatpush.bf16.msra.mxu0 %v1610
          %1738 = vmatmul.bf16.gmra.mxu0 %v1286
          %v1739 = vpop.f32.mrf.mxu0
          %v1740 = vadd.f32 %v1726, %v1739
          %v1741 = vpop.f32.mrf.mxu0
          %v1742 = vadd.f32 %v1728, %v1741
          %1743 = vdwg.mxu0
          %1744 = vmatpush.bf16.msra.mxu0 %v1625
          %1745 = vmatpush.bf16.msra.mxu0 %v1624
          %1746 = vmatpush.bf16.msra.mxu0 %v1623
          %1747 = vmatpush.bf16.msra.mxu0 %v1622
          %1748 = vmatpush.bf16.msra.mxu0 %v1621
          %1749 = vmatpush.bf16.msra.mxu0 %v1620
          %1750 = vmatpush.bf16.msra.mxu0 %v1619
          %1751 = vmatpush.bf16.msra.mxu0 %v1618
          %1752 = vmatmul.bf16.gmra.mxu0 %v1287
          %v1753 = vpop.f32.mrf.mxu0
          %v1754 = vadd.f32 %v1740, %v1753
          %v1755 = vpop.f32.mrf.mxu0
          %v1756 = vadd.f32 %v1742, %v1755
          %1757 = vdwg.mxu0
          %1758 = vst [vmem:[#allocation2] sm:$0xff] %v1754
          %1759 = vst [vmem:[#allocation2 + $0x8] sm:$0xff] %v1756
        $region196: #{ibot_forward.1} parent=107 // pred_fallthru
          _
        %v1760 = vld [vmem:[#allocation2] sm:$0xff]
        %v1761 = vld [vmem:[#allocation2 + $0x8] sm:$0xff]
        %v1762 = vld [vmem:[%s1033] sm:$0x1]
        %v1763 = vld [vmem:[%s1042] sm:$0x1]
        %1764 = vadd.xlane.f32.xlu0 %v1760
        %v1765 = vpop.xlane.xlu0 %1764
        %1766 = vadd.xlane.f32.xlu0 %v1761
        %v1767 = vpop.xlane.xlu0 %1766
        %v1768 = vrcp.pop 128.0
        %v1769 = vmul.f32 128.0, %v1768
        %v1770 = vsub.f32 1.0, %v1769
        %v1771 = vmul.f32 %v1768, %v1770
        %v1772 = vadd.f32 %v1768, %v1771
        %vm1773 = vweird.f32 %v1768
        %v1774 = vsel %vm1773, %v1768, %v1772
        %v1775 = vmul.f32 %v1765, %v1774
        %v1776 = vmul.f32 %v1767, %v1774
        %v1777 = vsub.f32 %v1760, %v1775
        %v1778 = vsub.f32 %v1761, %v1776
        %v1779 = vmul.f32 %v1777, %v1777
        %v1780 = vmul.f32 %v1778, %v1778
        %1781 = vadd.xlane.f32.xlu0 %v1779
        %v1782 = vpop.xlane.xlu0 %1781
        %1783 = vadd.xlane.f32.xlu0 %v1780
        %v1784 = vpop.xlane.xlu0 %1783
        %v1785 = vmul.f32 %v1782, %v1774
        %v1786 = vmul.f32 %v1784, %v1774
        %v1787 = vadd.f32 %v1785, 1e-06
        %v1788 = vadd.f32 %v1786, 1e-06
        %v1789 = vrsqrt.pop %v1787
        %v1790 = vmul.f32 %v1789, %v1787
        %v1791 = vmul.f32 %v1790, %v1789
        %v1792 = vmul.f32 0.5, %v1791
        %v1793 = vsub.f32 1.5, %v1792
        %v1794 = vmul.f32 %v1789, %v1793
        %vm1795 = vweird.f32 %v1787
        %vm1796 = vweird.f32 %v1789
        %vm1797 = vmor %vm1795, %vm1796
        %v1798 = vsel %vm1797, %v1789, %v1794
        %v1799 = vrsqrt.pop %v1788
        %v1800 = vmul.f32 %v1799, %v1788
        %v1801 = vmul.f32 %v1800, %v1799
        %v1802 = vmul.f32 0.5, %v1801
        %v1803 = vsub.f32 1.5, %v1802
        %v1804 = vmul.f32 %v1799, %v1803
        %vm1805 = vweird.f32 %v1788
        %vm1806 = vweird.f32 %v1799
        %vm1807 = vmor %vm1805, %vm1806
        %v1808 = vsel %vm1807, %v1799, %v1804
        %v1809 = vmul.f32 %v1777, %v1798
        %v1810 = vmul.f32 %v1778, %v1808
        %v1812 = vperm.slane %v1762, 0
        %v1814 = vmul.f32 %v1809, %v1812
        %v1815 = vmul.f32 %v1810, %v1812
        %v1817 = vperm.slane %v1763, 0
        %v1819 = vadd.f32 %v1814, %v1817
        %v1820 = vadd.f32 %v1815, %v1817
        %v1821 = vpack.c.bf16 %v1820, %v1819
        %v1822 = vld [vmem:[%s1052] sm:$0xff]
        %v1823 = vld [vmem:[%s1052 + $0x8] sm:$0xf]
        %v1824 = vld [vmem:[%s1052 + $0xc] sm:$0xff]
        %v1825 = vld [vmem:[%s1052 + $0x14] sm:$0xf]
        %v1826 = vld [vmem:[%s1052 + $0x18] sm:$0xff]
        %v1827 = vld [vmem:[%s1052 + $0x20] sm:$0xf]
        %v1828 = vld [vmem:[%s1052 + $0x24] sm:$0xff]
        %v1829 = vld [vmem:[%s1052 + $0x2c] sm:$0xf]
        %v1830 = vld [vmem:[%s1052 + $0x30] sm:$0xff]
        %v1831 = vld [vmem:[%s1052 + $0x38] sm:$0xf]
        %v1832 = vld [vmem:[%s1052 + $0x3c] sm:$0xff]
        %v1833 = vld [vmem:[%s1052 + $0x44] sm:$0xf]
        %v1834 = vld [vmem:[%s1052 + $0x48] sm:$0xff]
        %v1835 = vld [vmem:[%s1052 + $0x50] sm:$0xf]
        %v1836 = vld [vmem:[%s1052 + $0x54] sm:$0xff]
        %v1837 = vld [vmem:[%s1052 + $0x5c] sm:$0xf]
        %v1838 = vld [vmem:[%s1052 + $0x60] sm:$0xff]
        %v1839 = vld [vmem:[%s1052 + $0x68] sm:$0xf]
        %v1840 = vld [vmem:[%s1052 + $0x6c] sm:$0xff]
        %v1841 = vld [vmem:[%s1052 + $0x74] sm:$0xf]
        %v1842 = vld [vmem:[%s1052 + $0x78] sm:$0xff]
        %v1843 = vld [vmem:[%s1052 + $0x80] sm:$0xf]
        %v1844 = vld [vmem:[%s1052 + $0x84] sm:$0xff]
        %v1845 = vld [vmem:[%s1052 + $0x8c] sm:$0xf]
        %v1846 = vld [vmem:[%s1052 + $0x90] sm:$0xff]
        %v1847 = vld [vmem:[%s1052 + $0x98] sm:$0xf]
        %v1848 = vld [vmem:[%s1052 + $0x9c] sm:$0xff]
        %v1849 = vld [vmem:[%s1052 + $0xa4] sm:$0xf]
        %v1850 = vld [vmem:[%s1052 + $0xa8] sm:$0xff]
        %v1851 = vld [vmem:[%s1052 + $0xb0] sm:$0xf]
        %v1852 = vld [vmem:[%s1052 + $0xb4] sm:$0xff]
        %v1853 = vld [vmem:[%s1052 + $0xbc] sm:$0xf]
        %v1886 = vunpack.c.l.b16 %v1822
        %v1887 = vunpack.c.h.b16 %v1822
        %v1888 = vunpack.c.l.b16 %v1823
        %v1889 = vunpack.c.l.b16 %v1824
        %v1890 = vunpack.c.h.b16 %v1824
        %v1891 = vunpack.c.l.b16 %v1825
        %v1892 = vunpack.c.l.b16 %v1826
        %v1893 = vunpack.c.h.b16 %v1826
        %v1894 = vunpack.c.l.b16 %v1827
        %v1895 = vunpack.c.l.b16 %v1828
        %v1896 = vunpack.c.h.b16 %v1828
        %v1897 = vunpack.c.l.b16 %v1829
        %v1898 = vunpack.c.l.b16 %v1830
        %v1899 = vunpack.c.h.b16 %v1830
        %v1900 = vunpack.c.l.b16 %v1831
        %v1901 = vunpack.c.l.b16 %v1832
        %v1902 = vunpack.c.h.b16 %v1832
        %v1903 = vunpack.c.l.b16 %v1833
        %v1904 = vunpack.c.l.b16 %v1834
        %v1905 = vunpack.c.h.b16 %v1834
        %v1906 = vunpack.c.l.b16 %v1835
        %v1907 = vunpack.c.l.b16 %v1836
        %v1908 = vunpack.c.h.b16 %v1836
        %v1909 = vunpack.c.l.b16 %v1837
        %v1910 = vunpack.c.l.b16 %v1838
        %v1911 = vunpack.c.h.b16 %v1838
        %v1912 = vunpack.c.l.b16 %v1839
        %v1913 = vunpack.c.l.b16 %v1840
        %v1914 = vunpack.c.h.b16 %v1840
        %v1915 = vunpack.c.l.b16 %v1841
        %v1916 = vunpack.c.l.b16 %v1842
        %v1917 = vunpack.c.h.b16 %v1842
        %v1918 = vunpack.c.l.b16 %v1843
        %v1919 = vunpack.c.l.b16 %v1844
        %v1920 = vunpack.c.h.b16 %v1844
        %v1921 = vunpack.c.l.b16 %v1845
        %v1922 = vunpack.c.l.b16 %v1846
        %v1923 = vunpack.c.h.b16 %v1846
        %v1924 = vunpack.c.l.b16 %v1847
        %v1925 = vunpack.c.l.b16 %v1848
        %v1926 = vunpack.c.h.b16 %v1848
        %v1927 = vunpack.c.l.b16 %v1849
        %v1928 = vunpack.c.l.b16 %v1850
        %v1929 = vunpack.c.h.b16 %v1850
        %v1930 = vunpack.c.l.b16 %v1851
        %v1931 = vunpack.c.l.b16 %v1852
        %v1932 = vunpack.c.h.b16 %v1852
        %v1933 = vunpack.c.l.b16 %v1853
        %v1934 = vpack.c.b16 %v1889, %v1886
        %v1935 = vpack.c.b16 %v1890, %v1887
        %v1936 = vpack.c.b16 %v1891, %v1888
        %v1937 = vpack.c.b16 %v1895, %v1892
        %v1938 = vpack.c.b16 %v1896, %v1893
        %v1939 = vpack.c.b16 %v1897, %v1894
        %v1940 = vpack.c.b16 %v1901, %v1898
        %v1941 = vpack.c.b16 %v1902, %v1899
        %v1942 = vpack.c.b16 %v1903, %v1900
        %v1943 = vpack.c.b16 %v1907, %v1904
        %v1944 = vpack.c.b16 %v1908, %v1905
        %v1945 = vpack.c.b16 %v1909, %v1906
        %v1946 = vpack.c.b16 %v1913, %v1910
        %v1947 = vpack.c.b16 %v1914, %v1911
        %v1948 = vpack.c.b16 %v1915, %v1912
        %v1949 = vpack.c.b16 %v1919, %v1916
        %v1950 = vpack.c.b16 %v1920, %v1917
        %v1951 = vpack.c.b16 %v1921, %v1918
        %v1952 = vpack.c.b16 %v1925, %v1922
        %v1953 = vpack.c.b16 %v1926, %v1923
        %v1954 = vpack.c.b16 %v1927, %v1924
        %v1955 = vpack.c.b16 %v1931, %v1928
        %v1956 = vpack.c.b16 %v1932, %v1929
        %v1957 = vpack.c.b16 %v1933, %v1930
        %1982 = vmatpush.bf16.msra.mxu0 %v1955
        %1983 = vmatpush.bf16.msra.mxu0 %v1952
        %1984 = vmatpush.bf16.msra.mxu0 %v1949
        %1985 = vmatpush.bf16.msra.mxu0 %v1946
        %1986 = vmatpush.bf16.msra.mxu0 %v1943
        %1987 = vmatpush.bf16.msra.mxu0 %v1940
        %1988 = vmatpush.bf16.msra.mxu0 %v1937
        %1989 = vmatpush.bf16.msra.mxu0 %v1934
        %1990 = vmatmul.bf16.gmra.mxu0 %v1821
        %v1991 = vpop.f32.mrf.mxu0
        %v1992 = vadd.f32 0.0, %v1991
        %v1993 = vpop.f32.mrf.mxu0
        %v1994 = vadd.f32 0.0, %v1993
        %1995 = vdwg.mxu0
        %1996 = vmatpush.bf16.msra.mxu0 %v1956
        %1997 = vmatpush.bf16.msra.mxu0 %v1953
        %1998 = vmatpush.bf16.msra.mxu0 %v1950
        %1999 = vmatpush.bf16.msra.mxu0 %v1947
        %2000 = vmatpush.bf16.msra.mxu0 %v1944
        %2001 = vmatpush.bf16.msra.mxu0 %v1941
        %2002 = vmatpush.bf16.msra.mxu0 %v1938
        %2003 = vmatpush.bf16.msra.mxu0 %v1935
        %2004 = vmatmul.bf16.gmra.mxu0 %v1821
        %v2005 = vpop.f32.mrf.mxu0
        %v2006 = vadd.f32 0.0, %v2005
        %v2007 = vpop.f32.mrf.mxu0
        %v2008 = vadd.f32 0.0, %v2007
        %2009 = vdwg.mxu0
        %2010 = vmatpush.bf16.msra.mxu0 %v1957
        %2011 = vmatpush.bf16.msra.mxu0 %v1954
        %2012 = vmatpush.bf16.msra.mxu0 %v1951
        %2013 = vmatpush.bf16.msra.mxu0 %v1948
        %2014 = vmatpush.bf16.msra.mxu0 %v1945
        %2015 = vmatpush.bf16.msra.mxu0 %v1942
        %2016 = vmatpush.bf16.msra.mxu0 %v1939
        %2017 = vmatpush.bf16.msra.mxu0 %v1936
        %2018 = vmatmul.bf16.gmra.mxu0 %v1821
        %v2019 = vpop.f32.mrf.mxu0
        %v2020 = vadd.f32 0.0, %v2019
        %v2021 = vpop.f32.mrf.mxu0
        %v2022 = vadd.f32 0.0, %v2021
        %2023 = vdwg.mxu0
        %v2024 = vpack.c.bf16 %v1994, %v1992
        %v2025 = vld [vmem:[#allocation7] sm:$0xff]
        %v2026 = vld [vmem:[#allocation7 + $0x8] sm:$0xff]
        %v2027 = vld [vmem:[#allocation9] sm:$0x1]
        %v2028 = vperm.slane %v2027, 0
        %v2029 = vmul.f32 %v2006, %v2028
        %v2030 = vmul.f32 %v2008, %v2028
        %v2031 = vpack.c.bf16 %v2030, %v2029
        %v2032 = vmul.f32 %v2020, %v2028
        %v2033 = vmul.f32 %v2022, %v2028
        %v2034 = vpack.c.bf16 %v2033, %v2032
        %2035 = vmatpush.bf16.xpose.msra.mxu0 0
        %2036 = vmatpush.bf16.xpose.msra.mxu0 0
        %2037 = vmatpush.bf16.xpose.msra.mxu0 0
        %2038 = vmatpush.bf16.xpose.msra.mxu0 0
        %2039 = vmatpush.bf16.xpose.msra.mxu0 0
        %2040 = vmatpush.bf16.xpose.msra.mxu0 0
        %2041 = vmatpush.bf16.xpose.msra.mxu0 0
        %2042 = vmatpush.bf16.xpose.msra.mxu0 %v2031
        %2043 = vmatmul.bf16.gmra.mxu0 %v2024
        %v2044 = vpop.f32.mrf.mxu0
        %v2045 = vadd.f32 0.0, %v2044
        %v2046 = vpop.f32.mrf.mxu0
        %v2047 = vadd.f32 0.0, %v2046
        %2048 = vdwg.mxu0
        %v2049 = vmul.f32 %v2045, 0.17677669
        %v2050 = vmul.f32 %v2047, 0.17677669
        %v2051 = vadd.f32 %v2049, %v2025
        %v2052 = vadd.f32 %v2050, %v2026
        %vm2053 = vcmask 130048
        %v2054 = vsel %vm2053, %v2051, -inf
        %2055 = vmax.xlane.f32.xlu0 %v2054
        %v2056 = vpop.xlane.xlu0 %2055
        %v2057 = vsel %vm2053, %v2052, -inf
        %2058 = vmax.xlane.f32.xlu0 %v2057
        %v2059 = vpop.xlane.xlu0 %2058
        %v2060 = vsub.f32 %v2051, %v2056
        %v2061 = vsub.f32 %v2052, %v2059
        %v2062 = vmul.f32 %v2060, 1.442695
        %v2063 = vpow.pop %v2062
        %v2064 = vmul.f32 %v2061, 1.442695
        %v2065 = vpow.pop %v2064
        %v2066 = vsel %vm2053, %v2063, 0.0
        %2067 = vadd.xlane.f32.xlu0 %v2066
        %v2068 = vpop.xlane.xlu0 %2067
        %v2069 = vsel %vm2053, %v2065, 0.0
        %2070 = vadd.xlane.f32.xlu0 %v2069
        %v2071 = vpop.xlane.xlu0 %2070
        %v2072 = vrcp.pop %v2068
        %v2073 = vmul.f32 %v2068, %v2072
        %v2074 = vsub.f32 1.0, %v2073
        %v2075 = vmul.f32 %v2072, %v2074
        %v2076 = vadd.f32 %v2072, %v2075
        %vm2077 = vweird.f32 %v2068
        %vm2078 = vweird.f32 %v2072
        %vm2079 = vmor %vm2077, %vm2078
        %v2080 = vsel %vm2079, %v2072, %v2076
        %v2081 = vand.u32 2147483647, %v2068
        %vm2082 = vcmp.eq.f32.partialorder %v2081, 8.507059e+37
        %v2083 = vand.u32 %v2068, 2147483648
        %v2084 = vor.u32 1.1754944e-38, %v2083
        %v2085 = vsel %vm2082, %v2084, %v2080
        %v2086 = vmul.f32 %v2063, %v2085
        %v2087 = vrcp.pop %v2071
        %v2088 = vmul.f32 %v2071, %v2087
        %v2089 = vsub.f32 1.0, %v2088
        %v2090 = vmul.f32 %v2087, %v2089
        %v2091 = vadd.f32 %v2087, %v2090
        %vm2092 = vweird.f32 %v2071
        %vm2093 = vweird.f32 %v2087
        %vm2094 = vmor %vm2092, %vm2093
        %v2095 = vsel %vm2094, %v2087, %v2091
        %v2096 = vand.u32 2147483647, %v2071
        %vm2097 = vcmp.eq.f32.partialorder %v2096, 8.507059e+37
        %v2098 = vand.u32 %v2071, 2147483648
        %v2099 = vor.u32 1.1754944e-38, %v2098
        %v2100 = vsel %vm2097, %v2099, %v2095
        %v2101 = vmul.f32 %v2065, %v2100
        %v2102 = vpack.c.bf16 %v2101, %v2086
        %v2103 = vld [vmem:[#allocation9 + $0x1] sm:$0x1]
        %v2104 = vperm.slane %v2103, 0
        %v2105 = vmul.f32 %v2006, %v2104
        %v2106 = vmul.f32 %v2008, %v2104
        %v2107 = vpack.c.bf16 %v2106, %v2105
        %v2108 = vmul.f32 %v2020, %v2104
        %v2109 = vmul.f32 %v2022, %v2104
        %v2110 = vpack.c.bf16 %v2109, %v2108
        %2111 = vmatpush.bf16.xpose.msra.mxu0 0
        %2112 = vmatpush.bf16.xpose.msra.mxu0 0
        %2113 = vmatpush.bf16.xpose.msra.mxu0 0
        %2114 = vmatpush.bf16.xpose.msra.mxu0 0
        %2115 = vmatpush.bf16.xpose.msra.mxu0 0
        %2116 = vmatpush.bf16.xpose.msra.mxu0 0
        %2117 = vmatpush.bf16.xpose.msra.mxu0 0
        %2118 = vmatpush.bf16.xpose.msra.mxu0 %v2107
        %2119 = vmatmul.bf16.gmra.mxu0 %v2024
        %v2120 = vpop.f32.mrf.mxu0
        %v2121 = vadd.f32 0.0, %v2120
        %v2122 = vpop.f32.mrf.mxu0
        %v2123 = vadd.f32 0.0, %v2122
        %2124 = vdwg.mxu0
        %v2125 = vmul.f32 %v2121, 0.17677669
        %v2126 = vmul.f32 %v2123, 0.17677669
        %v2127 = vadd.f32 %v2125, %v2025
        %v2128 = vadd.f32 %v2126, %v2026
        %v2129 = vsel %vm2053, %v2127, -inf
        %2130 = vmax.xlane.f32.xlu0 %v2129
        %v2131 = vpop.xlane.xlu0 %2130
        %v2132 = vsel %vm2053, %v2128, -inf
        %2133 = vmax.xlane.f32.xlu0 %v2132
        %v2134 = vpop.xlane.xlu0 %2133
        %v2135 = vsub.f32 %v2127, %v2131
        %v2136 = vsub.f32 %v2128, %v2134
        %v2137 = vmul.f32 %v2135, 1.442695
        %v2138 = vpow.pop %v2137
        %v2139 = vmul.f32 %v2136, 1.442695
        %v2140 = vpow.pop %v2139
        %v2141 = vsel %vm2053, %v2138, 0.0
        %2142 = vadd.xlane.f32.xlu0 %v2141
        %v2143 = vpop.xlane.xlu0 %2142
        %v2144 = vsel %vm2053, %v2140, 0.0
        %2145 = vadd.xlane.f32.xlu0 %v2144
        %v2146 = vpop.xlane.xlu0 %2145
        %v2147 = vrcp.pop %v2143
        %v2148 = vmul.f32 %v2143, %v2147
        %v2149 = vsub.f32 1.0, %v2148
        %v2150 = vmul.f32 %v2147, %v2149
        %v2151 = vadd.f32 %v2147, %v2150
        %vm2152 = vweird.f32 %v2143
        %vm2153 = vweird.f32 %v2147
        %vm2154 = vmor %vm2152, %vm2153
        %v2155 = vsel %vm2154, %v2147, %v2151
        %v2156 = vand.u32 2147483647, %v2143
        %vm2157 = vcmp.eq.f32.partialorder %v2156, 8.507059e+37
        %v2158 = vand.u32 %v2143, 2147483648
        %v2159 = vor.u32 1.1754944e-38, %v2158
        %v2160 = vsel %vm2157, %v2159, %v2155
        %v2161 = vmul.f32 %v2138, %v2160
        %v2162 = vrcp.pop %v2146
        %v2163 = vmul.f32 %v2146, %v2162
        %v2164 = vsub.f32 1.0, %v2163
        %v2165 = vmul.f32 %v2162, %v2164
        %v2166 = vadd.f32 %v2162, %v2165
        %vm2167 = vweird.f32 %v2146
        %vm2168 = vweird.f32 %v2162
        %vm2169 = vmor %vm2167, %vm2168
        %v2170 = vsel %vm2169, %v2162, %v2166
        %v2171 = vand.u32 2147483647, %v2146
        %vm2172 = vcmp.eq.f32.partialorder %v2171, 8.507059e+37
        %v2173 = vand.u32 %v2146, 2147483648
        %v2174 = vor.u32 1.1754944e-38, %v2173
        %v2175 = vsel %vm2172, %v2174, %v2170
        %v2176 = vmul.f32 %v2140, %v2175
        %v2177 = vpack.c.bf16 %v2176, %v2161
        %v2179 = vsel %vm2053, %v2177, 0
        %2181 = vmatpush.bf16.msra.mxu0 0
        %2182 = vmatpush.bf16.msra.mxu0 0
        %2183 = vmatpush.bf16.msra.mxu0 0
        %2184 = vmatpush.bf16.msra.mxu0 0
        %2185 = vmatpush.bf16.msra.mxu0 0
        %2186 = vmatpush.bf16.msra.mxu0 0
        %2187 = vmatpush.bf16.msra.mxu0 0
        %2188 = vmatpush.bf16.msra.mxu0 %v2110
        %2189 = vmatmul.bf16.gmra.mxu0 %v2179
        %v2190 = vpop.f32.mrf.mxu0
        %v2191 = vadd.f32 0.0, %v2190
        %v2192 = vpop.f32.mrf.mxu0
        %v2193 = vadd.f32 0.0, %v2192
        %2194 = vdwg.mxu0
        %v2196 = vsel %vm2053, %v2102, 0
        %2198 = vmatpush.bf16.msra.mxu0 0
        %2199 = vmatpush.bf16.msra.mxu0 0
        %2200 = vmatpush.bf16.msra.mxu0 0
        %2201 = vmatpush.bf16.msra.mxu0 0
        %2202 = vmatpush.bf16.msra.mxu0 0
        %2203 = vmatpush.bf16.msra.mxu0 0
        %2204 = vmatpush.bf16.msra.mxu0 0
        %2205 = vmatpush.bf16.msra.mxu0 %v2034
        %2206 = vmatmul.bf16.gmra.mxu0 %v2196
        %v2207 = vpop.f32.mrf.mxu0
        %v2208 = vadd.f32 %v2191, %v2207
        %v2209 = vpop.f32.mrf.mxu0
        %v2210 = vadd.f32 %v2193, %v2209
        %2211 = vdwg.mxu0
        %v2212 = vld [vmem:[#allocation9 + $0x2] sm:$0x1]
        %v2213 = vperm.slane %v2212, 0
        %v2214 = vmul.f32 %v2006, %v2213
        %v2215 = vmul.f32 %v2008, %v2213
        %v2216 = vpack.c.bf16 %v2215, %v2214
        %v2217 = vmul.f32 %v2020, %v2213
        %v2218 = vmul.f32 %v2022, %v2213
        %v2219 = vpack.c.bf16 %v2218, %v2217
        %2220 = vmatpush.bf16.xpose.msra.mxu0 0
        %2221 = vmatpush.bf16.xpose.msra.mxu0 0
        %2222 = vmatpush.bf16.xpose.msra.mxu0 0
        %2223 = vmatpush.bf16.xpose.msra.mxu0 0
        %2224 = vmatpush.bf16.xpose.msra.mxu0 0
        %2225 = vmatpush.bf16.xpose.msra.mxu0 0
        %2226 = vmatpush.bf16.xpose.msra.mxu0 0
        %2227 = vmatpush.bf16.xpose.msra.mxu0 %v2216
        %2228 = vmatmul.bf16.gmra.mxu0 %v2024
        %v2229 = vpop.f32.mrf.mxu0
        %v2230 = vadd.f32 0.0, %v2229
        %v2231 = vpop.f32.mrf.mxu0
        %v2232 = vadd.f32 0.0, %v2231
        %2233 = vdwg.mxu0
        %v2234 = vmul.f32 %v2230, 0.17677669
        %v2235 = vmul.f32 %v2232, 0.17677669
        %v2236 = vadd.f32 %v2234, %v2025
        %v2237 = vadd.f32 %v2235, %v2026
        %v2238 = vsel %vm2053, %v2236, -inf
        %2239 = vmax.xlane.f32.xlu0 %v2238
        %v2240 = vpop.xlane.xlu0 %2239
        %v2241 = vsel %vm2053, %v2237, -inf
        %2242 = vmax.xlane.f32.xlu0 %v2241
        %v2243 = vpop.xlane.xlu0 %2242
        %v2244 = vsub.f32 %v2236, %v2240
        %v2245 = vsub.f32 %v2237, %v2243
        %v2246 = vmul.f32 %v2244, 1.442695
        %v2247 = vpow.pop %v2246
        %v2248 = vmul.f32 %v2245, 1.442695
        %v2249 = vpow.pop %v2248
        %v2250 = vsel %vm2053, %v2247, 0.0
        %2251 = vadd.xlane.f32.xlu0 %v2250
        %v2252 = vpop.xlane.xlu0 %2251
        %v2253 = vsel %vm2053, %v2249, 0.0
        %2254 = vadd.xlane.f32.xlu0 %v2253
        %v2255 = vpop.xlane.xlu0 %2254
        %v2256 = vrcp.pop %v2252
        %v2257 = vmul.f32 %v2252, %v2256
        %v2258 = vsub.f32 1.0, %v2257
        %v2259 = vmul.f32 %v2256, %v2258
        %v2260 = vadd.f32 %v2256, %v2259
        %vm2261 = vweird.f32 %v2252
        %vm2262 = vweird.f32 %v2256
        %vm2263 = vmor %vm2261, %vm2262
        %v2264 = vsel %vm2263, %v2256, %v2260
        %v2265 = vand.u32 2147483647, %v2252
        %vm2266 = vcmp.eq.f32.partialorder %v2265, 8.507059e+37
        %v2267 = vand.u32 %v2252, 2147483648
        %v2268 = vor.u32 1.1754944e-38, %v2267
        %v2269 = vsel %vm2266, %v2268, %v2264
        %v2270 = vmul.f32 %v2247, %v2269
        %v2271 = vrcp.pop %v2255
        %v2272 = vmul.f32 %v2255, %v2271
        %v2273 = vsub.f32 1.0, %v2272
        %v2274 = vmul.f32 %v2271, %v2273
        %v2275 = vadd.f32 %v2271, %v2274
        %vm2276 = vweird.f32 %v2255
        %vm2277 = vweird.f32 %v2271
        %vm2278 = vmor %vm2276, %vm2277
        %v2279 = vsel %vm2278, %v2271, %v2275
        %v2280 = vand.u32 2147483647, %v2255
        %vm2281 = vcmp.eq.f32.partialorder %v2280, 8.507059e+37
        %v2282 = vand.u32 %v2255, 2147483648
        %v2283 = vor.u32 1.1754944e-38, %v2282
        %v2284 = vsel %vm2281, %v2283, %v2279
        %v2285 = vmul.f32 %v2249, %v2284
        %v2286 = vpack.c.bf16 %v2285, %v2270
        %v2288 = vsel %vm2053, %v2286, 0
        %2290 = vmatpush.bf16.msra.mxu0 0
        %2291 = vmatpush.bf16.msra.mxu0 0
        %2292 = vmatpush.bf16.msra.mxu0 0
        %2293 = vmatpush.bf16.msra.mxu0 0
        %2294 = vmatpush.bf16.msra.mxu0 0
        %2295 = vmatpush.bf16.msra.mxu0 0
        %2296 = vmatpush.bf16.msra.mxu0 0
        %2297 = vmatpush.bf16.msra.mxu0 %v2219
        %2298 = vmatmul.bf16.gmra.mxu0 %v2288
        %v2299 = vpop.f32.mrf.mxu0
        %v2300 = vadd.f32 0.0, %v2299
        %v2301 = vpop.f32.mrf.mxu0
        %v2302 = vadd.f32 0.0, %v2301
        %2303 = vdwg.mxu0
        %v2304 = vadd.f32 %v2208, %v2300
        %v2305 = vadd.f32 %v2210, %v2302
        %v2306 = vld [vmem:[#allocation9 + $0x3] sm:$0x1]
        %v2307 = vperm.slane %v2306, 0
        %v2308 = vmul.f32 %v2006, %v2307
        %v2309 = vmul.f32 %v2008, %v2307
        %v2310 = vpack.c.bf16 %v2309, %v2308
        %v2311 = vmul.f32 %v2020, %v2307
        %v2312 = vmul.f32 %v2022, %v2307
        %v2313 = vpack.c.bf16 %v2312, %v2311
        %2314 = vmatpush.bf16.xpose.msra.mxu0 0
        %2315 = vmatpush.bf16.xpose.msra.mxu0 0
        %2316 = vmatpush.bf16.xpose.msra.mxu0 0
        %2317 = vmatpush.bf16.xpose.msra.mxu0 0
        %2318 = vmatpush.bf16.xpose.msra.mxu0 0
        %2319 = vmatpush.bf16.xpose.msra.mxu0 0
        %2320 = vmatpush.bf16.xpose.msra.mxu0 0
        %2321 = vmatpush.bf16.xpose.msra.mxu0 %v2310
        %2322 = vmatmul.bf16.gmra.mxu0 %v2024
        %v2323 = vpop.f32.mrf.mxu0
        %v2324 = vadd.f32 0.0, %v2323
        %v2325 = vpop.f32.mrf.mxu0
        %v2326 = vadd.f32 0.0, %v2325
        %2327 = vdwg.mxu0
        %v2328 = vmul.f32 %v2324, 0.17677669
        %v2329 = vmul.f32 %v2326, 0.17677669
        %v2330 = vadd.f32 %v2328, %v2025
        %v2331 = vadd.f32 %v2329, %v2026
        %v2332 = vsel %vm2053, %v2330, -inf
        %2333 = vmax.xlane.f32.xlu0 %v2332
        %v2334 = vpop.xlane.xlu0 %2333
        %v2335 = vsel %vm2053, %v2331, -inf
        %2336 = vmax.xlane.f32.xlu0 %v2335
        %v2337 = vpop.xlane.xlu0 %2336
        %v2338 = vsub.f32 %v2330, %v2334
        %v2339 = vsub.f32 %v2331, %v2337
        %v2340 = vmul.f32 %v2338, 1.442695
        %v2341 = vpow.pop %v2340
        %v2342 = vmul.f32 %v2339, 1.442695
        %v2343 = vpow.pop %v2342
        %v2344 = vsel %vm2053, %v2341, 0.0
        %2345 = vadd.xlane.f32.xlu0 %v2344
        %v2346 = vpop.xlane.xlu0 %2345
        %v2347 = vsel %vm2053, %v2343, 0.0
        %2348 = vadd.xlane.f32.xlu0 %v2347
        %v2349 = vpop.xlane.xlu0 %2348
        %v2350 = vrcp.pop %v2346
        %v2351 = vmul.f32 %v2346, %v2350
        %v2352 = vsub.f32 1.0, %v2351
        %v2353 = vmul.f32 %v2350, %v2352
        %v2354 = vadd.f32 %v2350, %v2353
        %vm2355 = vweird.f32 %v2346
        %vm2356 = vweird.f32 %v2350
        %vm2357 = vmor %vm2355, %vm2356
        %v2358 = vsel %vm2357, %v2350, %v2354
        %v2359 = vand.u32 2147483647, %v2346
        %vm2360 = vcmp.eq.f32.partialorder %v2359, 8.507059e+37
        %v2361 = vand.u32 %v2346, 2147483648
        %v2362 = vor.u32 1.1754944e-38, %v2361
        %v2363 = vsel %vm2360, %v2362, %v2358
        %v2364 = vmul.f32 %v2341, %v2363
        %v2365 = vrcp.pop %v2349
        %v2366 = vmul.f32 %v2349, %v2365
        %v2367 = vsub.f32 1.0, %v2366
        %v2368 = vmul.f32 %v2365, %v2367
        %v2369 = vadd.f32 %v2365, %v2368
        %vm2370 = vweird.f32 %v2349
        %vm2371 = vweird.f32 %v2365
        %vm2372 = vmor %vm2370, %vm2371
        %v2373 = vsel %vm2372, %v2365, %v2369
        %v2374 = vand.u32 2147483647, %v2349
        %vm2375 = vcmp.eq.f32.partialorder %v2374, 8.507059e+37
        %v2376 = vand.u32 %v2349, 2147483648
        %v2377 = vor.u32 1.1754944e-38, %v2376
        %v2378 = vsel %vm2375, %v2377, %v2373
        %v2379 = vmul.f32 %v2343, %v2378
        %v2380 = vpack.c.bf16 %v2379, %v2364
        %v2382 = vsel %vm2053, %v2380, 0
        %2384 = vmatpush.bf16.msra.mxu0 0
        %2385 = vmatpush.bf16.msra.mxu0 0
        %2386 = vmatpush.bf16.msra.mxu0 0
        %2387 = vmatpush.bf16.msra.mxu0 0
        %2388 = vmatpush.bf16.msra.mxu0 0
        %2389 = vmatpush.bf16.msra.mxu0 0
        %2390 = vmatpush.bf16.msra.mxu0 0
        %2391 = vmatpush.bf16.msra.mxu0 %v2313
        %2392 = vmatmul.bf16.gmra.mxu0 %v2382
        %v2393 = vpop.f32.mrf.mxu0
        %v2394 = vadd.f32 0.0, %v2393
        %v2395 = vpop.f32.mrf.mxu0
        %v2396 = vadd.f32 0.0, %v2395
        %2397 = vdwg.mxu0
        %v2398 = vadd.f32 %v2304, %v2394
        %v2399 = vadd.f32 %v2305, %v2396
        %v2400 = vpack.c.bf16 %v2399, %v2398
        %v2401 = vld [vmem:[%s1062] sm:$0xf]
        %v2402 = vld [vmem:[%s1062 + $0x4] sm:$0xf]
        %v2403 = vld [vmem:[%s1062 + $0x8] sm:$0xf]
        %v2404 = vld [vmem:[%s1062 + $0xc] sm:$0xf]
        %v2405 = vld [vmem:[%s1062 + $0x10] sm:$0xf]
        %v2406 = vld [vmem:[%s1062 + $0x14] sm:$0xf]
        %v2407 = vld [vmem:[%s1062 + $0x18] sm:$0xf]
        %v2408 = vld [vmem:[%s1062 + $0x1c] sm:$0xf]
        %v2409 = vld [vmem:[%s1062 + $0x20] sm:$0xf]
        %v2410 = vld [vmem:[%s1062 + $0x24] sm:$0xf]
        %v2411 = vld [vmem:[%s1062 + $0x28] sm:$0xf]
        %v2412 = vld [vmem:[%s1062 + $0x2c] sm:$0xf]
        %v2413 = vld [vmem:[%s1062 + $0x30] sm:$0xf]
        %v2414 = vld [vmem:[%s1062 + $0x34] sm:$0xf]
        %v2415 = vld [vmem:[%s1062 + $0x38] sm:$0xf]
        %v2416 = vld [vmem:[%s1062 + $0x3c] sm:$0xf]
        %v2417 = vld [vmem:[%s1071] sm:$0x1]
        %v2419 = vperm.slane %v2417, 0
        %v2437 = vunpack.c.l.b16 %v2401
        %v2438 = vunpack.c.l.b16 %v2402
        %v2439 = vunpack.c.l.b16 %v2403
        %v2440 = vunpack.c.l.b16 %v2404
        %v2441 = vunpack.c.l.b16 %v2405
        %v2442 = vunpack.c.l.b16 %v2406
        %v2443 = vunpack.c.l.b16 %v2407
        %v2444 = vunpack.c.l.b16 %v2408
        %v2445 = vunpack.c.l.b16 %v2409
        %v2446 = vunpack.c.l.b16 %v2410
        %v2447 = vunpack.c.l.b16 %v2411
        %v2448 = vunpack.c.l.b16 %v2412
        %v2449 = vunpack.c.l.b16 %v2413
        %v2450 = vunpack.c.l.b16 %v2414
        %v2451 = vunpack.c.l.b16 %v2415
        %v2452 = vunpack.c.l.b16 %v2416
        %v2453 = vpack.c.b16 %v2438, %v2437
        %v2454 = vpack.c.b16 %v2440, %v2439
        %v2455 = vpack.c.b16 %v2442, %v2441
        %v2456 = vpack.c.b16 %v2444, %v2443
        %v2457 = vpack.c.b16 %v2446, %v2445
        %v2458 = vpack.c.b16 %v2448, %v2447
        %v2459 = vpack.c.b16 %v2450, %v2449
        %v2460 = vpack.c.b16 %v2452, %v2451
        %2469 = vmatpush.bf16.msra.mxu0 %v2460
        %2470 = vmatpush.bf16.msra.mxu0 %v2459
        %2471 = vmatpush.bf16.msra.mxu0 %v2458
        %2472 = vmatpush.bf16.msra.mxu0 %v2457
        %2473 = vmatpush.bf16.msra.mxu0 %v2456
        %2474 = vmatpush.bf16.msra.mxu0 %v2455
        %2475 = vmatpush.bf16.msra.mxu0 %v2454
        %2476 = vmatpush.bf16.msra.mxu0 %v2453
        %2477 = vmatmul.bf16.gmra.mxu0 %v2400
        %v2478 = vpop.f32.mrf.mxu0
        %v2479 = vadd.f32 %v2419, %v2478
        %v2480 = vpop.f32.mrf.mxu0
        %v2481 = vadd.f32 %v2419, %v2480
        %2482 = vdwg.mxu0
        %v2483 = vadd.f32 %v1760, %v2479
        %v2484 = vadd.f32 %v1761, %v2481
        %v2485 = vld [vmem:[%s1080] sm:$0x1]
        %v2486 = vld [vmem:[%s1089] sm:$0x1]
        %2487 = vadd.xlane.f32.xlu0 %v2483
        %v2488 = vpop.xlane.xlu0 %2487
        %2489 = vadd.xlane.f32.xlu0 %v2484
        %v2490 = vpop.xlane.xlu0 %2489
        %v2491 = vmul.f32 %v2488, %v1774
        %v2492 = vmul.f32 %v2490, %v1774
        %v2493 = vsub.f32 %v2483, %v2491
        %v2494 = vsub.f32 %v2484, %v2492
        %v2495 = vmul.f32 %v2493, %v2493
        %v2496 = vmul.f32 %v2494, %v2494
        %2497 = vadd.xlane.f32.xlu0 %v2495
        %v2498 = vpop.xlane.xlu0 %2497
        %2499 = vadd.xlane.f32.xlu0 %v2496
        %v2500 = vpop.xlane.xlu0 %2499
        %v2501 = vmul.f32 %v2498, %v1774
        %v2502 = vmul.f32 %v2500, %v1774
        %v2503 = vadd.f32 %v2501, 1e-06
        %v2504 = vadd.f32 %v2502, 1e-06
        %v2505 = vrsqrt.pop %v2503
        %v2506 = vmul.f32 %v2505, %v2503
        %v2507 = vmul.f32 %v2506, %v2505
        %v2508 = vmul.f32 0.5, %v2507
        %v2509 = vsub.f32 1.5, %v2508
        %v2510 = vmul.f32 %v2505, %v2509
        %vm2511 = vweird.f32 %v2503
        %vm2512 = vweird.f32 %v2505
        %vm2513 = vmor %vm2511, %vm2512
        %v2514 = vsel %vm2513, %v2505, %v2510
        %v2515 = vrsqrt.pop %v2504
        %v2516 = vmul.f32 %v2515, %v2504
        %v2517 = vmul.f32 %v2516, %v2515
        %v2518 = vmul.f32 0.5, %v2517
        %v2519 = vsub.f32 1.5, %v2518
        %v2520 = vmul.f32 %v2515, %v2519
        %vm2521 = vweird.f32 %v2504
        %vm2522 = vweird.f32 %v2515
        %vm2523 = vmor %vm2521, %vm2522
        %v2524 = vsel %vm2523, %v2515, %v2520
        %v2525 = vmul.f32 %v2493, %v2514
        %v2526 = vmul.f32 %v2494, %v2524
        %v2528 = vperm.slane %v2485, 0
        %v2530 = vmul.f32 %v2525, %v2528
        %v2531 = vmul.f32 %v2526, %v2528
        %v2533 = vperm.slane %v2486, 0
        %v2535 = vadd.f32 %v2530, %v2533
        %v2536 = vadd.f32 %v2531, %v2533
        %v2537 = vpack.c.bf16 %v2536, %v2535
        %v2538 = vld [vmem:[%s1099] sm:$0xff]
        %v2539 = vld [vmem:[%s1099 + $0x8] sm:$0xff]
        %v2540 = vld [vmem:[%s1099 + $0x10] sm:$0xff]
        %v2541 = vld [vmem:[%s1099 + $0x18] sm:$0xff]
        %v2542 = vld [vmem:[%s1099 + $0x20] sm:$0xff]
        %v2543 = vld [vmem:[%s1099 + $0x28] sm:$0xff]
        %v2544 = vld [vmem:[%s1099 + $0x30] sm:$0xff]
        %v2545 = vld [vmem:[%s1099 + $0x38] sm:$0xff]
        %v2546 = vld [vmem:[%s1099 + $0x40] sm:$0xff]
        %v2547 = vld [vmem:[%s1099 + $0x48] sm:$0xff]
        %v2548 = vld [vmem:[%s1099 + $0x50] sm:$0xff]
        %v2549 = vld [vmem:[%s1099 + $0x58] sm:$0xff]
        %v2550 = vld [vmem:[%s1099 + $0x60] sm:$0xff]
        %v2551 = vld [vmem:[%s1099 + $0x68] sm:$0xff]
        %v2552 = vld [vmem:[%s1099 + $0x70] sm:$0xff]
        %v2553 = vld [vmem:[%s1099 + $0x78] sm:$0xff]
        %v2554 = vld [vmem:[%s1099 + $0x80] sm:$0xff]
        %v2555 = vld [vmem:[%s1099 + $0x88] sm:$0xff]
        %v2556 = vld [vmem:[%s1099 + $0x90] sm:$0xff]
        %v2557 = vld [vmem:[%s1099 + $0x98] sm:$0xff]
        %v2558 = vld [vmem:[%s1099 + $0xa0] sm:$0xff]
        %v2559 = vld [vmem:[%s1099 + $0xa8] sm:$0xff]
        %v2560 = vld [vmem:[%s1099 + $0xb0] sm:$0xff]
        %v2561 = vld [vmem:[%s1099 + $0xb8] sm:$0xff]
        %v2562 = vld [vmem:[%s1099 + $0xc0] sm:$0xff]
        %v2563 = vld [vmem:[%s1099 + $0xc8] sm:$0xff]
        %v2564 = vld [vmem:[%s1099 + $0xd0] sm:$0xff]
        %v2565 = vld [vmem:[%s1099 + $0xd8] sm:$0xff]
        %v2566 = vld [vmem:[%s1099 + $0xe0] sm:$0xff]
        %v2567 = vld [vmem:[%s1099 + $0xe8] sm:$0xff]
        %v2568 = vld [vmem:[%s1099 + $0xf0] sm:$0xff]
        %v2569 = vld [vmem:[%s1099 + $0xf8] sm:$0xff]
        %v2570 = vld [vmem:[%s1109] sm:$0xf]
        %v2572 = vperm.slane %v2570, 0
        %v2573 = vperm.slane %v2570, 1
        %v2574 = vperm.slane %v2570, 2
        %v2575 = vperm.slane %v2570, 3
        %v2612 = vunpack.c.l.b16 %v2538
        %v2613 = vunpack.c.h.b16 %v2538
        %v2614 = vunpack.c.l.b16 %v2539
        %v2615 = vunpack.c.h.b16 %v2539
        %v2616 = vunpack.c.l.b16 %v2540
        %v2617 = vunpack.c.h.b16 %v2540
        %v2618 = vunpack.c.l.b16 %v2541
        %v2619 = vunpack.c.h.b16 %v2541
        %v2620 = vunpack.c.l.b16 %v2542
        %v2621 = vunpack.c.h.b16 %v2542
        %v2622 = vunpack.c.l.b16 %v2543
        %v2623 = vunpack.c.h.b16 %v2543
        %v2624 = vunpack.c.l.b16 %v2544
        %v2625 = vunpack.c.h.b16 %v2544
        %v2626 = vunpack.c.l.b16 %v2545
        %v2627 = vunpack.c.h.b16 %v2545
        %v2628 = vunpack.c.l.b16 %v2546
        %v2629 = vunpack.c.h.b16 %v2546
        %v2630 = vunpack.c.l.b16 %v2547
        %v2631 = vunpack.c.h.b16 %v2547
        %v2632 = vunpack.c.l.b16 %v2548
        %v2633 = vunpack.c.h.b16 %v2548
        %v2634 = vunpack.c.l.b16 %v2549
        %v2635 = vunpack.c.h.b16 %v2549
        %v2636 = vunpack.c.l.b16 %v2550
        %v2637 = vunpack.c.h.b16 %v2550
        %v2638 = vunpack.c.l.b16 %v2551
        %v2639 = vunpack.c.h.b16 %v2551
        %v2640 = vunpack.c.l.b16 %v2552
        %v2641 = vunpack.c.h.b16 %v2552
        %v2642 = vunpack.c.l.b16 %v2553
        %v2643 = vunpack.c.h.b16 %v2553
        %v2644 = vunpack.c.l.b16 %v2554
        %v2645 = vunpack.c.h.b16 %v2554
        %v2646 = vunpack.c.l.b16 %v2555
        %v2647 = vunpack.c.h.b16 %v2555
        %v2648 = vunpack.c.l.b16 %v2556
        %v2649 = vunpack.c.h.b16 %v2556
        %v2650 = vunpack.c.l.b16 %v2557
        %v2651 = vunpack.c.h.b16 %v2557
        %v2652 = vunpack.c.l.b16 %v2558
        %v2653 = vunpack.c.h.b16 %v2558
        %v2654 = vunpack.c.l.b16 %v2559
        %v2655 = vunpack.c.h.b16 %v2559
        %v2656 = vunpack.c.l.b16 %v2560
        %v2657 = vunpack.c.h.b16 %v2560
        %v2658 = vunpack.c.l.b16 %v2561
        %v2659 = vunpack.c.h.b16 %v2561
        %v2660 = vunpack.c.l.b16 %v2562
        %v2661 = vunpack.c.h.b16 %v2562
        %v2662 = vunpack.c.l.b16 %v2563
        %v2663 = vunpack.c.h.b16 %v2563
        %v2664 = vunpack.c.l.b16 %v2564
        %v2665 = vunpack.c.h.b16 %v2564
        %v2666 = vunpack.c.l.b16 %v2565
        %v2667 = vunpack.c.h.b16 %v2565
        %v2668 = vunpack.c.l.b16 %v2566
        %v2669 = vunpack.c.h.b16 %v2566
        %v2670 = vunpack.c.l.b16 %v2567
        %v2671 = vunpack.c.h.b16 %v2567
        %v2672 = vunpack.c.l.b16 %v2568
        %v2673 = vunpack.c.h.b16 %v2568
        %v2674 = vunpack.c.l.b16 %v2569
        %v2675 = vunpack.c.h.b16 %v2569
        %v2676 = vpack.c.b16 %v2616, %v2612
        %v2677 = vpack.c.b16 %v2617, %v2613
        %v2678 = vpack.c.b16 %v2618, %v2614
        %v2679 = vpack.c.b16 %v2619, %v2615
        %v2680 = vpack.c.b16 %v2624, %v2620
        %v2681 = vpack.c.b16 %v2625, %v2621
        %v2682 = vpack.c.b16 %v2626, %v2622
        %v2683 = vpack.c.b16 %v2627, %v2623
        %v2684 = vpack.c.b16 %v2632, %v2628
        %v2685 = vpack.c.b16 %v2633, %v2629
        %v2686 = vpack.c.b16 %v2634, %v2630
        %v2687 = vpack.c.b16 %v2635, %v2631
        %v2688 = vpack.c.b16 %v2640, %v2636
        %v2689 = vpack.c.b16 %v2641, %v2637
        %v2690 = vpack.c.b16 %v2642, %v2638
        %v2691 = vpack.c.b16 %v2643, %v2639
        %v2692 = vpack.c.b16 %v2648, %v2644
        %v2693 = vpack.c.b16 %v2649, %v2645
        %v2694 = vpack.c.b16 %v2650, %v2646
        %v2695 = vpack.c.b16 %v2651, %v2647
        %v2696 = vpack.c.b16 %v2656, %v2652
        %v2697 = vpack.c.b16 %v2657, %v2653
        %v2698 = vpack.c.b16 %v2658, %v2654
        %v2699 = vpack.c.b16 %v2659, %v2655
        %v2700 = vpack.c.b16 %v2664, %v2660
        %v2701 = vpack.c.b16 %v2665, %v2661
        %v2702 = vpack.c.b16 %v2666, %v2662
        %v2703 = vpack.c.b16 %v2667, %v2663
        %v2704 = vpack.c.b16 %v2672, %v2668
        %v2705 = vpack.c.b16 %v2673, %v2669
        %v2706 = vpack.c.b16 %v2674, %v2670
        %v2707 = vpack.c.b16 %v2675, %v2671
        %2740 = vmatpush.bf16.msra.mxu0 %v2704
        %2741 = vmatpush.bf16.msra.mxu0 %v2700
        %2742 = vmatpush.bf16.msra.mxu0 %v2696
        %2743 = vmatpush.bf16.msra.mxu0 %v2692
        %2744 = vmatpush.bf16.msra.mxu0 %v2688
        %2745 = vmatpush.bf16.msra.mxu0 %v2684
        %2746 = vmatpush.bf16.msra.mxu0 %v2680
        %2747 = vmatpush.bf16.msra.mxu0 %v2676
        %2748 = vmatmul.bf16.gmra.mxu0 %v2537
        %v2749 = vpop.f32.mrf.mxu0
        %v2750 = vadd.f32 %v2572, %v2749
        %v2751 = vpop.f32.mrf.mxu0
        %v2752 = vadd.f32 %v2572, %v2751
        %2753 = vdwg.mxu0
        %2754 = vmatpush.bf16.msra.mxu0 %v2705
        %2755 = vmatpush.bf16.msra.mxu0 %v2701
        %2756 = vmatpush.bf16.msra.mxu0 %v2697
        %2757 = vmatpush.bf16.msra.mxu0 %v2693
        %2758 = vmatpush.bf16.msra.mxu0 %v2689
        %2759 = vmatpush.bf16.msra.mxu0 %v2685
        %2760 = vmatpush.bf16.msra.mxu0 %v2681
        %2761 = vmatpush.bf16.msra.mxu0 %v2677
        %2762 = vmatmul.bf16.gmra.mxu0 %v2537
        %v2763 = vpop.f32.mrf.mxu0
        %v2764 = vadd.f32 %v2573, %v2763
        %v2765 = vpop.f32.mrf.mxu0
        %v2766 = vadd.f32 %v2573, %v2765
        %2767 = vdwg.mxu0
        %2768 = vmatpush.bf16.msra.mxu0 %v2706
        %2769 = vmatpush.bf16.msra.mxu0 %v2702
        %2770 = vmatpush.bf16.msra.mxu0 %v2698
        %2771 = vmatpush.bf16.msra.mxu0 %v2694
        %2772 = vmatpush.bf16.msra.mxu0 %v2690
        %2773 = vmatpush.bf16.msra.mxu0 %v2686
        %2774 = vmatpush.bf16.msra.mxu0 %v2682
        %2775 = vmatpush.bf16.msra.mxu0 %v2678
        %2776 = vmatmul.bf16.gmra.mxu0 %v2537
        %v2777 = vpop.f32.mrf.mxu0
        %v2778 = vadd.f32 %v2574, %v2777
        %v2779 = vpop.f32.mrf.mxu0
        %v2780 = vadd.f32 %v2574, %v2779
        %2781 = vdwg.mxu0
        %2782 = vmatpush.bf16.msra.mxu0 %v2707
        %2783 = vmatpush.bf16.msra.mxu0 %v2703
        %2784 = vmatpush.bf16.msra.mxu0 %v2699
        %2785 = vmatpush.bf16.msra.mxu0 %v2695
        %2786 = vmatpush.bf16.msra.mxu0 %v2691
        %2787 = vmatpush.bf16.msra.mxu0 %v2687
        %2788 = vmatpush.bf16.msra.mxu0 %v2683
        %2789 = vmatpush.bf16.msra.mxu0 %v2679
        %2790 = vmatmul.bf16.gmra.mxu0 %v2537
        %v2791 = vpop.f32.mrf.mxu0
        %v2792 = vadd.f32 %v2575, %v2791
        %v2793 = vpop.f32.mrf.mxu0
        %v2794 = vadd.f32 %v2575, %v2793
        %2795 = vdwg.mxu0
        %v2796 = vmul.f32 %v2750, 0.5
        %v2797 = vmul.f32 %v2764, 0.5
        %v2798 = vmul.f32 %v2778, 0.5
        %v2799 = vmul.f32 %v2792, 0.5
        %v2800 = vmul.f32 %v2752, 0.5
        %v2801 = vmul.f32 %v2766, 0.5
        %v2802 = vmul.f32 %v2780, 0.5
        %v2803 = vmul.f32 %v2794, 0.5
        %v2804 = vmul.f32 %v2750, 0.70710677
        %v2805 = vmul.f32 %v2764, 0.70710677
        %v2806 = vmul.f32 %v2778, 0.70710677
        %v2807 = vmul.f32 %v2792, 0.70710677
        %v2808 = vmul.f32 %v2752, 0.70710677
        %v2809 = vmul.f32 %v2766, 0.70710677
        %v2810 = vmul.f32 %v2780, 0.70710677
        %v2811 = vmul.f32 %v2794, 0.70710677
        %vm2812 = vcmp.ge.f32.partialorder %v2804, 0.0
        %vm2813 = vcmp.ge.f32.partialorder %v2805, 0.0
        %vm2814 = vcmp.ge.f32.partialorder %v2806, 0.0
        %vm2815 = vcmp.ge.f32.partialorder %v2807, 0.0
        %vm2816 = vcmp.ge.f32.partialorder %v2808, 0.0
        %vm2817 = vcmp.ge.f32.partialorder %v2809, 0.0
        %vm2818 = vcmp.ge.f32.partialorder %v2810, 0.0
        %vm2819 = vcmp.ge.f32.partialorder %v2811, 0.0
        %v2820 = vsel %vm2812, 1.0, -1.0
        %v2821 = vsel %vm2813, 1.0, -1.0
        %v2822 = vsel %vm2814, 1.0, -1.0
        %v2823 = vsel %vm2815, 1.0, -1.0
        %v2824 = vsel %vm2816, 1.0, -1.0
        %v2825 = vsel %vm2817, 1.0, -1.0
        %v2826 = vsel %vm2818, 1.0, -1.0
        %v2827 = vsel %vm2819, 1.0, -1.0
        %v2828 = vand.u32 2147483647, %v2804
        %v2829 = vand.u32 2147483647, %v2805
        %v2830 = vand.u32 2147483647, %v2806
        %v2831 = vand.u32 2147483647, %v2807
        %v2832 = vand.u32 2147483647, %v2808
        %v2833 = vand.u32 2147483647, %v2809
        %v2834 = vand.u32 2147483647, %v2810
        %v2835 = vand.u32 2147483647, %v2811
        %v2836 = vmul.f32 %v2828, 0.3275911
        %v2837 = vmul.f32 %v2829, 0.3275911
        %v2838 = vmul.f32 %v2830, 0.3275911
        %v2839 = vmul.f32 %v2831, 0.3275911
        %v2840 = vmul.f32 %v2832, 0.3275911
        %v2841 = vmul.f32 %v2833, 0.3275911
        %v2842 = vmul.f32 %v2834, 0.3275911
        %v2843 = vmul.f32 %v2835, 0.3275911
        %v2844 = vadd.f32 %v2836, 1.0
        %v2845 = vadd.f32 %v2837, 1.0
        %v2846 = vadd.f32 %v2838, 1.0
        %v2847 = vadd.f32 %v2839, 1.0
        %v2848 = vadd.f32 %v2840, 1.0
        %v2849 = vadd.f32 %v2841, 1.0
        %v2850 = vadd.f32 %v2842, 1.0
        %v2851 = vadd.f32 %v2843, 1.0
        %v2852 = vrcp.pop %v2844
        %v2853 = vmul.f32 %v2844, %v2852
        %v2854 = vsub.f32 1.0, %v2853
        %v2855 = vmul.f32 %v2852, %v2854
        %v2856 = vadd.f32 %v2852, %v2855
        %vm2857 = vweird.f32 %v2844
        %vm2858 = vweird.f32 %v2852
        %vm2859 = vmor %vm2857, %vm2858
        %v2860 = vsel %vm2859, %v2852, %v2856
        %v2861 = vand.u32 2147483647, %v2844
        %vm2862 = vcmp.eq.f32.partialorder %v2861, 8.507059e+37
        %v2863 = vand.u32 %v2844, 2147483648
        %v2864 = vor.u32 1.1754944e-38, %v2863
        %v2865 = vsel %vm2862, %v2864, %v2860
        %v2866 = vmul.f32 1.0, %v2865
        %v2867 = vrcp.pop %v2845
        %v2868 = vmul.f32 %v2845, %v2867
        %v2869 = vsub.f32 1.0, %v2868
        %v2870 = vmul.f32 %v2867, %v2869
        %v2871 = vadd.f32 %v2867, %v2870
        %vm2872 = vweird.f32 %v2845
        %vm2873 = vweird.f32 %v2867
        %vm2874 = vmor %vm2872, %vm2873
        %v2875 = vsel %vm2874, %v2867, %v2871
        %v2876 = vand.u32 2147483647, %v2845
        %vm2877 = vcmp.eq.f32.partialorder %v2876, 8.507059e+37
        %v2878 = vand.u32 %v2845, 2147483648
        %v2879 = vor.u32 1.1754944e-38, %v2878
        %v2880 = vsel %vm2877, %v2879, %v2875
        %v2881 = vmul.f32 1.0, %v2880
        %v2882 = vrcp.pop %v2846
        %v2883 = vmul.f32 %v2846, %v2882
        %v2884 = vsub.f32 1.0, %v2883
        %v2885 = vmul.f32 %v2882, %v2884
        %v2886 = vadd.f32 %v2882, %v2885
        %vm2887 = vweird.f32 %v2846
        %vm2888 = vweird.f32 %v2882
        %vm2889 = vmor %vm2887, %vm2888
        %v2890 = vsel %vm2889, %v2882, %v2886
        %v2891 = vand.u32 2147483647, %v2846
        %vm2892 = vcmp.eq.f32.partialorder %v2891, 8.507059e+37
        %v2893 = vand.u32 %v2846, 2147483648
        %v2894 = vor.u32 1.1754944e-38, %v2893
        %v2895 = vsel %vm2892, %v2894, %v2890
        %v2896 = vmul.f32 1.0, %v2895
        %v2897 = vrcp.pop %v2847
        %v2898 = vmul.f32 %v2847, %v2897
        %v2899 = vsub.f32 1.0, %v2898
        %v2900 = vmul.f32 %v2897, %v2899
        %v2901 = vadd.f32 %v2897, %v2900
        %vm2902 = vweird.f32 %v2847
        %vm2903 = vweird.f32 %v2897
        %vm2904 = vmor %vm2902, %vm2903
        %v2905 = vsel %vm2904, %v2897, %v2901
        %v2906 = vand.u32 2147483647, %v2847
        %vm2907 = vcmp.eq.f32.partialorder %v2906, 8.507059e+37
        %v2908 = vand.u32 %v2847, 2147483648
        %v2909 = vor.u32 1.1754944e-38, %v2908
        %v2910 = vsel %vm2907, %v2909, %v2905
        %v2911 = vmul.f32 1.0, %v2910
        %v2912 = vrcp.pop %v2848
        %v2913 = vmul.f32 %v2848, %v2912
        %v2914 = vsub.f32 1.0, %v2913
        %v2915 = vmul.f32 %v2912, %v2914
        %v2916 = vadd.f32 %v2912, %v2915
        %vm2917 = vweird.f32 %v2848
        %vm2918 = vweird.f32 %v2912
        %vm2919 = vmor %vm2917, %vm2918
        %v2920 = vsel %vm2919, %v2912, %v2916
        %v2921 = vand.u32 2147483647, %v2848
        %vm2922 = vcmp.eq.f32.partialorder %v2921, 8.507059e+37
        %v2923 = vand.u32 %v2848, 2147483648
        %v2924 = vor.u32 1.1754944e-38, %v2923
        %v2925 = vsel %vm2922, %v2924, %v2920
        %v2926 = vmul.f32 1.0, %v2925
        %v2927 = vrcp.pop %v2849
        %v2928 = vmul.f32 %v2849, %v2927
        %v2929 = vsub.f32 1.0, %v2928
        %v2930 = vmul.f32 %v2927, %v2929
        %v2931 = vadd.f32 %v2927, %v2930
        %vm2932 = vweird.f32 %v2849
        %vm2933 = vweird.f32 %v2927
        %vm2934 = vmor %vm2932, %vm2933
        %v2935 = vsel %vm2934, %v2927, %v2931
        %v2936 = vand.u32 2147483647, %v2849
        %vm2937 = vcmp.eq.f32.partialorder %v2936, 8.507059e+37
        %v2938 = vand.u32 %v2849, 2147483648
        %v2939 = vor.u32 1.1754944e-38, %v2938
        %v2940 = vsel %vm2937, %v2939, %v2935
        %v2941 = vmul.f32 1.0, %v2940
        %v2942 = vrcp.pop %v2850
        %v2943 = vmul.f32 %v2850, %v2942
        %v2944 = vsub.f32 1.0, %v2943
        %v2945 = vmul.f32 %v2942, %v2944
        %v2946 = vadd.f32 %v2942, %v2945
        %vm2947 = vweird.f32 %v2850
        %vm2948 = vweird.f32 %v2942
        %vm2949 = vmor %vm2947, %vm2948
        %v2950 = vsel %vm2949, %v2942, %v2946
        %v2951 = vand.u32 2147483647, %v2850
        %vm2952 = vcmp.eq.f32.partialorder %v2951, 8.507059e+37
        %v2953 = vand.u32 %v2850, 2147483648
        %v2954 = vor.u32 1.1754944e-38, %v2953
        %v2955 = vsel %vm2952, %v2954, %v2950
        %v2956 = vmul.f32 1.0, %v2955
        %v2957 = vrcp.pop %v2851
        %v2958 = vmul.f32 %v2851, %v2957
        %v2959 = vsub.f32 1.0, %v2958
        %v2960 = vmul.f32 %v2957, %v2959
        %v2961 = vadd.f32 %v2957, %v2960
        %vm2962 = vweird.f32 %v2851
        %vm2963 = vweird.f32 %v2957
        %vm2964 = vmor %vm2962, %vm2963
        %v2965 = vsel %vm2964, %v2957, %v2961
        %v2966 = vand.u32 2147483647, %v2851
        %vm2967 = vcmp.eq.f32.partialorder %v2966, 8.507059e+37
        %v2968 = vand.u32 %v2851, 2147483648
        %v2969 = vor.u32 1.1754944e-38, %v2968
        %v2970 = vsel %vm2967, %v2969, %v2965
        %v2971 = vmul.f32 1.0, %v2970
        %v2972 = vmul.f32 %v2866, 1.0614054
        %v2973 = vmul.f32 %v2881, 1.0614054
        %v2974 = vmul.f32 %v2896, 1.0614054
        %v2975 = vmul.f32 %v2911, 1.0614054
        %v2976 = vmul.f32 %v2926, 1.0614054
        %v2977 = vmul.f32 %v2941, 1.0614054
        %v2978 = vmul.f32 %v2956, 1.0614054
        %v2979 = vmul.f32 %v2971, 1.0614054
        %v2980 = vadd.f32 %v2972, -1.4531521
        %v2981 = vadd.f32 %v2973, -1.4531521
        %v2982 = vadd.f32 %v2974, -1.4531521
        %v2983 = vadd.f32 %v2975, -1.4531521
        %v2984 = vadd.f32 %v2976, -1.4531521
        %v2985 = vadd.f32 %v2977, -1.4531521
        %v2986 = vadd.f32 %v2978, -1.4531521
        %v2987 = vadd.f32 %v2979, -1.4531521
        %v2988 = vmul.f32 %v2866, %v2980
        %v2989 = vmul.f32 %v2881, %v2981
        %v2990 = vmul.f32 %v2896, %v2982
        %v2991 = vmul.f32 %v2911, %v2983
        %v2992 = vmul.f32 %v2926, %v2984
        %v2993 = vmul.f32 %v2941, %v2985
        %v2994 = vmul.f32 %v2956, %v2986
        %v2995 = vmul.f32 %v2971, %v2987
        %v2996 = vadd.f32 %v2988, 1.4214138
        %v2997 = vadd.f32 %v2989, 1.4214138
        %v2998 = vadd.f32 %v2990, 1.4214138
        %v2999 = vadd.f32 %v2991, 1.4214138
        %v3000 = vadd.f32 %v2992, 1.4214138
        %v3001 = vadd.f32 %v2993, 1.4214138
        %v3002 = vadd.f32 %v2994, 1.4214138
        %v3003 = vadd.f32 %v2995, 1.4214138
        %v3004 = vmul.f32 %v2866, %v2996
        %v3005 = vmul.f32 %v2881, %v2997
        %v3006 = vmul.f32 %v2896, %v2998
        %v3007 = vmul.f32 %v2911, %v2999
        %v3008 = vmul.f32 %v2926, %v3000
        %v3009 = vmul.f32 %v2941, %v3001
        %v3010 = vmul.f32 %v2956, %v3002
        %v3011 = vmul.f32 %v2971, %v3003
        %v3012 = vadd.f32 %v3004, -0.28449672
        %v3013 = vadd.f32 %v3005, -0.28449672
        %v3014 = vadd.f32 %v3006, -0.28449672
        %v3015 = vadd.f32 %v3007, -0.28449672
        %v3016 = vadd.f32 %v3008, -0.28449672
        %v3017 = vadd.f32 %v3009, -0.28449672
        %v3018 = vadd.f32 %v3010, -0.28449672
        %v3019 = vadd.f32 %v3011, -0.28449672
        %v3020 = vmul.f32 %v2866, %v3012
        %v3021 = vmul.f32 %v2881, %v3013
        %v3022 = vmul.f32 %v2896, %v3014
        %v3023 = vmul.f32 %v2911, %v3015
        %v3024 = vmul.f32 %v2926, %v3016
        %v3025 = vmul.f32 %v2941, %v3017
        %v3026 = vmul.f32 %v2956, %v3018
        %v3027 = vmul.f32 %v2971, %v3019
        %v3028 = vadd.f32 %v3020, 0.2548296
        %v3029 = vadd.f32 %v3021, 0.2548296
        %v3030 = vadd.f32 %v3022, 0.2548296
        %v3031 = vadd.f32 %v3023, 0.2548296
        %v3032 = vadd.f32 %v3024, 0.2548296
        %v3033 = vadd.f32 %v3025, 0.2548296
        %v3034 = vadd.f32 %v3026, 0.2548296
        %v3035 = vadd.f32 %v3027, 0.2548296
        %v3036 = vmul.f32 %v2866, %v3028
        %v3037 = vmul.f32 %v2881, %v3029
        %v3038 = vmul.f32 %v2896, %v3030
        %v3039 = vmul.f32 %v2911, %v3031
        %v3040 = vmul.f32 %v2926, %v3032
        %v3041 = vmul.f32 %v2941, %v3033
        %v3042 = vmul.f32 %v2956, %v3034
        %v3043 = vmul.f32 %v2971, %v3035
        %v3044 = vsub.f32 0.0, %v2828
        %v3045 = vsub.f32 0.0, %v2829
        %v3046 = vsub.f32 0.0, %v2830
        %v3047 = vsub.f32 0.0, %v2831
        %v3048 = vsub.f32 0.0, %v2832
        %v3049 = vsub.f32 0.0, %v2833
        %v3050 = vsub.f32 0.0, %v2834
        %v3051 = vsub.f32 0.0, %v2835
        %v3052 = vmul.f32 %v3044, %v2828
        %v3053 = vmul.f32 %v3045, %v2829
        %v3054 = vmul.f32 %v3046, %v2830
        %v3055 = vmul.f32 %v3047, %v2831
        %v3056 = vmul.f32 %v3048, %v2832
        %v3057 = vmul.f32 %v3049, %v2833
        %v3058 = vmul.f32 %v3050, %v2834
        %v3059 = vmul.f32 %v3051, %v2835
        %v3060 = vmul.f32 %v3052, 1.442695
        %v3061 = vpow.pop %v3060
        %v3062 = vmul.f32 %v3053, 1.442695
        %v3063 = vpow.pop %v3062
        %v3064 = vmul.f32 %v3054, 1.442695
        %v3065 = vpow.pop %v3064
        %v3066 = vmul.f32 %v3055, 1.442695
        %v3067 = vpow.pop %v3066
        %v3068 = vmul.f32 %v3056, 1.442695
        %v3069 = vpow.pop %v3068
        %v3070 = vmul.f32 %v3057, 1.442695
        %v3071 = vpow.pop %v3070
        %v3072 = vmul.f32 %v3058, 1.442695
        %v3073 = vpow.pop %v3072
        %v3074 = vmul.f32 %v3059, 1.442695
        %v3075 = vpow.pop %v3074
        %v3076 = vmul.f32 %v3036, %v3061
        %v3077 = vmul.f32 %v3037, %v3063
        %v3078 = vmul.f32 %v3038, %v3065
        %v3079 = vmul.f32 %v3039, %v3067
        %v3080 = vmul.f32 %v3040, %v3069
        %v3081 = vmul.f32 %v3041, %v3071
        %v3082 = vmul.f32 %v3042, %v3073
        %v3083 = vmul.f32 %v3043, %v3075
        %v3084 = vsub.f32 1.0, %v3076
        %v3085 = vsub.f32 1.0, %v3077
        %v3086 = vsub.f32 1.0, %v3078
        %v3087 = vsub.f32 1.0, %v3079
        %v3088 = vsub.f32 1.0, %v3080
        %v3089 = vsub.f32 1.0, %v3081
        %v3090 = vsub.f32 1.0, %v3082
        %v3091 = vsub.f32 1.0, %v3083
        %v3092 = vmul.f32 %v2820, %v3084
        %v3093 = vmul.f32 %v2821, %v3085
        %v3094 = vmul.f32 %v2822, %v3086
        %v3095 = vmul.f32 %v2823, %v3087
        %v3096 = vmul.f32 %v2824, %v3088
        %v3097 = vmul.f32 %v2825, %v3089
        %v3098 = vmul.f32 %v2826, %v3090
        %v3099 = vmul.f32 %v2827, %v3091
        %v3100 = vadd.f32 %v3092, 1.0
        %v3101 = vadd.f32 %v3093, 1.0
        %v3102 = vadd.f32 %v3094, 1.0
        %v3103 = vadd.f32 %v3095, 1.0
        %v3104 = vadd.f32 %v3096, 1.0
        %v3105 = vadd.f32 %v3097, 1.0
        %v3106 = vadd.f32 %v3098, 1.0
        %v3107 = vadd.f32 %v3099, 1.0
        %v3108 = vmul.f32 %v2796, %v3100
        %v3109 = vmul.f32 %v2797, %v3101
        %v3110 = vmul.f32 %v2798, %v3102
        %v3111 = vmul.f32 %v2799, %v3103
        %v3112 = vmul.f32 %v2800, %v3104
        %v3113 = vmul.f32 %v2801, %v3105
        %v3114 = vmul.f32 %v2802, %v3106
        %v3115 = vmul.f32 %v2803, %v3107
        %v3116 = vpack.c.bf16 %v3112, %v3108
        %v3117 = vpack.c.bf16 %v3113, %v3109
        %v3118 = vpack.c.bf16 %v3114, %v3110
        %v3119 = vpack.c.bf16 %v3115, %v3111
        %v3120 = vld [vmem:[%s1119] sm:$0xf]
        %v3121 = vld [vmem:[%s1119 + $0x4] sm:$0xf]
        %v3122 = vld [vmem:[%s1119 + $0x8] sm:$0xf]
        %v3123 = vld [vmem:[%s1119 + $0xc] sm:$0xf]
        %v3124 = vld [vmem:[%s1119 + $0x10] sm:$0xf]
        %v3125 = vld [vmem:[%s1119 + $0x14] sm:$0xf]
        %v3126 = vld [vmem:[%s1119 + $0x18] sm:$0xf]
        %v3127 = vld [vmem:[%s1119 + $0x1c] sm:$0xf]
        %v3128 = vld [vmem:[%s1119 + $0x20] sm:$0xf]
        %v3129 = vld [vmem:[%s1119 + $0x24] sm:$0xf]
        %v3130 = vld [vmem:[%s1119 + $0x28] sm:$0xf]
        %v3131 = vld [vmem:[%s1119 + $0x2c] sm:$0xf]
        %v3132 = vld [vmem:[%s1119 + $0x30] sm:$0xf]
        %v3133 = vld [vmem:[%s1119 + $0x34] sm:$0xf]
        %v3134 = vld [vmem:[%s1119 + $0x38] sm:$0xf]
        %v3135 = vld [vmem:[%s1119 + $0x3c] sm:$0xf]
        %v3136 = vld [vmem:[%s1119 + $0x40] sm:$0xf]
        %v3137 = vld [vmem:[%s1119 + $0x44] sm:$0xf]
        %v3138 = vld [vmem:[%s1119 + $0x48] sm:$0xf]
        %v3139 = vld [vmem:[%s1119 + $0x4c] sm:$0xf]
        %v3140 = vld [vmem:[%s1119 + $0x50] sm:$0xf]
        %v3141 = vld [vmem:[%s1119 + $0x54] sm:$0xf]
        %v3142 = vld [vmem:[%s1119 + $0x58] sm:$0xf]
        %v3143 = vld [vmem:[%s1119 + $0x5c] sm:$0xf]
        %v3144 = vld [vmem:[%s1119 + $0x60] sm:$0xf]
        %v3145 = vld [vmem:[%s1119 + $0x64] sm:$0xf]
        %v3146 = vld [vmem:[%s1119 + $0x68] sm:$0xf]
        %v3147 = vld [vmem:[%s1119 + $0x6c] sm:$0xf]
        %v3148 = vld [vmem:[%s1119 + $0x70] sm:$0xf]
        %v3149 = vld [vmem:[%s1119 + $0x74] sm:$0xf]
        %v3150 = vld [vmem:[%s1119 + $0x78] sm:$0xf]
        %v3151 = vld [vmem:[%s1119 + $0x7c] sm:$0xf]
        %v3152 = vld [vmem:[%s1119 + $0x80] sm:$0xf]
        %v3153 = vld [vmem:[%s1119 + $0x84] sm:$0xf]
        %v3154 = vld [vmem:[%s1119 + $0x88] sm:$0xf]
        %v3155 = vld [vmem:[%s1119 + $0x8c] sm:$0xf]
        %v3156 = vld [vmem:[%s1119 + $0x90] sm:$0xf]
        %v3157 = vld [vmem:[%s1119 + $0x94] sm:$0xf]
        %v3158 = vld [vmem:[%s1119 + $0x98] sm:$0xf]
        %v3159 = vld [vmem:[%s1119 + $0x9c] sm:$0xf]
        %v3160 = vld [vmem:[%s1119 + $0xa0] sm:$0xf]
        %v3161 = vld [vmem:[%s1119 + $0xa4] sm:$0xf]
        %v3162 = vld [vmem:[%s1119 + $0xa8] sm:$0xf]
        %v3163 = vld [vmem:[%s1119 + $0xac] sm:$0xf]
        %v3164 = vld [vmem:[%s1119 + $0xb0] sm:$0xf]
        %v3165 = vld [vmem:[%s1119 + $0xb4] sm:$0xf]
        %v3166 = vld [vmem:[%s1119 + $0xb8] sm:$0xf]
        %v3167 = vld [vmem:[%s1119 + $0xbc] sm:$0xf]
        %v3168 = vld [vmem:[%s1119 + $0xc0] sm:$0xf]
        %v3169 = vld [vmem:[%s1119 + $0xc4] sm:$0xf]
        %v3170 = vld [vmem:[%s1119 + $0xc8] sm:$0xf]
        %v3171 = vld [vmem:[%s1119 + $0xcc] sm:$0xf]
        %v3172 = vld [vmem:[%s1119 + $0xd0] sm:$0xf]
        %v3173 = vld [vmem:[%s1119 + $0xd4] sm:$0xf]
        %v3174 = vld [vmem:[%s1119 + $0xd8] sm:$0xf]
        %v3175 = vld [vmem:[%s1119 + $0xdc] sm:$0xf]
        %v3176 = vld [vmem:[%s1119 + $0xe0] sm:$0xf]
        %v3177 = vld [vmem:[%s1119 + $0xe4] sm:$0xf]
        %v3178 = vld [vmem:[%s1119 + $0xe8] sm:$0xf]
        %v3179 = vld [vmem:[%s1119 + $0xec] sm:$0xf]
        %v3180 = vld [vmem:[%s1119 + $0xf0] sm:$0xf]
        %v3181 = vld [vmem:[%s1119 + $0xf4] sm:$0xf]
        %v3182 = vld [vmem:[%s1119 + $0xf8] sm:$0xf]
        %v3183 = vld [vmem:[%s1119 + $0xfc] sm:$0xf]
        %v3184 = vld [vmem:[%s1128] sm:$0x1]
        %v3186 = vperm.slane %v3184, 0
        %v3252 = vunpack.c.l.b16 %v3120
        %v3253 = vunpack.c.l.b16 %v3121
        %v3254 = vunpack.c.l.b16 %v3122
        %v3255 = vunpack.c.l.b16 %v3123
        %v3256 = vunpack.c.l.b16 %v3124
        %v3257 = vunpack.c.l.b16 %v3125
        %v3258 = vunpack.c.l.b16 %v3126
        %v3259 = vunpack.c.l.b16 %v3127
        %v3260 = vunpack.c.l.b16 %v3128
        %v3261 = vunpack.c.l.b16 %v3129
        %v3262 = vunpack.c.l.b16 %v3130
        %v3263 = vunpack.c.l.b16 %v3131
        %v3264 = vunpack.c.l.b16 %v3132
        %v3265 = vunpack.c.l.b16 %v3133
        %v3266 = vunpack.c.l.b16 %v3134
        %v3267 = vunpack.c.l.b16 %v3135
        %v3268 = vunpack.c.l.b16 %v3136
        %v3269 = vunpack.c.l.b16 %v3137
        %v3270 = vunpack.c.l.b16 %v3138
        %v3271 = vunpack.c.l.b16 %v3139
        %v3272 = vunpack.c.l.b16 %v3140
        %v3273 = vunpack.c.l.b16 %v3141
        %v3274 = vunpack.c.l.b16 %v3142
        %v3275 = vunpack.c.l.b16 %v3143
        %v3276 = vunpack.c.l.b16 %v3144
        %v3277 = vunpack.c.l.b16 %v3145
        %v3278 = vunpack.c.l.b16 %v3146
        %v3279 = vunpack.c.l.b16 %v3147
        %v3280 = vunpack.c.l.b16 %v3148
        %v3281 = vunpack.c.l.b16 %v3149
        %v3282 = vunpack.c.l.b16 %v3150
        %v3283 = vunpack.c.l.b16 %v3151
        %v3284 = vunpack.c.l.b16 %v3152
        %v3285 = vunpack.c.l.b16 %v3153
        %v3286 = vunpack.c.l.b16 %v3154
        %v3287 = vunpack.c.l.b16 %v3155
        %v3288 = vunpack.c.l.b16 %v3156
        %v3289 = vunpack.c.l.b16 %v3157
        %v3290 = vunpack.c.l.b16 %v3158
        %v3291 = vunpack.c.l.b16 %v3159
        %v3292 = vunpack.c.l.b16 %v3160
        %v3293 = vunpack.c.l.b16 %v3161
        %v3294 = vunpack.c.l.b16 %v3162
        %v3295 = vunpack.c.l.b16 %v3163
        %v3296 = vunpack.c.l.b16 %v3164
        %v3297 = vunpack.c.l.b16 %v3165
        %v3298 = vunpack.c.l.b16 %v3166
        %v3299 = vunpack.c.l.b16 %v3167
        %v3300 = vunpack.c.l.b16 %v3168
        %v3301 = vunpack.c.l.b16 %v3169
        %v3302 = vunpack.c.l.b16 %v3170
        %v3303 = vunpack.c.l.b16 %v3171
        %v3304 = vunpack.c.l.b16 %v3172
        %v3305 = vunpack.c.l.b16 %v3173
        %v3306 = vunpack.c.l.b16 %v3174
        %v3307 = vunpack.c.l.b16 %v3175
        %v3308 = vunpack.c.l.b16 %v3176
        %v3309 = vunpack.c.l.b16 %v3177
        %v3310 = vunpack.c.l.b16 %v3178
        %v3311 = vunpack.c.l.b16 %v3179
        %v3312 = vunpack.c.l.b16 %v3180
        %v3313 = vunpack.c.l.b16 %v3181
        %v3314 = vunpack.c.l.b16 %v3182
        %v3315 = vunpack.c.l.b16 %v3183
        %v3316 = vpack.c.b16 %v3253, %v3252
        %v3317 = vpack.c.b16 %v3255, %v3254
        %v3318 = vpack.c.b16 %v3257, %v3256
        %v3319 = vpack.c.b16 %v3259, %v3258
        %v3320 = vpack.c.b16 %v3261, %v3260
        %v3321 = vpack.c.b16 %v3263, %v3262
        %v3322 = vpack.c.b16 %v3265, %v3264
        %v3323 = vpack.c.b16 %v3267, %v3266
        %v3324 = vpack.c.b16 %v3269, %v3268
        %v3325 = vpack.c.b16 %v3271, %v3270
        %v3326 = vpack.c.b16 %v3273, %v3272
        %v3327 = vpack.c.b16 %v3275, %v3274
        %v3328 = vpack.c.b16 %v3277, %v3276
        %v3329 = vpack.c.b16 %v3279, %v3278
        %v3330 = vpack.c.b16 %v3281, %v3280
        %v3331 = vpack.c.b16 %v3283, %v3282
        %v3332 = vpack.c.b16 %v3285, %v3284
        %v3333 = vpack.c.b16 %v3287, %v3286
        %v3334 = vpack.c.b16 %v3289, %v3288
        %v3335 = vpack.c.b16 %v3291, %v3290
        %v3336 = vpack.c.b16 %v3293, %v3292
        %v3337 = vpack.c.b16 %v3295, %v3294
        %v3338 = vpack.c.b16 %v3297, %v3296
        %v3339 = vpack.c.b16 %v3299, %v3298
        %v3340 = vpack.c.b16 %v3301, %v3300
        %v3341 = vpack.c.b16 %v3303, %v3302
        %v3342 = vpack.c.b16 %v3305, %v3304
        %v3343 = vpack.c.b16 %v3307, %v3306
        %v3344 = vpack.c.b16 %v3309, %v3308
        %v3345 = vpack.c.b16 %v3311, %v3310
        %v3346 = vpack.c.b16 %v3313, %v3312
        %v3347 = vpack.c.b16 %v3315, %v3314
        %3380 = vmatpush.bf16.msra.mxu0 %v3323
        %3381 = vmatpush.bf16.msra.mxu0 %v3322
        %3382 = vmatpush.bf16.msra.mxu0 %v3321
        %3383 = vmatpush.bf16.msra.mxu0 %v3320
        %3384 = vmatpush.bf16.msra.mxu0 %v3319
        %3385 = vmatpush.bf16.msra.mxu0 %v3318
        %3386 = vmatpush.bf16.msra.mxu0 %v3317
        %3387 = vmatpush.bf16.msra.mxu0 %v3316
        %3388 = vmatmul.bf16.gmra.mxu0 %v3116
        %v3389 = vpop.f32.mrf.mxu0
        %v3390 = vadd.f32 %v3186, %v3389
        %v3391 = vpop.f32.mrf.mxu0
        %v3392 = vadd.f32 %v3186, %v3391
        %3393 = vdwg.mxu0
        %3394 = vmatpush.bf16.msra.mxu0 %v3331
        %3395 = vmatpush.bf16.msra.mxu0 %v3330
        %3396 = vmatpush.bf16.msra.mxu0 %v3329
        %3397 = vmatpush.bf16.msra.mxu0 %v3328
        %3398 = vmatpush.bf16.msra.mxu0 %v3327
        %3399 = vmatpush.bf16.msra.mxu0 %v3326
        %3400 = vmatpush.bf16.msra.mxu0 %v3325
        %3401 = vmatpush.bf16.msra.mxu0 %v3324
        %3402 = vmatmul.bf16.gmra.mxu0 %v3117
        %v3403 = vpop.f32.mrf.mxu0
        %v3404 = vadd.f32 %v3390, %v3403
        %v3405 = vpop.f32.mrf.mxu0
        %v3406 = vadd.f32 %v3392, %v3405
        %3407 = vdwg.mxu0
        %3408 = vmatpush.bf16.msra.mxu0 %v3339
        %3409 = vmatpush.bf16.msra.mxu0 %v3338
        %3410 = vmatpush.bf16.msra.mxu0 %v3337
        %3411 = vmatpush.bf16.msra.mxu0 %v3336
        %3412 = vmatpush.bf16.msra.mxu0 %v3335
        %3413 = vmatpush.bf16.msra.mxu0 %v3334
        %3414 = vmatpush.bf16.msra.mxu0 %v3333
        %3415 = vmatpush.bf16.msra.mxu0 %v3332
        %3416 = vmatmul.bf16.gmra.mxu0 %v3118
        %v3417 = vpop.f32.mrf.mxu0
        %v3418 = vadd.f32 %v3404, %v3417
        %v3419 = vpop.f32.mrf.mxu0
        %v3420 = vadd.f32 %v3406, %v3419
        %3421 = vdwg.mxu0
        %3422 = vmatpush.bf16.msra.mxu0 %v3347
        %3423 = vmatpush.bf16.msra.mxu0 %v3346
        %3424 = vmatpush.bf16.msra.mxu0 %v3345
        %3425 = vmatpush.bf16.msra.mxu0 %v3344
        %3426 = vmatpush.bf16.msra.mxu0 %v3343
        %3427 = vmatpush.bf16.msra.mxu0 %v3342
        %3428 = vmatpush.bf16.msra.mxu0 %v3341
        %3429 = vmatpush.bf16.msra.mxu0 %v3340
        %3430 = vmatmul.bf16.gmra.mxu0 %v3119
        %v3431 = vpop.f32.mrf.mxu0
        %v3432 = vadd.f32 %v3418, %v3431
        %v3433 = vpop.f32.mrf.mxu0
        %v3434 = vadd.f32 %v3420, %v3433
        %3435 = vdwg.mxu0
        %v3436 = vadd.f32 %v2483, %v3432
        %v3437 = vadd.f32 %v2484, %v3434
        %3438 = vst [vmem:[#allocation2] sm:$0xff] %v3436
        %3439 = vst [vmem:[#allocation2 + $0x8] sm:$0xff] %v3437
        // Predicated region
        $region197: #{ibot_forward.1} parent=107 // pred_check
          %p3440 = pneg %p1266
        $region198: #{ibot_forward.1} parent=107 // pred_check_branch
          %3442 = sbr.rel (%p3440) target = $region200
        $region199: #{ibot_forward.1} parent=107 // pred_region
          %3443 = vst [vmem:[#allocation3 - $0x1] sm:$0x1e] %v3436
          %3444 = vst [vmem:[#allocation3 + $0x3] sm:$0x1e] %v3437
        $region200: #{ibot_forward.1} parent=107 // pred_fallthru
          _
        %p3445 = scmp.eq.s32.totalorder %s44, 1
        // Predicated region
        $region201: #{ibot_forward.1} parent=107 // pred_check
          %p3446 = pneg %p3445
        $region202: #{ibot_forward.1} parent=107 // pred_check_branch
          %3448 = sbr.rel (%p3446) target = $region204
        $region203: #{ibot_forward.1} parent=107 // pred_region
          %s3449 = scalar_lea.vmem [#allocation3], 8
          %3450 = vst [vmem:[%s3449 - $0x1] sm:$0x1e] %v3436
          %3451 = vst [vmem:[%s3449 + $0x3] sm:$0x1e] %v3437
        $region204: #{ibot_forward.1} parent=107 // pred_fallthru
          _
        %p3452 = scmp.eq.s32.totalorder %s44, 2
        // Predicated region
        $region205: #{ibot_forward.1} parent=107 // pred_check
          %p3453 = pneg %p3452
        $region206: #{ibot_forward.1} parent=107 // pred_check_branch
          %3455 = sbr.rel (%p3453) target = $region208
        $region207: #{ibot_forward.1} parent=107 // pred_region
          %s3456 = scalar_lea.vmem [#allocation3], 16
          %3457 = vst [vmem:[%s3456 - $0x1] sm:$0x1e] %v3436
          %3458 = vst [vmem:[%s3456 + $0x3] sm:$0x1e] %v3437
        $region208: #{ibot_forward.1} parent=107 // pred_fallthru
          _
        %p3459 = scmp.eq.s32.totalorder %s44, 3
        // Predicated region
        $region209: #{ibot_forward.1} parent=107 // pred_check
          %p3460 = pneg %p3459
        $region210: #{ibot_forward.1} parent=107 // pred_check_branch
          %3462 = sbr.rel (%p3460) target = $region212
        $region211: #{ibot_forward.1} parent=107 // pred_region
          %s3463 = scalar_lea.vmem [#allocation3], 24
          %3464 = vst [vmem:[%s3463 - $0x1] sm:$0x1e] %v3436
          %3465 = vst [vmem:[%s3463 + $0x3] sm:$0x1e] %v3437
          %v3466 = vld [vmem:[#allocation3] sm:$0xff]
          %s3467 = scalar_lea.vmem [#allocation3], 8
          %v3468 = vld [vmem:[%s3467] sm:$0xff]
          %s3469 = scalar_lea.vmem [#allocation3], 16
          %v3470 = vld [vmem:[%s3469] sm:$0xff]
          %v3471 = vld [vmem:[%s3463] sm:$0xff]
          %v3472 = vpack.c.bf16 %v3466, %v3466
          %v3473 = vld [vmem:[#allocation23] sm:$0xff]
          %v3474 = vld [vmem:[#allocation23 + $0x8] sm:$0xff]
          %v3475 = vld [vmem:[#allocation23 + $0x10] sm:$0xff]
          %v3476 = vld [vmem:[#allocation23 + $0x18] sm:$0xff]
          %v3477 = vld [vmem:[#allocation23 + $0x20] sm:$0xff]
          %v3478 = vld [vmem:[#allocation23 + $0x28] sm:$0xff]
          %v3479 = vld [vmem:[#allocation23 + $0x30] sm:$0xff]
          %v3480 = vld [vmem:[#allocation23 + $0x38] sm:$0xff]
          %v3481 = vld [vmem:[#allocation23 + $0x40] sm:$0xff]
          %v3482 = vld [vmem:[#allocation23 + $0x48] sm:$0xff]
          %v3483 = vld [vmem:[#allocation23 + $0x50] sm:$0xff]
          %v3484 = vld [vmem:[#allocation23 + $0x58] sm:$0xff]
          %v3485 = vld [vmem:[#allocation23 + $0x60] sm:$0xff]
          %v3486 = vld [vmem:[#allocation23 + $0x68] sm:$0xff]
          %v3487 = vld [vmem:[#allocation23 + $0x70] sm:$0xff]
          %v3488 = vld [vmem:[#allocation23 + $0x78] sm:$0xff]
          %v3489 = vld [vmem:[#allocation23 + $0x80] sm:$0xff]
          %v3490 = vld [vmem:[#allocation23 + $0x88] sm:$0xff]
          %v3491 = vld [vmem:[#allocation23 + $0x90] sm:$0xff]
          %v3492 = vld [vmem:[#allocation23 + $0x98] sm:$0xff]
          %v3493 = vld [vmem:[#allocation23 + $0xa0] sm:$0xff]
          %v3494 = vld [vmem:[#allocation23 + $0xa8] sm:$0xff]
          %v3495 = vld [vmem:[#allocation23 + $0xb0] sm:$0xff]
          %v3496 = vld [vmem:[#allocation23 + $0xb8] sm:$0xff]
          %v3497 = vld [vmem:[#allocation23 + $0xc0] sm:$0xff]
          %v3498 = vld [vmem:[#allocation23 + $0xc8] sm:$0xff]
          %v3499 = vld [vmem:[#allocation23 + $0xd0] sm:$0xff]
          %v3500 = vld [vmem:[#allocation23 + $0xd8] sm:$0xff]
          %v3501 = vld [vmem:[#allocation23 + $0xe0] sm:$0xff]
          %v3502 = vld [vmem:[#allocation23 + $0xe8] sm:$0xff]
          %v3503 = vld [vmem:[#allocation23 + $0xf0] sm:$0xff]
          %v3504 = vld [vmem:[#allocation23 + $0xf8] sm:$0xff]
          %v3505 = vld [vmem:[#allocation24] sm:$0xf]
          %v3507 = vperm.slane %v3505, 0
          %v3508 = vperm.slane %v3505, 1
          %v3509 = vperm.slane %v3505, 2
          %v3510 = vperm.slane %v3505, 3
          %v3547 = vunpack.c.l.b16 %v3473
          %v3548 = vunpack.c.h.b16 %v3473
          %v3549 = vunpack.c.l.b16 %v3474
          %v3550 = vunpack.c.h.b16 %v3474
          %v3551 = vunpack.c.l.b16 %v3475
          %v3552 = vunpack.c.h.b16 %v3475
          %v3553 = vunpack.c.l.b16 %v3476
          %v3554 = vunpack.c.h.b16 %v3476
          %v3555 = vunpack.c.l.b16 %v3477
          %v3556 = vunpack.c.h.b16 %v3477
          %v3557 = vunpack.c.l.b16 %v3478
          %v3558 = vunpack.c.h.b16 %v3478
          %v3559 = vunpack.c.l.b16 %v3479
          %v3560 = vunpack.c.h.b16 %v3479
          %v3561 = vunpack.c.l.b16 %v3480
          %v3562 = vunpack.c.h.b16 %v3480
          %v3563 = vunpack.c.l.b16 %v3481
          %v3564 = vunpack.c.h.b16 %v3481
          %v3565 = vunpack.c.l.b16 %v3482
          %v3566 = vunpack.c.h.b16 %v3482
          %v3567 = vunpack.c.l.b16 %v3483
          %v3568 = vunpack.c.h.b16 %v3483
          %v3569 = vunpack.c.l.b16 %v3484
          %v3570 = vunpack.c.h.b16 %v3484
          %v3571 = vunpack.c.l.b16 %v3485
          %v3572 = vunpack.c.h.b16 %v3485
          %v3573 = vunpack.c.l.b16 %v3486
          %v3574 = vunpack.c.h.b16 %v3486
          %v3575 = vunpack.c.l.b16 %v3487
          %v3576 = vunpack.c.h.b16 %v3487
          %v3577 = vunpack.c.l.b16 %v3488
          %v3578 = vunpack.c.h.b16 %v3488
          %v3579 = vunpack.c.l.b16 %v3489
          %v3580 = vunpack.c.h.b16 %v3489
          %v3581 = vunpack.c.l.b16 %v3490
          %v3582 = vunpack.c.h.b16 %v3490
          %v3583 = vunpack.c.l.b16 %v3491
          %v3584 = vunpack.c.h.b16 %v3491
          %v3585 = vunpack.c.l.b16 %v3492
          %v3586 = vunpack.c.h.b16 %v3492
          %v3587 = vunpack.c.l.b16 %v3493
          %v3588 = vunpack.c.h.b16 %v3493
          %v3589 = vunpack.c.l.b16 %v3494
          %v3590 = vunpack.c.h.b16 %v3494
          %v3591 = vunpack.c.l.b16 %v3495
          %v3592 = vunpack.c.h.b16 %v3495
          %v3593 = vunpack.c.l.b16 %v3496
          %v3594 = vunpack.c.h.b16 %v3496
          %v3595 = vunpack.c.l.b16 %v3497
          %v3596 = vunpack.c.h.b16 %v3497
          %v3597 = vunpack.c.l.b16 %v3498
          %v3598 = vunpack.c.h.b16 %v3498
          %v3599 = vunpack.c.l.b16 %v3499
          %v3600 = vunpack.c.h.b16 %v3499
          %v3601 = vunpack.c.l.b16 %v3500
          %v3602 = vunpack.c.h.b16 %v3500
          %v3603 = vunpack.c.l.b16 %v3501
          %v3604 = vunpack.c.h.b16 %v3501
          %v3605 = vunpack.c.l.b16 %v3502
          %v3606 = vunpack.c.h.b16 %v3502
          %v3607 = vunpack.c.l.b16 %v3503
          %v3608 = vunpack.c.h.b16 %v3503
          %v3609 = vunpack.c.l.b16 %v3504
          %v3610 = vunpack.c.h.b16 %v3504
          %v3611 = vpack.c.b16 %v3551, %v3547
          %v3612 = vpack.c.b16 %v3552, %v3548
          %v3613 = vpack.c.b16 %v3553, %v3549
          %v3614 = vpack.c.b16 %v3554, %v3550
          %v3615 = vpack.c.b16 %v3559, %v3555
          %v3616 = vpack.c.b16 %v3560, %v3556
          %v3617 = vpack.c.b16 %v3561, %v3557
          %v3618 = vpack.c.b16 %v3562, %v3558
          %v3619 = vpack.c.b16 %v3567, %v3563
          %v3620 = vpack.c.b16 %v3568, %v3564
          %v3621 = vpack.c.b16 %v3569, %v3565
          %v3622 = vpack.c.b16 %v3570, %v3566
          %v3623 = vpack.c.b16 %v3575, %v3571
          %v3624 = vpack.c.b16 %v3576, %v3572
          %v3625 = vpack.c.b16 %v3577, %v3573
          %v3626 = vpack.c.b16 %v3578, %v3574
          %v3627 = vpack.c.b16 %v3583, %v3579
          %v3628 = vpack.c.b16 %v3584, %v3580
          %v3629 = vpack.c.b16 %v3585, %v3581
          %v3630 = vpack.c.b16 %v3586, %v3582
          %v3631 = vpack.c.b16 %v3591, %v3587
          %v3632 = vpack.c.b16 %v3592, %v3588
          %v3633 = vpack.c.b16 %v3593, %v3589
          %v3634 = vpack.c.b16 %v3594, %v3590
          %v3635 = vpack.c.b16 %v3599, %v3595
          %v3636 = vpack.c.b16 %v3600, %v3596
          %v3637 = vpack.c.b16 %v3601, %v3597
          %v3638 = vpack.c.b16 %v3602, %v3598
          %v3639 = vpack.c.b16 %v3607, %v3603
          %v3640 = vpack.c.b16 %v3608, %v3604
          %v3641 = vpack.c.b16 %v3609, %v3605
          %v3642 = vpack.c.b16 %v3610, %v3606
          %3675 = vmatpush.bf16.msra.mxu0 %v3639
          %3676 = vmatpush.bf16.msra.mxu0 %v3635
          %3677 = vmatpush.bf16.msra.mxu0 %v3631
          %3678 = vmatpush.bf16.msra.mxu0 %v3627
          %3679 = vmatpush.bf16.msra.mxu0 %v3623
          %3680 = vmatpush.bf16.msra.mxu0 %v3619
          %3681 = vmatpush.bf16.msra.mxu0 %v3615
          %3682 = vmatpush.bf16.msra.mxu0 %v3611
          %3683 = vmatmul.bf16.gmra.mxu0 %v3472
          %v3684 = vpop.f32.mrf.mxu0
          %v3685 = vadd.f32 %v3507, %v3684
          %v3686 = vpop.f32.mrf.mxu0
          %3687 = vdwg.mxu0
          %3688 = vmatpush.bf16.msra.mxu0 %v3640
          %3689 = vmatpush.bf16.msra.mxu0 %v3636
          %3690 = vmatpush.bf16.msra.mxu0 %v3632
          %3691 = vmatpush.bf16.msra.mxu0 %v3628
          %3692 = vmatpush.bf16.msra.mxu0 %v3624
          %3693 = vmatpush.bf16.msra.mxu0 %v3620
          %3694 = vmatpush.bf16.msra.mxu0 %v3616
          %3695 = vmatpush.bf16.msra.mxu0 %v3612
          %3696 = vmatmul.bf16.gmra.mxu0 %v3472
          %v3697 = vpop.f32.mrf.mxu0
          %v3698 = vadd.f32 %v3508, %v3697
          %v3699 = vpop.f32.mrf.mxu0
          %3700 = vdwg.mxu0
          %3701 = vmatpush.bf16.msra.mxu0 %v3641
          %3702 = vmatpush.bf16.msra.mxu0 %v3637
          %3703 = vmatpush.bf16.msra.mxu0 %v3633
          %3704 = vmatpush.bf16.msra.mxu0 %v3629
          %3705 = vmatpush.bf16.msra.mxu0 %v3625
          %3706 = vmatpush.bf16.msra.mxu0 %v3621
          %3707 = vmatpush.bf16.msra.mxu0 %v3617
          %3708 = vmatpush.bf16.msra.mxu0 %v3613
          %3709 = vmatmul.bf16.gmra.mxu0 %v3472
          %v3710 = vpop.f32.mrf.mxu0
          %v3711 = vadd.f32 %v3509, %v3710
          %v3712 = vpop.f32.mrf.mxu0
          %3713 = vdwg.mxu0
          %3714 = vmatpush.bf16.msra.mxu0 %v3642
          %3715 = vmatpush.bf16.msra.mxu0 %v3638
          %3716 = vmatpush.bf16.msra.mxu0 %v3634
          %3717 = vmatpush.bf16.msra.mxu0 %v3630
          %3718 = vmatpush.bf16.msra.mxu0 %v3626
          %3719 = vmatpush.bf16.msra.mxu0 %v3622
          %3720 = vmatpush.bf16.msra.mxu0 %v3618
          %3721 = vmatpush.bf16.msra.mxu0 %v3614
          %3722 = vmatmul.bf16.gmra.mxu0 %v3472
          %v3723 = vpop.f32.mrf.mxu0
          %v3724 = vadd.f32 %v3510, %v3723
          %v3725 = vpop.f32.mrf.mxu0
          %3726 = vdwg.mxu0
          %v3727 = vmul.f32 %v3685, 0.5
          %v3728 = vmul.f32 %v3698, 0.5
          %v3729 = vmul.f32 %v3711, 0.5
          %v3730 = vmul.f32 %v3724, 0.5
          %v3731 = vmul.f32 %v3685, 0.70710677
          %v3732 = vmul.f32 %v3698, 0.70710677
          %v3733 = vmul.f32 %v3711, 0.70710677
          %v3734 = vmul.f32 %v3724, 0.70710677
          %vm3735 = vcmp.ge.f32.partialorder %v3731, 0.0
          %vm3736 = vcmp.ge.f32.partialorder %v3732, 0.0
          %vm3737 = vcmp.ge.f32.partialorder %v3733, 0.0
          %vm3738 = vcmp.ge.f32.partialorder %v3734, 0.0
          %v3739 = vsel %vm3735, 1.0, -1.0
          %v3740 = vsel %vm3736, 1.0, -1.0
          %v3741 = vsel %vm3737, 1.0, -1.0
          %v3742 = vsel %vm3738, 1.0, -1.0
          %v3743 = vand.u32 2147483647, %v3731
          %v3744 = vand.u32 2147483647, %v3732
          %v3745 = vand.u32 2147483647, %v3733
          %v3746 = vand.u32 2147483647, %v3734
          %v3747 = vmul.f32 %v3743, 0.3275911
          %v3748 = vmul.f32 %v3744, 0.3275911
          %v3749 = vmul.f32 %v3745, 0.3275911
          %v3750 = vmul.f32 %v3746, 0.3275911
          %v3751 = vadd.f32 %v3747, 1.0
          %v3752 = vadd.f32 %v3748, 1.0
          %v3753 = vadd.f32 %v3749, 1.0
          %v3754 = vadd.f32 %v3750, 1.0
          %v3755 = vrcp.pop %v3751
          %v3756 = vmul.f32 %v3751, %v3755
          %v3757 = vsub.f32 1.0, %v3756
          %v3758 = vmul.f32 %v3755, %v3757
          %v3759 = vadd.f32 %v3755, %v3758
          %vm3760 = vweird.f32 %v3751
          %vm3761 = vweird.f32 %v3755
          %vm3762 = vmor %vm3760, %vm3761
          %v3763 = vsel %vm3762, %v3755, %v3759
          %v3764 = vand.u32 2147483647, %v3751
          %vm3765 = vcmp.eq.f32.partialorder %v3764, 8.507059e+37
          %v3766 = vand.u32 %v3751, 2147483648
          %v3767 = vor.u32 1.1754944e-38, %v3766
          %v3768 = vsel %vm3765, %v3767, %v3763
          %v3769 = vmul.f32 1.0, %v3768
          %v3770 = vrcp.pop %v3752
          %v3771 = vmul.f32 %v3752, %v3770
          %v3772 = vsub.f32 1.0, %v3771
          %v3773 = vmul.f32 %v3770, %v3772
          %v3774 = vadd.f32 %v3770, %v3773
          %vm3775 = vweird.f32 %v3752
          %vm3776 = vweird.f32 %v3770
          %vm3777 = vmor %vm3775, %vm3776
          %v3778 = vsel %vm3777, %v3770, %v3774
          %v3779 = vand.u32 2147483647, %v3752
          %vm3780 = vcmp.eq.f32.partialorder %v3779, 8.507059e+37
          %v3781 = vand.u32 %v3752, 2147483648
          %v3782 = vor.u32 1.1754944e-38, %v3781
          %v3783 = vsel %vm3780, %v3782, %v3778
          %v3784 = vmul.f32 1.0, %v3783
          %v3785 = vrcp.pop %v3753
          %v3786 = vmul.f32 %v3753, %v3785
          %v3787 = vsub.f32 1.0, %v3786
          %v3788 = vmul.f32 %v3785, %v3787
          %v3789 = vadd.f32 %v3785, %v3788
          %vm3790 = vweird.f32 %v3753
          %vm3791 = vweird.f32 %v3785
          %vm3792 = vmor %vm3790, %vm3791
          %v3793 = vsel %vm3792, %v3785, %v3789
          %v3794 = vand.u32 2147483647, %v3753
          %vm3795 = vcmp.eq.f32.partialorder %v3794, 8.507059e+37
          %v3796 = vand.u32 %v3753, 2147483648
          %v3797 = vor.u32 1.1754944e-38, %v3796
          %v3798 = vsel %vm3795, %v3797, %v3793
          %v3799 = vmul.f32 1.0, %v3798
          %v3800 = vrcp.pop %v3754
          %v3801 = vmul.f32 %v3754, %v3800
          %v3802 = vsub.f32 1.0, %v3801
          %v3803 = vmul.f32 %v3800, %v3802
          %v3804 = vadd.f32 %v3800, %v3803
          %vm3805 = vweird.f32 %v3754
          %vm3806 = vweird.f32 %v3800
          %vm3807 = vmor %vm3805, %vm3806
          %v3808 = vsel %vm3807, %v3800, %v3804
          %v3809 = vand.u32 2147483647, %v3754
          %vm3810 = vcmp.eq.f32.partialorder %v3809, 8.507059e+37
          %v3811 = vand.u32 %v3754, 2147483648
          %v3812 = vor.u32 1.1754944e-38, %v3811
          %v3813 = vsel %vm3810, %v3812, %v3808
          %v3814 = vmul.f32 1.0, %v3813
          %v3815 = vmul.f32 %v3769, 1.0614054
          %v3816 = vmul.f32 %v3784, 1.0614054
          %v3817 = vmul.f32 %v3799, 1.0614054
          %v3818 = vmul.f32 %v3814, 1.0614054
          %v3819 = vadd.f32 %v3815, -1.4531521
          %v3820 = vadd.f32 %v3816, -1.4531521
          %v3821 = vadd.f32 %v3817, -1.4531521
          %v3822 = vadd.f32 %v3818, -1.4531521
          %v3823 = vmul.f32 %v3769, %v3819
          %v3824 = vmul.f32 %v3784, %v3820
          %v3825 = vmul.f32 %v3799, %v3821
          %v3826 = vmul.f32 %v3814, %v3822
          %v3827 = vadd.f32 %v3823, 1.4214138
          %v3828 = vadd.f32 %v3824, 1.4214138
          %v3829 = vadd.f32 %v3825, 1.4214138
          %v3830 = vadd.f32 %v3826, 1.4214138
          %v3831 = vmul.f32 %v3769, %v3827
          %v3832 = vmul.f32 %v3784, %v3828
          %v3833 = vmul.f32 %v3799, %v3829
          %v3834 = vmul.f32 %v3814, %v3830
          %v3835 = vadd.f32 %v3831, -0.28449672
          %v3836 = vadd.f32 %v3832, -0.28449672
          %v3837 = vadd.f32 %v3833, -0.28449672
          %v3838 = vadd.f32 %v3834, -0.28449672
          %v3839 = vmul.f32 %v3769, %v3835
          %v3840 = vmul.f32 %v3784, %v3836
          %v3841 = vmul.f32 %v3799, %v3837
          %v3842 = vmul.f32 %v3814, %v3838
          %v3843 = vadd.f32 %v3839, 0.2548296
          %v3844 = vadd.f32 %v3840, 0.2548296
          %v3845 = vadd.f32 %v3841, 0.2548296
          %v3846 = vadd.f32 %v3842, 0.2548296
          %v3847 = vmul.f32 %v3769, %v3843
          %v3848 = vmul.f32 %v3784, %v3844
          %v3849 = vmul.f32 %v3799, %v3845
          %v3850 = vmul.f32 %v3814, %v3846
          %v3851 = vsub.f32 0.0, %v3743
          %v3852 = vsub.f32 0.0, %v3744
          %v3853 = vsub.f32 0.0, %v3745
          %v3854 = vsub.f32 0.0, %v3746
          %v3855 = vmul.f32 %v3851, %v3743
          %v3856 = vmul.f32 %v3852, %v3744
          %v3857 = vmul.f32 %v3853, %v3745
          %v3858 = vmul.f32 %v3854, %v3746
          %v3859 = vmul.f32 %v3855, 1.442695
          %v3860 = vpow.pop %v3859
          %v3861 = vmul.f32 %v3856, 1.442695
          %v3862 = vpow.pop %v3861
          %v3863 = vmul.f32 %v3857, 1.442695
          %v3864 = vpow.pop %v3863
          %v3865 = vmul.f32 %v3858, 1.442695
          %v3866 = vpow.pop %v3865
          %v3867 = vmul.f32 %v3847, %v3860
          %v3868 = vmul.f32 %v3848, %v3862
          %v3869 = vmul.f32 %v3849, %v3864
          %v3870 = vmul.f32 %v3850, %v3866
          %v3871 = vsub.f32 1.0, %v3867
          %v3872 = vsub.f32 1.0, %v3868
          %v3873 = vsub.f32 1.0, %v3869
          %v3874 = vsub.f32 1.0, %v3870
          %v3875 = vmul.f32 %v3739, %v3871
          %v3876 = vmul.f32 %v3740, %v3872
          %v3877 = vmul.f32 %v3741, %v3873
          %v3878 = vmul.f32 %v3742, %v3874
          %v3879 = vadd.f32 %v3875, 1.0
          %v3880 = vadd.f32 %v3876, 1.0
          %v3881 = vadd.f32 %v3877, 1.0
          %v3882 = vadd.f32 %v3878, 1.0
          %v3883 = vmul.f32 %v3727, %v3879
          %v3884 = vmul.f32 %v3728, %v3880
          %v3885 = vmul.f32 %v3729, %v3881
          %v3886 = vmul.f32 %v3730, %v3882
          %v3887 = vpack.c.bf16 %v3883, %v3883
          %v3888 = vpack.c.bf16 %v3884, %v3884
          %v3889 = vpack.c.bf16 %v3885, %v3885
          %v3890 = vpack.c.bf16 %v3886, %v3886
          %v3891 = vld [vmem:[#allocation25] sm:$0xff]
          %v3892 = vld [vmem:[#allocation25 + $0x8] sm:$0xff]
          %v3893 = vld [vmem:[#allocation25 + $0x10] sm:$0xff]
          %v3894 = vld [vmem:[#allocation25 + $0x18] sm:$0xff]
          %v3895 = vld [vmem:[#allocation25 + $0x20] sm:$0xff]
          %v3896 = vld [vmem:[#allocation25 + $0x28] sm:$0xff]
          %v3897 = vld [vmem:[#allocation25 + $0x30] sm:$0xff]
          %v3898 = vld [vmem:[#allocation25 + $0x38] sm:$0xff]
          %v3899 = vld [vmem:[#allocation25 + $0x40] sm:$0xff]
          %v3900 = vld [vmem:[#allocation25 + $0x48] sm:$0xff]
          %v3901 = vld [vmem:[#allocation25 + $0x50] sm:$0xff]
          %v3902 = vld [vmem:[#allocation25 + $0x58] sm:$0xff]
          %v3903 = vld [vmem:[#allocation25 + $0x60] sm:$0xff]
          %v3904 = vld [vmem:[#allocation25 + $0x68] sm:$0xff]
          %v3905 = vld [vmem:[#allocation25 + $0x70] sm:$0xff]
          %v3906 = vld [vmem:[#allocation25 + $0x78] sm:$0xff]
          %v3907 = vld [vmem:[#allocation25 + $0x80] sm:$0xff]
          %v3908 = vld [vmem:[#allocation25 + $0x88] sm:$0xff]
          %v3909 = vld [vmem:[#allocation25 + $0x90] sm:$0xff]
          %v3910 = vld [vmem:[#allocation25 + $0x98] sm:$0xff]
          %v3911 = vld [vmem:[#allocation25 + $0xa0] sm:$0xff]
          %v3912 = vld [vmem:[#allocation25 + $0xa8] sm:$0xff]
          %v3913 = vld [vmem:[#allocation25 + $0xb0] sm:$0xff]
          %v3914 = vld [vmem:[#allocation25 + $0xb8] sm:$0xff]
          %v3915 = vld [vmem:[#allocation25 + $0xc0] sm:$0xff]
          %v3916 = vld [vmem:[#allocation25 + $0xc8] sm:$0xff]
          %v3917 = vld [vmem:[#allocation25 + $0xd0] sm:$0xff]
          %v3918 = vld [vmem:[#allocation25 + $0xd8] sm:$0xff]
          %v3919 = vld [vmem:[#allocation25 + $0xe0] sm:$0xff]
          %v3920 = vld [vmem:[#allocation25 + $0xe8] sm:$0xff]
          %v3921 = vld [vmem:[#allocation25 + $0xf0] sm:$0xff]
          %v3922 = vld [vmem:[#allocation25 + $0xf8] sm:$0xff]
          %v3923 = vld [vmem:[#allocation25 + $0x100] sm:$0xff]
          %v3924 = vld [vmem:[#allocation25 + $0x108] sm:$0xff]
          %v3925 = vld [vmem:[#allocation25 + $0x110] sm:$0xff]
          %v3926 = vld [vmem:[#allocation25 + $0x118] sm:$0xff]
          %v3927 = vld [vmem:[#allocation25 + $0x120] sm:$0xff]
          %v3928 = vld [vmem:[#allocation25 + $0x128] sm:$0xff]
          %v3929 = vld [vmem:[#allocation25 + $0x130] sm:$0xff]
          %v3930 = vld [vmem:[#allocation25 + $0x138] sm:$0xff]
          %v3931 = vld [vmem:[#allocation25 + $0x140] sm:$0xff]
          %v3932 = vld [vmem:[#allocation25 + $0x148] sm:$0xff]
          %v3933 = vld [vmem:[#allocation25 + $0x150] sm:$0xff]
          %v3934 = vld [vmem:[#allocation25 + $0x158] sm:$0xff]
          %v3935 = vld [vmem:[#allocation25 + $0x160] sm:$0xff]
          %v3936 = vld [vmem:[#allocation25 + $0x168] sm:$0xff]
          %v3937 = vld [vmem:[#allocation25 + $0x170] sm:$0xff]
          %v3938 = vld [vmem:[#allocation25 + $0x178] sm:$0xff]
          %v3939 = vld [vmem:[#allocation25 + $0x180] sm:$0xff]
          %v3940 = vld [vmem:[#allocation25 + $0x188] sm:$0xff]
          %v3941 = vld [vmem:[#allocation25 + $0x190] sm:$0xff]
          %v3942 = vld [vmem:[#allocation25 + $0x198] sm:$0xff]
          %v3943 = vld [vmem:[#allocation25 + $0x1a0] sm:$0xff]
          %v3944 = vld [vmem:[#allocation25 + $0x1a8] sm:$0xff]
          %v3945 = vld [vmem:[#allocation25 + $0x1b0] sm:$0xff]
          %v3946 = vld [vmem:[#allocation25 + $0x1b8] sm:$0xff]
          %v3947 = vld [vmem:[#allocation25 + $0x1c0] sm:$0xff]
          %v3948 = vld [vmem:[#allocation25 + $0x1c8] sm:$0xff]
          %v3949 = vld [vmem:[#allocation25 + $0x1d0] sm:$0xff]
          %v3950 = vld [vmem:[#allocation25 + $0x1d8] sm:$0xff]
          %v3951 = vld [vmem:[#allocation25 + $0x1e0] sm:$0xff]
          %v3952 = vld [vmem:[#allocation25 + $0x1e8] sm:$0xff]
          %v3953 = vld [vmem:[#allocation25 + $0x1f0] sm:$0xff]
          %v3954 = vld [vmem:[#allocation25 + $0x1f8] sm:$0xff]
          %v3955 = vld [vmem:[#allocation25 + $0x200] sm:$0xff]
          %v3956 = vld [vmem:[#allocation25 + $0x208] sm:$0xff]
          %v3957 = vld [vmem:[#allocation25 + $0x210] sm:$0xff]
          %v3958 = vld [vmem:[#allocation25 + $0x218] sm:$0xff]
          %v3959 = vld [vmem:[#allocation25 + $0x220] sm:$0xff]
          %v3960 = vld [vmem:[#allocation25 + $0x228] sm:$0xff]
          %v3961 = vld [vmem:[#allocation25 + $0x230] sm:$0xff]
          %v3962 = vld [vmem:[#allocation25 + $0x238] sm:$0xff]
          %v3963 = vld [vmem:[#allocation25 + $0x240] sm:$0xff]
          %v3964 = vld [vmem:[#allocation25 + $0x248] sm:$0xff]
          %v3965 = vld [vmem:[#allocation25 + $0x250] sm:$0xff]
          %v3966 = vld [vmem:[#allocation25 + $0x258] sm:$0xff]
          %v3967 = vld [vmem:[#allocation25 + $0x260] sm:$0xff]
          %v3968 = vld [vmem:[#allocation25 + $0x268] sm:$0xff]
          %v3969 = vld [vmem:[#allocation25 + $0x270] sm:$0xff]
          %v3970 = vld [vmem:[#allocation25 + $0x278] sm:$0xff]
          %v3971 = vld [vmem:[#allocation25 + $0x280] sm:$0xff]
          %v3972 = vld [vmem:[#allocation25 + $0x288] sm:$0xff]
          %v3973 = vld [vmem:[#allocation25 + $0x290] sm:$0xff]
          %v3974 = vld [vmem:[#allocation25 + $0x298] sm:$0xff]
          %v3975 = vld [vmem:[#allocation25 + $0x2a0] sm:$0xff]
          %v3976 = vld [vmem:[#allocation25 + $0x2a8] sm:$0xff]
          %v3977 = vld [vmem:[#allocation25 + $0x2b0] sm:$0xff]
          %v3978 = vld [vmem:[#allocation25 + $0x2b8] sm:$0xff]
          %v3979 = vld [vmem:[#allocation25 + $0x2c0] sm:$0xff]
          %v3980 = vld [vmem:[#allocation25 + $0x2c8] sm:$0xff]
          %v3981 = vld [vmem:[#allocation25 + $0x2d0] sm:$0xff]
          %v3982 = vld [vmem:[#allocation25 + $0x2d8] sm:$0xff]
          %v3983 = vld [vmem:[#allocation25 + $0x2e0] sm:$0xff]
          %v3984 = vld [vmem:[#allocation25 + $0x2e8] sm:$0xff]
          %v3985 = vld [vmem:[#allocation25 + $0x2f0] sm:$0xff]
          %v3986 = vld [vmem:[#allocation25 + $0x2f8] sm:$0xff]
          %v3987 = vld [vmem:[#allocation25 + $0x300] sm:$0xff]
          %v3988 = vld [vmem:[#allocation25 + $0x308] sm:$0xff]
          %v3989 = vld [vmem:[#allocation25 + $0x310] sm:$0xff]
          %v3990 = vld [vmem:[#allocation25 + $0x318] sm:$0xff]
          %v3991 = vld [vmem:[#allocation25 + $0x320] sm:$0xff]
          %v3992 = vld [vmem:[#allocation25 + $0x328] sm:$0xff]
          %v3993 = vld [vmem:[#allocation25 + $0x330] sm:$0xff]
          %v3994 = vld [vmem:[#allocation25 + $0x338] sm:$0xff]
          %v3995 = vld [vmem:[#allocation25 + $0x340] sm:$0xff]
          %v3996 = vld [vmem:[#allocation25 + $0x348] sm:$0xff]
          %v3997 = vld [vmem:[#allocation25 + $0x350] sm:$0xff]
          %v3998 = vld [vmem:[#allocation25 + $0x358] sm:$0xff]
          %v3999 = vld [vmem:[#allocation25 + $0x360] sm:$0xff]
          %v4000 = vld [vmem:[#allocation25 + $0x368] sm:$0xff]
          %v4001 = vld [vmem:[#allocation25 + $0x370] sm:$0xff]
          %v4002 = vld [vmem:[#allocation25 + $0x378] sm:$0xff]
          %v4003 = vld [vmem:[#allocation25 + $0x380] sm:$0xff]
          %v4004 = vld [vmem:[#allocation25 + $0x388] sm:$0xff]
          %v4005 = vld [vmem:[#allocation25 + $0x390] sm:$0xff]
          %v4006 = vld [vmem:[#allocation25 + $0x398] sm:$0xff]
          %v4007 = vld [vmem:[#allocation25 + $0x3a0] sm:$0xff]
          %v4008 = vld [vmem:[#allocation25 + $0x3a8] sm:$0xff]
          %v4009 = vld [vmem:[#allocation25 + $0x3b0] sm:$0xff]
          %v4010 = vld [vmem:[#allocation25 + $0x3b8] sm:$0xff]
          %v4011 = vld [vmem:[#allocation25 + $0x3c0] sm:$0xff]
          %v4012 = vld [vmem:[#allocation25 + $0x3c8] sm:$0xff]
          %v4013 = vld [vmem:[#allocation25 + $0x3d0] sm:$0xff]
          %v4014 = vld [vmem:[#allocation25 + $0x3d8] sm:$0xff]
          %v4015 = vld [vmem:[#allocation25 + $0x3e0] sm:$0xff]
          %v4016 = vld [vmem:[#allocation25 + $0x3e8] sm:$0xff]
          %v4017 = vld [vmem:[#allocation25 + $0x3f0] sm:$0xff]
          %v4018 = vld [vmem:[#allocation25 + $0x3f8] sm:$0xff]
          %v4019 = vld [vmem:[#allocation25 + $0x400] sm:$0xff]
          %v4020 = vld [vmem:[#allocation25 + $0x408] sm:$0xff]
          %v4021 = vld [vmem:[#allocation25 + $0x410] sm:$0xff]
          %v4022 = vld [vmem:[#allocation25 + $0x418] sm:$0xff]
          %v4023 = vld [vmem:[#allocation25 + $0x420] sm:$0xff]
          %v4024 = vld [vmem:[#allocation25 + $0x428] sm:$0xff]
          %v4025 = vld [vmem:[#allocation25 + $0x430] sm:$0xff]
          %v4026 = vld [vmem:[#allocation25 + $0x438] sm:$0xff]
          %v4027 = vld [vmem:[#allocation25 + $0x440] sm:$0xff]
          %v4028 = vld [vmem:[#allocation25 + $0x448] sm:$0xff]
          %v4029 = vld [vmem:[#allocation25 + $0x450] sm:$0xff]
          %v4030 = vld [vmem:[#allocation25 + $0x458] sm:$0xff]
          %v4031 = vld [vmem:[#allocation25 + $0x460] sm:$0xff]
          %v4032 = vld [vmem:[#allocation25 + $0x468] sm:$0xff]
          %v4033 = vld [vmem:[#allocation25 + $0x470] sm:$0xff]
          %v4034 = vld [vmem:[#allocation25 + $0x478] sm:$0xff]
          %v4035 = vld [vmem:[#allocation25 + $0x480] sm:$0xff]
          %v4036 = vld [vmem:[#allocation25 + $0x488] sm:$0xff]
          %v4037 = vld [vmem:[#allocation25 + $0x490] sm:$0xff]
          %v4038 = vld [vmem:[#allocation25 + $0x498] sm:$0xff]
          %v4039 = vld [vmem:[#allocation25 + $0x4a0] sm:$0xff]
          %v4040 = vld [vmem:[#allocation25 + $0x4a8] sm:$0xff]
          %v4041 = vld [vmem:[#allocation25 + $0x4b0] sm:$0xff]
          %v4042 = vld [vmem:[#allocation25 + $0x4b8] sm:$0xff]
          %v4043 = vld [vmem:[#allocation25 + $0x4c0] sm:$0xff]
          %v4044 = vld [vmem:[#allocation25 + $0x4c8] sm:$0xff]
          %v4045 = vld [vmem:[#allocation25 + $0x4d0] sm:$0xff]
          %v4046 = vld [vmem:[#allocation25 + $0x4d8] sm:$0xff]
          %v4047 = vld [vmem:[#allocation25 + $0x4e0] sm:$0xff]
          %v4048 = vld [vmem:[#allocation25 + $0x4e8] sm:$0xff]
          %v4049 = vld [vmem:[#allocation25 + $0x4f0] sm:$0xff]
          %v4050 = vld [vmem:[#allocation25 + $0x4f8] sm:$0xff]
          %v4051 = vld [vmem:[#allocation25 + $0x500] sm:$0xff]
          %v4052 = vld [vmem:[#allocation25 + $0x508] sm:$0xff]
          %v4053 = vld [vmem:[#allocation25 + $0x510] sm:$0xff]
          %v4054 = vld [vmem:[#allocation25 + $0x518] sm:$0xff]
          %v4055 = vld [vmem:[#allocation25 + $0x520] sm:$0xff]
          %v4056 = vld [vmem:[#allocation25 + $0x528] sm:$0xff]
          %v4057 = vld [vmem:[#allocation25 + $0x530] sm:$0xff]
          %v4058 = vld [vmem:[#allocation25 + $0x538] sm:$0xff]
          %v4059 = vld [vmem:[#allocation25 + $0x540] sm:$0xff]
          %v4060 = vld [vmem:[#allocation25 + $0x548] sm:$0xff]
          %v4061 = vld [vmem:[#allocation25 + $0x550] sm:$0xff]
          %v4062 = vld [vmem:[#allocation25 + $0x558] sm:$0xff]
          %v4063 = vld [vmem:[#allocation25 + $0x560] sm:$0xff]
          %v4064 = vld [vmem:[#allocation25 + $0x568] sm:$0xff]
          %v4065 = vld [vmem:[#allocation25 + $0x570] sm:$0xff]
          %v4066 = vld [vmem:[#allocation25 + $0x578] sm:$0xff]
          %v4067 = vld [vmem:[#allocation25 + $0x580] sm:$0xff]
          %v4068 = vld [vmem:[#allocation25 + $0x588] sm:$0xff]
          %v4069 = vld [vmem:[#allocation25 + $0x590] sm:$0xff]
          %v4070 = vld [vmem:[#allocation25 + $0x598] sm:$0xff]
          %v4071 = vld [vmem:[#allocation25 + $0x5a0] sm:$0xff]
          %v4072 = vld [vmem:[#allocation25 + $0x5a8] sm:$0xff]
          %v4073 = vld [vmem:[#allocation25 + $0x5b0] sm:$0xff]
          %v4074 = vld [vmem:[#allocation25 + $0x5b8] sm:$0xff]
          %v4075 = vld [vmem:[#allocation25 + $0x5c0] sm:$0xff]
          %v4076 = vld [vmem:[#allocation25 + $0x5c8] sm:$0xff]
          %v4077 = vld [vmem:[#allocation25 + $0x5d0] sm:$0xff]
          %v4078 = vld [vmem:[#allocation25 + $0x5d8] sm:$0xff]
          %v4079 = vld [vmem:[#allocation25 + $0x5e0] sm:$0xff]
          %v4080 = vld [vmem:[#allocation25 + $0x5e8] sm:$0xff]
          %v4081 = vld [vmem:[#allocation25 + $0x5f0] sm:$0xff]
          %v4082 = vld [vmem:[#allocation25 + $0x5f8] sm:$0xff]
          %v4083 = vld [vmem:[#allocation25 + $0x600] sm:$0xff]
          %v4084 = vld [vmem:[#allocation25 + $0x608] sm:$0xff]
          %v4085 = vld [vmem:[#allocation25 + $0x610] sm:$0xff]
          %v4086 = vld [vmem:[#allocation25 + $0x618] sm:$0xff]
          %v4087 = vld [vmem:[#allocation25 + $0x620] sm:$0xff]
          %v4088 = vld [vmem:[#allocation25 + $0x628] sm:$0xff]
          %v4089 = vld [vmem:[#allocation25 + $0x630] sm:$0xff]
          %v4090 = vld [vmem:[#allocation25 + $0x638] sm:$0xff]
          %v4091 = vld [vmem:[#allocation25 + $0x640] sm:$0xff]
          %v4092 = vld [vmem:[#allocation25 + $0x648] sm:$0xff]
          %v4093 = vld [vmem:[#allocation25 + $0x650] sm:$0xff]
          %v4094 = vld [vmem:[#allocation25 + $0x658] sm:$0xff]
          %v4095 = vld [vmem:[#allocation25 + $0x660] sm:$0xff]
          %v4096 = vld [vmem:[#allocation25 + $0x668] sm:$0xff]
          %v4097 = vld [vmem:[#allocation25 + $0x670] sm:$0xff]
          %v4098 = vld [vmem:[#allocation25 + $0x678] sm:$0xff]
          %v4099 = vld [vmem:[#allocation25 + $0x680] sm:$0xff]
          %v4100 = vld [vmem:[#allocation25 + $0x688] sm:$0xff]
          %v4101 = vld [vmem:[#allocation25 + $0x690] sm:$0xff]
          %v4102 = vld [vmem:[#allocation25 + $0x698] sm:$0xff]
          %v4103 = vld [vmem:[#allocation25 + $0x6a0] sm:$0xff]
          %v4104 = vld [vmem:[#allocation25 + $0x6a8] sm:$0xff]
          %v4105 = vld [vmem:[#allocation25 + $0x6b0] sm:$0xff]
          %v4106 = vld [vmem:[#allocation25 + $0x6b8] sm:$0xff]
          %v4107 = vld [vmem:[#allocation25 + $0x6c0] sm:$0xff]
          %v4108 = vld [vmem:[#allocation25 + $0x6c8] sm:$0xff]
          %v4109 = vld [vmem:[#allocation25 + $0x6d0] sm:$0xff]
          %v4110 = vld [vmem:[#allocation25 + $0x6d8] sm:$0xff]
          %v4111 = vld [vmem:[#allocation25 + $0x6e0] sm:$0xff]
          %v4112 = vld [vmem:[#allocation25 + $0x6e8] sm:$0xff]
          %v4113 = vld [vmem:[#allocation25 + $0x6f0] sm:$0xff]
          %v4114 = vld [vmem:[#allocation25 + $0x6f8] sm:$0xff]
          %v4115 = vld [vmem:[#allocation25 + $0x700] sm:$0xff]
          %v4116 = vld [vmem:[#allocation25 + $0x708] sm:$0xff]
          %v4117 = vld [vmem:[#allocation25 + $0x710] sm:$0xff]
          %v4118 = vld [vmem:[#allocation25 + $0x718] sm:$0xff]
          %v4119 = vld [vmem:[#allocation25 + $0x720] sm:$0xff]
          %v4120 = vld [vmem:[#allocation25 + $0x728] sm:$0xff]
          %v4121 = vld [vmem:[#allocation25 + $0x730] sm:$0xff]
          %v4122 = vld [vmem:[#allocation25 + $0x738] sm:$0xff]
          %v4123 = vld [vmem:[#allocation25 + $0x740] sm:$0xff]
          %v4124 = vld [vmem:[#allocation25 + $0x748] sm:$0xff]
          %v4125 = vld [vmem:[#allocation25 + $0x750] sm:$0xff]
          %v4126 = vld [vmem:[#allocation25 + $0x758] sm:$0xff]
          %v4127 = vld [vmem:[#allocation25 + $0x760] sm:$0xff]
          %v4128 = vld [vmem:[#allocation25 + $0x768] sm:$0xff]
          %v4129 = vld [vmem:[#allocation25 + $0x770] sm:$0xff]
          %v4130 = vld [vmem:[#allocation25 + $0x778] sm:$0xff]
          %v4131 = vld [vmem:[#allocation25 + $0x780] sm:$0xff]
          %v4132 = vld [vmem:[#allocation25 + $0x788] sm:$0xff]
          %v4133 = vld [vmem:[#allocation25 + $0x790] sm:$0xff]
          %v4134 = vld [vmem:[#allocation25 + $0x798] sm:$0xff]
          %v4135 = vld [vmem:[#allocation25 + $0x7a0] sm:$0xff]
          %v4136 = vld [vmem:[#allocation25 + $0x7a8] sm:$0xff]
          %v4137 = vld [vmem:[#allocation25 + $0x7b0] sm:$0xff]
          %v4138 = vld [vmem:[#allocation25 + $0x7b8] sm:$0xff]
          %v4139 = vld [vmem:[#allocation25 + $0x7c0] sm:$0xff]
          %v4140 = vld [vmem:[#allocation25 + $0x7c8] sm:$0xff]
          %v4141 = vld [vmem:[#allocation25 + $0x7d0] sm:$0xff]
          %v4142 = vld [vmem:[#allocation25 + $0x7d8] sm:$0xff]
          %v4143 = vld [vmem:[#allocation25 + $0x7e0] sm:$0xff]
          %v4144 = vld [vmem:[#allocation25 + $0x7e8] sm:$0xff]
          %v4145 = vld [vmem:[#allocation25 + $0x7f0] sm:$0xff]
          %v4146 = vld [vmem:[#allocation25 + $0x7f8] sm:$0xff]
          %v4147 = vld [vmem:[#allocation25 + $0x800] sm:$0xff]
          %v4148 = vld [vmem:[#allocation25 + $0x808] sm:$0xff]
          %v4149 = vld [vmem:[#allocation25 + $0x810] sm:$0xff]
          %v4150 = vld [vmem:[#allocation25 + $0x818] sm:$0xff]
          %v4151 = vld [vmem:[#allocation25 + $0x820] sm:$0xff]
          %v4152 = vld [vmem:[#allocation25 + $0x828] sm:$0xff]
          %v4153 = vld [vmem:[#allocation25 + $0x830] sm:$0xff]
          %v4154 = vld [vmem:[#allocation25 + $0x838] sm:$0xff]
          %v4155 = vld [vmem:[#allocation25 + $0x840] sm:$0xff]
          %v4156 = vld [vmem:[#allocation25 + $0x848] sm:$0xff]
          %v4157 = vld [vmem:[#allocation25 + $0x850] sm:$0xff]
          %v4158 = vld [vmem:[#allocation25 + $0x858] sm:$0xff]
          %v4159 = vld [vmem:[#allocation25 + $0x860] sm:$0xff]
          %v4160 = vld [vmem:[#allocation25 + $0x868] sm:$0xff]
          %v4161 = vld [vmem:[#allocation25 + $0x870] sm:$0xff]
          %v4162 = vld [vmem:[#allocation25 + $0x878] sm:$0xff]
          %v4163 = vld [vmem:[#allocation25 + $0x880] sm:$0xff]
          %v4164 = vld [vmem:[#allocation25 + $0x888] sm:$0xff]
          %v4165 = vld [vmem:[#allocation25 + $0x890] sm:$0xff]
          %v4166 = vld [vmem:[#allocation25 + $0x898] sm:$0xff]
          %v4167 = vld [vmem:[#allocation25 + $0x8a0] sm:$0xff]
          %v4168 = vld [vmem:[#allocation25 + $0x8a8] sm:$0xff]
          %v4169 = vld [vmem:[#allocation25 + $0x8b0] sm:$0xff]
          %v4170 = vld [vmem:[#allocation25 + $0x8b8] sm:$0xff]
          %v4171 = vld [vmem:[#allocation25 + $0x8c0] sm:$0xff]
          %v4172 = vld [vmem:[#allocation25 + $0x8c8] sm:$0xff]
          %v4173 = vld [vmem:[#allocation25 + $0x8d0] sm:$0xff]
          %v4174 = vld [vmem:[#allocation25 + $0x8d8] sm:$0xff]
          %v4175 = vld [vmem:[#allocation25 + $0x8e0] sm:$0xff]
          %v4176 = vld [vmem:[#allocation25 + $0x8e8] sm:$0xff]
          %v4177 = vld [vmem:[#allocation25 + $0x8f0] sm:$0xff]
          %v4178 = vld [vmem:[#allocation25 + $0x8f8] sm:$0xff]
          %v4179 = vld [vmem:[#allocation25 + $0x900] sm:$0xff]
          %v4180 = vld [vmem:[#allocation25 + $0x908] sm:$0xff]
          %v4181 = vld [vmem:[#allocation25 + $0x910] sm:$0xff]
          %v4182 = vld [vmem:[#allocation25 + $0x918] sm:$0xff]
          %v4183 = vld [vmem:[#allocation25 + $0x920] sm:$0xff]
          %v4184 = vld [vmem:[#allocation25 + $0x928] sm:$0xff]
          %v4185 = vld [vmem:[#allocation25 + $0x930] sm:$0xff]
          %v4186 = vld [vmem:[#allocation25 + $0x938] sm:$0xff]
          %v4187 = vld [vmem:[#allocation25 + $0x940] sm:$0xff]
          %v4188 = vld [vmem:[#allocation25 + $0x948] sm:$0xff]
          %v4189 = vld [vmem:[#allocation25 + $0x950] sm:$0xff]
          %v4190 = vld [vmem:[#allocation25 + $0x958] sm:$0xff]
          %v4191 = vld [vmem:[#allocation25 + $0x960] sm:$0xff]
          %v4192 = vld [vmem:[#allocation25 + $0x968] sm:$0xff]
          %v4193 = vld [vmem:[#allocation25 + $0x970] sm:$0xff]
          %v4194 = vld [vmem:[#allocation25 + $0x978] sm:$0xff]
          %v4195 = vld [vmem:[#allocation25 + $0x980] sm:$0xff]
          %v4196 = vld [vmem:[#allocation25 + $0x988] sm:$0xff]
          %v4197 = vld [vmem:[#allocation25 + $0x990] sm:$0xff]
          %v4198 = vld [vmem:[#allocation25 + $0x998] sm:$0xff]
          %v4199 = vld [vmem:[#allocation25 + $0x9a0] sm:$0xff]
          %v4200 = vld [vmem:[#allocation25 + $0x9a8] sm:$0xff]
          %v4201 = vld [vmem:[#allocation25 + $0x9b0] sm:$0xff]
          %v4202 = vld [vmem:[#allocation25 + $0x9b8] sm:$0xff]
          %v4203 = vld [vmem:[#allocation25 + $0x9c0] sm:$0xff]
          %v4204 = vld [vmem:[#allocation25 + $0x9c8] sm:$0xff]
          %v4205 = vld [vmem:[#allocation25 + $0x9d0] sm:$0xff]
          %v4206 = vld [vmem:[#allocation25 + $0x9d8] sm:$0xff]
          %v4207 = vld [vmem:[#allocation25 + $0x9e0] sm:$0xff]
          %v4208 = vld [vmem:[#allocation25 + $0x9e8] sm:$0xff]
          %v4209 = vld [vmem:[#allocation25 + $0x9f0] sm:$0xff]
          %v4210 = vld [vmem:[#allocation25 + $0x9f8] sm:$0xff]
          %v4211 = vld [vmem:[#allocation25 + $0xa00] sm:$0xff]
          %v4212 = vld [vmem:[#allocation25 + $0xa08] sm:$0xff]
          %v4213 = vld [vmem:[#allocation25 + $0xa10] sm:$0xff]
          %v4214 = vld [vmem:[#allocation25 + $0xa18] sm:$0xff]
          %v4215 = vld [vmem:[#allocation25 + $0xa20] sm:$0xff]
          %v4216 = vld [vmem:[#allocation25 + $0xa28] sm:$0xff]
          %v4217 = vld [vmem:[#allocation25 + $0xa30] sm:$0xff]
          %v4218 = vld [vmem:[#allocation25 + $0xa38] sm:$0xff]
          %v4219 = vld [vmem:[#allocation25 + $0xa40] sm:$0xff]
          %v4220 = vld [vmem:[#allocation25 + $0xa48] sm:$0xff]
          %v4221 = vld [vmem:[#allocation25 + $0xa50] sm:$0xff]
          %v4222 = vld [vmem:[#allocation25 + $0xa58] sm:$0xff]
          %v4223 = vld [vmem:[#allocation25 + $0xa60] sm:$0xff]
          %v4224 = vld [vmem:[#allocation25 + $0xa68] sm:$0xff]
          %v4225 = vld [vmem:[#allocation25 + $0xa70] sm:$0xff]
          %v4226 = vld [vmem:[#allocation25 + $0xa78] sm:$0xff]
          %v4227 = vld [vmem:[#allocation25 + $0xa80] sm:$0xff]
          %v4228 = vld [vmem:[#allocation25 + $0xa88] sm:$0xff]
          %v4229 = vld [vmem:[#allocation25 + $0xa90] sm:$0xff]
          %v4230 = vld [vmem:[#allocation25 + $0xa98] sm:$0xff]
          %v4231 = vld [vmem:[#allocation25 + $0xaa0] sm:$0xff]
          %v4232 = vld [vmem:[#allocation25 + $0xaa8] sm:$0xff]
          %v4233 = vld [vmem:[#allocation25 + $0xab0] sm:$0xff]
          %v4234 = vld [vmem:[#allocation25 + $0xab8] sm:$0xff]
          %v4235 = vld [vmem:[#allocation25 + $0xac0] sm:$0xff]
          %v4236 = vld [vmem:[#allocation25 + $0xac8] sm:$0xff]
          %v4237 = vld [vmem:[#allocation25 + $0xad0] sm:$0xff]
          %v4238 = vld [vmem:[#allocation25 + $0xad8] sm:$0xff]
          %v4239 = vld [vmem:[#allocation25 + $0xae0] sm:$0xff]
          %v4240 = vld [vmem:[#allocation25 + $0xae8] sm:$0xff]
          %v4241 = vld [vmem:[#allocation25 + $0xaf0] sm:$0xff]
          %v4242 = vld [vmem:[#allocation25 + $0xaf8] sm:$0xff]
          %v4243 = vld [vmem:[#allocation25 + $0xb00] sm:$0xff]
          %v4244 = vld [vmem:[#allocation25 + $0xb08] sm:$0xff]
          %v4245 = vld [vmem:[#allocation25 + $0xb10] sm:$0xff]
          %v4246 = vld [vmem:[#allocation25 + $0xb18] sm:$0xff]
          %v4247 = vld [vmem:[#allocation25 + $0xb20] sm:$0xff]
          %v4248 = vld [vmem:[#allocation25 + $0xb28] sm:$0xff]
          %v4249 = vld [vmem:[#allocation25 + $0xb30] sm:$0xff]
          %v4250 = vld [vmem:[#allocation25 + $0xb38] sm:$0xff]
          %v4251 = vld [vmem:[#allocation25 + $0xb40] sm:$0xff]
          %v4252 = vld [vmem:[#allocation25 + $0xb48] sm:$0xff]
          %v4253 = vld [vmem:[#allocation25 + $0xb50] sm:$0xff]
          %v4254 = vld [vmem:[#allocation25 + $0xb58] sm:$0xff]
          %v4255 = vld [vmem:[#allocation25 + $0xb60] sm:$0xff]
          %v4256 = vld [vmem:[#allocation25 + $0xb68] sm:$0xff]
          %v4257 = vld [vmem:[#allocation25 + $0xb70] sm:$0xff]
          %v4258 = vld [vmem:[#allocation25 + $0xb78] sm:$0xff]
          %v4259 = vld [vmem:[#allocation25 + $0xb80] sm:$0xff]
          %v4260 = vld [vmem:[#allocation25 + $0xb88] sm:$0xff]
          %v4261 = vld [vmem:[#allocation25 + $0xb90] sm:$0xff]
          %v4262 = vld [vmem:[#allocation25 + $0xb98] sm:$0xff]
          %v4263 = vld [vmem:[#allocation25 + $0xba0] sm:$0xff]
          %v4264 = vld [vmem:[#allocation25 + $0xba8] sm:$0xff]
          %v4265 = vld [vmem:[#allocation25 + $0xbb0] sm:$0xff]
          %v4266 = vld [vmem:[#allocation25 + $0xbb8] sm:$0xff]
          %v4267 = vld [vmem:[#allocation25 + $0xbc0] sm:$0xff]
          %v4268 = vld [vmem:[#allocation25 + $0xbc8] sm:$0xff]
          %v4269 = vld [vmem:[#allocation25 + $0xbd0] sm:$0xff]
          %v4270 = vld [vmem:[#allocation25 + $0xbd8] sm:$0xff]
          %v4271 = vld [vmem:[#allocation25 + $0xbe0] sm:$0xff]
          %v4272 = vld [vmem:[#allocation25 + $0xbe8] sm:$0xff]
          %v4273 = vld [vmem:[#allocation25 + $0xbf0] sm:$0xff]
          %v4274 = vld [vmem:[#allocation25 + $0xbf8] sm:$0xff]
          %v4275 = vld [vmem:[#allocation25 + $0xc00] sm:$0xff]
          %v4276 = vld [vmem:[#allocation25 + $0xc08] sm:$0xff]
          %v4277 = vld [vmem:[#allocation25 + $0xc10] sm:$0xff]
          %v4278 = vld [vmem:[#allocation25 + $0xc18] sm:$0xff]
          %v4279 = vld [vmem:[#allocation25 + $0xc20] sm:$0xff]
          %v4280 = vld [vmem:[#allocation25 + $0xc28] sm:$0xff]
          %v4281 = vld [vmem:[#allocation25 + $0xc30] sm:$0xff]
          %v4282 = vld [vmem:[#allocation25 + $0xc38] sm:$0xff]
          %v4283 = vld [vmem:[#allocation25 + $0xc40] sm:$0xff]
          %v4284 = vld [vmem:[#allocation25 + $0xc48] sm:$0xff]
          %v4285 = vld [vmem:[#allocation25 + $0xc50] sm:$0xff]
          %v4286 = vld [vmem:[#allocation25 + $0xc58] sm:$0xff]
          %v4287 = vld [vmem:[#allocation25 + $0xc60] sm:$0xff]
          %v4288 = vld [vmem:[#allocation25 + $0xc68] sm:$0xff]
          %v4289 = vld [vmem:[#allocation25 + $0xc70] sm:$0xff]
          %v4290 = vld [vmem:[#allocation25 + $0xc78] sm:$0xff]
          %v4291 = vld [vmem:[#allocation25 + $0xc80] sm:$0xff]
          %v4292 = vld [vmem:[#allocation25 + $0xc88] sm:$0xff]
          %v4293 = vld [vmem:[#allocation25 + $0xc90] sm:$0xff]
          %v4294 = vld [vmem:[#allocation25 + $0xc98] sm:$0xff]
          %v4295 = vld [vmem:[#allocation25 + $0xca0] sm:$0xff]
          %v4296 = vld [vmem:[#allocation25 + $0xca8] sm:$0xff]
          %v4297 = vld [vmem:[#allocation25 + $0xcb0] sm:$0xff]
          %v4298 = vld [vmem:[#allocation25 + $0xcb8] sm:$0xff]
          %v4299 = vld [vmem:[#allocation25 + $0xcc0] sm:$0xff]
          %v4300 = vld [vmem:[#allocation25 + $0xcc8] sm:$0xff]
          %v4301 = vld [vmem:[#allocation25 + $0xcd0] sm:$0xff]
          %v4302 = vld [vmem:[#allocation25 + $0xcd8] sm:$0xff]
          %v4303 = vld [vmem:[#allocation25 + $0xce0] sm:$0xff]
          %v4304 = vld [vmem:[#allocation25 + $0xce8] sm:$0xff]
          %v4305 = vld [vmem:[#allocation25 + $0xcf0] sm:$0xff]
          %v4306 = vld [vmem:[#allocation25 + $0xcf8] sm:$0xff]
          %v4307 = vld [vmem:[#allocation25 + $0xd00] sm:$0xff]
          %v4308 = vld [vmem:[#allocation25 + $0xd08] sm:$0xff]
          %v4309 = vld [vmem:[#allocation25 + $0xd10] sm:$0xff]
          %v4310 = vld [vmem:[#allocation25 + $0xd18] sm:$0xff]
          %v4311 = vld [vmem:[#allocation25 + $0xd20] sm:$0xff]
          %v4312 = vld [vmem:[#allocation25 + $0xd28] sm:$0xff]
          %v4313 = vld [vmem:[#allocation25 + $0xd30] sm:$0xff]
          %v4314 = vld [vmem:[#allocation25 + $0xd38] sm:$0xff]
          %v4315 = vld [vmem:[#allocation25 + $0xd40] sm:$0xff]
          %v4316 = vld [vmem:[#allocation25 + $0xd48] sm:$0xff]
          %v4317 = vld [vmem:[#allocation25 + $0xd50] sm:$0xff]
          %v4318 = vld [vmem:[#allocation25 + $0xd58] sm:$0xff]
          %v4319 = vld [vmem:[#allocation25 + $0xd60] sm:$0xff]
          %v4320 = vld [vmem:[#allocation25 + $0xd68] sm:$0xff]
          %v4321 = vld [vmem:[#allocation25 + $0xd70] sm:$0xff]
          %v4322 = vld [vmem:[#allocation25 + $0xd78] sm:$0xff]
          %v4323 = vld [vmem:[#allocation25 + $0xd80] sm:$0xff]
          %v4324 = vld [vmem:[#allocation25 + $0xd88] sm:$0xff]
          %v4325 = vld [vmem:[#allocation25 + $0xd90] sm:$0xff]
          %v4326 = vld [vmem:[#allocation25 + $0xd98] sm:$0xff]
          %v4327 = vld [vmem:[#allocation25 + $0xda0] sm:$0xff]
          %v4328 = vld [vmem:[#allocation25 + $0xda8] sm:$0xff]
          %v4329 = vld [vmem:[#allocation25 + $0xdb0] sm:$0xff]
          %v4330 = vld [vmem:[#allocation25 + $0xdb8] sm:$0xff]
          %v4331 = vld [vmem:[#allocation25 + $0xdc0] sm:$0xff]
          %v4332 = vld [vmem:[#allocation25 + $0xdc8] sm:$0xff]
          %v4333 = vld [vmem:[#allocation25 + $0xdd0] sm:$0xff]
          %v4334 = vld [vmem:[#allocation25 + $0xdd8] sm:$0xff]
          %v4335 = vld [vmem:[#allocation25 + $0xde0] sm:$0xff]
          %v4336 = vld [vmem:[#allocation25 + $0xde8] sm:$0xff]
          %v4337 = vld [vmem:[#allocation25 + $0xdf0] sm:$0xff]
          %v4338 = vld [vmem:[#allocation25 + $0xdf8] sm:$0xff]
          %v4339 = vld [vmem:[#allocation25 + $0xe00] sm:$0xff]
          %v4340 = vld [vmem:[#allocation25 + $0xe08] sm:$0xff]
          %v4341 = vld [vmem:[#allocation25 + $0xe10] sm:$0xff]
          %v4342 = vld [vmem:[#allocation25 + $0xe18] sm:$0xff]
          %v4343 = vld [vmem:[#allocation25 + $0xe20] sm:$0xff]
          %v4344 = vld [vmem:[#allocation25 + $0xe28] sm:$0xff]
          %v4345 = vld [vmem:[#allocation25 + $0xe30] sm:$0xff]
          %v4346 = vld [vmem:[#allocation25 + $0xe38] sm:$0xff]
          %v4347 = vld [vmem:[#allocation25 + $0xe40] sm:$0xff]
          %v4348 = vld [vmem:[#allocation25 + $0xe48] sm:$0xff]
          %v4349 = vld [vmem:[#allocation25 + $0xe50] sm:$0xff]
          %v4350 = vld [vmem:[#allocation25 + $0xe58] sm:$0xff]
          %v4351 = vld [vmem:[#allocation25 + $0xe60] sm:$0xff]
          %v4352 = vld [vmem:[#allocation25 + $0xe68] sm:$0xff]
          %v4353 = vld [vmem:[#allocation25 + $0xe70] sm:$0xff]
          %v4354 = vld [vmem:[#allocation25 + $0xe78] sm:$0xff]
          %v4355 = vld [vmem:[#allocation25 + $0xe80] sm:$0xff]
          %v4356 = vld [vmem:[#allocation25 + $0xe88] sm:$0xff]
          %v4357 = vld [vmem:[#allocation25 + $0xe90] sm:$0xff]
          %v4358 = vld [vmem:[#allocation25 + $0xe98] sm:$0xff]
          %v4359 = vld [vmem:[#allocation25 + $0xea0] sm:$0xff]
          %v4360 = vld [vmem:[#allocation25 + $0xea8] sm:$0xff]
          %v4361 = vld [vmem:[#allocation25 + $0xeb0] sm:$0xff]
          %v4362 = vld [vmem:[#allocation25 + $0xeb8] sm:$0xff]
          %v4363 = vld [vmem:[#allocation25 + $0xec0] sm:$0xff]
          %v4364 = vld [vmem:[#allocation25 + $0xec8] sm:$0xff]
          %v4365 = vld [vmem:[#allocation25 + $0xed0] sm:$0xff]
          %v4366 = vld [vmem:[#allocation25 + $0xed8] sm:$0xff]
          %v4367 = vld [vmem:[#allocation25 + $0xee0] sm:$0xff]
          %v4368 = vld [vmem:[#allocation25 + $0xee8] sm:$0xff]
          %v4369 = vld [vmem:[#allocation25 + $0xef0] sm:$0xff]
          %v4370 = vld [vmem:[#allocation25 + $0xef8] sm:$0xff]
          %v4371 = vld [vmem:[#allocation25 + $0xf00] sm:$0xff]
          %v4372 = vld [vmem:[#allocation25 + $0xf08] sm:$0xff]
          %v4373 = vld [vmem:[#allocation25 + $0xf10] sm:$0xff]
          %v4374 = vld [vmem:[#allocation25 + $0xf18] sm:$0xff]
          %v4375 = vld [vmem:[#allocation25 + $0xf20] sm:$0xff]
          %v4376 = vld [vmem:[#allocation25 + $0xf28] sm:$0xff]
          %v4377 = vld [vmem:[#allocation25 + $0xf30] sm:$0xff]
          %v4378 = vld [vmem:[#allocation25 + $0xf38] sm:$0xff]
          %v4379 = vld [vmem:[#allocation25 + $0xf40] sm:$0xff]
          %v4380 = vld [vmem:[#allocation25 + $0xf48] sm:$0xff]
          %v4381 = vld [vmem:[#allocation25 + $0xf50] sm:$0xff]
          %v4382 = vld [vmem:[#allocation25 + $0xf58] sm:$0xff]
          %v4383 = vld [vmem:[#allocation25 + $0xf60] sm:$0xff]
          %v4384 = vld [vmem:[#allocation25 + $0xf68] sm:$0xff]
          %v4385 = vld [vmem:[#allocation25 + $0xf70] sm:$0xff]
          %v4386 = vld [vmem:[#allocation25 + $0xf78] sm:$0xff]
          %v4387 = vld [vmem:[#allocation25 + $0xf80] sm:$0xff]
          %v4388 = vld [vmem:[#allocation25 + $0xf88] sm:$0xff]
          %v4389 = vld [vmem:[#allocation25 + $0xf90] sm:$0xff]
          %v4390 = vld [vmem:[#allocation25 + $0xf98] sm:$0xff]
          %v4391 = vld [vmem:[#allocation25 + $0xfa0] sm:$0xff]
          %v4392 = vld [vmem:[#allocation25 + $0xfa8] sm:$0xff]
          %v4393 = vld [vmem:[#allocation25 + $0xfb0] sm:$0xff]
          %v4394 = vld [vmem:[#allocation25 + $0xfb8] sm:$0xff]
          %v4395 = vld [vmem:[#allocation25 + $0xfc0] sm:$0xff]
          %v4396 = vld [vmem:[#allocation25 + $0xfc8] sm:$0xff]
          %v4397 = vld [vmem:[#allocation25 + $0xfd0] sm:$0xff]
          %v4398 = vld [vmem:[#allocation25 + $0xfd8] sm:$0xff]
          %v4399 = vld [vmem:[#allocation25 + $0xfe0] sm:$0xff]
          %v4400 = vld [vmem:[#allocation25 + $0xfe8] sm:$0xff]
          %v4401 = vld [vmem:[#allocation25 + $0xff0] sm:$0xff]
          %v4402 = vld [vmem:[#allocation25 + $0xff8] sm:$0xff]
          %v4403 = vld [vmem:[#allocation27] sm:$0xff]
          %v4404 = vld [vmem:[#allocation27 + $0x8] sm:$0xff]
          %v4407 = vperm.slane %v4403, 0
          %v4408 = vperm.slane %v4403, 1
          %v4409 = vperm.slane %v4403, 2
          %v4410 = vperm.slane %v4403, 3
          %v4411 = vperm.slane %v4403, 4
          %v4412 = vperm.slane %v4403, 5
          %v4413 = vperm.slane %v4403, 6
          %v4414 = vperm.slane %v4403, 7
          %v4415 = vperm.slane %v4404, 0
          %v4416 = vperm.slane %v4404, 1
          %v4417 = vperm.slane %v4404, 2
          %v4418 = vperm.slane %v4404, 3
          %v4419 = vperm.slane %v4404, 4
          %v4420 = vperm.slane %v4404, 5
          %v4421 = vperm.slane %v4404, 6
          %v4422 = vperm.slane %v4404, 7
          %v4951 = vunpack.c.l.b16 %v3891
          %v4952 = vunpack.c.h.b16 %v3891
          %v4953 = vunpack.c.l.b16 %v3892
          %v4954 = vunpack.c.h.b16 %v3892
          %v4955 = vunpack.c.l.b16 %v3893
          %v4956 = vunpack.c.h.b16 %v3893
          %v4957 = vunpack.c.l.b16 %v3894
          %v4958 = vunpack.c.h.b16 %v3894
          %v4959 = vunpack.c.l.b16 %v3895
          %v4960 = vunpack.c.h.b16 %v3895
          %v4961 = vunpack.c.l.b16 %v3896
          %v4962 = vunpack.c.h.b16 %v3896
          %v4963 = vunpack.c.l.b16 %v3897
          %v4964 = vunpack.c.h.b16 %v3897
          %v4965 = vunpack.c.l.b16 %v3898
          %v4966 = vunpack.c.h.b16 %v3898
          %v4967 = vunpack.c.l.b16 %v3899
          %v4968 = vunpack.c.h.b16 %v3899
          %v4969 = vunpack.c.l.b16 %v3900
          %v4970 = vunpack.c.h.b16 %v3900
          %v4971 = vunpack.c.l.b16 %v3901
          %v4972 = vunpack.c.h.b16 %v3901
          %v4973 = vunpack.c.l.b16 %v3902
          %v4974 = vunpack.c.h.b16 %v3902
          %v4975 = vunpack.c.l.b16 %v3903
          %v4976 = vunpack.c.h.b16 %v3903
          %v4977 = vunpack.c.l.b16 %v3904
          %v4978 = vunpack.c.h.b16 %v3904
          %v4979 = vunpack.c.l.b16 %v3905
          %v4980 = vunpack.c.h.b16 %v3905
          %v4981 = vunpack.c.l.b16 %v3906
          %v4982 = vunpack.c.h.b16 %v3906
          %v4983 = vunpack.c.l.b16 %v3907
          %v4984 = vunpack.c.h.b16 %v3907
          %v4985 = vunpack.c.l.b16 %v3908
          %v4986 = vunpack.c.h.b16 %v3908
          %v4987 = vunpack.c.l.b16 %v3909
          %v4988 = vunpack.c.h.b16 %v3909
          %v4989 = vunpack.c.l.b16 %v3910
          %v4990 = vunpack.c.h.b16 %v3910
          %v4991 = vunpack.c.l.b16 %v3911
          %v4992 = vunpack.c.h.b16 %v3911
          %v4993 = vunpack.c.l.b16 %v3912
          %v4994 = vunpack.c.h.b16 %v3912
          %v4995 = vunpack.c.l.b16 %v3913
          %v4996 = vunpack.c.h.b16 %v3913
          %v4997 = vunpack.c.l.b16 %v3914
          %v4998 = vunpack.c.h.b16 %v3914
          %v4999 = vunpack.c.l.b16 %v3915
          %v5000 = vunpack.c.h.b16 %v3915
          %v5001 = vunpack.c.l.b16 %v3916
          %v5002 = vunpack.c.h.b16 %v3916
          %v5003 = vunpack.c.l.b16 %v3917
          %v5004 = vunpack.c.h.b16 %v3917
          %v5005 = vunpack.c.l.b16 %v3918
          %v5006 = vunpack.c.h.b16 %v3918
          %v5007 = vunpack.c.l.b16 %v3919
          %v5008 = vunpack.c.h.b16 %v3919
          %v5009 = vunpack.c.l.b16 %v3920
          %v5010 = vunpack.c.h.b16 %v3920
          %v5011 = vunpack.c.l.b16 %v3921
          %v5012 = vunpack.c.h.b16 %v3921
          %v5013 = vunpack.c.l.b16 %v3922
          %v5014 = vunpack.c.h.b16 %v3922
          %v5015 = vunpack.c.l.b16 %v3923
          %v5016 = vunpack.c.h.b16 %v3923
          %v5017 = vunpack.c.l.b16 %v3924
          %v5018 = vunpack.c.h.b16 %v3924
          %v5019 = vunpack.c.l.b16 %v3925
          %v5020 = vunpack.c.h.b16 %v3925
          %v5021 = vunpack.c.l.b16 %v3926
          %v5022 = vunpack.c.h.b16 %v3926
          %v5023 = vunpack.c.l.b16 %v3927
          %v5024 = vunpack.c.h.b16 %v3927
          %v5025 = vunpack.c.l.b16 %v3928
          %v5026 = vunpack.c.h.b16 %v3928
          %v5027 = vunpack.c.l.b16 %v3929
          %v5028 = vunpack.c.h.b16 %v3929
          %v5029 = vunpack.c.l.b16 %v3930
          %v5030 = vunpack.c.h.b16 %v3930
          %v5031 = vunpack.c.l.b16 %v3931
          %v5032 = vunpack.c.h.b16 %v3931
          %v5033 = vunpack.c.l.b16 %v3932
          %v5034 = vunpack.c.h.b16 %v3932
          %v5035 = vunpack.c.l.b16 %v3933
          %v5036 = vunpack.c.h.b16 %v3933
          %v5037 = vunpack.c.l.b16 %v3934
          %v5038 = vunpack.c.h.b16 %v3934
          %v5039 = vunpack.c.l.b16 %v3935
          %v5040 = vunpack.c.h.b16 %v3935
          %v5041 = vunpack.c.l.b16 %v3936
          %v5042 = vunpack.c.h.b16 %v3936
          %v5043 = vunpack.c.l.b16 %v3937
          %v5044 = vunpack.c.h.b16 %v3937
          %v5045 = vunpack.c.l.b16 %v3938
          %v5046 = vunpack.c.h.b16 %v3938
          %v5047 = vunpack.c.l.b16 %v3939
          %v5048 = vunpack.c.h.b16 %v3939
          %v5049 = vunpack.c.l.b16 %v3940
          %v5050 = vunpack.c.h.b16 %v3940
          %v5051 = vunpack.c.l.b16 %v3941
          %v5052 = vunpack.c.h.b16 %v3941
          %v5053 = vunpack.c.l.b16 %v3942
          %v5054 = vunpack.c.h.b16 %v3942
          %v5055 = vunpack.c.l.b16 %v3943
          %v5056 = vunpack.c.h.b16 %v3943
          %v5057 = vunpack.c.l.b16 %v3944
          %v5058 = vunpack.c.h.b16 %v3944
          %v5059 = vunpack.c.l.b16 %v3945
          %v5060 = vunpack.c.h.b16 %v3945
          %v5061 = vunpack.c.l.b16 %v3946
          %v5062 = vunpack.c.h.b16 %v3946
          %v5063 = vunpack.c.l.b16 %v3947
          %v5064 = vunpack.c.h.b16 %v3947
          %v5065 = vunpack.c.l.b16 %v3948
          %v5066 = vunpack.c.h.b16 %v3948
          %v5067 = vunpack.c.l.b16 %v3949
          %v5068 = vunpack.c.h.b16 %v3949
          %v5069 = vunpack.c.l.b16 %v3950
          %v5070 = vunpack.c.h.b16 %v3950
          %v5071 = vunpack.c.l.b16 %v3951
          %v5072 = vunpack.c.h.b16 %v3951
          %v5073 = vunpack.c.l.b16 %v3952
          %v5074 = vunpack.c.h.b16 %v3952
          %v5075 = vunpack.c.l.b16 %v3953
          %v5076 = vunpack.c.h.b16 %v3953
          %v5077 = vunpack.c.l.b16 %v3954
          %v5078 = vunpack.c.h.b16 %v3954
          %v5079 = vunpack.c.l.b16 %v3955
          %v5080 = vunpack.c.h.b16 %v3955
          %v5081 = vunpack.c.l.b16 %v3956
          %v5082 = vunpack.c.h.b16 %v3956
          %v5083 = vunpack.c.l.b16 %v3957
          %v5084 = vunpack.c.h.b16 %v3957
          %v5085 = vunpack.c.l.b16 %v3958
          %v5086 = vunpack.c.h.b16 %v3958
          %v5087 = vunpack.c.l.b16 %v3959
          %v5088 = vunpack.c.h.b16 %v3959
          %v5089 = vunpack.c.l.b16 %v3960
          %v5090 = vunpack.c.h.b16 %v3960
          %v5091 = vunpack.c.l.b16 %v3961
          %v5092 = vunpack.c.h.b16 %v3961
          %v5093 = vunpack.c.l.b16 %v3962
          %v5094 = vunpack.c.h.b16 %v3962
          %v5095 = vunpack.c.l.b16 %v3963
          %v5096 = vunpack.c.h.b16 %v3963
          %v5097 = vunpack.c.l.b16 %v3964
          %v5098 = vunpack.c.h.b16 %v3964
          %v5099 = vunpack.c.l.b16 %v3965
          %v5100 = vunpack.c.h.b16 %v3965
          %v5101 = vunpack.c.l.b16 %v3966
          %v5102 = vunpack.c.h.b16 %v3966
          %v5103 = vunpack.c.l.b16 %v3967
          %v5104 = vunpack.c.h.b16 %v3967
          %v5105 = vunpack.c.l.b16 %v3968
          %v5106 = vunpack.c.h.b16 %v3968
          %v5107 = vunpack.c.l.b16 %v3969
          %v5108 = vunpack.c.h.b16 %v3969
          %v5109 = vunpack.c.l.b16 %v3970
          %v5110 = vunpack.c.h.b16 %v3970
          %v5111 = vunpack.c.l.b16 %v3971
          %v5112 = vunpack.c.h.b16 %v3971
          %v5113 = vunpack.c.l.b16 %v3972
          %v5114 = vunpack.c.h.b16 %v3972
          %v5115 = vunpack.c.l.b16 %v3973
          %v5116 = vunpack.c.h.b16 %v3973
          %v5117 = vunpack.c.l.b16 %v3974
          %v5118 = vunpack.c.h.b16 %v3974
          %v5119 = vunpack.c.l.b16 %v3975
          %v5120 = vunpack.c.h.b16 %v3975
          %v5121 = vunpack.c.l.b16 %v3976
          %v5122 = vunpack.c.h.b16 %v3976
          %v5123 = vunpack.c.l.b16 %v3977
          %v5124 = vunpack.c.h.b16 %v3977
          %v5125 = vunpack.c.l.b16 %v3978
          %v5126 = vunpack.c.h.b16 %v3978
          %v5127 = vunpack.c.l.b16 %v3979
          %v5128 = vunpack.c.h.b16 %v3979
          %v5129 = vunpack.c.l.b16 %v3980
          %v5130 = vunpack.c.h.b16 %v3980
          %v5131 = vunpack.c.l.b16 %v3981
          %v5132 = vunpack.c.h.b16 %v3981
          %v5133 = vunpack.c.l.b16 %v3982
          %v5134 = vunpack.c.h.b16 %v3982
          %v5135 = vunpack.c.l.b16 %v3983
          %v5136 = vunpack.c.h.b16 %v3983
          %v5137 = vunpack.c.l.b16 %v3984
          %v5138 = vunpack.c.h.b16 %v3984
          %v5139 = vunpack.c.l.b16 %v3985
          %v5140 = vunpack.c.h.b16 %v3985
          %v5141 = vunpack.c.l.b16 %v3986
          %v5142 = vunpack.c.h.b16 %v3986
          %v5143 = vunpack.c.l.b16 %v3987
          %v5144 = vunpack.c.h.b16 %v3987
          %v5145 = vunpack.c.l.b16 %v3988
          %v5146 = vunpack.c.h.b16 %v3988
          %v5147 = vunpack.c.l.b16 %v3989
          %v5148 = vunpack.c.h.b16 %v3989
          %v5149 = vunpack.c.l.b16 %v3990
          %v5150 = vunpack.c.h.b16 %v3990
          %v5151 = vunpack.c.l.b16 %v3991
          %v5152 = vunpack.c.h.b16 %v3991
          %v5153 = vunpack.c.l.b16 %v3992
          %v5154 = vunpack.c.h.b16 %v3992
          %v5155 = vunpack.c.l.b16 %v3993
          %v5156 = vunpack.c.h.b16 %v3993
          %v5157 = vunpack.c.l.b16 %v3994
          %v5158 = vunpack.c.h.b16 %v3994
          %v5159 = vunpack.c.l.b16 %v3995
          %v5160 = vunpack.c.h.b16 %v3995
          %v5161 = vunpack.c.l.b16 %v3996
          %v5162 = vunpack.c.h.b16 %v3996
          %v5163 = vunpack.c.l.b16 %v3997
          %v5164 = vunpack.c.h.b16 %v3997
          %v5165 = vunpack.c.l.b16 %v3998
          %v5166 = vunpack.c.h.b16 %v3998
          %v5167 = vunpack.c.l.b16 %v3999
          %v5168 = vunpack.c.h.b16 %v3999
          %v5169 = vunpack.c.l.b16 %v4000
          %v5170 = vunpack.c.h.b16 %v4000
          %v5171 = vunpack.c.l.b16 %v4001
          %v5172 = vunpack.c.h.b16 %v4001
          %v5173 = vunpack.c.l.b16 %v4002
          %v5174 = vunpack.c.h.b16 %v4002
          %v5175 = vunpack.c.l.b16 %v4003
          %v5176 = vunpack.c.h.b16 %v4003
          %v5177 = vunpack.c.l.b16 %v4004
          %v5178 = vunpack.c.h.b16 %v4004
          %v5179 = vunpack.c.l.b16 %v4005
          %v5180 = vunpack.c.h.b16 %v4005
          %v5181 = vunpack.c.l.b16 %v4006
          %v5182 = vunpack.c.h.b16 %v4006
          %v5183 = vunpack.c.l.b16 %v4007
          %v5184 = vunpack.c.h.b16 %v4007
          %v5185 = vunpack.c.l.b16 %v4008
          %v5186 = vunpack.c.h.b16 %v4008
          %v5187 = vunpack.c.l.b16 %v4009
          %v5188 = vunpack.c.h.b16 %v4009
          %v5189 = vunpack.c.l.b16 %v4010
          %v5190 = vunpack.c.h.b16 %v4010
          %v5191 = vunpack.c.l.b16 %v4011
          %v5192 = vunpack.c.h.b16 %v4011
          %v5193 = vunpack.c.l.b16 %v4012
          %v5194 = vunpack.c.h.b16 %v4012
          %v5195 = vunpack.c.l.b16 %v4013
          %v5196 = vunpack.c.h.b16 %v4013
          %v5197 = vunpack.c.l.b16 %v4014
          %v5198 = vunpack.c.h.b16 %v4014
          %v5199 = vunpack.c.l.b16 %v4015
          %v5200 = vunpack.c.h.b16 %v4015
          %v5201 = vunpack.c.l.b16 %v4016
          %v5202 = vunpack.c.h.b16 %v4016
          %v5203 = vunpack.c.l.b16 %v4017
          %v5204 = vunpack.c.h.b16 %v4017
          %v5205 = vunpack.c.l.b16 %v4018
          %v5206 = vunpack.c.h.b16 %v4018
          %v5207 = vunpack.c.l.b16 %v4019
          %v5208 = vunpack.c.h.b16 %v4019
          %v5209 = vunpack.c.l.b16 %v4020
          %v5210 = vunpack.c.h.b16 %v4020
          %v5211 = vunpack.c.l.b16 %v4021
          %v5212 = vunpack.c.h.b16 %v4021
          %v5213 = vunpack.c.l.b16 %v4022
          %v5214 = vunpack.c.h.b16 %v4022
          %v5215 = vunpack.c.l.b16 %v4023
          %v5216 = vunpack.c.h.b16 %v4023
          %v5217 = vunpack.c.l.b16 %v4024
          %v5218 = vunpack.c.h.b16 %v4024
          %v5219 = vunpack.c.l.b16 %v4025
          %v5220 = vunpack.c.h.b16 %v4025
          %v5221 = vunpack.c.l.b16 %v4026
          %v5222 = vunpack.c.h.b16 %v4026
          %v5223 = vunpack.c.l.b16 %v4027
          %v5224 = vunpack.c.h.b16 %v4027
          %v5225 = vunpack.c.l.b16 %v4028
          %v5226 = vunpack.c.h.b16 %v4028
          %v5227 = vunpack.c.l.b16 %v4029
          %v5228 = vunpack.c.h.b16 %v4029
          %v5229 = vunpack.c.l.b16 %v4030
          %v5230 = vunpack.c.h.b16 %v4030
          %v5231 = vunpack.c.l.b16 %v4031
          %v5232 = vunpack.c.h.b16 %v4031
          %v5233 = vunpack.c.l.b16 %v4032
          %v5234 = vunpack.c.h.b16 %v4032
          %v5235 = vunpack.c.l.b16 %v4033
          %v5236 = vunpack.c.h.b16 %v4033
          %v5237 = vunpack.c.l.b16 %v4034
          %v5238 = vunpack.c.h.b16 %v4034
          %v5239 = vunpack.c.l.b16 %v4035
          %v5240 = vunpack.c.h.b16 %v4035
          %v5241 = vunpack.c.l.b16 %v4036
          %v5242 = vunpack.c.h.b16 %v4036
          %v5243 = vunpack.c.l.b16 %v4037
          %v5244 = vunpack.c.h.b16 %v4037
          %v5245 = vunpack.c.l.b16 %v4038
          %v5246 = vunpack.c.h.b16 %v4038
          %v5247 = vunpack.c.l.b16 %v4039
          %v5248 = vunpack.c.h.b16 %v4039
          %v5249 = vunpack.c.l.b16 %v4040
          %v5250 = vunpack.c.h.b16 %v4040
          %v5251 = vunpack.c.l.b16 %v4041
          %v5252 = vunpack.c.h.b16 %v4041
          %v5253 = vunpack.c.l.b16 %v4042
          %v5254 = vunpack.c.h.b16 %v4042
          %v5255 = vunpack.c.l.b16 %v4043
          %v5256 = vunpack.c.h.b16 %v4043
          %v5257 = vunpack.c.l.b16 %v4044
          %v5258 = vunpack.c.h.b16 %v4044
          %v5259 = vunpack.c.l.b16 %v4045
          %v5260 = vunpack.c.h.b16 %v4045
          %v5261 = vunpack.c.l.b16 %v4046
          %v5262 = vunpack.c.h.b16 %v4046
          %v5263 = vunpack.c.l.b16 %v4047
          %v5264 = vunpack.c.h.b16 %v4047
          %v5265 = vunpack.c.l.b16 %v4048
          %v5266 = vunpack.c.h.b16 %v4048
          %v5267 = vunpack.c.l.b16 %v4049
          %v5268 = vunpack.c.h.b16 %v4049
          %v5269 = vunpack.c.l.b16 %v4050
          %v5270 = vunpack.c.h.b16 %v4050
          %v5271 = vunpack.c.l.b16 %v4051
          %v5272 = vunpack.c.h.b16 %v4051
          %v5273 = vunpack.c.l.b16 %v4052
          %v5274 = vunpack.c.h.b16 %v4052
          %v5275 = vunpack.c.l.b16 %v4053
          %v5276 = vunpack.c.h.b16 %v4053
          %v5277 = vunpack.c.l.b16 %v4054
          %v5278 = vunpack.c.h.b16 %v4054
          %v5279 = vunpack.c.l.b16 %v4055
          %v5280 = vunpack.c.h.b16 %v4055
          %v5281 = vunpack.c.l.b16 %v4056
          %v5282 = vunpack.c.h.b16 %v4056
          %v5283 = vunpack.c.l.b16 %v4057
          %v5284 = vunpack.c.h.b16 %v4057
          %v5285 = vunpack.c.l.b16 %v4058
          %v5286 = vunpack.c.h.b16 %v4058
          %v5287 = vunpack.c.l.b16 %v4059
          %v5288 = vunpack.c.h.b16 %v4059
          %v5289 = vunpack.c.l.b16 %v4060
          %v5290 = vunpack.c.h.b16 %v4060
          %v5291 = vunpack.c.l.b16 %v4061
          %v5292 = vunpack.c.h.b16 %v4061
          %v5293 = vunpack.c.l.b16 %v4062
          %v5294 = vunpack.c.h.b16 %v4062
          %v5295 = vunpack.c.l.b16 %v4063
          %v5296 = vunpack.c.h.b16 %v4063
          %v5297 = vunpack.c.l.b16 %v4064
          %v5298 = vunpack.c.h.b16 %v4064
          %v5299 = vunpack.c.l.b16 %v4065
          %v5300 = vunpack.c.h.b16 %v4065
          %v5301 = vunpack.c.l.b16 %v4066
          %v5302 = vunpack.c.h.b16 %v4066
          %v5303 = vunpack.c.l.b16 %v4067
          %v5304 = vunpack.c.h.b16 %v4067
          %v5305 = vunpack.c.l.b16 %v4068
          %v5306 = vunpack.c.h.b16 %v4068
          %v5307 = vunpack.c.l.b16 %v4069
          %v5308 = vunpack.c.h.b16 %v4069
          %v5309 = vunpack.c.l.b16 %v4070
          %v5310 = vunpack.c.h.b16 %v4070
          %v5311 = vunpack.c.l.b16 %v4071
          %v5312 = vunpack.c.h.b16 %v4071
          %v5313 = vunpack.c.l.b16 %v4072
          %v5314 = vunpack.c.h.b16 %v4072
          %v5315 = vunpack.c.l.b16 %v4073
          %v5316 = vunpack.c.h.b16 %v4073
          %v5317 = vunpack.c.l.b16 %v4074
          %v5318 = vunpack.c.h.b16 %v4074
          %v5319 = vunpack.c.l.b16 %v4075
          %v5320 = vunpack.c.h.b16 %v4075
          %v5321 = vunpack.c.l.b16 %v4076
          %v5322 = vunpack.c.h.b16 %v4076
          %v5323 = vunpack.c.l.b16 %v4077
          %v5324 = vunpack.c.h.b16 %v4077
          %v5325 = vunpack.c.l.b16 %v4078
          %v5326 = vunpack.c.h.b16 %v4078
          %v5327 = vunpack.c.l.b16 %v4079
          %v5328 = vunpack.c.h.b16 %v4079
          %v5329 = vunpack.c.l.b16 %v4080
          %v5330 = vunpack.c.h.b16 %v4080
          %v5331 = vunpack.c.l.b16 %v4081
          %v5332 = vunpack.c.h.b16 %v4081
          %v5333 = vunpack.c.l.b16 %v4082
          %v5334 = vunpack.c.h.b16 %v4082
          %v5335 = vunpack.c.l.b16 %v4083
          %v5336 = vunpack.c.h.b16 %v4083
          %v5337 = vunpack.c.l.b16 %v4084
          %v5338 = vunpack.c.h.b16 %v4084
          %v5339 = vunpack.c.l.b16 %v4085
          %v5340 = vunpack.c.h.b16 %v4085
          %v5341 = vunpack.c.l.b16 %v4086
          %v5342 = vunpack.c.h.b16 %v4086
          %v5343 = vunpack.c.l.b16 %v4087
          %v5344 = vunpack.c.h.b16 %v4087
          %v5345 = vunpack.c.l.b16 %v4088
          %v5346 = vunpack.c.h.b16 %v4088
          %v5347 = vunpack.c.l.b16 %v4089
          %v5348 = vunpack.c.h.b16 %v4089
          %v5349 = vunpack.c.l.b16 %v4090
          %v5350 = vunpack.c.h.b16 %v4090
          %v5351 = vunpack.c.l.b16 %v4091
          %v5352 = vunpack.c.h.b16 %v4091
          %v5353 = vunpack.c.l.b16 %v4092
          %v5354 = vunpack.c.h.b16 %v4092
          %v5355 = vunpack.c.l.b16 %v4093
          %v5356 = vunpack.c.h.b16 %v4093
          %v5357 = vunpack.c.l.b16 %v4094
          %v5358 = vunpack.c.h.b16 %v4094
          %v5359 = vunpack.c.l.b16 %v4095
          %v5360 = vunpack.c.h.b16 %v4095
          %v5361 = vunpack.c.l.b16 %v4096
          %v5362 = vunpack.c.h.b16 %v4096
          %v5363 = vunpack.c.l.b16 %v4097
          %v5364 = vunpack.c.h.b16 %v4097
          %v5365 = vunpack.c.l.b16 %v4098
          %v5366 = vunpack.c.h.b16 %v4098
          %v5367 = vunpack.c.l.b16 %v4099
          %v5368 = vunpack.c.h.b16 %v4099
          %v5369 = vunpack.c.l.b16 %v4100
          %v5370 = vunpack.c.h.b16 %v4100
          %v5371 = vunpack.c.l.b16 %v4101
          %v5372 = vunpack.c.h.b16 %v4101
          %v5373 = vunpack.c.l.b16 %v4102
          %v5374 = vunpack.c.h.b16 %v4102
          %v5375 = vunpack.c.l.b16 %v4103
          %v5376 = vunpack.c.h.b16 %v4103
          %v5377 = vunpack.c.l.b16 %v4104
          %v5378 = vunpack.c.h.b16 %v4104
          %v5379 = vunpack.c.l.b16 %v4105
          %v5380 = vunpack.c.h.b16 %v4105
          %v5381 = vunpack.c.l.b16 %v4106
          %v5382 = vunpack.c.h.b16 %v4106
          %v5383 = vunpack.c.l.b16 %v4107
          %v5384 = vunpack.c.h.b16 %v4107
          %v5385 = vunpack.c.l.b16 %v4108
          %v5386 = vunpack.c.h.b16 %v4108
          %v5387 = vunpack.c.l.b16 %v4109
          %v5388 = vunpack.c.h.b16 %v4109
          %v5389 = vunpack.c.l.b16 %v4110
          %v5390 = vunpack.c.h.b16 %v4110
          %v5391 = vunpack.c.l.b16 %v4111
          %v5392 = vunpack.c.h.b16 %v4111
          %v5393 = vunpack.c.l.b16 %v4112
          %v5394 = vunpack.c.h.b16 %v4112
          %v5395 = vunpack.c.l.b16 %v4113
          %v5396 = vunpack.c.h.b16 %v4113
          %v5397 = vunpack.c.l.b16 %v4114
          %v5398 = vunpack.c.h.b16 %v4114
          %v5399 = vunpack.c.l.b16 %v4115
          %v5400 = vunpack.c.h.b16 %v4115
          %v5401 = vunpack.c.l.b16 %v4116
          %v5402 = vunpack.c.h.b16 %v4116
          %v5403 = vunpack.c.l.b16 %v4117
          %v5404 = vunpack.c.h.b16 %v4117
          %v5405 = vunpack.c.l.b16 %v4118
          %v5406 = vunpack.c.h.b16 %v4118
          %v5407 = vunpack.c.l.b16 %v4119
          %v5408 = vunpack.c.h.b16 %v4119
          %v5409 = vunpack.c.l.b16 %v4120
          %v5410 = vunpack.c.h.b16 %v4120
          %v5411 = vunpack.c.l.b16 %v4121
          %v5412 = vunpack.c.h.b16 %v4121
          %v5413 = vunpack.c.l.b16 %v4122
          %v5414 = vunpack.c.h.b16 %v4122
          %v5415 = vunpack.c.l.b16 %v4123
          %v5416 = vunpack.c.h.b16 %v4123
          %v5417 = vunpack.c.l.b16 %v4124
          %v5418 = vunpack.c.h.b16 %v4124
          %v5419 = vunpack.c.l.b16 %v4125
          %v5420 = vunpack.c.h.b16 %v4125
          %v5421 = vunpack.c.l.b16 %v4126
          %v5422 = vunpack.c.h.b16 %v4126
          %v5423 = vunpack.c.l.b16 %v4127
          %v5424 = vunpack.c.h.b16 %v4127
          %v5425 = vunpack.c.l.b16 %v4128
          %v5426 = vunpack.c.h.b16 %v4128
          %v5427 = vunpack.c.l.b16 %v4129
          %v5428 = vunpack.c.h.b16 %v4129
          %v5429 = vunpack.c.l.b16 %v4130
          %v5430 = vunpack.c.h.b16 %v4130
          %v5431 = vunpack.c.l.b16 %v4131
          %v5432 = vunpack.c.h.b16 %v4131
          %v5433 = vunpack.c.l.b16 %v4132
          %v5434 = vunpack.c.h.b16 %v4132
          %v5435 = vunpack.c.l.b16 %v4133
          %v5436 = vunpack.c.h.b16 %v4133
          %v5437 = vunpack.c.l.b16 %v4134
          %v5438 = vunpack.c.h.b16 %v4134
          %v5439 = vunpack.c.l.b16 %v4135
          %v5440 = vunpack.c.h.b16 %v4135
          %v5441 = vunpack.c.l.b16 %v4136
          %v5442 = vunpack.c.h.b16 %v4136
          %v5443 = vunpack.c.l.b16 %v4137
          %v5444 = vunpack.c.h.b16 %v4137
          %v5445 = vunpack.c.l.b16 %v4138
          %v5446 = vunpack.c.h.b16 %v4138
          %v5447 = vunpack.c.l.b16 %v4139
          %v5448 = vunpack.c.h.b16 %v4139
          %v5449 = vunpack.c.l.b16 %v4140
          %v5450 = vunpack.c.h.b16 %v4140
          %v5451 = vunpack.c.l.b16 %v4141
          %v5452 = vunpack.c.h.b16 %v4141
          %v5453 = vunpack.c.l.b16 %v4142
          %v5454 = vunpack.c.h.b16 %v4142
          %v5455 = vunpack.c.l.b16 %v4143
          %v5456 = vunpack.c.h.b16 %v4143
          %v5457 = vunpack.c.l.b16 %v4144
          %v5458 = vunpack.c.h.b16 %v4144
          %v5459 = vunpack.c.l.b16 %v4145
          %v5460 = vunpack.c.h.b16 %v4145
          %v5461 = vunpack.c.l.b16 %v4146
          %v5462 = vunpack.c.h.b16 %v4146
          %v5463 = vunpack.c.l.b16 %v4147
          %v5464 = vunpack.c.h.b16 %v4147
          %v5465 = vunpack.c.l.b16 %v4148
          %v5466 = vunpack.c.h.b16 %v4148
          %v5467 = vunpack.c.l.b16 %v4149
          %v5468 = vunpack.c.h.b16 %v4149
          %v5469 = vunpack.c.l.b16 %v4150
          %v5470 = vunpack.c.h.b16 %v4150
          %v5471 = vunpack.c.l.b16 %v4151
          %v5472 = vunpack.c.h.b16 %v4151
          %v5473 = vunpack.c.l.b16 %v4152
          %v5474 = vunpack.c.h.b16 %v4152
          %v5475 = vunpack.c.l.b16 %v4153
          %v5476 = vunpack.c.h.b16 %v4153
          %v5477 = vunpack.c.l.b16 %v4154
          %v5478 = vunpack.c.h.b16 %v4154
          %v5479 = vunpack.c.l.b16 %v4155
          %v5480 = vunpack.c.h.b16 %v4155
          %v5481 = vunpack.c.l.b16 %v4156
          %v5482 = vunpack.c.h.b16 %v4156
          %v5483 = vunpack.c.l.b16 %v4157
          %v5484 = vunpack.c.h.b16 %v4157
          %v5485 = vunpack.c.l.b16 %v4158
          %v5486 = vunpack.c.h.b16 %v4158
          %v5487 = vunpack.c.l.b16 %v4159
          %v5488 = vunpack.c.h.b16 %v4159
          %v5489 = vunpack.c.l.b16 %v4160
          %v5490 = vunpack.c.h.b16 %v4160
          %v5491 = vunpack.c.l.b16 %v4161
          %v5492 = vunpack.c.h.b16 %v4161
          %v5493 = vunpack.c.l.b16 %v4162
          %v5494 = vunpack.c.h.b16 %v4162
          %v5495 = vunpack.c.l.b16 %v4163
          %v5496 = vunpack.c.h.b16 %v4163
          %v5497 = vunpack.c.l.b16 %v4164
          %v5498 = vunpack.c.h.b16 %v4164
          %v5499 = vunpack.c.l.b16 %v4165
          %v5500 = vunpack.c.h.b16 %v4165
          %v5501 = vunpack.c.l.b16 %v4166
          %v5502 = vunpack.c.h.b16 %v4166
          %v5503 = vunpack.c.l.b16 %v4167
          %v5504 = vunpack.c.h.b16 %v4167
          %v5505 = vunpack.c.l.b16 %v4168
          %v5506 = vunpack.c.h.b16 %v4168
          %v5507 = vunpack.c.l.b16 %v4169
          %v5508 = vunpack.c.h.b16 %v4169
          %v5509 = vunpack.c.l.b16 %v4170
          %v5510 = vunpack.c.h.b16 %v4170
          %v5511 = vunpack.c.l.b16 %v4171
          %v5512 = vunpack.c.h.b16 %v4171
          %v5513 = vunpack.c.l.b16 %v4172
          %v5514 = vunpack.c.h.b16 %v4172
          %v5515 = vunpack.c.l.b16 %v4173
          %v5516 = vunpack.c.h.b16 %v4173
          %v5517 = vunpack.c.l.b16 %v4174
          %v5518 = vunpack.c.h.b16 %v4174
          %v5519 = vunpack.c.l.b16 %v4175
          %v5520 = vunpack.c.h.b16 %v4175
          %v5521 = vunpack.c.l.b16 %v4176
          %v5522 = vunpack.c.h.b16 %v4176
          %v5523 = vunpack.c.l.b16 %v4177
          %v5524 = vunpack.c.h.b16 %v4177
          %v5525 = vunpack.c.l.b16 %v4178
          %v5526 = vunpack.c.h.b16 %v4178
          %v5527 = vunpack.c.l.b16 %v4179
          %v5528 = vunpack.c.h.b16 %v4179
          %v5529 = vunpack.c.l.b16 %v4180
          %v5530 = vunpack.c.h.b16 %v4180
          %v5531 = vunpack.c.l.b16 %v4181
          %v5532 = vunpack.c.h.b16 %v4181
          %v5533 = vunpack.c.l.b16 %v4182
          %v5534 = vunpack.c.h.b16 %v4182
          %v5535 = vunpack.c.l.b16 %v4183
          %v5536 = vunpack.c.h.b16 %v4183
          %v5537 = vunpack.c.l.b16 %v4184
          %v5538 = vunpack.c.h.b16 %v4184
          %v5539 = vunpack.c.l.b16 %v4185
          %v5540 = vunpack.c.h.b16 %v4185
          %v5541 = vunpack.c.l.b16 %v4186
          %v5542 = vunpack.c.h.b16 %v4186
          %v5543 = vunpack.c.l.b16 %v4187
          %v5544 = vunpack.c.h.b16 %v4187
          %v5545 = vunpack.c.l.b16 %v4188
          %v5546 = vunpack.c.h.b16 %v4188
          %v5547 = vunpack.c.l.b16 %v4189
          %v5548 = vunpack.c.h.b16 %v4189
          %v5549 = vunpack.c.l.b16 %v4190
          %v5550 = vunpack.c.h.b16 %v4190
          %v5551 = vunpack.c.l.b16 %v4191
          %v5552 = vunpack.c.h.b16 %v4191
          %v5553 = vunpack.c.l.b16 %v4192
          %v5554 = vunpack.c.h.b16 %v4192
          %v5555 = vunpack.c.l.b16 %v4193
          %v5556 = vunpack.c.h.b16 %v4193
          %v5557 = vunpack.c.l.b16 %v4194
          %v5558 = vunpack.c.h.b16 %v4194
          %v5559 = vunpack.c.l.b16 %v4195
          %v5560 = vunpack.c.h.b16 %v4195
          %v5561 = vunpack.c.l.b16 %v4196
          %v5562 = vunpack.c.h.b16 %v4196
          %v5563 = vunpack.c.l.b16 %v4197
          %v5564 = vunpack.c.h.b16 %v4197
          %v5565 = vunpack.c.l.b16 %v4198
          %v5566 = vunpack.c.h.b16 %v4198
          %v5567 = vunpack.c.l.b16 %v4199
          %v5568 = vunpack.c.h.b16 %v4199
          %v5569 = vunpack.c.l.b16 %v4200
          %v5570 = vunpack.c.h.b16 %v4200
          %v5571 = vunpack.c.l.b16 %v4201
          %v5572 = vunpack.c.h.b16 %v4201
          %v5573 = vunpack.c.l.b16 %v4202
          %v5574 = vunpack.c.h.b16 %v4202
          %v5575 = vunpack.c.l.b16 %v4203
          %v5576 = vunpack.c.h.b16 %v4203
          %v5577 = vunpack.c.l.b16 %v4204
          %v5578 = vunpack.c.h.b16 %v4204
          %v5579 = vunpack.c.l.b16 %v4205
          %v5580 = vunpack.c.h.b16 %v4205
          %v5581 = vunpack.c.l.b16 %v4206
          %v5582 = vunpack.c.h.b16 %v4206
          %v5583 = vunpack.c.l.b16 %v4207
          %v5584 = vunpack.c.h.b16 %v4207
          %v5585 = vunpack.c.l.b16 %v4208
          %v5586 = vunpack.c.h.b16 %v4208
          %v5587 = vunpack.c.l.b16 %v4209
          %v5588 = vunpack.c.h.b16 %v4209
          %v5589 = vunpack.c.l.b16 %v4210
          %v5590 = vunpack.c.h.b16 %v4210
          %v5591 = vunpack.c.l.b16 %v4211
          %v5592 = vunpack.c.h.b16 %v4211
          %v5593 = vunpack.c.l.b16 %v4212
          %v5594 = vunpack.c.h.b16 %v4212
          %v5595 = vunpack.c.l.b16 %v4213
          %v5596 = vunpack.c.h.b16 %v4213
          %v5597 = vunpack.c.l.b16 %v4214
          %v5598 = vunpack.c.h.b16 %v4214
          %v5599 = vunpack.c.l.b16 %v4215
          %v5600 = vunpack.c.h.b16 %v4215
          %v5601 = vunpack.c.l.b16 %v4216
          %v5602 = vunpack.c.h.b16 %v4216
          %v5603 = vunpack.c.l.b16 %v4217
          %v5604 = vunpack.c.h.b16 %v4217
          %v5605 = vunpack.c.l.b16 %v4218
          %v5606 = vunpack.c.h.b16 %v4218
          %v5607 = vunpack.c.l.b16 %v4219
          %v5608 = vunpack.c.h.b16 %v4219
          %v5609 = vunpack.c.l.b16 %v4220
          %v5610 = vunpack.c.h.b16 %v4220
          %v5611 = vunpack.c.l.b16 %v4221
          %v5612 = vunpack.c.h.b16 %v4221
          %v5613 = vunpack.c.l.b16 %v4222
          %v5614 = vunpack.c.h.b16 %v4222
          %v5615 = vunpack.c.l.b16 %v4223
          %v5616 = vunpack.c.h.b16 %v4223
          %v5617 = vunpack.c.l.b16 %v4224
          %v5618 = vunpack.c.h.b16 %v4224
          %v5619 = vunpack.c.l.b16 %v4225
          %v5620 = vunpack.c.h.b16 %v4225
          %v5621 = vunpack.c.l.b16 %v4226
          %v5622 = vunpack.c.h.b16 %v4226
          %v5623 = vunpack.c.l.b16 %v4227
          %v5624 = vunpack.c.h.b16 %v4227
          %v5625 = vunpack.c.l.b16 %v4228
          %v5626 = vunpack.c.h.b16 %v4228
          %v5627 = vunpack.c.l.b16 %v4229
          %v5628 = vunpack.c.h.b16 %v4229
          %v5629 = vunpack.c.l.b16 %v4230
          %v5630 = vunpack.c.h.b16 %v4230
          %v5631 = vunpack.c.l.b16 %v4231
          %v5632 = vunpack.c.h.b16 %v4231
          %v5633 = vunpack.c.l.b16 %v4232
          %v5634 = vunpack.c.h.b16 %v4232
          %v5635 = vunpack.c.l.b16 %v4233
          %v5636 = vunpack.c.h.b16 %v4233
          %v5637 = vunpack.c.l.b16 %v4234
          %v5638 = vunpack.c.h.b16 %v4234
          %v5639 = vunpack.c.l.b16 %v4235
          %v5640 = vunpack.c.h.b16 %v4235
          %v5641 = vunpack.c.l.b16 %v4236
          %v5642 = vunpack.c.h.b16 %v4236
          %v5643 = vunpack.c.l.b16 %v4237
          %v5644 = vunpack.c.h.b16 %v4237
          %v5645 = vunpack.c.l.b16 %v4238
          %v5646 = vunpack.c.h.b16 %v4238
          %v5647 = vunpack.c.l.b16 %v4239
          %v5648 = vunpack.c.h.b16 %v4239
          %v5649 = vunpack.c.l.b16 %v4240
          %v5650 = vunpack.c.h.b16 %v4240
          %v5651 = vunpack.c.l.b16 %v4241
          %v5652 = vunpack.c.h.b16 %v4241
          %v5653 = vunpack.c.l.b16 %v4242
          %v5654 = vunpack.c.h.b16 %v4242
          %v5655 = vunpack.c.l.b16 %v4243
          %v5656 = vunpack.c.h.b16 %v4243
          %v5657 = vunpack.c.l.b16 %v4244
          %v5658 = vunpack.c.h.b16 %v4244
          %v5659 = vunpack.c.l.b16 %v4245
          %v5660 = vunpack.c.h.b16 %v4245
          %v5661 = vunpack.c.l.b16 %v4246
          %v5662 = vunpack.c.h.b16 %v4246
          %v5663 = vunpack.c.l.b16 %v4247
          %v5664 = vunpack.c.h.b16 %v4247
          %v5665 = vunpack.c.l.b16 %v4248
          %v5666 = vunpack.c.h.b16 %v4248
          %v5667 = vunpack.c.l.b16 %v4249
          %v5668 = vunpack.c.h.b16 %v4249
          %v5669 = vunpack.c.l.b16 %v4250
          %v5670 = vunpack.c.h.b16 %v4250
          %v5671 = vunpack.c.l.b16 %v4251
          %v5672 = vunpack.c.h.b16 %v4251
          %v5673 = vunpack.c.l.b16 %v4252
          %v5674 = vunpack.c.h.b16 %v4252
          %v5675 = vunpack.c.l.b16 %v4253
          %v5676 = vunpack.c.h.b16 %v4253
          %v5677 = vunpack.c.l.b16 %v4254
          %v5678 = vunpack.c.h.b16 %v4254
          %v5679 = vunpack.c.l.b16 %v4255
          %v5680 = vunpack.c.h.b16 %v4255
          %v5681 = vunpack.c.l.b16 %v4256
          %v5682 = vunpack.c.h.b16 %v4256
          %v5683 = vunpack.c.l.b16 %v4257
          %v5684 = vunpack.c.h.b16 %v4257
          %v5685 = vunpack.c.l.b16 %v4258
          %v5686 = vunpack.c.h.b16 %v4258
          %v5687 = vunpack.c.l.b16 %v4259
          %v5688 = vunpack.c.h.b16 %v4259
          %v5689 = vunpack.c.l.b16 %v4260
          %v5690 = vunpack.c.h.b16 %v4260
          %v5691 = vunpack.c.l.b16 %v4261
          %v5692 = vunpack.c.h.b16 %v4261
          %v5693 = vunpack.c.l.b16 %v4262
          %v5694 = vunpack.c.h.b16 %v4262
          %v5695 = vunpack.c.l.b16 %v4263
          %v5696 = vunpack.c.h.b16 %v4263
          %v5697 = vunpack.c.l.b16 %v4264
          %v5698 = vunpack.c.h.b16 %v4264
          %v5699 = vunpack.c.l.b16 %v4265
          %v5700 = vunpack.c.h.b16 %v4265
          %v5701 = vunpack.c.l.b16 %v4266
          %v5702 = vunpack.c.h.b16 %v4266
          %v5703 = vunpack.c.l.b16 %v4267
          %v5704 = vunpack.c.h.b16 %v4267
          %v5705 = vunpack.c.l.b16 %v4268
          %v5706 = vunpack.c.h.b16 %v4268
          %v5707 = vunpack.c.l.b16 %v4269
          %v5708 = vunpack.c.h.b16 %v4269
          %v5709 = vunpack.c.l.b16 %v4270
          %v5710 = vunpack.c.h.b16 %v4270
          %v5711 = vunpack.c.l.b16 %v4271
          %v5712 = vunpack.c.h.b16 %v4271
          %v5713 = vunpack.c.l.b16 %v4272
          %v5714 = vunpack.c.h.b16 %v4272
          %v5715 = vunpack.c.l.b16 %v4273
          %v5716 = vunpack.c.h.b16 %v4273
          %v5717 = vunpack.c.l.b16 %v4274
          %v5718 = vunpack.c.h.b16 %v4274
          %v5719 = vunpack.c.l.b16 %v4275
          %v5720 = vunpack.c.h.b16 %v4275
          %v5721 = vunpack.c.l.b16 %v4276
          %v5722 = vunpack.c.h.b16 %v4276
          %v5723 = vunpack.c.l.b16 %v4277
          %v5724 = vunpack.c.h.b16 %v4277
          %v5725 = vunpack.c.l.b16 %v4278
          %v5726 = vunpack.c.h.b16 %v4278
          %v5727 = vunpack.c.l.b16 %v4279
          %v5728 = vunpack.c.h.b16 %v4279
          %v5729 = vunpack.c.l.b16 %v4280
          %v5730 = vunpack.c.h.b16 %v4280
          %v5731 = vunpack.c.l.b16 %v4281
          %v5732 = vunpack.c.h.b16 %v4281
          %v5733 = vunpack.c.l.b16 %v4282
          %v5734 = vunpack.c.h.b16 %v4282
          %v5735 = vunpack.c.l.b16 %v4283
          %v5736 = vunpack.c.h.b16 %v4283
          %v5737 = vunpack.c.l.b16 %v4284
          %v5738 = vunpack.c.h.b16 %v4284
          %v5739 = vunpack.c.l.b16 %v4285
          %v5740 = vunpack.c.h.b16 %v4285
          %v5741 = vunpack.c.l.b16 %v4286
          %v5742 = vunpack.c.h.b16 %v4286
          %v5743 = vunpack.c.l.b16 %v4287
          %v5744 = vunpack.c.h.b16 %v4287
          %v5745 = vunpack.c.l.b16 %v4288
          %v5746 = vunpack.c.h.b16 %v4288
          %v5747 = vunpack.c.l.b16 %v4289
          %v5748 = vunpack.c.h.b16 %v4289
          %v5749 = vunpack.c.l.b16 %v4290
          %v5750 = vunpack.c.h.b16 %v4290
          %v5751 = vunpack.c.l.b16 %v4291
          %v5752 = vunpack.c.h.b16 %v4291
          %v5753 = vunpack.c.l.b16 %v4292
          %v5754 = vunpack.c.h.b16 %v4292
          %v5755 = vunpack.c.l.b16 %v4293
          %v5756 = vunpack.c.h.b16 %v4293
          %v5757 = vunpack.c.l.b16 %v4294
          %v5758 = vunpack.c.h.b16 %v4294
          %v5759 = vunpack.c.l.b16 %v4295
          %v5760 = vunpack.c.h.b16 %v4295
          %v5761 = vunpack.c.l.b16 %v4296
          %v5762 = vunpack.c.h.b16 %v4296
          %v5763 = vunpack.c.l.b16 %v4297
          %v5764 = vunpack.c.h.b16 %v4297
          %v5765 = vunpack.c.l.b16 %v4298
          %v5766 = vunpack.c.h.b16 %v4298
          %v5767 = vunpack.c.l.b16 %v4299
          %v5768 = vunpack.c.h.b16 %v4299
          %v5769 = vunpack.c.l.b16 %v4300
          %v5770 = vunpack.c.h.b16 %v4300
          %v5771 = vunpack.c.l.b16 %v4301
          %v5772 = vunpack.c.h.b16 %v4301
          %v5773 = vunpack.c.l.b16 %v4302
          %v5774 = vunpack.c.h.b16 %v4302
          %v5775 = vunpack.c.l.b16 %v4303
          %v5776 = vunpack.c.h.b16 %v4303
          %v5777 = vunpack.c.l.b16 %v4304
          %v5778 = vunpack.c.h.b16 %v4304
          %v5779 = vunpack.c.l.b16 %v4305
          %v5780 = vunpack.c.h.b16 %v4305
          %v5781 = vunpack.c.l.b16 %v4306
          %v5782 = vunpack.c.h.b16 %v4306
          %v5783 = vunpack.c.l.b16 %v4307
          %v5784 = vunpack.c.h.b16 %v4307
          %v5785 = vunpack.c.l.b16 %v4308
          %v5786 = vunpack.c.h.b16 %v4308
          %v5787 = vunpack.c.l.b16 %v4309
          %v5788 = vunpack.c.h.b16 %v4309
          %v5789 = vunpack.c.l.b16 %v4310
          %v5790 = vunpack.c.h.b16 %v4310
          %v5791 = vunpack.c.l.b16 %v4311
          %v5792 = vunpack.c.h.b16 %v4311
          %v5793 = vunpack.c.l.b16 %v4312
          %v5794 = vunpack.c.h.b16 %v4312
          %v5795 = vunpack.c.l.b16 %v4313
          %v5796 = vunpack.c.h.b16 %v4313
          %v5797 = vunpack.c.l.b16 %v4314
          %v5798 = vunpack.c.h.b16 %v4314
          %v5799 = vunpack.c.l.b16 %v4315
          %v5800 = vunpack.c.h.b16 %v4315
          %v5801 = vunpack.c.l.b16 %v4316
          %v5802 = vunpack.c.h.b16 %v4316
          %v5803 = vunpack.c.l.b16 %v4317
          %v5804 = vunpack.c.h.b16 %v4317
          %v5805 = vunpack.c.l.b16 %v4318
          %v5806 = vunpack.c.h.b16 %v4318
          %v5807 = vunpack.c.l.b16 %v4319
          %v5808 = vunpack.c.h.b16 %v4319
          %v5809 = vunpack.c.l.b16 %v4320
          %v5810 = vunpack.c.h.b16 %v4320
          %v5811 = vunpack.c.l.b16 %v4321
          %v5812 = vunpack.c.h.b16 %v4321
          %v5813 = vunpack.c.l.b16 %v4322
          %v5814 = vunpack.c.h.b16 %v4322
          %v5815 = vunpack.c.l.b16 %v4323
          %v5816 = vunpack.c.h.b16 %v4323
          %v5817 = vunpack.c.l.b16 %v4324
          %v5818 = vunpack.c.h.b16 %v4324
          %v5819 = vunpack.c.l.b16 %v4325
          %v5820 = vunpack.c.h.b16 %v4325
          %v5821 = vunpack.c.l.b16 %v4326
          %v5822 = vunpack.c.h.b16 %v4326
          %v5823 = vunpack.c.l.b16 %v4327
          %v5824 = vunpack.c.h.b16 %v4327
          %v5825 = vunpack.c.l.b16 %v4328
          %v5826 = vunpack.c.h.b16 %v4328
          %v5827 = vunpack.c.l.b16 %v4329
          %v5828 = vunpack.c.h.b16 %v4329
          %v5829 = vunpack.c.l.b16 %v4330
          %v5830 = vunpack.c.h.b16 %v4330
          %v5831 = vunpack.c.l.b16 %v4331
          %v5832 = vunpack.c.h.b16 %v4331
          %v5833 = vunpack.c.l.b16 %v4332
          %v5834 = vunpack.c.h.b16 %v4332
          %v5835 = vunpack.c.l.b16 %v4333
          %v5836 = vunpack.c.h.b16 %v4333
          %v5837 = vunpack.c.l.b16 %v4334
          %v5838 = vunpack.c.h.b16 %v4334
          %v5839 = vunpack.c.l.b16 %v4335
          %v5840 = vunpack.c.h.b16 %v4335
          %v5841 = vunpack.c.l.b16 %v4336
          %v5842 = vunpack.c.h.b16 %v4336
          %v5843 = vunpack.c.l.b16 %v4337
          %v5844 = vunpack.c.h.b16 %v4337
          %v5845 = vunpack.c.l.b16 %v4338
          %v5846 = vunpack.c.h.b16 %v4338
          %v5847 = vunpack.c.l.b16 %v4339
          %v5848 = vunpack.c.h.b16 %v4339
          %v5849 = vunpack.c.l.b16 %v4340
          %v5850 = vunpack.c.h.b16 %v4340
          %v5851 = vunpack.c.l.b16 %v4341
          %v5852 = vunpack.c.h.b16 %v4341
          %v5853 = vunpack.c.l.b16 %v4342
          %v5854 = vunpack.c.h.b16 %v4342
          %v5855 = vunpack.c.l.b16 %v4343
          %v5856 = vunpack.c.h.b16 %v4343
          %v5857 = vunpack.c.l.b16 %v4344
          %v5858 = vunpack.c.h.b16 %v4344
          %v5859 = vunpack.c.l.b16 %v4345
          %v5860 = vunpack.c.h.b16 %v4345
          %v5861 = vunpack.c.l.b16 %v4346
          %v5862 = vunpack.c.h.b16 %v4346
          %v5863 = vunpack.c.l.b16 %v4347
          %v5864 = vunpack.c.h.b16 %v4347
          %v5865 = vunpack.c.l.b16 %v4348
          %v5866 = vunpack.c.h.b16 %v4348
          %v5867 = vunpack.c.l.b16 %v4349
          %v5868 = vunpack.c.h.b16 %v4349
          %v5869 = vunpack.c.l.b16 %v4350
          %v5870 = vunpack.c.h.b16 %v4350
          %v5871 = vunpack.c.l.b16 %v4351
          %v5872 = vunpack.c.h.b16 %v4351
          %v5873 = vunpack.c.l.b16 %v4352
          %v5874 = vunpack.c.h.b16 %v4352
          %v5875 = vunpack.c.l.b16 %v4353
          %v5876 = vunpack.c.h.b16 %v4353
          %v5877 = vunpack.c.l.b16 %v4354
          %v5878 = vunpack.c.h.b16 %v4354
          %v5879 = vunpack.c.l.b16 %v4355
          %v5880 = vunpack.c.h.b16 %v4355
          %v5881 = vunpack.c.l.b16 %v4356
          %v5882 = vunpack.c.h.b16 %v4356
          %v5883 = vunpack.c.l.b16 %v4357
          %v5884 = vunpack.c.h.b16 %v4357
          %v5885 = vunpack.c.l.b16 %v4358
          %v5886 = vunpack.c.h.b16 %v4358
          %v5887 = vunpack.c.l.b16 %v4359
          %v5888 = vunpack.c.h.b16 %v4359
          %v5889 = vunpack.c.l.b16 %v4360
          %v5890 = vunpack.c.h.b16 %v4360
          %v5891 = vunpack.c.l.b16 %v4361
          %v5892 = vunpack.c.h.b16 %v4361
          %v5893 = vunpack.c.l.b16 %v4362
          %v5894 = vunpack.c.h.b16 %v4362
          %v5895 = vunpack.c.l.b16 %v4363
          %v5896 = vunpack.c.h.b16 %v4363
          %v5897 = vunpack.c.l.b16 %v4364
          %v5898 = vunpack.c.h.b16 %v4364
          %v5899 = vunpack.c.l.b16 %v4365
          %v5900 = vunpack.c.h.b16 %v4365
          %v5901 = vunpack.c.l.b16 %v4366
          %v5902 = vunpack.c.h.b16 %v4366
          %v5903 = vunpack.c.l.b16 %v4367
          %v5904 = vunpack.c.h.b16 %v4367
          %v5905 = vunpack.c.l.b16 %v4368
          %v5906 = vunpack.c.h.b16 %v4368
          %v5907 = vunpack.c.l.b16 %v4369
          %v5908 = vunpack.c.h.b16 %v4369
          %v5909 = vunpack.c.l.b16 %v4370
          %v5910 = vunpack.c.h.b16 %v4370
          %v5911 = vunpack.c.l.b16 %v4371
          %v5912 = vunpack.c.h.b16 %v4371
          %v5913 = vunpack.c.l.b16 %v4372
          %v5914 = vunpack.c.h.b16 %v4372
          %v5915 = vunpack.c.l.b16 %v4373
          %v5916 = vunpack.c.h.b16 %v4373
          %v5917 = vunpack.c.l.b16 %v4374
          %v5918 = vunpack.c.h.b16 %v4374
          %v5919 = vunpack.c.l.b16 %v4375
          %v5920 = vunpack.c.h.b16 %v4375
          %v5921 = vunpack.c.l.b16 %v4376
          %v5922 = vunpack.c.h.b16 %v4376
          %v5923 = vunpack.c.l.b16 %v4377
          %v5924 = vunpack.c.h.b16 %v4377
          %v5925 = vunpack.c.l.b16 %v4378
          %v5926 = vunpack.c.h.b16 %v4378
          %v5927 = vunpack.c.l.b16 %v4379
          %v5928 = vunpack.c.h.b16 %v4379
          %v5929 = vunpack.c.l.b16 %v4380
          %v5930 = vunpack.c.h.b16 %v4380
          %v5931 = vunpack.c.l.b16 %v4381
          %v5932 = vunpack.c.h.b16 %v4381
          %v5933 = vunpack.c.l.b16 %v4382
          %v5934 = vunpack.c.h.b16 %v4382
          %v5935 = vunpack.c.l.b16 %v4383
          %v5936 = vunpack.c.h.b16 %v4383
          %v5937 = vunpack.c.l.b16 %v4384
          %v5938 = vunpack.c.h.b16 %v4384
          %v5939 = vunpack.c.l.b16 %v4385
          %v5940 = vunpack.c.h.b16 %v4385
          %v5941 = vunpack.c.l.b16 %v4386
          %v5942 = vunpack.c.h.b16 %v4386
          %v5943 = vunpack.c.l.b16 %v4387
          %v5944 = vunpack.c.h.b16 %v4387
          %v5945 = vunpack.c.l.b16 %v4388
          %v5946 = vunpack.c.h.b16 %v4388
          %v5947 = vunpack.c.l.b16 %v4389
          %v5948 = vunpack.c.h.b16 %v4389
          %v5949 = vunpack.c.l.b16 %v4390
          %v5950 = vunpack.c.h.b16 %v4390
          %v5951 = vunpack.c.l.b16 %v4391
          %v5952 = vunpack.c.h.b16 %v4391
          %v5953 = vunpack.c.l.b16 %v4392
          %v5954 = vunpack.c.h.b16 %v4392
          %v5955 = vunpack.c.l.b16 %v4393
          %v5956 = vunpack.c.h.b16 %v4393
          %v5957 = vunpack.c.l.b16 %v4394
          %v5958 = vunpack.c.h.b16 %v4394
          %v5959 = vunpack.c.l.b16 %v4395
          %v5960 = vunpack.c.h.b16 %v4395
          %v5961 = vunpack.c.l.b16 %v4396
          %v5962 = vunpack.c.h.b16 %v4396
          %v5963 = vunpack.c.l.b16 %v4397
          %v5964 = vunpack.c.h.b16 %v4397
          %v5965 = vunpack.c.l.b16 %v4398
          %v5966 = vunpack.c.h.b16 %v4398
          %v5967 = vunpack.c.l.b16 %v4399
          %v5968 = vunpack.c.h.b16 %v4399
          %v5969 = vunpack.c.l.b16 %v4400
          %v5970 = vunpack.c.h.b16 %v4400
          %v5971 = vunpack.c.l.b16 %v4401
          %v5972 = vunpack.c.h.b16 %v4401
          %v5973 = vunpack.c.l.b16 %v4402
          %v5974 = vunpack.c.h.b16 %v4402
          %v5975 = vpack.c.b16 %v4967, %v4951
          %v5976 = vpack.c.b16 %v4968, %v4952
          %v5977 = vpack.c.b16 %v4969, %v4953
          %v5978 = vpack.c.b16 %v4970, %v4954
          %v5979 = vpack.c.b16 %v4971, %v4955
          %v5980 = vpack.c.b16 %v4972, %v4956
          %v5981 = vpack.c.b16 %v4973, %v4957
          %v5982 = vpack.c.b16 %v4974, %v4958
          %v5983 = vpack.c.b16 %v4975, %v4959
          %v5984 = vpack.c.b16 %v4976, %v4960
          %v5985 = vpack.c.b16 %v4977, %v4961
          %v5986 = vpack.c.b16 %v4978, %v4962
          %v5987 = vpack.c.b16 %v4979, %v4963
          %v5988 = vpack.c.b16 %v4980, %v4964
          %v5989 = vpack.c.b16 %v4981, %v4965
          %v5990 = vpack.c.b16 %v4982, %v4966
          %v5991 = vpack.c.b16 %v4999, %v4983
          %v5992 = vpack.c.b16 %v5000, %v4984
          %v5993 = vpack.c.b16 %v5001, %v4985
          %v5994 = vpack.c.b16 %v5002, %v4986
          %v5995 = vpack.c.b16 %v5003, %v4987
          %v5996 = vpack.c.b16 %v5004, %v4988
          %v5997 = vpack.c.b16 %v5005, %v4989
          %v5998 = vpack.c.b16 %v5006, %v4990
          %v5999 = vpack.c.b16 %v5007, %v4991
          %v6000 = vpack.c.b16 %v5008, %v4992
          %v6001 = vpack.c.b16 %v5009, %v4993
          %v6002 = vpack.c.b16 %v5010, %v4994
          %v6003 = vpack.c.b16 %v5011, %v4995
          %v6004 = vpack.c.b16 %v5012, %v4996
          %v6005 = vpack.c.b16 %v5013, %v4997
          %v6006 = vpack.c.b16 %v5014, %v4998
          %v6007 = vpack.c.b16 %v5031, %v5015
          %v6008 = vpack.c.b16 %v5032, %v5016
          %v6009 = vpack.c.b16 %v5033, %v5017
          %v6010 = vpack.c.b16 %v5034, %v5018
          %v6011 = vpack.c.b16 %v5035, %v5019
          %v6012 = vpack.c.b16 %v5036, %v5020
          %v6013 = vpack.c.b16 %v5037, %v5021
          %v6014 = vpack.c.b16 %v5038, %v5022
          %v6015 = vpack.c.b16 %v5039, %v5023
          %v6016 = vpack.c.b16 %v5040, %v5024
          %v6017 = vpack.c.b16 %v5041, %v5025
          %v6018 = vpack.c.b16 %v5042, %v5026
          %v6019 = vpack.c.b16 %v5043, %v5027
          %v6020 = vpack.c.b16 %v5044, %v5028
          %v6021 = vpack.c.b16 %v5045, %v5029
          %v6022 = vpack.c.b16 %v5046, %v5030
          %v6023 = vpack.c.b16 %v5063, %v5047
          %v6024 = vpack.c.b16 %v5064, %v5048
          %v6025 = vpack.c.b16 %v5065, %v5049
          %v6026 = vpack.c.b16 %v5066, %v5050
          %v6027 = vpack.c.b16 %v5067, %v5051
          %v6028 = vpack.c.b16 %v5068, %v5052
          %v6029 = vpack.c.b16 %v5069, %v5053
          %v6030 = vpack.c.b16 %v5070, %v5054
          %v6031 = vpack.c.b16 %v5071, %v5055
          %v6032 = vpack.c.b16 %v5072, %v5056
          %v6033 = vpack.c.b16 %v5073, %v5057
          %v6034 = vpack.c.b16 %v5074, %v5058
          %v6035 = vpack.c.b16 %v5075, %v5059
          %v6036 = vpack.c.b16 %v5076, %v5060
          %v6037 = vpack.c.b16 %v5077, %v5061
          %v6038 = vpack.c.b16 %v5078, %v5062
          %v6039 = vpack.c.b16 %v5095, %v5079
          %v6040 = vpack.c.b16 %v5096, %v5080
          %v6041 = vpack.c.b16 %v5097, %v5081
          %v6042 = vpack.c.b16 %v5098, %v5082
          %v6043 = vpack.c.b16 %v5099, %v5083
          %v6044 = vpack.c.b16 %v5100, %v5084
          %v6045 = vpack.c.b16 %v5101, %v5085
          %v6046 = vpack.c.b16 %v5102, %v5086
          %v6047 = vpack.c.b16 %v5103, %v5087
          %v6048 = vpack.c.b16 %v5104, %v5088
          %v6049 = vpack.c.b16 %v5105, %v5089
          %v6050 = vpack.c.b16 %v5106, %v5090
          %v6051 = vpack.c.b16 %v5107, %v5091
          %v6052 = vpack.c.b16 %v5108, %v5092
          %v6053 = vpack.c.b16 %v5109, %v5093
          %v6054 = vpack.c.b16 %v5110, %v5094
          %v6055 = vpack.c.b16 %v5127, %v5111
          %v6056 = vpack.c.b16 %v5128, %v5112
          %v6057 = vpack.c.b16 %v5129, %v5113
          %v6058 = vpack.c.b16 %v5130, %v5114
          %v6059 = vpack.c.b16 %v5131, %v5115
          %v6060 = vpack.c.b16 %v5132, %v5116
          %v6061 = vpack.c.b16 %v5133, %v5117
          %v6062 = vpack.c.b16 %v5134, %v5118
          %v6063 = vpack.c.b16 %v5135, %v5119
          %v6064 = vpack.c.b16 %v5136, %v5120
          %v6065 = vpack.c.b16 %v5137, %v5121
          %v6066 = vpack.c.b16 %v5138, %v5122
          %v6067 = vpack.c.b16 %v5139, %v5123
          %v6068 = vpack.c.b16 %v5140, %v5124
          %v6069 = vpack.c.b16 %v5141, %v5125
          %v6070 = vpack.c.b16 %v5142, %v5126
          %v6071 = vpack.c.b16 %v5159, %v5143
          %v6072 = vpack.c.b16 %v5160, %v5144
          %v6073 = vpack.c.b16 %v5161, %v5145
          %v6074 = vpack.c.b16 %v5162, %v5146
          %v6075 = vpack.c.b16 %v5163, %v5147
          %v6076 = vpack.c.b16 %v5164, %v5148
          %v6077 = vpack.c.b16 %v5165, %v5149
          %v6078 = vpack.c.b16 %v5166, %v5150
          %v6079 = vpack.c.b16 %v5167, %v5151
          %v6080 = vpack.c.b16 %v5168, %v5152
          %v6081 = vpack.c.b16 %v5169, %v5153
          %v6082 = vpack.c.b16 %v5170, %v5154
          %v6083 = vpack.c.b16 %v5171, %v5155
          %v6084 = vpack.c.b16 %v5172, %v5156
          %v6085 = vpack.c.b16 %v5173, %v5157
          %v6086 = vpack.c.b16 %v5174, %v5158
          %v6087 = vpack.c.b16 %v5191, %v5175
          %v6088 = vpack.c.b16 %v5192, %v5176
          %v6089 = vpack.c.b16 %v5193, %v5177
          %v6090 = vpack.c.b16 %v5194, %v5178
          %v6091 = vpack.c.b16 %v5195, %v5179
          %v6092 = vpack.c.b16 %v5196, %v5180
          %v6093 = vpack.c.b16 %v5197, %v5181
          %v6094 = vpack.c.b16 %v5198, %v5182
          %v6095 = vpack.c.b16 %v5199, %v5183
          %v6096 = vpack.c.b16 %v5200, %v5184
          %v6097 = vpack.c.b16 %v5201, %v5185
          %v6098 = vpack.c.b16 %v5202, %v5186
          %v6099 = vpack.c.b16 %v5203, %v5187
          %v6100 = vpack.c.b16 %v5204, %v5188
          %v6101 = vpack.c.b16 %v5205, %v5189
          %v6102 = vpack.c.b16 %v5206, %v5190
          %v6103 = vpack.c.b16 %v5223, %v5207
          %v6104 = vpack.c.b16 %v5224, %v5208
          %v6105 = vpack.c.b16 %v5225, %v5209
          %v6106 = vpack.c.b16 %v5226, %v5210
          %v6107 = vpack.c.b16 %v5227, %v5211
          %v6108 = vpack.c.b16 %v5228, %v5212
          %v6109 = vpack.c.b16 %v5229, %v5213
          %v6110 = vpack.c.b16 %v5230, %v5214
          %v6111 = vpack.c.b16 %v5231, %v5215
          %v6112 = vpack.c.b16 %v5232, %v5216
          %v6113 = vpack.c.b16 %v5233, %v5217
          %v6114 = vpack.c.b16 %v5234, %v5218
          %v6115 = vpack.c.b16 %v5235, %v5219
          %v6116 = vpack.c.b16 %v5236, %v5220
          %v6117 = vpack.c.b16 %v5237, %v5221
          %v6118 = vpack.c.b16 %v5238, %v5222
          %v6119 = vpack.c.b16 %v5255, %v5239
          %v6120 = vpack.c.b16 %v5256, %v5240
          %v6121 = vpack.c.b16 %v5257, %v5241
          %v6122 = vpack.c.b16 %v5258, %v5242
          %v6123 = vpack.c.b16 %v5259, %v5243
          %v6124 = vpack.c.b16 %v5260, %v5244
          %v6125 = vpack.c.b16 %v5261, %v5245
          %v6126 = vpack.c.b16 %v5262, %v5246
          %v6127 = vpack.c.b16 %v5263, %v5247
          %v6128 = vpack.c.b16 %v5264, %v5248
          %v6129 = vpack.c.b16 %v5265, %v5249
          %v6130 = vpack.c.b16 %v5266, %v5250
          %v6131 = vpack.c.b16 %v5267, %v5251
          %v6132 = vpack.c.b16 %v5268, %v5252
          %v6133 = vpack.c.b16 %v5269, %v5253
          %v6134 = vpack.c.b16 %v5270, %v5254
          %v6135 = vpack.c.b16 %v5287, %v5271
          %v6136 = vpack.c.b16 %v5288, %v5272
          %v6137 = vpack.c.b16 %v5289, %v5273
          %v6138 = vpack.c.b16 %v5290, %v5274
          %v6139 = vpack.c.b16 %v5291, %v5275
          %v6140 = vpack.c.b16 %v5292, %v5276
          %v6141 = vpack.c.b16 %v5293, %v5277
          %v6142 = vpack.c.b16 %v5294, %v5278
          %v6143 = vpack.c.b16 %v5295, %v5279
          %v6144 = vpack.c.b16 %v5296, %v5280
          %v6145 = vpack.c.b16 %v5297, %v5281
          %v6146 = vpack.c.b16 %v5298, %v5282
          %v6147 = vpack.c.b16 %v5299, %v5283
          %v6148 = vpack.c.b16 %v5300, %v5284
          %v6149 = vpack.c.b16 %v5301, %v5285
          %v6150 = vpack.c.b16 %v5302, %v5286
          %v6151 = vpack.c.b16 %v5319, %v5303
          %v6152 = vpack.c.b16 %v5320, %v5304
          %v6153 = vpack.c.b16 %v5321, %v5305
          %v6154 = vpack.c.b16 %v5322, %v5306
          %v6155 = vpack.c.b16 %v5323, %v5307
          %v6156 = vpack.c.b16 %v5324, %v5308
          %v6157 = vpack.c.b16 %v5325, %v5309
          %v6158 = vpack.c.b16 %v5326, %v5310
          %v6159 = vpack.c.b16 %v5327, %v5311
          %v6160 = vpack.c.b16 %v5328, %v5312
          %v6161 = vpack.c.b16 %v5329, %v5313
          %v6162 = vpack.c.b16 %v5330, %v5314
          %v6163 = vpack.c.b16 %v5331, %v5315
          %v6164 = vpack.c.b16 %v5332, %v5316
          %v6165 = vpack.c.b16 %v5333, %v5317
          %v6166 = vpack.c.b16 %v5334, %v5318
          %v6167 = vpack.c.b16 %v5351, %v5335
          %v6168 = vpack.c.b16 %v5352, %v5336
          %v6169 = vpack.c.b16 %v5353, %v5337
          %v6170 = vpack.c.b16 %v5354, %v5338
          %v6171 = vpack.c.b16 %v5355, %v5339
          %v6172 = vpack.c.b16 %v5356, %v5340
          %v6173 = vpack.c.b16 %v5357, %v5341
          %v6174 = vpack.c.b16 %v5358, %v5342
          %v6175 = vpack.c.b16 %v5359, %v5343
          %v6176 = vpack.c.b16 %v5360, %v5344
          %v6177 = vpack.c.b16 %v5361, %v5345
          %v6178 = vpack.c.b16 %v5362, %v5346
          %v6179 = vpack.c.b16 %v5363, %v5347
          %v6180 = vpack.c.b16 %v5364, %v5348
          %v6181 = vpack.c.b16 %v5365, %v5349
          %v6182 = vpack.c.b16 %v5366, %v5350
          %v6183 = vpack.c.b16 %v5383, %v5367
          %v6184 = vpack.c.b16 %v5384, %v5368
          %v6185 = vpack.c.b16 %v5385, %v5369
          %v6186 = vpack.c.b16 %v5386, %v5370
          %v6187 = vpack.c.b16 %v5387, %v5371
          %v6188 = vpack.c.b16 %v5388, %v5372
          %v6189 = vpack.c.b16 %v5389, %v5373
          %v6190 = vpack.c.b16 %v5390, %v5374
          %v6191 = vpack.c.b16 %v5391, %v5375
          %v6192 = vpack.c.b16 %v5392, %v5376
          %v6193 = vpack.c.b16 %v5393, %v5377
          %v6194 = vpack.c.b16 %v5394, %v5378
          %v6195 = vpack.c.b16 %v5395, %v5379
          %v6196 = vpack.c.b16 %v5396, %v5380
          %v6197 = vpack.c.b16 %v5397, %v5381
          %v6198 = vpack.c.b16 %v5398, %v5382
          %v6199 = vpack.c.b16 %v5415, %v5399
          %v6200 = vpack.c.b16 %v5416, %v5400
          %v6201 = vpack.c.b16 %v5417, %v5401
          %v6202 = vpack.c.b16 %v5418, %v5402
          %v6203 = vpack.c.b16 %v5419, %v5403
          %v6204 = vpack.c.b16 %v5420, %v5404
          %v6205 = vpack.c.b16 %v5421, %v5405
          %v6206 = vpack.c.b16 %v5422, %v5406
          %v6207 = vpack.c.b16 %v5423, %v5407
          %v6208 = vpack.c.b16 %v5424, %v5408
          %v6209 = vpack.c.b16 %v5425, %v5409
          %v6210 = vpack.c.b16 %v5426, %v5410
          %v6211 = vpack.c.b16 %v5427, %v5411
          %v6212 = vpack.c.b16 %v5428, %v5412
          %v6213 = vpack.c.b16 %v5429, %v5413
          %v6214 = vpack.c.b16 %v5430, %v5414
          %v6215 = vpack.c.b16 %v5447, %v5431
          %v6216 = vpack.c.b16 %v5448, %v5432
          %v6217 = vpack.c.b16 %v5449, %v5433
          %v6218 = vpack.c.b16 %v5450, %v5434
          %v6219 = vpack.c.b16 %v5451, %v5435
          %v6220 = vpack.c.b16 %v5452, %v5436
          %v6221 = vpack.c.b16 %v5453, %v5437
          %v6222 = vpack.c.b16 %v5454, %v5438
          %v6223 = vpack.c.b16 %v5455, %v5439
          %v6224 = vpack.c.b16 %v5456, %v5440
          %v6225 = vpack.c.b16 %v5457, %v5441
          %v6226 = vpack.c.b16 %v5458, %v5442
          %v6227 = vpack.c.b16 %v5459, %v5443
          %v6228 = vpack.c.b16 %v5460, %v5444
          %v6229 = vpack.c.b16 %v5461, %v5445
          %v6230 = vpack.c.b16 %v5462, %v5446
          %v6231 = vpack.c.b16 %v5479, %v5463
          %v6232 = vpack.c.b16 %v5480, %v5464
          %v6233 = vpack.c.b16 %v5481, %v5465
          %v6234 = vpack.c.b16 %v5482, %v5466
          %v6235 = vpack.c.b16 %v5483, %v5467
          %v6236 = vpack.c.b16 %v5484, %v5468
          %v6237 = vpack.c.b16 %v5485, %v5469
          %v6238 = vpack.c.b16 %v5486, %v5470
          %v6239 = vpack.c.b16 %v5487, %v5471
          %v6240 = vpack.c.b16 %v5488, %v5472
          %v6241 = vpack.c.b16 %v5489, %v5473
          %v6242 = vpack.c.b16 %v5490, %v5474
          %v6243 = vpack.c.b16 %v5491, %v5475
          %v6244 = vpack.c.b16 %v5492, %v5476
          %v6245 = vpack.c.b16 %v5493, %v5477
          %v6246 = vpack.c.b16 %v5494, %v5478
          %v6247 = vpack.c.b16 %v5511, %v5495
          %v6248 = vpack.c.b16 %v5512, %v5496
          %v6249 = vpack.c.b16 %v5513, %v5497
          %v6250 = vpack.c.b16 %v5514, %v5498
          %v6251 = vpack.c.b16 %v5515, %v5499
          %v6252 = vpack.c.b16 %v5516, %v5500
          %v6253 = vpack.c.b16 %v5517, %v5501
          %v6254 = vpack.c.b16 %v5518, %v5502
          %v6255 = vpack.c.b16 %v5519, %v5503
          %v6256 = vpack.c.b16 %v5520, %v5504
          %v6257 = vpack.c.b16 %v5521, %v5505
          %v6258 = vpack.c.b16 %v5522, %v5506
          %v6259 = vpack.c.b16 %v5523, %v5507
          %v6260 = vpack.c.b16 %v5524, %v5508
          %v6261 = vpack.c.b16 %v5525, %v5509
          %v6262 = vpack.c.b16 %v5526, %v5510
          %v6263 = vpack.c.b16 %v5543, %v5527
          %v6264 = vpack.c.b16 %v5544, %v5528
          %v6265 = vpack.c.b16 %v5545, %v5529
          %v6266 = vpack.c.b16 %v5546, %v5530
          %v6267 = vpack.c.b16 %v5547, %v5531
          %v6268 = vpack.c.b16 %v5548, %v5532
          %v6269 = vpack.c.b16 %v5549, %v5533
          %v6270 = vpack.c.b16 %v5550, %v5534
          %v6271 = vpack.c.b16 %v5551, %v5535
          %v6272 = vpack.c.b16 %v5552, %v5536
          %v6273 = vpack.c.b16 %v5553, %v5537
          %v6274 = vpack.c.b16 %v5554, %v5538
          %v6275 = vpack.c.b16 %v5555, %v5539
          %v6276 = vpack.c.b16 %v5556, %v5540
          %v6277 = vpack.c.b16 %v5557, %v5541
          %v6278 = vpack.c.b16 %v5558, %v5542
          %v6279 = vpack.c.b16 %v5575, %v5559
          %v6280 = vpack.c.b16 %v5576, %v5560
          %v6281 = vpack.c.b16 %v5577, %v5561
          %v6282 = vpack.c.b16 %v5578, %v5562
          %v6283 = vpack.c.b16 %v5579, %v5563
          %v6284 = vpack.c.b16 %v5580, %v5564
          %v6285 = vpack.c.b16 %v5581, %v5565
          %v6286 = vpack.c.b16 %v5582, %v5566
          %v6287 = vpack.c.b16 %v5583, %v5567
          %v6288 = vpack.c.b16 %v5584, %v5568
          %v6289 = vpack.c.b16 %v5585, %v5569
          %v6290 = vpack.c.b16 %v5586, %v5570
          %v6291 = vpack.c.b16 %v5587, %v5571
          %v6292 = vpack.c.b16 %v5588, %v5572
          %v6293 = vpack.c.b16 %v5589, %v5573
          %v6294 = vpack.c.b16 %v5590, %v5574
          %v6295 = vpack.c.b16 %v5607, %v5591
          %v6296 = vpack.c.b16 %v5608, %v5592
          %v6297 = vpack.c.b16 %v5609, %v5593
          %v6298 = vpack.c.b16 %v5610, %v5594
          %v6299 = vpack.c.b16 %v5611, %v5595
          %v6300 = vpack.c.b16 %v5612, %v5596
          %v6301 = vpack.c.b16 %v5613, %v5597
          %v6302 = vpack.c.b16 %v5614, %v5598
          %v6303 = vpack.c.b16 %v5615, %v5599
          %v6304 = vpack.c.b16 %v5616, %v5600
          %v6305 = vpack.c.b16 %v5617, %v5601
          %v6306 = vpack.c.b16 %v5618, %v5602
          %v6307 = vpack.c.b16 %v5619, %v5603
          %v6308 = vpack.c.b16 %v5620, %v5604
          %v6309 = vpack.c.b16 %v5621, %v5605
          %v6310 = vpack.c.b16 %v5622, %v5606
          %v6311 = vpack.c.b16 %v5639, %v5623
          %v6312 = vpack.c.b16 %v5640, %v5624
          %v6313 = vpack.c.b16 %v5641, %v5625
          %v6314 = vpack.c.b16 %v5642, %v5626
          %v6315 = vpack.c.b16 %v5643, %v5627
          %v6316 = vpack.c.b16 %v5644, %v5628
          %v6317 = vpack.c.b16 %v5645, %v5629
          %v6318 = vpack.c.b16 %v5646, %v5630
          %v6319 = vpack.c.b16 %v5647, %v5631
          %v6320 = vpack.c.b16 %v5648, %v5632
          %v6321 = vpack.c.b16 %v5649, %v5633
          %v6322 = vpack.c.b16 %v5650, %v5634
          %v6323 = vpack.c.b16 %v5651, %v5635
          %v6324 = vpack.c.b16 %v5652, %v5636
          %v6325 = vpack.c.b16 %v5653, %v5637
          %v6326 = vpack.c.b16 %v5654, %v5638
          %v6327 = vpack.c.b16 %v5671, %v5655
          %v6328 = vpack.c.b16 %v5672, %v5656
          %v6329 = vpack.c.b16 %v5673, %v5657
          %v6330 = vpack.c.b16 %v5674, %v5658
          %v6331 = vpack.c.b16 %v5675, %v5659
          %v6332 = vpack.c.b16 %v5676, %v5660
          %v6333 = vpack.c.b16 %v5677, %v5661
          %v6334 = vpack.c.b16 %v5678, %v5662
          %v6335 = vpack.c.b16 %v5679, %v5663
          %v6336 = vpack.c.b16 %v5680, %v5664
          %v6337 = vpack.c.b16 %v5681, %v5665
          %v6338 = vpack.c.b16 %v5682, %v5666
          %v6339 = vpack.c.b16 %v5683, %v5667
          %v6340 = vpack.c.b16 %v5684, %v5668
          %v6341 = vpack.c.b16 %v5685, %v5669
          %v6342 = vpack.c.b16 %v5686, %v5670
          %v6343 = vpack.c.b16 %v5703, %v5687
          %v6344 = vpack.c.b16 %v5704, %v5688
          %v6345 = vpack.c.b16 %v5705, %v5689
          %v6346 = vpack.c.b16 %v5706, %v5690
          %v6347 = vpack.c.b16 %v5707, %v5691
          %v6348 = vpack.c.b16 %v5708, %v5692
          %v6349 = vpack.c.b16 %v5709, %v5693
          %v6350 = vpack.c.b16 %v5710, %v5694
          %v6351 = vpack.c.b16 %v5711, %v5695
          %v6352 = vpack.c.b16 %v5712, %v5696
          %v6353 = vpack.c.b16 %v5713, %v5697
          %v6354 = vpack.c.b16 %v5714, %v5698
          %v6355 = vpack.c.b16 %v5715, %v5699
          %v6356 = vpack.c.b16 %v5716, %v5700
          %v6357 = vpack.c.b16 %v5717, %v5701
          %v6358 = vpack.c.b16 %v5718, %v5702
          %v6359 = vpack.c.b16 %v5735, %v5719
          %v6360 = vpack.c.b16 %v5736, %v5720
          %v6361 = vpack.c.b16 %v5737, %v5721
          %v6362 = vpack.c.b16 %v5738, %v5722
          %v6363 = vpack.c.b16 %v5739, %v5723
          %v6364 = vpack.c.b16 %v5740, %v5724
          %v6365 = vpack.c.b16 %v5741, %v5725
          %v6366 = vpack.c.b16 %v5742, %v5726
          %v6367 = vpack.c.b16 %v5743, %v5727
          %v6368 = vpack.c.b16 %v5744, %v5728
          %v6369 = vpack.c.b16 %v5745, %v5729
          %v6370 = vpack.c.b16 %v5746, %v5730
          %v6371 = vpack.c.b16 %v5747, %v5731
          %v6372 = vpack.c.b16 %v5748, %v5732
          %v6373 = vpack.c.b16 %v5749, %v5733
          %v6374 = vpack.c.b16 %v5750, %v5734
          %v6375 = vpack.c.b16 %v5767, %v5751
          %v6376 = vpack.c.b16 %v5768, %v5752
          %v6377 = vpack.c.b16 %v5769, %v5753
          %v6378 = vpack.c.b16 %v5770, %v5754
          %v6379 = vpack.c.b16 %v5771, %v5755
          %v6380 = vpack.c.b16 %v5772, %v5756
          %v6381 = vpack.c.b16 %v5773, %v5757
          %v6382 = vpack.c.b16 %v5774, %v5758
          %v6383 = vpack.c.b16 %v5775, %v5759
          %v6384 = vpack.c.b16 %v5776, %v5760
          %v6385 = vpack.c.b16 %v5777, %v5761
          %v6386 = vpack.c.b16 %v5778, %v5762
          %v6387 = vpack.c.b16 %v5779, %v5763
          %v6388 = vpack.c.b16 %v5780, %v5764
          %v6389 = vpack.c.b16 %v5781, %v5765
          %v6390 = vpack.c.b16 %v5782, %v5766
          %v6391 = vpack.c.b16 %v5799, %v5783
          %v6392 = vpack.c.b16 %v5800, %v5784
          %v6393 = vpack.c.b16 %v5801, %v5785
          %v6394 = vpack.c.b16 %v5802, %v5786
          %v6395 = vpack.c.b16 %v5803, %v5787
          %v6396 = vpack.c.b16 %v5804, %v5788
          %v6397 = vpack.c.b16 %v5805, %v5789
          %v6398 = vpack.c.b16 %v5806, %v5790
          %v6399 = vpack.c.b16 %v5807, %v5791
          %v6400 = vpack.c.b16 %v5808, %v5792
          %v6401 = vpack.c.b16 %v5809, %v5793
          %v6402 = vpack.c.b16 %v5810, %v5794
          %v6403 = vpack.c.b16 %v5811, %v5795
          %v6404 = vpack.c.b16 %v5812, %v5796
          %v6405 = vpack.c.b16 %v5813, %v5797
          %v6406 = vpack.c.b16 %v5814, %v5798
          %v6407 = vpack.c.b16 %v5831, %v5815
          %v6408 = vpack.c.b16 %v5832, %v5816
          %v6409 = vpack.c.b16 %v5833, %v5817
          %v6410 = vpack.c.b16 %v5834, %v5818
          %v6411 = vpack.c.b16 %v5835, %v5819
          %v6412 = vpack.c.b16 %v5836, %v5820
          %v6413 = vpack.c.b16 %v5837, %v5821
          %v6414 = vpack.c.b16 %v5838, %v5822
          %v6415 = vpack.c.b16 %v5839, %v5823
          %v6416 = vpack.c.b16 %v5840, %v5824
          %v6417 = vpack.c.b16 %v5841, %v5825
          %v6418 = vpack.c.b16 %v5842, %v5826
          %v6419 = vpack.c.b16 %v5843, %v5827
          %v6420 = vpack.c.b16 %v5844, %v5828
          %v6421 = vpack.c.b16 %v5845, %v5829
          %v6422 = vpack.c.b16 %v5846, %v5830
          %v6423 = vpack.c.b16 %v5863, %v5847
          %v6424 = vpack.c.b16 %v5864, %v5848
          %v6425 = vpack.c.b16 %v5865, %v5849
          %v6426 = vpack.c.b16 %v5866, %v5850
          %v6427 = vpack.c.b16 %v5867, %v5851
          %v6428 = vpack.c.b16 %v5868, %v5852
          %v6429 = vpack.c.b16 %v5869, %v5853
          %v6430 = vpack.c.b16 %v5870, %v5854
          %v6431 = vpack.c.b16 %v5871, %v5855
          %v6432 = vpack.c.b16 %v5872, %v5856
          %v6433 = vpack.c.b16 %v5873, %v5857
          %v6434 = vpack.c.b16 %v5874, %v5858
          %v6435 = vpack.c.b16 %v5875, %v5859
          %v6436 = vpack.c.b16 %v5876, %v5860
          %v6437 = vpack.c.b16 %v5877, %v5861
          %v6438 = vpack.c.b16 %v5878, %v5862
          %v6439 = vpack.c.b16 %v5895, %v5879
          %v6440 = vpack.c.b16 %v5896, %v5880
          %v6441 = vpack.c.b16 %v5897, %v5881
          %v6442 = vpack.c.b16 %v5898, %v5882
          %v6443 = vpack.c.b16 %v5899, %v5883
          %v6444 = vpack.c.b16 %v5900, %v5884
          %v6445 = vpack.c.b16 %v5901, %v5885
          %v6446 = vpack.c.b16 %v5902, %v5886
          %v6447 = vpack.c.b16 %v5903, %v5887
          %v6448 = vpack.c.b16 %v5904, %v5888
          %v6449 = vpack.c.b16 %v5905, %v5889
          %v6450 = vpack.c.b16 %v5906, %v5890
          %v6451 = vpack.c.b16 %v5907, %v5891
          %v6452 = vpack.c.b16 %v5908, %v5892
          %v6453 = vpack.c.b16 %v5909, %v5893
          %v6454 = vpack.c.b16 %v5910, %v5894
          %v6455 = vpack.c.b16 %v5927, %v5911
          %v6456 = vpack.c.b16 %v5928, %v5912
          %v6457 = vpack.c.b16 %v5929, %v5913
          %v6458 = vpack.c.b16 %v5930, %v5914
          %v6459 = vpack.c.b16 %v5931, %v5915
          %v6460 = vpack.c.b16 %v5932, %v5916
          %v6461 = vpack.c.b16 %v5933, %v5917
          %v6462 = vpack.c.b16 %v5934, %v5918
          %v6463 = vpack.c.b16 %v5935, %v5919
          %v6464 = vpack.c.b16 %v5936, %v5920
          %v6465 = vpack.c.b16 %v5937, %v5921
          %v6466 = vpack.c.b16 %v5938, %v5922
          %v6467 = vpack.c.b16 %v5939, %v5923
          %v6468 = vpack.c.b16 %v5940, %v5924
          %v6469 = vpack.c.b16 %v5941, %v5925
          %v6470 = vpack.c.b16 %v5942, %v5926
          %v6471 = vpack.c.b16 %v5959, %v5943
          %v6472 = vpack.c.b16 %v5960, %v5944
          %v6473 = vpack.c.b16 %v5961, %v5945
          %v6474 = vpack.c.b16 %v5962, %v5946
          %v6475 = vpack.c.b16 %v5963, %v5947
          %v6476 = vpack.c.b16 %v5964, %v5948
          %v6477 = vpack.c.b16 %v5965, %v5949
          %v6478 = vpack.c.b16 %v5966, %v5950
          %v6479 = vpack.c.b16 %v5967, %v5951
          %v6480 = vpack.c.b16 %v5968, %v5952
          %v6481 = vpack.c.b16 %v5969, %v5953
          %v6482 = vpack.c.b16 %v5970, %v5954
          %v6483 = vpack.c.b16 %v5971, %v5955
          %v6484 = vpack.c.b16 %v5972, %v5956
          %v6485 = vpack.c.b16 %v5973, %v5957
          %v6486 = vpack.c.b16 %v5974, %v5958
          %6999 = vmatpush.bf16.msra.mxu0 %v6087
          %7000 = vmatpush.bf16.msra.mxu0 %v6071
          %7001 = vmatpush.bf16.msra.mxu0 %v6055
          %7002 = vmatpush.bf16.msra.mxu0 %v6039
          %7003 = vmatpush.bf16.msra.mxu0 %v6023
          %7004 = vmatpush.bf16.msra.mxu0 %v6007
          %7005 = vmatpush.bf16.msra.mxu0 %v5991
          %7006 = vmatpush.bf16.msra.mxu0 %v5975
          %7007 = vmatmul.bf16.gmra.mxu0 %v3887
          %v7008 = vpop.f32.mrf.mxu0
          %v7009 = vadd.f32 %v4407, %v7008
          %v7010 = vpop.f32.mrf.mxu0
          %7011 = vdwg.mxu0
          %7012 = vmatpush.bf16.msra.mxu0 %v6215
          %7013 = vmatpush.bf16.msra.mxu0 %v6199
          %7014 = vmatpush.bf16.msra.mxu0 %v6183
          %7015 = vmatpush.bf16.msra.mxu0 %v6167
          %7016 = vmatpush.bf16.msra.mxu0 %v6151
          %7017 = vmatpush.bf16.msra.mxu0 %v6135
          %7018 = vmatpush.bf16.msra.mxu0 %v6119
          %7019 = vmatpush.bf16.msra.mxu0 %v6103
          %7020 = vmatmul.bf16.gmra.mxu0 %v3888
          %v7021 = vpop.f32.mrf.mxu0
          %v7022 = vadd.f32 %v7009, %v7021
          %v7023 = vpop.f32.mrf.mxu0
          %7024 = vdwg.mxu0
          %7025 = vmatpush.bf16.msra.mxu0 %v6343
          %7026 = vmatpush.bf16.msra.mxu0 %v6327
          %7027 = vmatpush.bf16.msra.mxu0 %v6311
          %7028 = vmatpush.bf16.msra.mxu0 %v6295
          %7029 = vmatpush.bf16.msra.mxu0 %v6279
          %7030 = vmatpush.bf16.msra.mxu0 %v6263
          %7031 = vmatpush.bf16.msra.mxu0 %v6247
          %7032 = vmatpush.bf16.msra.mxu0 %v6231
          %7033 = vmatmul.bf16.gmra.mxu0 %v3889
          %v7034 = vpop.f32.mrf.mxu0
          %v7035 = vadd.f32 %v7022, %v7034
          %v7036 = vpop.f32.mrf.mxu0
          %7037 = vdwg.mxu0
          %7038 = vmatpush.bf16.msra.mxu0 %v6471
          %7039 = vmatpush.bf16.msra.mxu0 %v6455
          %7040 = vmatpush.bf16.msra.mxu0 %v6439
          %7041 = vmatpush.bf16.msra.mxu0 %v6423
          %7042 = vmatpush.bf16.msra.mxu0 %v6407
          %7043 = vmatpush.bf16.msra.mxu0 %v6391
          %7044 = vmatpush.bf16.msra.mxu0 %v6375
          %7045 = vmatpush.bf16.msra.mxu0 %v6359
          %7046 = vmatmul.bf16.gmra.mxu0 %v3890
          %v7047 = vpop.f32.mrf.mxu0
          %v7048 = vadd.f32 %v7035, %v7047
          %v7049 = vpop.f32.mrf.mxu0
          %7050 = vdwg.mxu0
          %7051 = vmatpush.bf16.msra.mxu0 %v6088
          %7052 = vmatpush.bf16.msra.mxu0 %v6072
          %7053 = vmatpush.bf16.msra.mxu0 %v6056
          %7054 = vmatpush.bf16.msra.mxu0 %v6040
          %7055 = vmatpush.bf16.msra.mxu0 %v6024
          %7056 = vmatpush.bf16.msra.mxu0 %v6008
          %7057 = vmatpush.bf16.msra.mxu0 %v5992
          %7058 = vmatpush.bf16.msra.mxu0 %v5976
          %7059 = vmatmul.bf16.gmra.mxu0 %v3887
          %v7060 = vpop.f32.mrf.mxu0
          %v7061 = vadd.f32 %v4408, %v7060
          %v7062 = vpop.f32.mrf.mxu0
          %7063 = vdwg.mxu0
          %7064 = vmatpush.bf16.msra.mxu0 %v6216
          %7065 = vmatpush.bf16.msra.mxu0 %v6200
          %7066 = vmatpush.bf16.msra.mxu0 %v6184
          %7067 = vmatpush.bf16.msra.mxu0 %v6168
          %7068 = vmatpush.bf16.msra.mxu0 %v6152
          %7069 = vmatpush.bf16.msra.mxu0 %v6136
          %7070 = vmatpush.bf16.msra.mxu0 %v6120
          %7071 = vmatpush.bf16.msra.mxu0 %v6104
          %7072 = vmatmul.bf16.gmra.mxu0 %v3888
          %v7073 = vpop.f32.mrf.mxu0
          %v7074 = vadd.f32 %v7061, %v7073
          %v7075 = vpop.f32.mrf.mxu0
          %7076 = vdwg.mxu0
          %7077 = vmatpush.bf16.msra.mxu0 %v6344
          %7078 = vmatpush.bf16.msra.mxu0 %v6328
          %7079 = vmatpush.bf16.msra.mxu0 %v6312
          %7080 = vmatpush.bf16.msra.mxu0 %v6296
          %7081 = vmatpush.bf16.msra.mxu0 %v6280
          %7082 = vmatpush.bf16.msra.mxu0 %v6264
          %7083 = vmatpush.bf16.msra.mxu0 %v6248
          %7084 = vmatpush.bf16.msra.mxu0 %v6232
          %7085 = vmatmul.bf16.gmra.mxu0 %v3889
          %v7086 = vpop.f32.mrf.mxu0
          %v7087 = vadd.f32 %v7074, %v7086
          %v7088 = vpop.f32.mrf.mxu0
          %7089 = vdwg.mxu0
          %7090 = vmatpush.bf16.msra.mxu0 %v6472
          %7091 = vmatpush.bf16.msra.mxu0 %v6456
          %7092 = vmatpush.bf16.msra.mxu0 %v6440
          %7093 = vmatpush.bf16.msra.mxu0 %v6424
          %7094 = vmatpush.bf16.msra.mxu0 %v6408
          %7095 = vmatpush.bf16.msra.mxu0 %v6392
          %7096 = vmatpush.bf16.msra.mxu0 %v6376
          %7097 = vmatpush.bf16.msra.mxu0 %v6360
          %7098 = vmatmul.bf16.gmra.mxu0 %v3890
          %v7099 = vpop.f32.mrf.mxu0
          %v7100 = vadd.f32 %v7087, %v7099
          %v7101 = vpop.f32.mrf.mxu0
          %7102 = vdwg.mxu0
          %7103 = vmatpush.bf16.msra.mxu0 %v6089
          %7104 = vmatpush.bf16.msra.mxu0 %v6073
          %7105 = vmatpush.bf16.msra.mxu0 %v6057
          %7106 = vmatpush.bf16.msra.mxu0 %v6041
          %7107 = vmatpush.bf16.msra.mxu0 %v6025
          %7108 = vmatpush.bf16.msra.mxu0 %v6009
          %7109 = vmatpush.bf16.msra.mxu0 %v5993
          %7110 = vmatpush.bf16.msra.mxu0 %v5977
          %7111 = vmatmul.bf16.gmra.mxu0 %v3887
          %v7112 = vpop.f32.mrf.mxu0
          %v7113 = vadd.f32 %v4409, %v7112
          %v7114 = vpop.f32.mrf.mxu0
          %7115 = vdwg.mxu0
          %7116 = vmatpush.bf16.msra.mxu0 %v6217
          %7117 = vmatpush.bf16.msra.mxu0 %v6201
          %7118 = vmatpush.bf16.msra.mxu0 %v6185
          %7119 = vmatpush.bf16.msra.mxu0 %v6169
          %7120 = vmatpush.bf16.msra.mxu0 %v6153
          %7121 = vmatpush.bf16.msra.mxu0 %v6137
          %7122 = vmatpush.bf16.msra.mxu0 %v6121
          %7123 = vmatpush.bf16.msra.mxu0 %v6105
          %7124 = vmatmul.bf16.gmra.mxu0 %v3888
          %v7125 = vpop.f32.mrf.mxu0
          %v7126 = vadd.f32 %v7113, %v7125
          %v7127 = vpop.f32.mrf.mxu0
          %7128 = vdwg.mxu0
          %7129 = vmatpush.bf16.msra.mxu0 %v6345
          %7130 = vmatpush.bf16.msra.mxu0 %v6329
          %7131 = vmatpush.bf16.msra.mxu0 %v6313
          %7132 = vmatpush.bf16.msra.mxu0 %v6297
          %7133 = vmatpush.bf16.msra.mxu0 %v6281
          %7134 = vmatpush.bf16.msra.mxu0 %v6265
          %7135 = vmatpush.bf16.msra.mxu0 %v6249
          %7136 = vmatpush.bf16.msra.mxu0 %v6233
          %7137 = vmatmul.bf16.gmra.mxu0 %v3889
          %v7138 = vpop.f32.mrf.mxu0
          %v7139 = vadd.f32 %v7126, %v7138
          %v7140 = vpop.f32.mrf.mxu0
          %7141 = vdwg.mxu0
          %7142 = vmatpush.bf16.msra.mxu0 %v6473
          %7143 = vmatpush.bf16.msra.mxu0 %v6457
          %7144 = vmatpush.bf16.msra.mxu0 %v6441
          %7145 = vmatpush.bf16.msra.mxu0 %v6425
          %7146 = vmatpush.bf16.msra.mxu0 %v6409
          %7147 = vmatpush.bf16.msra.mxu0 %v6393
          %7148 = vmatpush.bf16.msra.mxu0 %v6377
          %7149 = vmatpush.bf16.msra.mxu0 %v6361
          %7150 = vmatmul.bf16.gmra.mxu0 %v3890
          %v7151 = vpop.f32.mrf.mxu0
          %v7152 = vadd.f32 %v7139, %v7151
          %v7153 = vpop.f32.mrf.mxu0
          %7154 = vdwg.mxu0
          %7155 = vmatpush.bf16.msra.mxu0 %v6090
          %7156 = vmatpush.bf16.msra.mxu0 %v6074
          %7157 = vmatpush.bf16.msra.mxu0 %v6058
          %7158 = vmatpush.bf16.msra.mxu0 %v6042
          %7159 = vmatpush.bf16.msra.mxu0 %v6026
          %7160 = vmatpush.bf16.msra.mxu0 %v6010
          %7161 = vmatpush.bf16.msra.mxu0 %v5994
          %7162 = vmatpush.bf16.msra.mxu0 %v5978
          %7163 = vmatmul.bf16.gmra.mxu0 %v3887
          %v7164 = vpop.f32.mrf.mxu0
          %v7165 = vadd.f32 %v4410, %v7164
          %v7166 = vpop.f32.mrf.mxu0
          %7167 = vdwg.mxu0
          %7168 = vmatpush.bf16.msra.mxu0 %v6218
          %7169 = vmatpush.bf16.msra.mxu0 %v6202
          %7170 = vmatpush.bf16.msra.mxu0 %v6186
          %7171 = vmatpush.bf16.msra.mxu0 %v6170
          %7172 = vmatpush.bf16.msra.mxu0 %v6154
          %7173 = vmatpush.bf16.msra.mxu0 %v6138
          %7174 = vmatpush.bf16.msra.mxu0 %v6122
          %7175 = vmatpush.bf16.msra.mxu0 %v6106
          %7176 = vmatmul.bf16.gmra.mxu0 %v3888
          %v7177 = vpop.f32.mrf.mxu0
          %v7178 = vadd.f32 %v7165, %v7177
          %v7179 = vpop.f32.mrf.mxu0
          %7180 = vdwg.mxu0
          %7181 = vmatpush.bf16.msra.mxu0 %v6346
          %7182 = vmatpush.bf16.msra.mxu0 %v6330
          %7183 = vmatpush.bf16.msra.mxu0 %v6314
          %7184 = vmatpush.bf16.msra.mxu0 %v6298
          %7185 = vmatpush.bf16.msra.mxu0 %v6282
          %7186 = vmatpush.bf16.msra.mxu0 %v6266
          %7187 = vmatpush.bf16.msra.mxu0 %v6250
          %7188 = vmatpush.bf16.msra.mxu0 %v6234
          %7189 = vmatmul.bf16.gmra.mxu0 %v3889
          %v7190 = vpop.f32.mrf.mxu0
          %v7191 = vadd.f32 %v7178, %v7190
          %v7192 = vpop.f32.mrf.mxu0
          %7193 = vdwg.mxu0
          %7194 = vmatpush.bf16.msra.mxu0 %v6474
          %7195 = vmatpush.bf16.msra.mxu0 %v6458
          %7196 = vmatpush.bf16.msra.mxu0 %v6442
          %7197 = vmatpush.bf16.msra.mxu0 %v6426
          %7198 = vmatpush.bf16.msra.mxu0 %v6410
          %7199 = vmatpush.bf16.msra.mxu0 %v6394
          %7200 = vmatpush.bf16.msra.mxu0 %v6378
          %7201 = vmatpush.bf16.msra.mxu0 %v6362
          %7202 = vmatmul.bf16.gmra.mxu0 %v3890
          %v7203 = vpop.f32.mrf.mxu0
          %v7204 = vadd.f32 %v7191, %v7203
          %v7205 = vpop.f32.mrf.mxu0
          %7206 = vdwg.mxu0
          %7207 = vmatpush.bf16.msra.mxu0 %v6091
          %7208 = vmatpush.bf16.msra.mxu0 %v6075
          %7209 = vmatpush.bf16.msra.mxu0 %v6059
          %7210 = vmatpush.bf16.msra.mxu0 %v6043
          %7211 = vmatpush.bf16.msra.mxu0 %v6027
          %7212 = vmatpush.bf16.msra.mxu0 %v6011
          %7213 = vmatpush.bf16.msra.mxu0 %v5995
          %7214 = vmatpush.bf16.msra.mxu0 %v5979
          %7215 = vmatmul.bf16.gmra.mxu0 %v3887
          %v7216 = vpop.f32.mrf.mxu0
          %v7217 = vadd.f32 %v4411, %v7216
          %v7218 = vpop.f32.mrf.mxu0
          %7219 = vdwg.mxu0
          %7220 = vmatpush.bf16.msra.mxu0 %v6219
          %7221 = vmatpush.bf16.msra.mxu0 %v6203
          %7222 = vmatpush.bf16.msra.mxu0 %v6187
          %7223 = vmatpush.bf16.msra.mxu0 %v6171
          %7224 = vmatpush.bf16.msra.mxu0 %v6155
          %7225 = vmatpush.bf16.msra.mxu0 %v6139
          %7226 = vmatpush.bf16.msra.mxu0 %v6123
          %7227 = vmatpush.bf16.msra.mxu0 %v6107
          %7228 = vmatmul.bf16.gmra.mxu0 %v3888
          %v7229 = vpop.f32.mrf.mxu0
          %v7230 = vadd.f32 %v7217, %v7229
          %v7231 = vpop.f32.mrf.mxu0
          %7232 = vdwg.mxu0
          %7233 = vmatpush.bf16.msra.mxu0 %v6347
          %7234 = vmatpush.bf16.msra.mxu0 %v6331
          %7235 = vmatpush.bf16.msra.mxu0 %v6315
          %7236 = vmatpush.bf16.msra.mxu0 %v6299
          %7237 = vmatpush.bf16.msra.mxu0 %v6283
          %7238 = vmatpush.bf16.msra.mxu0 %v6267
          %7239 = vmatpush.bf16.msra.mxu0 %v6251
          %7240 = vmatpush.bf16.msra.mxu0 %v6235
          %7241 = vmatmul.bf16.gmra.mxu0 %v3889
          %v7242 = vpop.f32.mrf.mxu0
          %v7243 = vadd.f32 %v7230, %v7242
          %v7244 = vpop.f32.mrf.mxu0
          %7245 = vdwg.mxu0
          %7246 = vmatpush.bf16.msra.mxu0 %v6475
          %7247 = vmatpush.bf16.msra.mxu0 %v6459
          %7248 = vmatpush.bf16.msra.mxu0 %v6443
          %7249 = vmatpush.bf16.msra.mxu0 %v6427
          %7250 = vmatpush.bf16.msra.mxu0 %v6411
          %7251 = vmatpush.bf16.msra.mxu0 %v6395
          %7252 = vmatpush.bf16.msra.mxu0 %v6379
          %7253 = vmatpush.bf16.msra.mxu0 %v6363
          %7254 = vmatmul.bf16.gmra.mxu0 %v3890
          %v7255 = vpop.f32.mrf.mxu0
          %v7256 = vadd.f32 %v7243, %v7255
          %v7257 = vpop.f32.mrf.mxu0
          %7258 = vdwg.mxu0
          %7259 = vmatpush.bf16.msra.mxu0 %v6092
          %7260 = vmatpush.bf16.msra.mxu0 %v6076
          %7261 = vmatpush.bf16.msra.mxu0 %v6060
          %7262 = vmatpush.bf16.msra.mxu0 %v6044
          %7263 = vmatpush.bf16.msra.mxu0 %v6028
          %7264 = vmatpush.bf16.msra.mxu0 %v6012
          %7265 = vmatpush.bf16.msra.mxu0 %v5996
          %7266 = vmatpush.bf16.msra.mxu0 %v5980
          %7267 = vmatmul.bf16.gmra.mxu0 %v3887
          %v7268 = vpop.f32.mrf.mxu0
          %v7269 = vadd.f32 %v4412, %v7268
          %v7270 = vpop.f32.mrf.mxu0
          %7271 = vdwg.mxu0
          %7272 = vmatpush.bf16.msra.mxu0 %v6220
          %7273 = vmatpush.bf16.msra.mxu0 %v6204
          %7274 = vmatpush.bf16.msra.mxu0 %v6188
          %7275 = vmatpush.bf16.msra.mxu0 %v6172
          %7276 = vmatpush.bf16.msra.mxu0 %v6156
          %7277 = vmatpush.bf16.msra.mxu0 %v6140
          %7278 = vmatpush.bf16.msra.mxu0 %v6124
          %7279 = vmatpush.bf16.msra.mxu0 %v6108
          %7280 = vmatmul.bf16.gmra.mxu0 %v3888
          %v7281 = vpop.f32.mrf.mxu0
          %v7282 = vadd.f32 %v7269, %v7281
          %v7283 = vpop.f32.mrf.mxu0
          %7284 = vdwg.mxu0
          %7285 = vmatpush.bf16.msra.mxu0 %v6348
          %7286 = vmatpush.bf16.msra.mxu0 %v6332
          %7287 = vmatpush.bf16.msra.mxu0 %v6316
          %7288 = vmatpush.bf16.msra.mxu0 %v6300
          %7289 = vmatpush.bf16.msra.mxu0 %v6284
          %7290 = vmatpush.bf16.msra.mxu0 %v6268
          %7291 = vmatpush.bf16.msra.mxu0 %v6252
          %7292 = vmatpush.bf16.msra.mxu0 %v6236
          %7293 = vmatmul.bf16.gmra.mxu0 %v3889
          %v7294 = vpop.f32.mrf.mxu0
          %v7295 = vadd.f32 %v7282, %v7294
          %v7296 = vpop.f32.mrf.mxu0
          %7297 = vdwg.mxu0
          %7298 = vmatpush.bf16.msra.mxu0 %v6476
          %7299 = vmatpush.bf16.msra.mxu0 %v6460
          %7300 = vmatpush.bf16.msra.mxu0 %v6444
          %7301 = vmatpush.bf16.msra.mxu0 %v6428
          %7302 = vmatpush.bf16.msra.mxu0 %v6412
          %7303 = vmatpush.bf16.msra.mxu0 %v6396
          %7304 = vmatpush.bf16.msra.mxu0 %v6380
          %7305 = vmatpush.bf16.msra.mxu0 %v6364
          %7306 = vmatmul.bf16.gmra.mxu0 %v3890
          %v7307 = vpop.f32.mrf.mxu0
          %v7308 = vadd.f32 %v7295, %v7307
          %v7309 = vpop.f32.mrf.mxu0
          %7310 = vdwg.mxu0
          %7311 = vmatpush.bf16.msra.mxu0 %v6093
          %7312 = vmatpush.bf16.msra.mxu0 %v6077
          %7313 = vmatpush.bf16.msra.mxu0 %v6061
          %7314 = vmatpush.bf16.msra.mxu0 %v6045
          %7315 = vmatpush.bf16.msra.mxu0 %v6029
          %7316 = vmatpush.bf16.msra.mxu0 %v6013
          %7317 = vmatpush.bf16.msra.mxu0 %v5997
          %7318 = vmatpush.bf16.msra.mxu0 %v5981
          %7319 = vmatmul.bf16.gmra.mxu0 %v3887
          %v7320 = vpop.f32.mrf.mxu0
          %v7321 = vadd.f32 %v4413, %v7320
          %v7322 = vpop.f32.mrf.mxu0
          %7323 = vdwg.mxu0
          %7324 = vmatpush.bf16.msra.mxu0 %v6221
          %7325 = vmatpush.bf16.msra.mxu0 %v6205
          %7326 = vmatpush.bf16.msra.mxu0 %v6189
          %7327 = vmatpush.bf16.msra.mxu0 %v6173
          %7328 = vmatpush.bf16.msra.mxu0 %v6157
          %7329 = vmatpush.bf16.msra.mxu0 %v6141
          %7330 = vmatpush.bf16.msra.mxu0 %v6125
          %7331 = vmatpush.bf16.msra.mxu0 %v6109
          %7332 = vmatmul.bf16.gmra.mxu0 %v3888
          %v7333 = vpop.f32.mrf.mxu0
          %v7334 = vadd.f32 %v7321, %v7333
          %v7335 = vpop.f32.mrf.mxu0
          %7336 = vdwg.mxu0
          %7337 = vmatpush.bf16.msra.mxu0 %v6349
          %7338 = vmatpush.bf16.msra.mxu0 %v6333
          %7339 = vmatpush.bf16.msra.mxu0 %v6317
          %7340 = vmatpush.bf16.msra.mxu0 %v6301
          %7341 = vmatpush.bf16.msra.mxu0 %v6285
          %7342 = vmatpush.bf16.msra.mxu0 %v6269
          %7343 = vmatpush.bf16.msra.mxu0 %v6253
          %7344 = vmatpush.bf16.msra.mxu0 %v6237
          %7345 = vmatmul.bf16.gmra.mxu0 %v3889
          %v7346 = vpop.f32.mrf.mxu0
          %v7347 = vadd.f32 %v7334, %v7346
          %v7348 = vpop.f32.mrf.mxu0
          %7349 = vdwg.mxu0
          %7350 = vmatpush.bf16.msra.mxu0 %v6477
          %7351 = vmatpush.bf16.msra.mxu0 %v6461
          %7352 = vmatpush.bf16.msra.mxu0 %v6445
          %7353 = vmatpush.bf16.msra.mxu0 %v6429
          %7354 = vmatpush.bf16.msra.mxu0 %v6413
          %7355 = vmatpush.bf16.msra.mxu0 %v6397
          %7356 = vmatpush.bf16.msra.mxu0 %v6381
          %7357 = vmatpush.bf16.msra.mxu0 %v6365
          %7358 = vmatmul.bf16.gmra.mxu0 %v3890
          %v7359 = vpop.f32.mrf.mxu0
          %v7360 = vadd.f32 %v7347, %v7359
          %v7361 = vpop.f32.mrf.mxu0
          %7362 = vdwg.mxu0
          %7363 = vmatpush.bf16.msra.mxu0 %v6094
          %7364 = vmatpush.bf16.msra.mxu0 %v6078
          %7365 = vmatpush.bf16.msra.mxu0 %v6062
          %7366 = vmatpush.bf16.msra.mxu0 %v6046
          %7367 = vmatpush.bf16.msra.mxu0 %v6030
          %7368 = vmatpush.bf16.msra.mxu0 %v6014
          %7369 = vmatpush.bf16.msra.mxu0 %v5998
          %7370 = vmatpush.bf16.msra.mxu0 %v5982
          %7371 = vmatmul.bf16.gmra.mxu0 %v3887
          %v7372 = vpop.f32.mrf.mxu0
          %v7373 = vadd.f32 %v4414, %v7372
          %v7374 = vpop.f32.mrf.mxu0
          %7375 = vdwg.mxu0
          %7376 = vmatpush.bf16.msra.mxu0 %v6222
          %7377 = vmatpush.bf16.msra.mxu0 %v6206
          %7378 = vmatpush.bf16.msra.mxu0 %v6190
          %7379 = vmatpush.bf16.msra.mxu0 %v6174
          %7380 = vmatpush.bf16.msra.mxu0 %v6158
          %7381 = vmatpush.bf16.msra.mxu0 %v6142
          %7382 = vmatpush.bf16.msra.mxu0 %v6126
          %7383 = vmatpush.bf16.msra.mxu0 %v6110
          %7384 = vmatmul.bf16.gmra.mxu0 %v3888
          %v7385 = vpop.f32.mrf.mxu0
          %v7386 = vadd.f32 %v7373, %v7385
          %v7387 = vpop.f32.mrf.mxu0
          %7388 = vdwg.mxu0
          %7389 = vmatpush.bf16.msra.mxu0 %v6350
          %7390 = vmatpush.bf16.msra.mxu0 %v6334
          %7391 = vmatpush.bf16.msra.mxu0 %v6318
          %7392 = vmatpush.bf16.msra.mxu0 %v6302
          %7393 = vmatpush.bf16.msra.mxu0 %v6286
          %7394 = vmatpush.bf16.msra.mxu0 %v6270
          %7395 = vmatpush.bf16.msra.mxu0 %v6254
          %7396 = vmatpush.bf16.msra.mxu0 %v6238
          %7397 = vmatmul.bf16.gmra.mxu0 %v3889
          %v7398 = vpop.f32.mrf.mxu0
          %v7399 = vadd.f32 %v7386, %v7398
          %v7400 = vpop.f32.mrf.mxu0
          %7401 = vdwg.mxu0
          %7402 = vmatpush.bf16.msra.mxu0 %v6478
          %7403 = vmatpush.bf16.msra.mxu0 %v6462
          %7404 = vmatpush.bf16.msra.mxu0 %v6446
          %7405 = vmatpush.bf16.msra.mxu0 %v6430
          %7406 = vmatpush.bf16.msra.mxu0 %v6414
          %7407 = vmatpush.bf16.msra.mxu0 %v6398
          %7408 = vmatpush.bf16.msra.mxu0 %v6382
          %7409 = vmatpush.bf16.msra.mxu0 %v6366
          %7410 = vmatmul.bf16.gmra.mxu0 %v3890
          %v7411 = vpop.f32.mrf.mxu0
          %v7412 = vadd.f32 %v7399, %v7411
          %v7413 = vpop.f32.mrf.mxu0
          %7414 = vdwg.mxu0
          %7415 = vmatpush.bf16.msra.mxu0 %v6095
          %7416 = vmatpush.bf16.msra.mxu0 %v6079
          %7417 = vmatpush.bf16.msra.mxu0 %v6063
          %7418 = vmatpush.bf16.msra.mxu0 %v6047
          %7419 = vmatpush.bf16.msra.mxu0 %v6031
          %7420 = vmatpush.bf16.msra.mxu0 %v6015
          %7421 = vmatpush.bf16.msra.mxu0 %v5999
          %7422 = vmatpush.bf16.msra.mxu0 %v5983
          %7423 = vmatmul.bf16.gmra.mxu0 %v3887
          %v7424 = vpop.f32.mrf.mxu0
          %v7425 = vadd.f32 %v4415, %v7424
          %v7426 = vpop.f32.mrf.mxu0
          %7427 = vdwg.mxu0
          %7428 = vmatpush.bf16.msra.mxu0 %v6223
          %7429 = vmatpush.bf16.msra.mxu0 %v6207
          %7430 = vmatpush.bf16.msra.mxu0 %v6191
          %7431 = vmatpush.bf16.msra.mxu0 %v6175
          %7432 = vmatpush.bf16.msra.mxu0 %v6159
          %7433 = vmatpush.bf16.msra.mxu0 %v6143
          %7434 = vmatpush.bf16.msra.mxu0 %v6127
          %7435 = vmatpush.bf16.msra.mxu0 %v6111
          %7436 = vmatmul.bf16.gmra.mxu0 %v3888
          %v7437 = vpop.f32.mrf.mxu0
          %v7438 = vadd.f32 %v7425, %v7437
          %v7439 = vpop.f32.mrf.mxu0
          %7440 = vdwg.mxu0
          %7441 = vmatpush.bf16.msra.mxu0 %v6351
          %7442 = vmatpush.bf16.msra.mxu0 %v6335
          %7443 = vmatpush.bf16.msra.mxu0 %v6319
          %7444 = vmatpush.bf16.msra.mxu0 %v6303
          %7445 = vmatpush.bf16.msra.mxu0 %v6287
          %7446 = vmatpush.bf16.msra.mxu0 %v6271
          %7447 = vmatpush.bf16.msra.mxu0 %v6255
          %7448 = vmatpush.bf16.msra.mxu0 %v6239
          %7449 = vmatmul.bf16.gmra.mxu0 %v3889
          %v7450 = vpop.f32.mrf.mxu0
          %v7451 = vadd.f32 %v7438, %v7450
          %v7452 = vpop.f32.mrf.mxu0
          %7453 = vdwg.mxu0
          %7454 = vmatpush.bf16.msra.mxu0 %v6479
          %7455 = vmatpush.bf16.msra.mxu0 %v6463
          %7456 = vmatpush.bf16.msra.mxu0 %v6447
          %7457 = vmatpush.bf16.msra.mxu0 %v6431
          %7458 = vmatpush.bf16.msra.mxu0 %v6415
          %7459 = vmatpush.bf16.msra.mxu0 %v6399
          %7460 = vmatpush.bf16.msra.mxu0 %v6383
          %7461 = vmatpush.bf16.msra.mxu0 %v6367
          %7462 = vmatmul.bf16.gmra.mxu0 %v3890
          %v7463 = vpop.f32.mrf.mxu0
          %v7464 = vadd.f32 %v7451, %v7463
          %v7465 = vpop.f32.mrf.mxu0
          %7466 = vdwg.mxu0
          %7467 = vmatpush.bf16.msra.mxu0 %v6096
          %7468 = vmatpush.bf16.msra.mxu0 %v6080
          %7469 = vmatpush.bf16.msra.mxu0 %v6064
          %7470 = vmatpush.bf16.msra.mxu0 %v6048
          %7471 = vmatpush.bf16.msra.mxu0 %v6032
          %7472 = vmatpush.bf16.msra.mxu0 %v6016
          %7473 = vmatpush.bf16.msra.mxu0 %v6000
          %7474 = vmatpush.bf16.msra.mxu0 %v5984
          %7475 = vmatmul.bf16.gmra.mxu0 %v3887
          %v7476 = vpop.f32.mrf.mxu0
          %v7477 = vadd.f32 %v4416, %v7476
          %v7478 = vpop.f32.mrf.mxu0
          %7479 = vdwg.mxu0
          %7480 = vmatpush.bf16.msra.mxu0 %v6224
          %7481 = vmatpush.bf16.msra.mxu0 %v6208
          %7482 = vmatpush.bf16.msra.mxu0 %v6192
          %7483 = vmatpush.bf16.msra.mxu0 %v6176
          %7484 = vmatpush.bf16.msra.mxu0 %v6160
          %7485 = vmatpush.bf16.msra.mxu0 %v6144
          %7486 = vmatpush.bf16.msra.mxu0 %v6128
          %7487 = vmatpush.bf16.msra.mxu0 %v6112
          %7488 = vmatmul.bf16.gmra.mxu0 %v3888
          %v7489 = vpop.f32.mrf.mxu0
          %v7490 = vadd.f32 %v7477, %v7489
          %v7491 = vpop.f32.mrf.mxu0
          %7492 = vdwg.mxu0
          %7493 = vmatpush.bf16.msra.mxu0 %v6352
          %7494 = vmatpush.bf16.msra.mxu0 %v6336
          %7495 = vmatpush.bf16.msra.mxu0 %v6320
          %7496 = vmatpush.bf16.msra.mxu0 %v6304
          %7497 = vmatpush.bf16.msra.mxu0 %v6288
          %7498 = vmatpush.bf16.msra.mxu0 %v6272
          %7499 = vmatpush.bf16.msra.mxu0 %v6256
          %7500 = vmatpush.bf16.msra.mxu0 %v6240
          %7501 = vmatmul.bf16.gmra.mxu0 %v3889
          %v7502 = vpop.f32.mrf.mxu0
          %v7503 = vadd.f32 %v7490, %v7502
          %v7504 = vpop.f32.mrf.mxu0
          %7505 = vdwg.mxu0
          %7506 = vmatpush.bf16.msra.mxu0 %v6480
          %7507 = vmatpush.bf16.msra.mxu0 %v6464
          %7508 = vmatpush.bf16.msra.mxu0 %v6448
          %7509 = vmatpush.bf16.msra.mxu0 %v6432
          %7510 = vmatpush.bf16.msra.mxu0 %v6416
          %7511 = vmatpush.bf16.msra.mxu0 %v6400
          %7512 = vmatpush.bf16.msra.mxu0 %v6384
          %7513 = vmatpush.bf16.msra.mxu0 %v6368
          %7514 = vmatmul.bf16.gmra.mxu0 %v3890
          %v7515 = vpop.f32.mrf.mxu0
          %v7516 = vadd.f32 %v7503, %v7515
          %v7517 = vpop.f32.mrf.mxu0
          %7518 = vdwg.mxu0
          %7519 = vmatpush.bf16.msra.mxu0 %v6097
          %7520 = vmatpush.bf16.msra.mxu0 %v6081
          %7521 = vmatpush.bf16.msra.mxu0 %v6065
          %7522 = vmatpush.bf16.msra.mxu0 %v6049
          %7523 = vmatpush.bf16.msra.mxu0 %v6033
          %7524 = vmatpush.bf16.msra.mxu0 %v6017
          %7525 = vmatpush.bf16.msra.mxu0 %v6001
          %7526 = vmatpush.bf16.msra.mxu0 %v5985
          %7527 = vmatmul.bf16.gmra.mxu0 %v3887
          %v7528 = vpop.f32.mrf.mxu0
          %v7529 = vadd.f32 %v4417, %v7528
          %v7530 = vpop.f32.mrf.mxu0
          %7531 = vdwg.mxu0
          %7532 = vmatpush.bf16.msra.mxu0 %v6225
          %7533 = vmatpush.bf16.msra.mxu0 %v6209
          %7534 = vmatpush.bf16.msra.mxu0 %v6193
          %7535 = vmatpush.bf16.msra.mxu0 %v6177
          %7536 = vmatpush.bf16.msra.mxu0 %v6161
          %7537 = vmatpush.bf16.msra.mxu0 %v6145
          %7538 = vmatpush.bf16.msra.mxu0 %v6129
          %7539 = vmatpush.bf16.msra.mxu0 %v6113
          %7540 = vmatmul.bf16.gmra.mxu0 %v3888
          %v7541 = vpop.f32.mrf.mxu0
          %v7542 = vadd.f32 %v7529, %v7541
          %v7543 = vpop.f32.mrf.mxu0
          %7544 = vdwg.mxu0
          %7545 = vmatpush.bf16.msra.mxu0 %v6353
          %7546 = vmatpush.bf16.msra.mxu0 %v6337
          %7547 = vmatpush.bf16.msra.mxu0 %v6321
          %7548 = vmatpush.bf16.msra.mxu0 %v6305
          %7549 = vmatpush.bf16.msra.mxu0 %v6289
          %7550 = vmatpush.bf16.msra.mxu0 %v6273
          %7551 = vmatpush.bf16.msra.mxu0 %v6257
          %7552 = vmatpush.bf16.msra.mxu0 %v6241
          %7553 = vmatmul.bf16.gmra.mxu0 %v3889
          %v7554 = vpop.f32.mrf.mxu0
          %v7555 = vadd.f32 %v7542, %v7554
          %v7556 = vpop.f32.mrf.mxu0
          %7557 = vdwg.mxu0
          %7558 = vmatpush.bf16.msra.mxu0 %v6481
          %7559 = vmatpush.bf16.msra.mxu0 %v6465
          %7560 = vmatpush.bf16.msra.mxu0 %v6449
          %7561 = vmatpush.bf16.msra.mxu0 %v6433
          %7562 = vmatpush.bf16.msra.mxu0 %v6417
          %7563 = vmatpush.bf16.msra.mxu0 %v6401
          %7564 = vmatpush.bf16.msra.mxu0 %v6385
          %7565 = vmatpush.bf16.msra.mxu0 %v6369
          %7566 = vmatmul.bf16.gmra.mxu0 %v3890
          %v7567 = vpop.f32.mrf.mxu0
          %v7568 = vadd.f32 %v7555, %v7567
          %v7569 = vpop.f32.mrf.mxu0
          %7570 = vdwg.mxu0
          %7571 = vmatpush.bf16.msra.mxu0 %v6098
          %7572 = vmatpush.bf16.msra.mxu0 %v6082
          %7573 = vmatpush.bf16.msra.mxu0 %v6066
          %7574 = vmatpush.bf16.msra.mxu0 %v6050
          %7575 = vmatpush.bf16.msra.mxu0 %v6034
          %7576 = vmatpush.bf16.msra.mxu0 %v6018
          %7577 = vmatpush.bf16.msra.mxu0 %v6002
          %7578 = vmatpush.bf16.msra.mxu0 %v5986
          %7579 = vmatmul.bf16.gmra.mxu0 %v3887
          %v7580 = vpop.f32.mrf.mxu0
          %v7581 = vadd.f32 %v4418, %v7580
          %v7582 = vpop.f32.mrf.mxu0
          %7583 = vdwg.mxu0
          %7584 = vmatpush.bf16.msra.mxu0 %v6226
          %7585 = vmatpush.bf16.msra.mxu0 %v6210
          %7586 = vmatpush.bf16.msra.mxu0 %v6194
          %7587 = vmatpush.bf16.msra.mxu0 %v6178
          %7588 = vmatpush.bf16.msra.mxu0 %v6162
          %7589 = vmatpush.bf16.msra.mxu0 %v6146
          %7590 = vmatpush.bf16.msra.mxu0 %v6130
          %7591 = vmatpush.bf16.msra.mxu0 %v6114
          %7592 = vmatmul.bf16.gmra.mxu0 %v3888
          %v7593 = vpop.f32.mrf.mxu0
          %v7594 = vadd.f32 %v7581, %v7593
          %v7595 = vpop.f32.mrf.mxu0
          %7596 = vdwg.mxu0
          %7597 = vmatpush.bf16.msra.mxu0 %v6354
          %7598 = vmatpush.bf16.msra.mxu0 %v6338
          %7599 = vmatpush.bf16.msra.mxu0 %v6322
          %7600 = vmatpush.bf16.msra.mxu0 %v6306
          %7601 = vmatpush.bf16.msra.mxu0 %v6290
          %7602 = vmatpush.bf16.msra.mxu0 %v6274
          %7603 = vmatpush.bf16.msra.mxu0 %v6258
          %7604 = vmatpush.bf16.msra.mxu0 %v6242
          %7605 = vmatmul.bf16.gmra.mxu0 %v3889
          %v7606 = vpop.f32.mrf.mxu0
          %v7607 = vadd.f32 %v7594, %v7606
          %v7608 = vpop.f32.mrf.mxu0
          %7609 = vdwg.mxu0
          %7610 = vmatpush.bf16.msra.mxu0 %v6482
          %7611 = vmatpush.bf16.msra.mxu0 %v6466
          %7612 = vmatpush.bf16.msra.mxu0 %v6450
          %7613 = vmatpush.bf16.msra.mxu0 %v6434
          %7614 = vmatpush.bf16.msra.mxu0 %v6418
          %7615 = vmatpush.bf16.msra.mxu0 %v6402
          %7616 = vmatpush.bf16.msra.mxu0 %v6386
          %7617 = vmatpush.bf16.msra.mxu0 %v6370
          %7618 = vmatmul.bf16.gmra.mxu0 %v3890
          %v7619 = vpop.f32.mrf.mxu0
          %v7620 = vadd.f32 %v7607, %v7619
          %v7621 = vpop.f32.mrf.mxu0
          %7622 = vdwg.mxu0
          %7623 = vmatpush.bf16.msra.mxu0 %v6099
          %7624 = vmatpush.bf16.msra.mxu0 %v6083
          %7625 = vmatpush.bf16.msra.mxu0 %v6067
          %7626 = vmatpush.bf16.msra.mxu0 %v6051
          %7627 = vmatpush.bf16.msra.mxu0 %v6035
          %7628 = vmatpush.bf16.msra.mxu0 %v6019
          %7629 = vmatpush.bf16.msra.mxu0 %v6003
          %7630 = vmatpush.bf16.msra.mxu0 %v5987
          %7631 = vmatmul.bf16.gmra.mxu0 %v3887
          %v7632 = vpop.f32.mrf.mxu0
          %v7633 = vadd.f32 %v4419, %v7632
          %v7634 = vpop.f32.mrf.mxu0
          %7635 = vdwg.mxu0
          %7636 = vmatpush.bf16.msra.mxu0 %v6227
          %7637 = vmatpush.bf16.msra.mxu0 %v6211
          %7638 = vmatpush.bf16.msra.mxu0 %v6195
          %7639 = vmatpush.bf16.msra.mxu0 %v6179
          %7640 = vmatpush.bf16.msra.mxu0 %v6163
          %7641 = vmatpush.bf16.msra.mxu0 %v6147
          %7642 = vmatpush.bf16.msra.mxu0 %v6131
          %7643 = vmatpush.bf16.msra.mxu0 %v6115
          %7644 = vmatmul.bf16.gmra.mxu0 %v3888
          %v7645 = vpop.f32.mrf.mxu0
          %v7646 = vadd.f32 %v7633, %v7645
          %v7647 = vpop.f32.mrf.mxu0
          %7648 = vdwg.mxu0
          %7649 = vmatpush.bf16.msra.mxu0 %v6355
          %7650 = vmatpush.bf16.msra.mxu0 %v6339
          %7651 = vmatpush.bf16.msra.mxu0 %v6323
          %7652 = vmatpush.bf16.msra.mxu0 %v6307
          %7653 = vmatpush.bf16.msra.mxu0 %v6291
          %7654 = vmatpush.bf16.msra.mxu0 %v6275
          %7655 = vmatpush.bf16.msra.mxu0 %v6259
          %7656 = vmatpush.bf16.msra.mxu0 %v6243
          %7657 = vmatmul.bf16.gmra.mxu0 %v3889
          %v7658 = vpop.f32.mrf.mxu0
          %v7659 = vadd.f32 %v7646, %v7658
          %v7660 = vpop.f32.mrf.mxu0
          %7661 = vdwg.mxu0
          %7662 = vmatpush.bf16.msra.mxu0 %v6483
          %7663 = vmatpush.bf16.msra.mxu0 %v6467
          %7664 = vmatpush.bf16.msra.mxu0 %v6451
          %7665 = vmatpush.bf16.msra.mxu0 %v6435
          %7666 = vmatpush.bf16.msra.mxu0 %v6419
          %7667 = vmatpush.bf16.msra.mxu0 %v6403
          %7668 = vmatpush.bf16.msra.mxu0 %v6387
          %7669 = vmatpush.bf16.msra.mxu0 %v6371
          %7670 = vmatmul.bf16.gmra.mxu0 %v3890
          %v7671 = vpop.f32.mrf.mxu0
          %v7672 = vadd.f32 %v7659, %v7671
          %v7673 = vpop.f32.mrf.mxu0
          %7674 = vdwg.mxu0
          %7675 = vmatpush.bf16.msra.mxu0 %v6100
          %7676 = vmatpush.bf16.msra.mxu0 %v6084
          %7677 = vmatpush.bf16.msra.mxu0 %v6068
          %7678 = vmatpush.bf16.msra.mxu0 %v6052
          %7679 = vmatpush.bf16.msra.mxu0 %v6036
          %7680 = vmatpush.bf16.msra.mxu0 %v6020
          %7681 = vmatpush.bf16.msra.mxu0 %v6004
          %7682 = vmatpush.bf16.msra.mxu0 %v5988
          %7683 = vmatmul.bf16.gmra.mxu0 %v3887
          %v7684 = vpop.f32.mrf.mxu0
          %v7685 = vadd.f32 %v4420, %v7684
          %v7686 = vpop.f32.mrf.mxu0
          %7687 = vdwg.mxu0
          %7688 = vmatpush.bf16.msra.mxu0 %v6228
          %7689 = vmatpush.bf16.msra.mxu0 %v6212
          %7690 = vmatpush.bf16.msra.mxu0 %v6196
          %7691 = vmatpush.bf16.msra.mxu0 %v6180
          %7692 = vmatpush.bf16.msra.mxu0 %v6164
          %7693 = vmatpush.bf16.msra.mxu0 %v6148
          %7694 = vmatpush.bf16.msra.mxu0 %v6132
          %7695 = vmatpush.bf16.msra.mxu0 %v6116
          %7696 = vmatmul.bf16.gmra.mxu0 %v3888
          %v7697 = vpop.f32.mrf.mxu0
          %v7698 = vadd.f32 %v7685, %v7697
          %v7699 = vpop.f32.mrf.mxu0
          %7700 = vdwg.mxu0
          %7701 = vmatpush.bf16.msra.mxu0 %v6356
          %7702 = vmatpush.bf16.msra.mxu0 %v6340
          %7703 = vmatpush.bf16.msra.mxu0 %v6324
          %7704 = vmatpush.bf16.msra.mxu0 %v6308
          %7705 = vmatpush.bf16.msra.mxu0 %v6292
          %7706 = vmatpush.bf16.msra.mxu0 %v6276
          %7707 = vmatpush.bf16.msra.mxu0 %v6260
          %7708 = vmatpush.bf16.msra.mxu0 %v6244
          %7709 = vmatmul.bf16.gmra.mxu0 %v3889
          %v7710 = vpop.f32.mrf.mxu0
          %v7711 = vadd.f32 %v7698, %v7710
          %v7712 = vpop.f32.mrf.mxu0
          %7713 = vdwg.mxu0
          %7714 = vmatpush.bf16.msra.mxu0 %v6484
          %7715 = vmatpush.bf16.msra.mxu0 %v6468
          %7716 = vmatpush.bf16.msra.mxu0 %v6452
          %7717 = vmatpush.bf16.msra.mxu0 %v6436
          %7718 = vmatpush.bf16.msra.mxu0 %v6420
          %7719 = vmatpush.bf16.msra.mxu0 %v6404
          %7720 = vmatpush.bf16.msra.mxu0 %v6388
          %7721 = vmatpush.bf16.msra.mxu0 %v6372
          %7722 = vmatmul.bf16.gmra.mxu0 %v3890
          %v7723 = vpop.f32.mrf.mxu0
          %v7724 = vadd.f32 %v7711, %v7723
          %v7725 = vpop.f32.mrf.mxu0
          %7726 = vdwg.mxu0
          %7727 = vmatpush.bf16.msra.mxu0 %v6101
          %7728 = vmatpush.bf16.msra.mxu0 %v6085
          %7729 = vmatpush.bf16.msra.mxu0 %v6069
          %7730 = vmatpush.bf16.msra.mxu0 %v6053
          %7731 = vmatpush.bf16.msra.mxu0 %v6037
          %7732 = vmatpush.bf16.msra.mxu0 %v6021
          %7733 = vmatpush.bf16.msra.mxu0 %v6005
          %7734 = vmatpush.bf16.msra.mxu0 %v5989
          %7735 = vmatmul.bf16.gmra.mxu0 %v3887
          %v7736 = vpop.f32.mrf.mxu0
          %v7737 = vadd.f32 %v4421, %v7736
          %v7738 = vpop.f32.mrf.mxu0
          %7739 = vdwg.mxu0
          %7740 = vmatpush.bf16.msra.mxu0 %v6229
          %7741 = vmatpush.bf16.msra.mxu0 %v6213
          %7742 = vmatpush.bf16.msra.mxu0 %v6197
          %7743 = vmatpush.bf16.msra.mxu0 %v6181
          %7744 = vmatpush.bf16.msra.mxu0 %v6165
          %7745 = vmatpush.bf16.msra.mxu0 %v6149
          %7746 = vmatpush.bf16.msra.mxu0 %v6133
          %7747 = vmatpush.bf16.msra.mxu0 %v6117
          %7748 = vmatmul.bf16.gmra.mxu0 %v3888
          %v7749 = vpop.f32.mrf.mxu0
          %v7750 = vadd.f32 %v7737, %v7749
          %v7751 = vpop.f32.mrf.mxu0
          %7752 = vdwg.mxu0
          %7753 = vmatpush.bf16.msra.mxu0 %v6357
          %7754 = vmatpush.bf16.msra.mxu0 %v6341
          %7755 = vmatpush.bf16.msra.mxu0 %v6325
          %7756 = vmatpush.bf16.msra.mxu0 %v6309
          %7757 = vmatpush.bf16.msra.mxu0 %v6293
          %7758 = vmatpush.bf16.msra.mxu0 %v6277
          %7759 = vmatpush.bf16.msra.mxu0 %v6261
          %7760 = vmatpush.bf16.msra.mxu0 %v6245
          %7761 = vmatmul.bf16.gmra.mxu0 %v3889
          %v7762 = vpop.f32.mrf.mxu0
          %v7763 = vadd.f32 %v7750, %v7762
          %v7764 = vpop.f32.mrf.mxu0
          %7765 = vdwg.mxu0
          %7766 = vmatpush.bf16.msra.mxu0 %v6485
          %7767 = vmatpush.bf16.msra.mxu0 %v6469
          %7768 = vmatpush.bf16.msra.mxu0 %v6453
          %7769 = vmatpush.bf16.msra.mxu0 %v6437
          %7770 = vmatpush.bf16.msra.mxu0 %v6421
          %7771 = vmatpush.bf16.msra.mxu0 %v6405
          %7772 = vmatpush.bf16.msra.mxu0 %v6389
          %7773 = vmatpush.bf16.msra.mxu0 %v6373
          %7774 = vmatmul.bf16.gmra.mxu0 %v3890
          %v7775 = vpop.f32.mrf.mxu0
          %v7776 = vadd.f32 %v7763, %v7775
          %v7777 = vpop.f32.mrf.mxu0
          %7778 = vdwg.mxu0
          %7779 = vmatpush.bf16.msra.mxu0 %v6102
          %7780 = vmatpush.bf16.msra.mxu0 %v6086
          %7781 = vmatpush.bf16.msra.mxu0 %v6070
          %7782 = vmatpush.bf16.msra.mxu0 %v6054
          %7783 = vmatpush.bf16.msra.mxu0 %v6038
          %7784 = vmatpush.bf16.msra.mxu0 %v6022
          %7785 = vmatpush.bf16.msra.mxu0 %v6006
          %7786 = vmatpush.bf16.msra.mxu0 %v5990
          %7787 = vmatmul.bf16.gmra.mxu0 %v3887
          %v7788 = vpop.f32.mrf.mxu0
          %v7789 = vadd.f32 %v4422, %v7788
          %v7790 = vpop.f32.mrf.mxu0
          %7791 = vdwg.mxu0
          %7792 = vmatpush.bf16.msra.mxu0 %v6230
          %7793 = vmatpush.bf16.msra.mxu0 %v6214
          %7794 = vmatpush.bf16.msra.mxu0 %v6198
          %7795 = vmatpush.bf16.msra.mxu0 %v6182
          %7796 = vmatpush.bf16.msra.mxu0 %v6166
          %7797 = vmatpush.bf16.msra.mxu0 %v6150
          %7798 = vmatpush.bf16.msra.mxu0 %v6134
          %7799 = vmatpush.bf16.msra.mxu0 %v6118
          %7800 = vmatmul.bf16.gmra.mxu0 %v3888
          %v7801 = vpop.f32.mrf.mxu0
          %v7802 = vadd.f32 %v7789, %v7801
          %v7803 = vpop.f32.mrf.mxu0
          %7804 = vdwg.mxu0
          %7805 = vmatpush.bf16.msra.mxu0 %v6358
          %7806 = vmatpush.bf16.msra.mxu0 %v6342
          %7807 = vmatpush.bf16.msra.mxu0 %v6326
          %7808 = vmatpush.bf16.msra.mxu0 %v6310
          %7809 = vmatpush.bf16.msra.mxu0 %v6294
          %7810 = vmatpush.bf16.msra.mxu0 %v6278
          %7811 = vmatpush.bf16.msra.mxu0 %v6262
          %7812 = vmatpush.bf16.msra.mxu0 %v6246
          %7813 = vmatmul.bf16.gmra.mxu0 %v3889
          %v7814 = vpop.f32.mrf.mxu0
          %v7815 = vadd.f32 %v7802, %v7814
          %v7816 = vpop.f32.mrf.mxu0
          %7817 = vdwg.mxu0
          %7818 = vmatpush.bf16.msra.mxu0 %v6486
          %7819 = vmatpush.bf16.msra.mxu0 %v6470
          %7820 = vmatpush.bf16.msra.mxu0 %v6454
          %7821 = vmatpush.bf16.msra.mxu0 %v6438
          %7822 = vmatpush.bf16.msra.mxu0 %v6422
          %7823 = vmatpush.bf16.msra.mxu0 %v6406
          %7824 = vmatpush.bf16.msra.mxu0 %v6390
          %7825 = vmatpush.bf16.msra.mxu0 %v6374
          %7826 = vmatmul.bf16.gmra.mxu0 %v3890
          %v7827 = vpop.f32.mrf.mxu0
          %v7828 = vadd.f32 %v7815, %v7827
          %v7829 = vpop.f32.mrf.mxu0
          %7830 = vdwg.mxu0
          %7831 = vst [vmem:[%s22] sm:$0xff] %v7048
          %7832 = vst [vmem:[%s22 + $0x8] sm:$0xff] %v7100
          %7833 = vst [vmem:[%s22 + $0x10] sm:$0xff] %v7152
          %7834 = vst [vmem:[%s22 + $0x18] sm:$0xff] %v7204
          %7835 = vst [vmem:[%s22 + $0x20] sm:$0xff] %v7256
          %7836 = vst [vmem:[%s22 + $0x28] sm:$0xff] %v7308
          %7837 = vst [vmem:[%s22 + $0x30] sm:$0xff] %v7360
          %7838 = vst [vmem:[%s22 + $0x38] sm:$0xff] %v7412
          %7839 = vst [vmem:[%s22 + $0x40] sm:$0xff] %v7464
          %7840 = vst [vmem:[%s22 + $0x48] sm:$0xff] %v7516
          %7841 = vst [vmem:[%s22 + $0x50] sm:$0xff] %v7568
          %7842 = vst [vmem:[%s22 + $0x58] sm:$0xff] %v7620
          %7843 = vst [vmem:[%s22 + $0x60] sm:$0xff] %v7672
          %7844 = vst [vmem:[%s22 + $0x68] sm:$0xff] %v7724
          %7845 = vst [vmem:[%s22 + $0x70] sm:$0xff] %v7776
          %7846 = vst [vmem:[%s22 + $0x78] sm:$0xff] %v7828
          %v7847 = vpack.c.bf16 %v3468, %v3468
          %v7848 = vld [vmem:[#allocation28] sm:$0xff]
          %v7849 = vld [vmem:[#allocation28 + $0x8] sm:$0xff]
          %v7850 = vld [vmem:[#allocation28 + $0x10] sm:$0xff]
          %v7851 = vld [vmem:[#allocation28 + $0x18] sm:$0xff]
          %v7852 = vld [vmem:[#allocation28 + $0x20] sm:$0xff]
          %v7853 = vld [vmem:[#allocation28 + $0x28] sm:$0xff]
          %v7854 = vld [vmem:[#allocation28 + $0x30] sm:$0xff]
          %v7855 = vld [vmem:[#allocation28 + $0x38] sm:$0xff]
          %v7856 = vld [vmem:[#allocation28 + $0x40] sm:$0xff]
          %v7857 = vld [vmem:[#allocation28 + $0x48] sm:$0xff]
          %v7858 = vld [vmem:[#allocation28 + $0x50] sm:$0xff]
          %v7859 = vld [vmem:[#allocation28 + $0x58] sm:$0xff]
          %v7860 = vld [vmem:[#allocation28 + $0x60] sm:$0xff]
          %v7861 = vld [vmem:[#allocation28 + $0x68] sm:$0xff]
          %v7862 = vld [vmem:[#allocation28 + $0x70] sm:$0xff]
          %v7863 = vld [vmem:[#allocation28 + $0x78] sm:$0xff]
          %v7864 = vld [vmem:[#allocation28 + $0x80] sm:$0xff]
          %v7865 = vld [vmem:[#allocation28 + $0x88] sm:$0xff]
          %v7866 = vld [vmem:[#allocation28 + $0x90] sm:$0xff]
          %v7867 = vld [vmem:[#allocation28 + $0x98] sm:$0xff]
          %v7868 = vld [vmem:[#allocation28 + $0xa0] sm:$0xff]
          %v7869 = vld [vmem:[#allocation28 + $0xa8] sm:$0xff]
          %v7870 = vld [vmem:[#allocation28 + $0xb0] sm:$0xff]
          %v7871 = vld [vmem:[#allocation28 + $0xb8] sm:$0xff]
          %v7872 = vld [vmem:[#allocation28 + $0xc0] sm:$0xff]
          %v7873 = vld [vmem:[#allocation28 + $0xc8] sm:$0xff]
          %v7874 = vld [vmem:[#allocation28 + $0xd0] sm:$0xff]
          %v7875 = vld [vmem:[#allocation28 + $0xd8] sm:$0xff]
          %v7876 = vld [vmem:[#allocation28 + $0xe0] sm:$0xff]
          %v7877 = vld [vmem:[#allocation28 + $0xe8] sm:$0xff]
          %v7878 = vld [vmem:[#allocation28 + $0xf0] sm:$0xff]
          %v7879 = vld [vmem:[#allocation28 + $0xf8] sm:$0xff]
          %v7880 = vld [vmem:[#allocation30] sm:$0xf]
          %v7882 = vperm.slane %v7880, 0
          %v7883 = vperm.slane %v7880, 1
          %v7884 = vperm.slane %v7880, 2
          %v7885 = vperm.slane %v7880, 3
          %v7922 = vunpack.c.l.b16 %v7848
          %v7923 = vunpack.c.h.b16 %v7848
          %v7924 = vunpack.c.l.b16 %v7849
          %v7925 = vunpack.c.h.b16 %v7849
          %v7926 = vunpack.c.l.b16 %v7850
          %v7927 = vunpack.c.h.b16 %v7850
          %v7928 = vunpack.c.l.b16 %v7851
          %v7929 = vunpack.c.h.b16 %v7851
          %v7930 = vunpack.c.l.b16 %v7852
          %v7931 = vunpack.c.h.b16 %v7852
          %v7932 = vunpack.c.l.b16 %v7853
          %v7933 = vunpack.c.h.b16 %v7853
          %v7934 = vunpack.c.l.b16 %v7854
          %v7935 = vunpack.c.h.b16 %v7854
          %v7936 = vunpack.c.l.b16 %v7855
          %v7937 = vunpack.c.h.b16 %v7855
          %v7938 = vunpack.c.l.b16 %v7856
          %v7939 = vunpack.c.h.b16 %v7856
          %v7940 = vunpack.c.l.b16 %v7857
          %v7941 = vunpack.c.h.b16 %v7857
          %v7942 = vunpack.c.l.b16 %v7858
          %v7943 = vunpack.c.h.b16 %v7858
          %v7944 = vunpack.c.l.b16 %v7859
          %v7945 = vunpack.c.h.b16 %v7859
          %v7946 = vunpack.c.l.b16 %v7860
          %v7947 = vunpack.c.h.b16 %v7860
          %v7948 = vunpack.c.l.b16 %v7861
          %v7949 = vunpack.c.h.b16 %v7861
          %v7950 = vunpack.c.l.b16 %v7862
          %v7951 = vunpack.c.h.b16 %v7862
          %v7952 = vunpack.c.l.b16 %v7863
          %v7953 = vunpack.c.h.b16 %v7863
          %v7954 = vunpack.c.l.b16 %v7864
          %v7955 = vunpack.c.h.b16 %v7864
          %v7956 = vunpack.c.l.b16 %v7865
          %v7957 = vunpack.c.h.b16 %v7865
          %v7958 = vunpack.c.l.b16 %v7866
          %v7959 = vunpack.c.h.b16 %v7866
          %v7960 = vunpack.c.l.b16 %v7867
          %v7961 = vunpack.c.h.b16 %v7867
          %v7962 = vunpack.c.l.b16 %v7868
          %v7963 = vunpack.c.h.b16 %v7868
          %v7964 = vunpack.c.l.b16 %v7869
          %v7965 = vunpack.c.h.b16 %v7869
          %v7966 = vunpack.c.l.b16 %v7870
          %v7967 = vunpack.c.h.b16 %v7870
          %v7968 = vunpack.c.l.b16 %v7871
          %v7969 = vunpack.c.h.b16 %v7871
          %v7970 = vunpack.c.l.b16 %v7872
          %v7971 = vunpack.c.h.b16 %v7872
          %v7972 = vunpack.c.l.b16 %v7873
          %v7973 = vunpack.c.h.b16 %v7873
          %v7974 = vunpack.c.l.b16 %v7874
          %v7975 = vunpack.c.h.b16 %v7874
          %v7976 = vunpack.c.l.b16 %v7875
          %v7977 = vunpack.c.h.b16 %v7875
          %v7978 = vunpack.c.l.b16 %v7876
          %v7979 = vunpack.c.h.b16 %v7876
          %v7980 = vunpack.c.l.b16 %v7877
          %v7981 = vunpack.c.h.b16 %v7877
          %v7982 = vunpack.c.l.b16 %v7878
          %v7983 = vunpack.c.h.b16 %v7878
          %v7984 = vunpack.c.l.b16 %v7879
          %v7985 = vunpack.c.h.b16 %v7879
          %v7986 = vpack.c.b16 %v7926, %v7922
          %v7987 = vpack.c.b16 %v7927, %v7923
          %v7988 = vpack.c.b16 %v7928, %v7924
          %v7989 = vpack.c.b16 %v7929, %v7925
          %v7990 = vpack.c.b16 %v7934, %v7930
          %v7991 = vpack.c.b16 %v7935, %v7931
          %v7992 = vpack.c.b16 %v7936, %v7932
          %v7993 = vpack.c.b16 %v7937, %v7933
          %v7994 = vpack.c.b16 %v7942, %v7938
          %v7995 = vpack.c.b16 %v7943, %v7939
          %v7996 = vpack.c.b16 %v7944, %v7940
          %v7997 = vpack.c.b16 %v7945, %v7941
          %v7998 = vpack.c.b16 %v7950, %v7946
          %v7999 = vpack.c.b16 %v7951, %v7947
          %v8000 = vpack.c.b16 %v7952, %v7948
          %v8001 = vpack.c.b16 %v7953, %v7949
          %v8002 = vpack.c.b16 %v7958, %v7954
          %v8003 = vpack.c.b16 %v7959, %v7955
          %v8004 = vpack.c.b16 %v7960, %v7956
          %v8005 = vpack.c.b16 %v7961, %v7957
          %v8006 = vpack.c.b16 %v7966, %v7962
          %v8007 = vpack.c.b16 %v7967, %v7963
          %v8008 = vpack.c.b16 %v7968, %v7964
          %v8009 = vpack.c.b16 %v7969, %v7965
          %v8010 = vpack.c.b16 %v7974, %v7970
          %v8011 = vpack.c.b16 %v7975, %v7971
          %v8012 = vpack.c.b16 %v7976, %v7972
          %v8013 = vpack.c.b16 %v7977, %v7973
          %v8014 = vpack.c.b16 %v7982, %v7978
          %v8015 = vpack.c.b16 %v7983, %v7979
          %v8016 = vpack.c.b16 %v7984, %v7980
          %v8017 = vpack.c.b16 %v7985, %v7981
          %8050 = vmatpush.bf16.msra.mxu0 %v8014
          %8051 = vmatpush.bf16.msra.mxu0 %v8010
          %8052 = vmatpush.bf16.msra.mxu0 %v8006
          %8053 = vmatpush.bf16.msra.mxu0 %v8002
          %8054 = vmatpush.bf16.msra.mxu0 %v7998
          %8055 = vmatpush.bf16.msra.mxu0 %v7994
          %8056 = vmatpush.bf16.msra.mxu0 %v7990
          %8057 = vmatpush.bf16.msra.mxu0 %v7986
          %8058 = vmatmul.bf16.gmra.mxu0 %v7847
          %v8059 = vpop.f32.mrf.mxu0
          %v8060 = vadd.f32 %v7882, %v8059
          %v8061 = vpop.f32.mrf.mxu0
          %8062 = vdwg.mxu0
          %8063 = vmatpush.bf16.msra.mxu0 %v8015
          %8064 = vmatpush.bf16.msra.mxu0 %v8011
          %8065 = vmatpush.bf16.msra.mxu0 %v8007
          %8066 = vmatpush.bf16.msra.mxu0 %v8003
          %8067 = vmatpush.bf16.msra.mxu0 %v7999
          %8068 = vmatpush.bf16.msra.mxu0 %v7995
          %8069 = vmatpush.bf16.msra.mxu0 %v7991
          %8070 = vmatpush.bf16.msra.mxu0 %v7987
          %8071 = vmatmul.bf16.gmra.mxu0 %v7847
          %v8072 = vpop.f32.mrf.mxu0
          %v8073 = vadd.f32 %v7883, %v8072
          %v8074 = vpop.f32.mrf.mxu0
          %8075 = vdwg.mxu0
          %8076 = vmatpush.bf16.msra.mxu0 %v8016
          %8077 = vmatpush.bf16.msra.mxu0 %v8012
          %8078 = vmatpush.bf16.msra.mxu0 %v8008
          %8079 = vmatpush.bf16.msra.mxu0 %v8004
          %8080 = vmatpush.bf16.msra.mxu0 %v8000
          %8081 = vmatpush.bf16.msra.mxu0 %v7996
          %8082 = vmatpush.bf16.msra.mxu0 %v7992
          %8083 = vmatpush.bf16.msra.mxu0 %v7988
          %8084 = vmatmul.bf16.gmra.mxu0 %v7847
          %v8085 = vpop.f32.mrf.mxu0
          %v8086 = vadd.f32 %v7884, %v8085
          %v8087 = vpop.f32.mrf.mxu0
          %8088 = vdwg.mxu0
          %8089 = vmatpush.bf16.msra.mxu0 %v8017
          %8090 = vmatpush.bf16.msra.mxu0 %v8013
          %8091 = vmatpush.bf16.msra.mxu0 %v8009
          %8092 = vmatpush.bf16.msra.mxu0 %v8005
          %8093 = vmatpush.bf16.msra.mxu0 %v8001
          %8094 = vmatpush.bf16.msra.mxu0 %v7997
          %8095 = vmatpush.bf16.msra.mxu0 %v7993
          %8096 = vmatpush.bf16.msra.mxu0 %v7989
          %8097 = vmatmul.bf16.gmra.mxu0 %v7847
          %v8098 = vpop.f32.mrf.mxu0
          %v8099 = vadd.f32 %v7885, %v8098
          %v8100 = vpop.f32.mrf.mxu0
          %8101 = vdwg.mxu0
          %8102 = vst [vmem:[%s23] sm:$0xff] %v8060
          %8103 = vst [vmem:[%s23 + $0x8] sm:$0xff] %v8073
          %8104 = vst [vmem:[%s23 + $0x10] sm:$0xff] %v8086
          %8105 = vst [vmem:[%s23 + $0x18] sm:$0xff] %v8099
          %8106 = vst [vmem:[#allocation31] sm:$0xff] %v3470
          %v8108 = vrot.slane %v3471, 1
          %v8110 = vmax.f32 %v3471, %v8108
          %v8112 = vrot.slane %v8110, 2
          %v8114 = vmax.f32 %v8110, %v8112
          %8115 = vst [vmem:[#allocation32] sm:$0x1] %v8114
          %8116 = vst [vmem:[#allocation32 - $0x3] sm:$0x10] %v8114
        $region212: #{ibot_forward.1} parent=107 // pred_fallthru
          _
        // Predicated region
        $region213: #{ibot_forward.1} parent=107 // pred_check
          %p8117 = pneg %p574
        $region214: #{ibot_forward.1} parent=107 // pred_check_branch
          %8119 = sbr.rel (%p8117) target = $region216
        $region215: #{ibot_forward.1} parent=107 // pred_region
          _
        $region216: #{ibot_forward.1} parent=107 // pred_fallthru
          _
        // Predicated region
        $region217: #{ibot_forward.1} parent=107 // pred_check
          %p8120 = pneg %p595
        $region218: #{ibot_forward.1} parent=107 // pred_check_branch
          %8122 = sbr.rel (%p8120) target = $region220
        $region219: #{ibot_forward.1} parent=107 // pred_region
          _
        $region220: #{ibot_forward.1} parent=107 // pred_fallthru
          _
        // Predicated region
        $region221: #{ibot_forward.1} parent=107 // pred_check
          %p8123 = pneg %p616
        $region222: #{ibot_forward.1} parent=107 // pred_check_branch
          %8125 = sbr.rel (%p8123) target = $region224
        $region223: #{ibot_forward.1} parent=107 // pred_region
          %8127 = vsyncadd [#allocation6], 0
          %s8129 = sshll.u32 [#allocation31], 4
          %s8130 = int_to_ptr.vmem [resolvable:$true] %s8129
          %s8131 = sshll.u32 %s24, 4
          %s8132 = int_to_ptr.hbm [resolvable:$true] %s8131
          %8134 = dma.vmem_to_hbm [thread:$0]  %s8130, 128, %s8132, [#allocation6]
        $region224: #{ibot_forward.1} parent=107 // pred_fallthru
          _
        // Predicated region
        $region225: #{ibot_forward.1} parent=107 // pred_check
          %p8135 = pneg %p637
        $region226: #{ibot_forward.1} parent=107 // pred_check_branch
          %8137 = sbr.rel (%p8135) target = $region228
        $region227: #{ibot_forward.1} parent=107 // pred_region
          %8139 = vsyncadd [#allocation33], 0
          %s8141 = sshll.u32 [#allocation32], 4
          %s8142 = int_to_ptr.vmem [resolvable:$true] %s8141
          %s8143 = sshll.u32 %s25, 4
          %s8144 = int_to_ptr.hbm [resolvable:$true] %s8143
          %8146 = dma.vmem_to_hbm [thread:$0]  %s8142, 32, %s8144, [#allocation33]
        $region228: #{ibot_forward.1} parent=107 // pred_fallthru
          _
        // Predicated region
        $region229: #{ibot_forward.1} parent=107 // pred_check
          %p8147 = pneg %p574
        $region230: #{ibot_forward.1} parent=107 // pred_check_branch
          %8149 = sbr.rel (%p8147) target = $region232
        $region231: #{ibot_forward.1} parent=107 // pred_region
          _
        $region232: #{ibot_forward.1} parent=107 // pred_fallthru
          _
        // Predicated region
        $region233: #{ibot_forward.1} parent=107 // pred_check
          %p8150 = pneg %p595
        $region234: #{ibot_forward.1} parent=107 // pred_check_branch
          %8152 = sbr.rel (%p8150) target = $region236
        $region235: #{ibot_forward.1} parent=107 // pred_region
          _
        $region236: #{ibot_forward.1} parent=107 // pred_fallthru
          _
        // Predicated region
        $region237: #{ibot_forward.1} parent=107 // pred_check
          %p8153 = pneg %p616
        $region238: #{ibot_forward.1} parent=107 // pred_check_branch
          %8155 = sbr.rel (%p8153) target = $region240
        $region239: #{ibot_forward.1} parent=107 // pred_region
          %8157 = dma.done [#allocation6], 128
        $region240: #{ibot_forward.1} parent=107 // pred_fallthru
          _
        // Predicated region
        $region241: #{ibot_forward.1} parent=107 // pred_check
          %p8158 = pneg %p637
        $region242: #{ibot_forward.1} parent=107 // pred_check_branch
          %8160 = sbr.rel (%p8158) target = $region244
        $region243: #{ibot_forward.1} parent=107 // pred_region
          %8162 = dma.done [#allocation33], 32
        $region244: #{ibot_forward.1} parent=107 // pred_fallthru
          _
      $region108: #{ibot_forward.1} parent=5 // pred_fallthru
        _
      %p8163 = scmp.le.s32.totalorder 2, %s39
      // Predicated region
      $region245: #{ibot_forward.1} parent=5 // pred_check
        %p8164 = pneg %p8163
      $region246: #{ibot_forward.1} parent=5 // pred_check_branch
        %8166 = sbr.rel (%p8164) target = $region248
      $region247: #{ibot_forward.1} parent=5 // pred_region
        %s8167 = ssub.s32 %s39, 2
      $region248: #{ibot_forward.1} parent=5 // pred_fallthru
        _
    $region6: #{ibot_forward.1} parent=1 // loop_footer
      %s43 = sadd.s32 1, %s39
    $region7: #{ibot_forward.1} parent=1 // loop_footer_branch
      %38 = sbr.rel target = $region3
    $region8: #{ibot_forward.1} parent=1 // loop_exit
      _
    %8168 = vsyncpa [#allocation5], 1
    %s8169 = scalar_lea.sflag [#allocation5], 1
    %8170 = vsyncpa %s8169, 1
    %8171 = vsyncpa [#allocation8], 1
    %8172 = vsyncpa [#allocation11], 1
    %8173 = vsyncpa [#allocation26], 1
    %8174 = vsyncpa [#allocation29], 1
    %8175 = vsyncpa [#allocation6], 1
    %s8176 = scalar_lea.sflag [#allocation6], 1
    %8177 = vsyncpa %s8176, 1
    %8178 = vsyncpa [#allocation33], 1

</llo_original>
